<compile_context>
chip_gen: v6e
topology: v6e:2x2x1
jax: 0.10.0
libtpu: 0.0.40
codegen_flags: <defaults>
</compile_context>

<pallas_src>
import jax
import jax.numpy as jnp
from jax.experimental import pallas as pl
from jax.experimental.pallas import tpu as pltpu


# ---------------------------------------------------------------------------
# In-kernel building blocks (operate on VMEM refs / values only)
# ---------------------------------------------------------------------------
def _pool2x2(y_ref):
    """MaxPool2d(2,2) of a VMEM-resident NHWC ref via 4 stride-2 reads."""
    _, h, w, _ = y_ref.shape
    h2, w2 = h // 2, w // 2
    p00 = y_ref[:, pl.ds(0, h2, stride=2), pl.ds(0, w2, stride=2), :]
    p01 = y_ref[:, pl.ds(0, h2, stride=2), pl.ds(1, w2, stride=2), :]
    p10 = y_ref[:, pl.ds(1, h2, stride=2), pl.ds(0, w2, stride=2), :]
    p11 = y_ref[:, pl.ds(1, h2, stride=2), pl.ds(1, w2, stride=2), :]
    return jnp.maximum(jnp.maximum(p00, p01), jnp.maximum(p10, p11))


def _conv3x3_mxu(pad_ref, w, b):
    """3x3/pad=1 conv from a zero-padded NHWC VMEM ref as 9 bf16 MXU matmuls.

    pad_ref: (N, H+2, W+2, Cin) f32   w: (9, Cin, Cout) bf16   b: (1, Cout) f32
    Returns ReLU'd (N, H, W, Cout) f32.
    """
    n, hp, wp, cin = pad_ref.shape
    h, wd = hp - 2, wp - 2
    cout = w.shape[-1]
    acc = jnp.zeros((n * h * wd, cout), jnp.float32) + b          # bias init
    for k in range(9):
        kh, kw = k // 3, k % 3
        xs = pad_ref[:, kh:kh + h, kw:kw + wd, :]                 # shifted window
        xs = xs.reshape(n * h * wd, cin).astype(jnp.bfloat16)
        acc = acc + jnp.dot(xs, w[k], preferred_element_type=jnp.float32)
    return jnp.maximum(acc, 0.0).reshape(n, h, wd, cout)          # fused ReLU


# ---------------------------------------------------------------------------
# Fused SmallCNN forward kernel
# ---------------------------------------------------------------------------
def _smallcnn_kernel(x_ref, w1_ref, b1_ref, w2_ref, b2_ref, w3_ref, b3_ref,
                     wfc_ref, bfc_ref, wo_ref, bo_ref, out_ref,
                     y1_ref, p2_ref, y2_ref, p3_ref, y3_ref):
    n, hp, wp, _ = x_ref.shape
    h, wd = hp - 2, wp - 2                                        # 16, 16

    # ---- conv1 (C_in=1 -> 16) + ReLU: 9 shifted VPU multiply-accumulates ----
    w1 = w1_ref[...]                                              # (9, 16) f32
    acc1 = jnp.zeros((n, h, wd, w1.shape[-1]), jnp.float32) + b1_ref[...]
    for k in range(9):
        kh, kw = k // 3, k % 3
        xs = x_ref[:, kh:kh + h, kw:kw + wd, :]                   # (n, h, wd, 1)
        acc1 = acc1 + xs * w1[k]                                  # lane-broadcast MAC
    y1_ref[...] = jnp.maximum(acc1, 0.0)

    # ---- pool1 fused, written into conv2's zero-padded VMEM input ----
    p2_ref[...] = jnp.zeros(p2_ref.shape, jnp.float32)
    p2_ref[:, 1:1 + h // 2, 1:1 + wd // 2, :] = _pool2x2(y1_ref)

    # ---- conv2 (16 -> 16) + ReLU on the MXU ----
    y2_ref[...] = _conv3x3_mxu(p2_ref, w2_ref[...], b2_ref[...])

    # ---- pool2 fused, written into conv3's zero-padded VMEM input ----
    p3_ref[...] = jnp.zeros(p3_ref.shape, jnp.float32)
    p3_ref[:, 1:1 + h // 4, 1:1 + wd // 4, :] = _pool2x2(y2_ref)

    # ---- conv3 (16 -> 32) + ReLU on the MXU ----
    y3_ref[...] = _conv3x3_mxu(p3_ref, w3_ref[...], b3_ref[...])

    # ---- pool3 + flatten fused into fc: Linear(128 -> 32) + ReLU ----
    # The fc weight was repacked per spatial position in the wrapper (PyTorch
    # flattens NCHW), so the NHWC tile is consumed directly: 4 tiny matmuls.
    wfc = wfc_ref[...]                                            # (hf*wf, 32, 32)
    hf, wf = h // 8, wd // 8
    accf = jnp.zeros((n, wfc.shape[-1]), jnp.float32) + bfc_ref[...]
    for hh in range(hf):
        for ww in range(wf):
            blk = y3_ref[:, 2 * hh:2 * hh + 2, 2 * ww:2 * ww + 2, :]   # (n,2,2,32)
            pos = jnp.maximum(jnp.maximum(blk[:, 0, 0, :], blk[:, 0, 1, :]),
                              jnp.maximum(blk[:, 1, 0, :], blk[:, 1, 1, :]))
            accf = accf + jnp.dot(pos.astype(jnp.bfloat16), wfc[hh * wf + ww],
                                  preferred_element_type=jnp.float32)
    hfc = jnp.maximum(accf, 0.0)

    # ---- dropout (inference identity) -> out: Linear(32 -> 10), pre-activation ----
    # TODO(synk): training-mode nn.Dropout(p=0.5) RNG masking not implemented.
    out_ref[...] = (jnp.dot(hfc.astype(jnp.bfloat16), wo_ref[...],
                            preferred_element_type=jnp.float32) + bo_ref[...])


# ---------------------------------------------------------------------------
# Host-side wrapper (model boundary only: layout + weight repack)
# ---------------------------------------------------------------------------
def _repack_conv_w(w):
    """PyTorch (Cout, Cin, 3, 3) -> (9, Cin, Cout), k = kh*3 + kw."""
    cout, cin = w.shape[0], w.shape[1]
    return jnp.transpose(w, (2, 3, 1, 0)).reshape(9, cin, cout)


@jax.jit
def small_cnn_forward(x, params):
    """SmallCNN forward. x: (N, C_in, H, W) float32 NCHW -> (N, 10) logits."""
    n, cin, h, w = x.shape
    assert h % 8 == 0 and w % 8 == 0 and cin == params["conv1_w"].shape[1]

    # Model-boundary glue only: NCHW -> NHWC + 1-pixel zero halo for conv1.
    x_nhwc = jnp.transpose(x, (0, 2, 3, 1)).astype(jnp.float32)
    x_pad = jnp.pad(x_nhwc, ((0, 0), (1, 1), (1, 1), (0, 0)))

    # One-time weight repack (constant-folded under jit).
    c1 = params["conv1_w"].shape[0]
    c2 = params["conv2_w"].shape[0]
    c3 = params["conv3_w"].shape[0]
    nclass = params["out_w"].shape[0]
    hf, wf = h // 8, w // 8

    w1 = _repack_conv_w(params["conv1_w"])[:, 0, :]                  # (9, 16) f32, VPU path
    w2 = _repack_conv_w(params["conv2_w"]).astype(jnp.bfloat16)      # (9, 16, 16)
    w3 = _repack_conv_w(params["conv3_w"]).astype(jnp.bfloat16)      # (9, 16, 32)
    # fc weight: PyTorch flatten order is (c, h, w) -> split per spatial position.
    wfc = params["fc_w"].reshape(-1, c3, hf, wf)                     # (32, 32, hf, wf)
    wfc = jnp.transpose(wfc, (2, 3, 1, 0)).reshape(hf * wf, c3, -1)  # (hf*wf, 32, 32)
    wfc = wfc.astype(jnp.bfloat16)
    wo = params["out_w"].T.astype(jnp.bfloat16)                      # (32, 10)

    b1 = params["conv1_b"][None, :]
    b2 = params["conv2_b"][None, :]
    b3 = params["conv3_b"][None, :]
    bfc = params["fc_b"][None, :]
    bo = params["out_b"][None, :]

    # Whole-array operands, no grid: everything (well under 2 MiB incl. layout
    # padding) stays in VMEM on v5e/v6e/v7x.  If batch is scaled up, tile N with
    # a ("parallel",) grid and set pltpu.CompilerParams(vmem_limit_bytes=...)
    # to keep the per-step footprint <~16 MiB on v7x.
    return pl.pallas_call(
        _smallcnn_kernel,
        out_shape=jax.ShapeDtypeStruct((n, nclass), jnp.float32),
        scratch_shapes=[
            pltpu.VMEM((n, h, w, c1), jnp.float32),                      # y1
            pltpu.VMEM((n, h // 2 + 2, w // 2 + 2, c1), jnp.float32),    # p2 (padded)
            pltpu.VMEM((n, h // 2, w // 2, c2), jnp.float32),            # y2
            pltpu.VMEM((n, h // 4 + 2, w // 4 + 2, c2), jnp.float32),    # p3 (padded)
            pltpu.VMEM((n, h // 4, w // 4, c3), jnp.float32),            # y3
        ],
    )(x_pad, w1, b1, w2, b2, w3, b3, wfc, bfc, wo, bo)


# ---------------------------------------------------------------------------
# Pure-JAX reference (f32) and parameter init
# ---------------------------------------------------------------------------
def _reference_forward(x, params):
    def conv(z, w, b):
        y = jax.lax.conv_general_dilated(
            z, w, window_strides=(1, 1), padding="SAME",
            dimension_numbers=("NCHW", "OIHW", "NCHW"))
        return jax.nn.relu(y + b[None, :, None, None])

    def pool(z):
        n, c, hh, ww = z.shape
        return z.reshape(n, c, hh // 2, 2, ww // 2, 2).max(axis=(3, 5))

    h = conv(x, params["conv1_w"], params["conv1_b"])
    h = conv(pool(h), params["conv2_w"], params["conv2_b"])
    h = conv(pool(h), params["conv3_w"], params["conv3_b"])
    h = pool(h).reshape(x.shape[0], -1)
    h = jax.nn.relu(h @ params["fc_w"].T + params["fc_b"])
    return h @ params["out_w"].T + params["out_b"]


def init_params(key, in_channels=1, num_classes=10, fc_in=32 * 2 * 2):
    ks = jax.random.split(key, 10)

    def he(k, shape, fan_in):
        return jax.random.normal(k, shape, jnp.float32) * jnp.sqrt(2.0 / fan_in)

    return {
        "conv1_w": he(ks[0], (16, in_channels, 3, 3), in_channels * 9),
        "conv1_b": 0.1 * jax.random.normal(ks[1], (16,), jnp.float32),
        "conv2_w": he(ks[2], (16, 16, 3, 3), 16 * 9),
        "conv2_b": 0.1 * jax.random.normal(ks[3], (16,), jnp.float32),
        "conv3_w": he(ks[4], (32, 16, 3, 3), 16 * 9),
        "conv3_b": 0.1 * jax.random.normal(ks[5], (32,), jnp.float32),
        "fc_w": he(ks[6], (32, fc_in), fc_in),       # PyTorch Linear layout: (out, in)
        "fc_b": 0.1 * jax.random.normal(ks[7], (32,), jnp.float32),
        "out_w": he(ks[8], (num_classes, 32), 32),
        "out_b": 0.1 * jax.random.normal(ks[9], (num_classes,), jnp.float32),
    }


if __name__ == "__main__":
    key = jax.random.PRNGKey(0)
    k_x, k_p = jax.random.split(key)

    # NCHW input: batch=2, channels=1 (input_shape=1), spatial=16x16.
    # 16 -> pool 8 -> pool 4 -> pool 2 ; flatten = 32*2*2 = 128 -> fc 32 -> out 10
    x = jax.random.normal(k_x, (2, 1, 16, 16), jnp.float32)
    params = init_params(k_p, in_channels=1, num_classes=10, fc_in=32 * 2 * 2)

    logits = jax.block_until_ready(small_cnn_forward(x, params))
    ref = jax.block_until_ready(_reference_forward(x, params))

    assert logits.shape == (2, 10), logits.shape
    assert bool(jnp.all(jnp.isfinite(logits)))
    # bf16 MXU operands vs. f32 XLA reference: generous tolerance.
    assert bool(jnp.allclose(logits, ref, atol=2e-1, rtol=1e-1)), (
        float(jnp.max(jnp.abs(logits - ref))))
    print("KERNEL_OK")
</pallas_src>

<mosaic_0001>
module attributes {stable_mosaic.version = 11 : i64} {
  func.func @_smallcnn_kernel(%arg0: memref<2x18x18x1xf32, #tpu.memory_space<vmem>>, %arg1: memref<9x16xf32, #tpu.memory_space<vmem>>, %arg2: memref<1x16xf32, #tpu.memory_space<vmem>>, %arg3: memref<9x16x16xbf16, #tpu.memory_space<vmem>>, %arg4: memref<1x16xf32, #tpu.memory_space<vmem>>, %arg5: memref<9x16x32xbf16, #tpu.memory_space<vmem>>, %arg6: memref<1x32xf32, #tpu.memory_space<vmem>>, %arg7: memref<4x32x32xbf16, #tpu.memory_space<vmem>>, %arg8: memref<1x32xf32, #tpu.memory_space<vmem>>, %arg9: memref<32x10xbf16, #tpu.memory_space<vmem>>, %arg10: memref<1x10xf32, #tpu.memory_space<vmem>>, %arg11: memref<2x10xf32, #tpu.memory_space<vmem>>, %arg12: memref<2x16x16x16xf32, #tpu.memory_space<vmem>>, %arg13: memref<2x10x10x16xf32, #tpu.memory_space<vmem>>, %arg14: memref<2x8x8x16xf32, #tpu.memory_space<vmem>>, %arg15: memref<2x6x6x16xf32, #tpu.memory_space<vmem>>, %arg16: memref<2x4x4x32xf32, #tpu.memory_space<vmem>>) attributes {dimension_semantics = [], scalar_prefetch = 0 : i64, scratch_operands = 5 : i64, tpu.core_type = #tpu.core_type<tc>} {
    %c0 = arith.constant 0 : index
    %c0_0 = arith.constant 0 : index
    %0 = vector.load %arg1[%c0, %c0_0] : memref<9x16xf32, #tpu.memory_space<vmem>>, vector<9x16xf32>
    %cst = arith.constant 0.000000e+00 : f32
    %1 = vector.broadcast %cst : f32 to vector<2x16x16x16xf32>
    %c0_1 = arith.constant 0 : index
    %c0_2 = arith.constant 0 : index
    %2 = vector.load %arg2[%c0_1, %c0_2] : memref<1x16xf32, #tpu.memory_space<vmem>>, vector<1x16xf32>
    %3 = vector.shape_cast %2 : vector<1x16xf32> to vector<1x1x1x16xf32>
    %4 = vector.broadcast %3 : vector<1x1x1x16xf32> to vector<2x16x16x16xf32>
    %5 = arith.addf %1, %4 : vector<2x16x16x16xf32>
    %c0_3 = arith.constant 0 : index
    %c0_4 = arith.constant 0 : index
    %c0_5 = arith.constant 0 : index
    %c0_6 = arith.constant 0 : index
    %6 = vector.load %arg0[%c0_3, %c0_4, %c0_5, %c0_6] : memref<2x18x18x1xf32, #tpu.memory_space<vmem>>, vector<2x16x16x1xf32>
    %7 = vector.extract_strided_slice %0 {offsets = [0, 0], sizes = [1, 16], strides = [1, 1]} : vector<9x16xf32> to vector<1x16xf32>
    %8 = vector.shape_cast %7 : vector<1x16xf32> to vector<16xf32>
    %9 = vector.shape_cast %8 : vector<16xf32> to vector<1x1x1x16xf32>
    %10 = vector.broadcast %6 : vector<2x16x16x1xf32> to vector<2x16x16x16xf32>
    %11 = vector.broadcast %9 : vector<1x1x1x16xf32> to vector<2x16x16x16xf32>
    %12 = arith.mulf %10, %11 : vector<2x16x16x16xf32>
    %13 = arith.addf %5, %12 : vector<2x16x16x16xf32>
    %c0_7 = arith.constant 0 : index
    %c0_8 = arith.constant 0 : index
    %c1 = arith.constant 1 : index
    %c0_9 = arith.constant 0 : index
    %14 = vector.load %arg0[%c0_7, %c0_8, %c1, %c0_9] : memref<2x18x18x1xf32, #tpu.memory_space<vmem>>, vector<2x16x16x1xf32>
    %15 = vector.extract_strided_slice %0 {offsets = [1, 0], sizes = [1, 16], strides = [1, 1]} : vector<9x16xf32> to vector<1x16xf32>
    %16 = vector.shape_cast %15 : vector<1x16xf32> to vector<16xf32>
    %17 = vector.shape_cast %16 : vector<16xf32> to vector<1x1x1x16xf32>
    %18 = vector.broadcast %14 : vector<2x16x16x1xf32> to vector<2x16x16x16xf32>
    %19 = vector.broadcast %17 : vector<1x1x1x16xf32> to vector<2x16x16x16xf32>
    %20 = arith.mulf %18, %19 : vector<2x16x16x16xf32>
    %21 = arith.addf %13, %20 : vector<2x16x16x16xf32>
    %c0_10 = arith.constant 0 : index
    %c0_11 = arith.constant 0 : index
    %c2 = arith.constant 2 : index
    %c0_12 = arith.constant 0 : index
    %22 = vector.load %arg0[%c0_10, %c0_11, %c2, %c0_12] : memref<2x18x18x1xf32, #tpu.memory_space<vmem>>, vector<2x16x16x1xf32>
    %23 = vector.extract_strided_slice %0 {offsets = [2, 0], sizes = [1, 16], strides = [1, 1]} : vector<9x16xf32> to vector<1x16xf32>
    %24 = vector.shape_cast %23 : vector<1x16xf32> to vector<16xf32>
    %25 = vector.shape_cast %24 : vector<16xf32> to vector<1x1x1x16xf32>
    %26 = vector.broadcast %22 : vector<2x16x16x1xf32> to vector<2x16x16x16xf32>
    %27 = vector.broadcast %25 : vector<1x1x1x16xf32> to vector<2x16x16x16xf32>
    %28 = arith.mulf %26, %27 : vector<2x16x16x16xf32>
    %29 = arith.addf %21, %28 : vector<2x16x16x16xf32>
    %c0_13 = arith.constant 0 : index
    %c1_14 = arith.constant 1 : index
    %c0_15 = arith.constant 0 : index
    %c0_16 = arith.constant 0 : index
    %30 = vector.load %arg0[%c0_13, %c1_14, %c0_15, %c0_16] : memref<2x18x18x1xf32, #tpu.memory_space<vmem>>, vector<2x16x16x1xf32>
    %31 = vector.extract_strided_slice %0 {offsets = [3, 0], sizes = [1, 16], strides = [1, 1]} : vector<9x16xf32> to vector<1x16xf32>
    %32 = vector.shape_cast %31 : vector<1x16xf32> to vector<16xf32>
    %33 = vector.shape_cast %32 : vector<16xf32> to vector<1x1x1x16xf32>
    %34 = vector.broadcast %30 : vector<2x16x16x1xf32> to vector<2x16x16x16xf32>
    %35 = vector.broadcast %33 : vector<1x1x1x16xf32> to vector<2x16x16x16xf32>
    %36 = arith.mulf %34, %35 : vector<2x16x16x16xf32>
    %37 = arith.addf %29, %36 : vector<2x16x16x16xf32>
    %c0_17 = arith.constant 0 : index
    %c1_18 = arith.constant 1 : index
    %c1_19 = arith.constant 1 : index
    %c0_20 = arith.constant 0 : index
    %38 = vector.load %arg0[%c0_17, %c1_18, %c1_19, %c0_20] : memref<2x18x18x1xf32, #tpu.memory_space<vmem>>, vector<2x16x16x1xf32>
    %39 = vector.extract_strided_slice %0 {offsets = [4, 0], sizes = [1, 16], strides = [1, 1]} : vector<9x16xf32> to vector<1x16xf32>
    %40 = vector.shape_cast %39 : vector<1x16xf32> to vector<16xf32>
    %41 = vector.shape_cast %40 : vector<16xf32> to vector<1x1x1x16xf32>
    %42 = vector.broadcast %38 : vector<2x16x16x1xf32> to vector<2x16x16x16xf32>
    %43 = vector.broadcast %41 : vector<1x1x1x16xf32> to vector<2x16x16x16xf32>
    %44 = arith.mulf %42, %43 : vector<2x16x16x16xf32>
    %45 = arith.addf %37, %44 : vector<2x16x16x16xf32>
    %c0_21 = arith.constant 0 : index
    %c1_22 = arith.constant 1 : index
    %c2_23 = arith.constant 2 : index
    %c0_24 = arith.constant 0 : index
    %46 = vector.load %arg0[%c0_21, %c1_22, %c2_23, %c0_24] : memref<2x18x18x1xf32, #tpu.memory_space<vmem>>, vector<2x16x16x1xf32>
    %47 = vector.extract_strided_slice %0 {offsets = [5, 0], sizes = [1, 16], strides = [1, 1]} : vector<9x16xf32> to vector<1x16xf32>
    %48 = vector.shape_cast %47 : vector<1x16xf32> to vector<16xf32>
    %49 = vector.shape_cast %48 : vector<16xf32> to vector<1x1x1x16xf32>
    %50 = vector.broadcast %46 : vector<2x16x16x1xf32> to vector<2x16x16x16xf32>
    %51 = vector.broadcast %49 : vector<1x1x1x16xf32> to vector<2x16x16x16xf32>
    %52 = arith.mulf %50, %51 : vector<2x16x16x16xf32>
    %53 = arith.addf %45, %52 : vector<2x16x16x16xf32>
    %c0_25 = arith.constant 0 : index
    %c2_26 = arith.constant 2 : index
    %c0_27 = arith.constant 0 : index
    %c0_28 = arith.constant 0 : index
    %54 = vector.load %arg0[%c0_25, %c2_26, %c0_27, %c0_28] : memref<2x18x18x1xf32, #tpu.memory_space<vmem>>, vector<2x16x16x1xf32>
    %55 = vector.extract_strided_slice %0 {offsets = [6, 0], sizes = [1, 16], strides = [1, 1]} : vector<9x16xf32> to vector<1x16xf32>
    %56 = vector.shape_cast %55 : vector<1x16xf32> to vector<16xf32>
    %57 = vector.shape_cast %56 : vector<16xf32> to vector<1x1x1x16xf32>
    %58 = vector.broadcast %54 : vector<2x16x16x1xf32> to vector<2x16x16x16xf32>
    %59 = vector.broadcast %57 : vector<1x1x1x16xf32> to vector<2x16x16x16xf32>
    %60 = arith.mulf %58, %59 : vector<2x16x16x16xf32>
    %61 = arith.addf %53, %60 : vector<2x16x16x16xf32>
    %c0_29 = arith.constant 0 : index
    %c2_30 = arith.constant 2 : index
    %c1_31 = arith.constant 1 : index
    %c0_32 = arith.constant 0 : index
    %62 = vector.load %arg0[%c0_29, %c2_30, %c1_31, %c0_32] : memref<2x18x18x1xf32, #tpu.memory_space<vmem>>, vector<2x16x16x1xf32>
    %63 = vector.extract_strided_slice %0 {offsets = [7, 0], sizes = [1, 16], strides = [1, 1]} : vector<9x16xf32> to vector<1x16xf32>
    %64 = vector.shape_cast %63 : vector<1x16xf32> to vector<16xf32>
    %65 = vector.shape_cast %64 : vector<16xf32> to vector<1x1x1x16xf32>
    %66 = vector.broadcast %62 : vector<2x16x16x1xf32> to vector<2x16x16x16xf32>
    %67 = vector.broadcast %65 : vector<1x1x1x16xf32> to vector<2x16x16x16xf32>
    %68 = arith.mulf %66, %67 : vector<2x16x16x16xf32>
    %69 = arith.addf %61, %68 : vector<2x16x16x16xf32>
    %c0_33 = arith.constant 0 : index
    %c2_34 = arith.constant 2 : index
    %c2_35 = arith.constant 2 : index
    %c0_36 = arith.constant 0 : index
    %70 = vector.load %arg0[%c0_33, %c2_34, %c2_35, %c0_36] : memref<2x18x18x1xf32, #tpu.memory_space<vmem>>, vector<2x16x16x1xf32>
    %71 = vector.extract_strided_slice %0 {offsets = [8, 0], sizes = [1, 16], strides = [1, 1]} : vector<9x16xf32> to vector<1x16xf32>
    %72 = vector.shape_cast %71 : vector<1x16xf32> to vector<16xf32>
    %73 = vector.shape_cast %72 : vector<16xf32> to vector<1x1x1x16xf32>
    %74 = vector.broadcast %70 : vector<2x16x16x1xf32> to vector<2x16x16x16xf32>
    %75 = vector.broadcast %73 : vector<1x1x1x16xf32> to vector<2x16x16x16xf32>
    %76 = arith.mulf %74, %75 : vector<2x16x16x16xf32>
    %77 = arith.addf %69, %76 : vector<2x16x16x16xf32>
    %cst_37 = arith.constant 0.000000e+00 : f32
    %78 = vector.broadcast %cst_37 : f32 to vector<2x16x16x16xf32>
    %79 = arith.maximumf %77, %78 : vector<2x16x16x16xf32>
    %c0_38 = arith.constant 0 : index
    %c0_39 = arith.constant 0 : index
    %c0_40 = arith.constant 0 : index
    %c0_41 = arith.constant 0 : index
    %80 = vector.load %arg12[%c0_38, %c0_39, %c0_40, %c0_41] : memref<2x16x16x16xf32, #tpu.memory_space<vmem>>, vector<2x16x16x16xf32>
    tpu.vector_store %arg12[%c0_38, %c0_39, %c0_40, %c0_41], %79 {strides = array<i32>} : memref<2x16x16x16xf32, #tpu.memory_space<vmem>>, vector<2x16x16x16xf32>,
    %cst_42 = arith.constant 0.000000e+00 : f32
    %81 = vector.broadcast %cst_42 : f32 to vector<2x10x10x16xf32>
    %c0_43 = arith.constant 0 : index
    %c0_44 = arith.constant 0 : index
    %c0_45 = arith.constant 0 : index
    %c0_46 = arith.constant 0 : index
    %82 = vector.load %arg13[%c0_43, %c0_44, %c0_45, %c0_46] : memref<2x10x10x16xf32, #tpu.memory_space<vmem>>, vector<2x10x10x16xf32>
    tpu.vector_store %arg13[%c0_43, %c0_44, %c0_45, %c0_46], %81 {strides = array<i32>} : memref<2x10x10x16xf32, #tpu.memory_space<vmem>>, vector<2x10x10x16xf32>,
    %c0_47 = arith.constant 0 : index
    %c0_48 = arith.constant 0 : index
    %c0_49 = arith.constant 0 : index
    %c0_50 = arith.constant 0 : index
    %83 = tpu.strided_load %arg12[%c0_47, %c0_48, %c0_49, %c0_50] {strides = array<i32: 1, 2, 2, 1>} : memref<2x16x16x16xf32, #tpu.memory_space<vmem>>, vector<2x8x8x16xf32>
    %c0_51 = arith.constant 0 : index
    %c0_52 = arith.constant 0 : index
    %c1_53 = arith.constant 1 : index
    %c0_54 = arith.constant 0 : index
    %84 = tpu.strided_load %arg12[%c0_51, %c0_52, %c1_53, %c0_54] {strides = array<i32: 1, 2, 2, 1>} : memref<2x16x16x16xf32, #tpu.memory_space<vmem>>, vector<2x8x8x16xf32>
    %c0_55 = arith.constant 0 : index
    %c1_56 = arith.constant 1 : index
    %c0_57 = arith.constant 0 : index
    %c0_58 = arith.constant 0 : index
    %85 = tpu.strided_load %arg12[%c0_55, %c1_56, %c0_57, %c0_58] {strides = array<i32: 1, 2, 2, 1>} : memref<2x16x16x16xf32, #tpu.memory_space<vmem>>, vector<2x8x8x16xf32>
    %c0_59 = arith.constant 0 : index
    %c1_60 = arith.constant 1 : index
    %c1_61 = arith.constant 1 : index
    %c0_62 = arith.constant 0 : index
    %86 = tpu.strided_load %arg12[%c0_59, %c1_60, %c1_61, %c0_62] {strides = array<i32: 1, 2, 2, 1>} : memref<2x16x16x16xf32, #tpu.memory_space<vmem>>, vector<2x8x8x16xf32>
    %87 = arith.maximumf %83, %84 : vector<2x8x8x16xf32>
    %88 = arith.maximumf %85, %86 : vector<2x8x8x16xf32>
    %89 = arith.maximumf %87, %88 : vector<2x8x8x16xf32>
    %c0_63 = arith.constant 0 : index
    %c1_64 = arith.constant 1 : index
    %c1_65 = arith.constant 1 : index
    %c0_66 = arith.constant 0 : index
    %90 = vector.load %arg13[%c0_63, %c1_64, %c1_65, %c0_66] : memref<2x10x10x16xf32, #tpu.memory_space<vmem>>, vector<2x8x8x16xf32>
    tpu.vector_store %arg13[%c0_63, %c1_64, %c1_65, %c0_66], %89 {strides = array<i32>} : memref<2x10x10x16xf32, #tpu.memory_space<vmem>>, vector<2x8x8x16xf32>,
    %c0_67 = arith.constant 0 : index
    %c0_68 = arith.constant 0 : index
    %c0_69 = arith.constant 0 : index
    %91 = vector.load %arg3[%c0_67, %c0_68, %c0_69] : memref<9x16x16xbf16, #tpu.memory_space<vmem>>, vector<9x16x16xbf16>
    %c0_70 = arith.constant 0 : index
    %c0_71 = arith.constant 0 : index
    %92 = vector.load %arg4[%c0_70, %c0_71] : memref<1x16xf32, #tpu.memory_space<vmem>>, vector<1x16xf32>
    %cst_72 = arith.constant 0.000000e+00 : f32
    %93 = vector.broadcast %cst_72 : f32 to vector<128x16xf32>
    %94 = vector.broadcast %92 : vector<1x16xf32> to vector<128x16xf32>
    %95 = arith.addf %93, %94 : vector<128x16xf32>
    %c0_73 = arith.constant 0 : index
    %c0_74 = arith.constant 0 : index
    %c0_75 = arith.constant 0 : index
    %c0_76 = arith.constant 0 : index
    %96 = vector.load %arg13[%c0_73, %c0_74, %c0_75, %c0_76] : memref<2x10x10x16xf32, #tpu.memory_space<vmem>>, vector<2x8x8x16xf32>
    %97 = vector.shape_cast %96 : vector<2x8x8x16xf32> to vector<128x16xf32>
    %98 = arith.truncf %97 : vector<128x16xf32> to vector<128x16xbf16>
    %99 = vector.extract_strided_slice %91 {offsets = [0, 0, 0], sizes = [1, 16, 16], strides = [1, 1, 1]} : vector<9x16x16xbf16> to vector<1x16x16xbf16>
    %100 = vector.shape_cast %99 : vector<1x16x16xbf16> to vector<16x16xbf16>
    %cst_77 = arith.constant dense<0.000000e+00> : vector<128x16xf32>
    %101 = tpu.matmul %98, %100, %cst_77 {dimension_numbers = #tpu.dot_dimension_numbers<[1], [0], [0], [1], [0, 0, 1, 1], [], []>} : vector<128x16xbf16>, vector<16x16xbf16>, vector<128x16xf32> -> vector<128x16xf32>
    %102 = arith.addf %95, %101 : vector<128x16xf32>
    %c0_78 = arith.constant 0 : index
    %c0_79 = arith.constant 0 : index
    %c1_80 = arith.constant 1 : index
    %c0_81 = arith.constant 0 : index
    %103 = vector.load %arg13[%c0_78, %c0_79, %c1_80, %c0_81] : memref<2x10x10x16xf32, #tpu.memory_space<vmem>>, vector<2x8x8x16xf32>
    %104 = vector.shape_cast %103 : vector<2x8x8x16xf32> to vector<128x16xf32>
    %105 = arith.truncf %104 : vector<128x16xf32> to vector<128x16xbf16>
    %106 = vector.extract_strided_slice %91 {offsets = [1, 0, 0], sizes = [1, 16, 16], strides = [1, 1, 1]} : vector<9x16x16xbf16> to vector<1x16x16xbf16>
    %107 = vector.shape_cast %106 : vector<1x16x16xbf16> to vector<16x16xbf16>
    %cst_82 = arith.constant dense<0.000000e+00> : vector<128x16xf32>
    %108 = tpu.matmul %105, %107, %cst_82 {dimension_numbers = #tpu.dot_dimension_numbers<[1], [0], [0], [1], [0, 0, 1, 1], [], []>} : vector<128x16xbf16>, vector<16x16xbf16>, vector<128x16xf32> -> vector<128x16xf32>
    %109 = arith.addf %102, %108 : vector<128x16xf32>
    %c0_83 = arith.constant 0 : index
    %c0_84 = arith.constant 0 : index
    %c2_85 = arith.constant 2 : index
    %c0_86 = arith.constant 0 : index
    %110 = vector.load %arg13[%c0_83, %c0_84, %c2_85, %c0_86] : memref<2x10x10x16xf32, #tpu.memory_space<vmem>>, vector<2x8x8x16xf32>
    %111 = vector.shape_cast %110 : vector<2x8x8x16xf32> to vector<128x16xf32>
    %112 = arith.truncf %111 : vector<128x16xf32> to vector<128x16xbf16>
    %113 = vector.extract_strided_slice %91 {offsets = [2, 0, 0], sizes = [1, 16, 16], strides = [1, 1, 1]} : vector<9x16x16xbf16> to vector<1x16x16xbf16>
    %114 = vector.shape_cast %113 : vector<1x16x16xbf16> to vector<16x16xbf16>
    %cst_87 = arith.constant dense<0.000000e+00> : vector<128x16xf32>
    %115 = tpu.matmul %112, %114, %cst_87 {dimension_numbers = #tpu.dot_dimension_numbers<[1], [0], [0], [1], [0, 0, 1, 1], [], []>} : vector<128x16xbf16>, vector<16x16xbf16>, vector<128x16xf32> -> vector<128x16xf32>
    %116 = arith.addf %109, %115 : vector<128x16xf32>
    %c0_88 = arith.constant 0 : index
    %c1_89 = arith.constant 1 : index
    %c0_90 = arith.constant 0 : index
    %c0_91 = arith.constant 0 : index
    %117 = vector.load %arg13[%c0_88, %c1_89, %c0_90, %c0_91] : memref<2x10x10x16xf32, #tpu.memory_space<vmem>>, vector<2x8x8x16xf32>
    %118 = vector.shape_cast %117 : vector<2x8x8x16xf32> to vector<128x16xf32>
    %119 = arith.truncf %118 : vector<128x16xf32> to vector<128x16xbf16>
    %120 = vector.extract_strided_slice %91 {offsets = [3, 0, 0], sizes = [1, 16, 16], strides = [1, 1, 1]} : vector<9x16x16xbf16> to vector<1x16x16xbf16>
    %121 = vector.shape_cast %120 : vector<1x16x16xbf16> to vector<16x16xbf16>
    %cst_92 = arith.constant dense<0.000000e+00> : vector<128x16xf32>
    %122 = tpu.matmul %119, %121, %cst_92 {dimension_numbers = #tpu.dot_dimension_numbers<[1], [0], [0], [1], [0, 0, 1, 1], [], []>} : vector<128x16xbf16>, vector<16x16xbf16>, vector<128x16xf32> -> vector<128x16xf32>
    %123 = arith.addf %116, %122 : vector<128x16xf32>
    %c0_93 = arith.constant 0 : index
    %c1_94 = arith.constant 1 : index
    %c1_95 = arith.constant 1 : index
    %c0_96 = arith.constant 0 : index
    %124 = vector.load %arg13[%c0_93, %c1_94, %c1_95, %c0_96] : memref<2x10x10x16xf32, #tpu.memory_space<vmem>>, vector<2x8x8x16xf32>
    %125 = vector.shape_cast %124 : vector<2x8x8x16xf32> to vector<128x16xf32>
    %126 = arith.truncf %125 : vector<128x16xf32> to vector<128x16xbf16>
    %127 = vector.extract_strided_slice %91 {offsets = [4, 0, 0], sizes = [1, 16, 16], strides = [1, 1, 1]} : vector<9x16x16xbf16> to vector<1x16x16xbf16>
    %128 = vector.shape_cast %127 : vector<1x16x16xbf16> to vector<16x16xbf16>
    %cst_97 = arith.constant dense<0.000000e+00> : vector<128x16xf32>
    %129 = tpu.matmul %126, %128, %cst_97 {dimension_numbers = #tpu.dot_dimension_numbers<[1], [0], [0], [1], [0, 0, 1, 1], [], []>} : vector<128x16xbf16>, vector<16x16xbf16>, vector<128x16xf32> -> vector<128x16xf32>
    %130 = arith.addf %123, %129 : vector<128x16xf32>
    %c0_98 = arith.constant 0 : index
    %c1_99 = arith.constant 1 : index
    %c2_100 = arith.constant 2 : index
    %c0_101 = arith.constant 0 : index
    %131 = vector.load %arg13[%c0_98, %c1_99, %c2_100, %c0_101] : memref<2x10x10x16xf32, #tpu.memory_space<vmem>>, vector<2x8x8x16xf32>
    %132 = vector.shape_cast %131 : vector<2x8x8x16xf32> to vector<128x16xf32>
    %133 = arith.truncf %132 : vector<128x16xf32> to vector<128x16xbf16>
    %134 = vector.extract_strided_slice %91 {offsets = [5, 0, 0], sizes = [1, 16, 16], strides = [1, 1, 1]} : vector<9x16x16xbf16> to vector<1x16x16xbf16>
    %135 = vector.shape_cast %134 : vector<1x16x16xbf16> to vector<16x16xbf16>
    %cst_102 = arith.constant dense<0.000000e+00> : vector<128x16xf32>
    %136 = tpu.matmul %133, %135, %cst_102 {dimension_numbers = #tpu.dot_dimension_numbers<[1], [0], [0], [1], [0, 0, 1, 1], [], []>} : vector<128x16xbf16>, vector<16x16xbf16>, vector<128x16xf32> -> vector<128x16xf32>
    %137 = arith.addf %130, %136 : vector<128x16xf32>
    %c0_103 = arith.constant 0 : index
    %c2_104 = arith.constant 2 : index
    %c0_105 = arith.constant 0 : index
    %c0_106 = arith.constant 0 : index
    %138 = vector.load %arg13[%c0_103, %c2_104, %c0_105, %c0_106] : memref<2x10x10x16xf32, #tpu.memory_space<vmem>>, vector<2x8x8x16xf32>
    %139 = vector.shape_cast %138 : vector<2x8x8x16xf32> to vector<128x16xf32>
    %140 = arith.truncf %139 : vector<128x16xf32> to vector<128x16xbf16>
    %141 = vector.extract_strided_slice %91 {offsets = [6, 0, 0], sizes = [1, 16, 16], strides = [1, 1, 1]} : vector<9x16x16xbf16> to vector<1x16x16xbf16>
    %142 = vector.shape_cast %141 : vector<1x16x16xbf16> to vector<16x16xbf16>
    %cst_107 = arith.constant dense<0.000000e+00> : vector<128x16xf32>
    %143 = tpu.matmul %140, %142, %cst_107 {dimension_numbers = #tpu.dot_dimension_numbers<[1], [0], [0], [1], [0, 0, 1, 1], [], []>} : vector<128x16xbf16>, vector<16x16xbf16>, vector<128x16xf32> -> vector<128x16xf32>
    %144 = arith.addf %137, %143 : vector<128x16xf32>
    %c0_108 = arith.constant 0 : index
    %c2_109 = arith.constant 2 : index
    %c1_110 = arith.constant 1 : index
    %c0_111 = arith.constant 0 : index
    %145 = vector.load %arg13[%c0_108, %c2_109, %c1_110, %c0_111] : memref<2x10x10x16xf32, #tpu.memory_space<vmem>>, vector<2x8x8x16xf32>
    %146 = vector.shape_cast %145 : vector<2x8x8x16xf32> to vector<128x16xf32>
    %147 = arith.truncf %146 : vector<128x16xf32> to vector<128x16xbf16>
    %148 = vector.extract_strided_slice %91 {offsets = [7, 0, 0], sizes = [1, 16, 16], strides = [1, 1, 1]} : vector<9x16x16xbf16> to vector<1x16x16xbf16>
    %149 = vector.shape_cast %148 : vector<1x16x16xbf16> to vector<16x16xbf16>
    %cst_112 = arith.constant dense<0.000000e+00> : vector<128x16xf32>
    %150 = tpu.matmul %147, %149, %cst_112 {dimension_numbers = #tpu.dot_dimension_numbers<[1], [0], [0], [1], [0, 0, 1, 1], [], []>} : vector<128x16xbf16>, vector<16x16xbf16>, vector<128x16xf32> -> vector<128x16xf32>
    %151 = arith.addf %144, %150 : vector<128x16xf32>
    %c0_113 = arith.constant 0 : index
    %c2_114 = arith.constant 2 : index
    %c2_115 = arith.constant 2 : index
    %c0_116 = arith.constant 0 : index
    %152 = vector.load %arg13[%c0_113, %c2_114, %c2_115, %c0_116] : memref<2x10x10x16xf32, #tpu.memory_space<vmem>>, vector<2x8x8x16xf32>
    %153 = vector.shape_cast %152 : vector<2x8x8x16xf32> to vector<128x16xf32>
    %154 = arith.truncf %153 : vector<128x16xf32> to vector<128x16xbf16>
    %155 = vector.extract_strided_slice %91 {offsets = [8, 0, 0], sizes = [1, 16, 16], strides = [1, 1, 1]} : vector<9x16x16xbf16> to vector<1x16x16xbf16>
    %156 = vector.shape_cast %155 : vector<1x16x16xbf16> to vector<16x16xbf16>
    %cst_117 = arith.constant dense<0.000000e+00> : vector<128x16xf32>
    %157 = tpu.matmul %154, %156, %cst_117 {dimension_numbers = #tpu.dot_dimension_numbers<[1], [0], [0], [1], [0, 0, 1, 1], [], []>} : vector<128x16xbf16>, vector<16x16xbf16>, vector<128x16xf32> -> vector<128x16xf32>
    %158 = arith.addf %151, %157 : vector<128x16xf32>
    %cst_118 = arith.constant 0.000000e+00 : f32
    %159 = vector.broadcast %cst_118 : f32 to vector<128x16xf32>
    %160 = arith.maximumf %158, %159 : vector<128x16xf32>
    %161 = vector.shape_cast %160 : vector<128x16xf32> to vector<2x8x8x16xf32>
    %c0_119 = arith.constant 0 : index
    %c0_120 = arith.constant 0 : index
    %c0_121 = arith.constant 0 : index
    %c0_122 = arith.constant 0 : index
    %162 = vector.load %arg14[%c0_119, %c0_120, %c0_121, %c0_122] : memref<2x8x8x16xf32, #tpu.memory_space<vmem>>, vector<2x8x8x16xf32>
    tpu.vector_store %arg14[%c0_119, %c0_120, %c0_121, %c0_122], %161 {strides = array<i32>} : memref<2x8x8x16xf32, #tpu.memory_space<vmem>>, vector<2x8x8x16xf32>,
    %cst_123 = arith.constant 0.000000e+00 : f32
    %163 = vector.broadcast %cst_123 : f32 to vector<2x6x6x16xf32>
    %c0_124 = arith.constant 0 : index
    %c0_125 = arith.constant 0 : index
    %c0_126 = arith.constant 0 : index
    %c0_127 = arith.constant 0 : index
    %164 = vector.load %arg15[%c0_124, %c0_125, %c0_126, %c0_127] : memref<2x6x6x16xf32, #tpu.memory_space<vmem>>, vector<2x6x6x16xf32>
    tpu.vector_store %arg15[%c0_124, %c0_125, %c0_126, %c0_127], %163 {strides = array<i32>} : memref<2x6x6x16xf32, #tpu.memory_space<vmem>>, vector<2x6x6x16xf32>,
    %c0_128 = arith.constant 0 : index
    %c0_129 = arith.constant 0 : index
    %c0_130 = arith.constant 0 : index
    %c0_131 = arith.constant 0 : index
    %165 = tpu.strided_load %arg14[%c0_128, %c0_129, %c0_130, %c0_131] {strides = array<i32: 1, 2, 2, 1>} : memref<2x8x8x16xf32, #tpu.memory_space<vmem>>, vector<2x4x4x16xf32>
    %c0_132 = arith.constant 0 : index
    %c0_133 = arith.constant 0 : index
    %c1_134 = arith.constant 1 : index
    %c0_135 = arith.constant 0 : index
    %166 = tpu.strided_load %arg14[%c0_132, %c0_133, %c1_134, %c0_135] {strides = array<i32: 1, 2, 2, 1>} : memref<2x8x8x16xf32, #tpu.memory_space<vmem>>, vector<2x4x4x16xf32>
    %c0_136 = arith.constant 0 : index
    %c1_137 = arith.constant 1 : index
    %c0_138 = arith.constant 0 : index
    %c0_139 = arith.constant 0 : index
    %167 = tpu.strided_load %arg14[%c0_136, %c1_137, %c0_138, %c0_139] {strides = array<i32: 1, 2, 2, 1>} : memref<2x8x8x16xf32, #tpu.memory_space<vmem>>, vector<2x4x4x16xf32>
    %c0_140 = arith.constant 0 : index
    %c1_141 = arith.constant 1 : index
    %c1_142 = arith.constant 1 : index
    %c0_143 = arith.constant 0 : index
    %168 = tpu.strided_load %arg14[%c0_140, %c1_141, %c1_142, %c0_143] {strides = array<i32: 1, 2, 2, 1>} : memref<2x8x8x16xf32, #tpu.memory_space<vmem>>, vector<2x4x4x16xf32>
    %169 = arith.maximumf %165, %166 : vector<2x4x4x16xf32>
    %170 = arith.maximumf %167, %168 : vector<2x4x4x16xf32>
    %171 = arith.maximumf %169, %170 : vector<2x4x4x16xf32>
    %c0_144 = arith.constant 0 : index
    %c1_145 = arith.constant 1 : index
    %c1_146 = arith.constant 1 : index
    %c0_147 = arith.constant 0 : index
    %172 = vector.load %arg15[%c0_144, %c1_145, %c1_146, %c0_147] : memref<2x6x6x16xf32, #tpu.memory_space<vmem>>, vector<2x4x4x16xf32>
    tpu.vector_store %arg15[%c0_144, %c1_145, %c1_146, %c0_147], %171 {strides = array<i32>} : memref<2x6x6x16xf32, #tpu.memory_space<vmem>>, vector<2x4x4x16xf32>,
    %c0_148 = arith.constant 0 : index
    %c0_149 = arith.constant 0 : index
    %c0_150 = arith.constant 0 : index
    %173 = vector.load %arg5[%c0_148, %c0_149, %c0_150] : memref<9x16x32xbf16, #tpu.memory_space<vmem>>, vector<9x16x32xbf16>
    %c0_151 = arith.constant 0 : index
    %c0_152 = arith.constant 0 : index
    %174 = vector.load %arg6[%c0_151, %c0_152] : memref<1x32xf32, #tpu.memory_space<vmem>>, vector<1x32xf32>
    %cst_153 = arith.constant 0.000000e+00 : f32
    %175 = vector.broadcast %cst_153 : f32 to vector<32x32xf32>
    %176 = vector.broadcast %174 : vector<1x32xf32> to vector<32x32xf32>
    %177 = arith.addf %175, %176 : vector<32x32xf32>
    %c0_154 = arith.constant 0 : index
    %c0_155 = arith.constant 0 : index
    %c0_156 = arith.constant 0 : index
    %c0_157 = arith.constant 0 : index
    %178 = vector.load %arg15[%c0_154, %c0_155, %c0_156, %c0_157] : memref<2x6x6x16xf32, #tpu.memory_space<vmem>>, vector<2x4x4x16xf32>
    %179 = vector.shape_cast %178 : vector<2x4x4x16xf32> to vector<32x16xf32>
    %180 = arith.truncf %179 : vector<32x16xf32> to vector<32x16xbf16>
    %181 = vector.extract_strided_slice %173 {offsets = [0, 0, 0], sizes = [1, 16, 32], strides = [1, 1, 1]} : vector<9x16x32xbf16> to vector<1x16x32xbf16>
    %182 = vector.shape_cast %181 : vector<1x16x32xbf16> to vector<16x32xbf16>
    %cst_158 = arith.constant dense<0.000000e+00> : vector<32x32xf32>
    %183 = tpu.matmul %180, %182, %cst_158 {dimension_numbers = #tpu.dot_dimension_numbers<[1], [0], [0], [1], [0, 0, 1, 1], [], []>} : vector<32x16xbf16>, vector<16x32xbf16>, vector<32x32xf32> -> vector<32x32xf32>
    %184 = arith.addf %177, %183 : vector<32x32xf32>
    %c0_159 = arith.constant 0 : index
    %c0_160 = arith.constant 0 : index
    %c1_161 = arith.constant 1 : index
    %c0_162 = arith.constant 0 : index
    %185 = vector.load %arg15[%c0_159, %c0_160, %c1_161, %c0_162] : memref<2x6x6x16xf32, #tpu.memory_space<vmem>>, vector<2x4x4x16xf32>
    %186 = vector.shape_cast %185 : vector<2x4x4x16xf32> to vector<32x16xf32>
    %187 = arith.truncf %186 : vector<32x16xf32> to vector<32x16xbf16>
    %188 = vector.extract_strided_slice %173 {offsets = [1, 0, 0], sizes = [1, 16, 32], strides = [1, 1, 1]} : vector<9x16x32xbf16> to vector<1x16x32xbf16>
    %189 = vector.shape_cast %188 : vector<1x16x32xbf16> to vector<16x32xbf16>
    %cst_163 = arith.constant dense<0.000000e+00> : vector<32x32xf32>
    %190 = tpu.matmul %187, %189, %cst_163 {dimension_numbers = #tpu.dot_dimension_numbers<[1], [0], [0], [1], [0, 0, 1, 1], [], []>} : vector<32x16xbf16>, vector<16x32xbf16>, vector<32x32xf32> -> vector<32x32xf32>
    %191 = arith.addf %184, %190 : vector<32x32xf32>
    %c0_164 = arith.constant 0 : index
    %c0_165 = arith.constant 0 : index
    %c2_166 = arith.constant 2 : index
    %c0_167 = arith.constant 0 : index
    %192 = vector.load %arg15[%c0_164, %c0_165, %c2_166, %c0_167] : memref<2x6x6x16xf32, #tpu.memory_space<vmem>>, vector<2x4x4x16xf32>
    %193 = vector.shape_cast %192 : vector<2x4x4x16xf32> to vector<32x16xf32>
    %194 = arith.truncf %193 : vector<32x16xf32> to vector<32x16xbf16>
    %195 = vector.extract_strided_slice %173 {offsets = [2, 0, 0], sizes = [1, 16, 32], strides = [1, 1, 1]} : vector<9x16x32xbf16> to vector<1x16x32xbf16>
    %196 = vector.shape_cast %195 : vector<1x16x32xbf16> to vector<16x32xbf16>
    %cst_168 = arith.constant dense<0.000000e+00> : vector<32x32xf32>
    %197 = tpu.matmul %194, %196, %cst_168 {dimension_numbers = #tpu.dot_dimension_numbers<[1], [0], [0], [1], [0, 0, 1, 1], [], []>} : vector<32x16xbf16>, vector<16x32xbf16>, vector<32x32xf32> -> vector<32x32xf32>
    %198 = arith.addf %191, %197 : vector<32x32xf32>
    %c0_169 = arith.constant 0 : index
    %c1_170 = arith.constant 1 : index
    %c0_171 = arith.constant 0 : index
    %c0_172 = arith.constant 0 : index
    %199 = vector.load %arg15[%c0_169, %c1_170, %c0_171, %c0_172] : memref<2x6x6x16xf32, #tpu.memory_space<vmem>>, vector<2x4x4x16xf32>
    %200 = vector.shape_cast %199 : vector<2x4x4x16xf32> to vector<32x16xf32>
    %201 = arith.truncf %200 : vector<32x16xf32> to vector<32x16xbf16>
    %202 = vector.extract_strided_slice %173 {offsets = [3, 0, 0], sizes = [1, 16, 32], strides = [1, 1, 1]} : vector<9x16x32xbf16> to vector<1x16x32xbf16>
    %203 = vector.shape_cast %202 : vector<1x16x32xbf16> to vector<16x32xbf16>
    %cst_173 = arith.constant dense<0.000000e+00> : vector<32x32xf32>
    %204 = tpu.matmul %201, %203, %cst_173 {dimension_numbers = #tpu.dot_dimension_numbers<[1], [0], [0], [1], [0, 0, 1, 1], [], []>} : vector<32x16xbf16>, vector<16x32xbf16>, vector<32x32xf32> -> vector<32x32xf32>
    %205 = arith.addf %198, %204 : vector<32x32xf32>
    %c0_174 = arith.constant 0 : index
    %c1_175 = arith.constant 1 : index
    %c1_176 = arith.constant 1 : index
    %c0_177 = arith.constant 0 : index
    %206 = vector.load %arg15[%c0_174, %c1_175, %c1_176, %c0_177] : memref<2x6x6x16xf32, #tpu.memory_space<vmem>>, vector<2x4x4x16xf32>
    %207 = vector.shape_cast %206 : vector<2x4x4x16xf32> to vector<32x16xf32>
    %208 = arith.truncf %207 : vector<32x16xf32> to vector<32x16xbf16>
    %209 = vector.extract_strided_slice %173 {offsets = [4, 0, 0], sizes = [1, 16, 32], strides = [1, 1, 1]} : vector<9x16x32xbf16> to vector<1x16x32xbf16>
    %210 = vector.shape_cast %209 : vector<1x16x32xbf16> to vector<16x32xbf16>
    %cst_178 = arith.constant dense<0.000000e+00> : vector<32x32xf32>
    %211 = tpu.matmul %208, %210, %cst_178 {dimension_numbers = #tpu.dot_dimension_numbers<[1], [0], [0], [1], [0, 0, 1, 1], [], []>} : vector<32x16xbf16>, vector<16x32xbf16>, vector<32x32xf32> -> vector<32x32xf32>
    %212 = arith.addf %205, %211 : vector<32x32xf32>
    %c0_179 = arith.constant 0 : index
    %c1_180 = arith.constant 1 : index
    %c2_181 = arith.constant 2 : index
    %c0_182 = arith.constant 0 : index
    %213 = vector.load %arg15[%c0_179, %c1_180, %c2_181, %c0_182] : memref<2x6x6x16xf32, #tpu.memory_space<vmem>>, vector<2x4x4x16xf32>
    %214 = vector.shape_cast %213 : vector<2x4x4x16xf32> to vector<32x16xf32>
    %215 = arith.truncf %214 : vector<32x16xf32> to vector<32x16xbf16>
    %216 = vector.extract_strided_slice %173 {offsets = [5, 0, 0], sizes = [1, 16, 32], strides = [1, 1, 1]} : vector<9x16x32xbf16> to vector<1x16x32xbf16>
    %217 = vector.shape_cast %216 : vector<1x16x32xbf16> to vector<16x32xbf16>
    %cst_183 = arith.constant dense<0.000000e+00> : vector<32x32xf32>
    %218 = tpu.matmul %215, %217, %cst_183 {dimension_numbers = #tpu.dot_dimension_numbers<[1], [0], [0], [1], [0, 0, 1, 1], [], []>} : vector<32x16xbf16>, vector<16x32xbf16>, vector<32x32xf32> -> vector<32x32xf32>
    %219 = arith.addf %212, %218 : vector<32x32xf32>
    %c0_184 = arith.constant 0 : index
    %c2_185 = arith.constant 2 : index
    %c0_186 = arith.constant 0 : index
    %c0_187 = arith.constant 0 : index
    %220 = vector.load %arg15[%c0_184, %c2_185, %c0_186, %c0_187] : memref<2x6x6x16xf32, #tpu.memory_space<vmem>>, vector<2x4x4x16xf32>
    %221 = vector.shape_cast %220 : vector<2x4x4x16xf32> to vector<32x16xf32>
    %222 = arith.truncf %221 : vector<32x16xf32> to vector<32x16xbf16>
    %223 = vector.extract_strided_slice %173 {offsets = [6, 0, 0], sizes = [1, 16, 32], strides = [1, 1, 1]} : vector<9x16x32xbf16> to vector<1x16x32xbf16>
    %224 = vector.shape_cast %223 : vector<1x16x32xbf16> to vector<16x32xbf16>
    %cst_188 = arith.constant dense<0.000000e+00> : vector<32x32xf32>
    %225 = tpu.matmul %222, %224, %cst_188 {dimension_numbers = #tpu.dot_dimension_numbers<[1], [0], [0], [1], [0, 0, 1, 1], [], []>} : vector<32x16xbf16>, vector<16x32xbf16>, vector<32x32xf32> -> vector<32x32xf32>
    %226 = arith.addf %219, %225 : vector<32x32xf32>
    %c0_189 = arith.constant 0 : index
    %c2_190 = arith.constant 2 : index
    %c1_191 = arith.constant 1 : index
    %c0_192 = arith.constant 0 : index
    %227 = vector.load %arg15[%c0_189, %c2_190, %c1_191, %c0_192] : memref<2x6x6x16xf32, #tpu.memory_space<vmem>>, vector<2x4x4x16xf32>
    %228 = vector.shape_cast %227 : vector<2x4x4x16xf32> to vector<32x16xf32>
    %229 = arith.truncf %228 : vector<32x16xf32> to vector<32x16xbf16>
    %230 = vector.extract_strided_slice %173 {offsets = [7, 0, 0], sizes = [1, 16, 32], strides = [1, 1, 1]} : vector<9x16x32xbf16> to vector<1x16x32xbf16>
    %231 = vector.shape_cast %230 : vector<1x16x32xbf16> to vector<16x32xbf16>
    %cst_193 = arith.constant dense<0.000000e+00> : vector<32x32xf32>
    %232 = tpu.matmul %229, %231, %cst_193 {dimension_numbers = #tpu.dot_dimension_numbers<[1], [0], [0], [1], [0, 0, 1, 1], [], []>} : vector<32x16xbf16>, vector<16x32xbf16>, vector<32x32xf32> -> vector<32x32xf32>
    %233 = arith.addf %226, %232 : vector<32x32xf32>
    %c0_194 = arith.constant 0 : index
    %c2_195 = arith.constant 2 : index
    %c2_196 = arith.constant 2 : index
    %c0_197 = arith.constant 0 : index
    %234 = vector.load %arg15[%c0_194, %c2_195, %c2_196, %c0_197] : memref<2x6x6x16xf32, #tpu.memory_space<vmem>>, vector<2x4x4x16xf32>
    %235 = vector.shape_cast %234 : vector<2x4x4x16xf32> to vector<32x16xf32>
    %236 = arith.truncf %235 : vector<32x16xf32> to vector<32x16xbf16>
    %237 = vector.extract_strided_slice %173 {offsets = [8, 0, 0], sizes = [1, 16, 32], strides = [1, 1, 1]} : vector<9x16x32xbf16> to vector<1x16x32xbf16>
    %238 = vector.shape_cast %237 : vector<1x16x32xbf16> to vector<16x32xbf16>
    %cst_198 = arith.constant dense<0.000000e+00> : vector<32x32xf32>
    %239 = tpu.matmul %236, %238, %cst_198 {dimension_numbers = #tpu.dot_dimension_numbers<[1], [0], [0], [1], [0, 0, 1, 1], [], []>} : vector<32x16xbf16>, vector<16x32xbf16>, vector<32x32xf32> -> vector<32x32xf32>
    %240 = arith.addf %233, %239 : vector<32x32xf32>
    %cst_199 = arith.constant 0.000000e+00 : f32
    %241 = vector.broadcast %cst_199 : f32 to vector<32x32xf32>
    %242 = arith.maximumf %240, %241 : vector<32x32xf32>
    %243 = vector.shape_cast %242 : vector<32x32xf32> to vector<2x4x4x32xf32>
    %c0_200 = arith.constant 0 : index
    %c0_201 = arith.constant 0 : index
    %c0_202 = arith.constant 0 : index
    %c0_203 = arith.constant 0 : index
    %244 = vector.load %arg16[%c0_200, %c0_201, %c0_202, %c0_203] : memref<2x4x4x32xf32, #tpu.memory_space<vmem>>, vector<2x4x4x32xf32>
    tpu.vector_store %arg16[%c0_200, %c0_201, %c0_202, %c0_203], %243 {strides = array<i32>} : memref<2x4x4x32xf32, #tpu.memory_space<vmem>>, vector<2x4x4x32xf32>,
    %c0_204 = arith.constant 0 : index
    %c0_205 = arith.constant 0 : index
    %c0_206 = arith.constant 0 : index
    %245 = vector.load %arg7[%c0_204, %c0_205, %c0_206] : memref<4x32x32xbf16, #tpu.memory_space<vmem>>, vector<4x32x32xbf16>
    %cst_207 = arith.constant 0.000000e+00 : f32
    %246 = vector.broadcast %cst_207 : f32 to vector<2x32xf32>
    %c0_208 = arith.constant 0 : index
    %c0_209 = arith.constant 0 : index
    %247 = vector.load %arg8[%c0_208, %c0_209] : memref<1x32xf32, #tpu.memory_space<vmem>>, vector<1x32xf32>
    %248 = vector.broadcast %247 : vector<1x32xf32> to vector<2x32xf32>
    %249 = arith.addf %246, %248 : vector<2x32xf32>
    %c0_210 = arith.constant 0 : index
    %c0_211 = arith.constant 0 : index
    %c0_212 = arith.constant 0 : index
    %c0_213 = arith.constant 0 : index
    %250 = vector.load %arg16[%c0_210, %c0_211, %c0_212, %c0_213] : memref<2x4x4x32xf32, #tpu.memory_space<vmem>>, vector<2x2x2x32xf32>
    %251 = vector.extract_strided_slice %250 {offsets = [0, 0, 0, 0], sizes = [2, 1, 1, 32], strides = [1, 1, 1, 1]} : vector<2x2x2x32xf32> to vector<2x1x1x32xf32>
    %252 = vector.shape_cast %251 : vector<2x1x1x32xf32> to vector<2x32xf32>
    %253 = vector.extract_strided_slice %250 {offsets = [0, 0, 1, 0], sizes = [2, 1, 1, 32], strides = [1, 1, 1, 1]} : vector<2x2x2x32xf32> to vector<2x1x1x32xf32>
    %254 = vector.shape_cast %253 : vector<2x1x1x32xf32> to vector<2x32xf32>
    %255 = arith.maximumf %252, %254 : vector<2x32xf32>
    %256 = vector.extract_strided_slice %250 {offsets = [0, 1, 0, 0], sizes = [2, 1, 1, 32], strides = [1, 1, 1, 1]} : vector<2x2x2x32xf32> to vector<2x1x1x32xf32>
    %257 = vector.shape_cast %256 : vector<2x1x1x32xf32> to vector<2x32xf32>
    %258 = vector.extract_strided_slice %250 {offsets = [0, 1, 1, 0], sizes = [2, 1, 1, 32], strides = [1, 1, 1, 1]} : vector<2x2x2x32xf32> to vector<2x1x1x32xf32>
    %259 = vector.shape_cast %258 : vector<2x1x1x32xf32> to vector<2x32xf32>
    %260 = arith.maximumf %257, %259 : vector<2x32xf32>
    %261 = arith.maximumf %255, %260 : vector<2x32xf32>
    %262 = arith.truncf %261 : vector<2x32xf32> to vector<2x32xbf16>
    %263 = vector.extract_strided_slice %245 {offsets = [0, 0, 0], sizes = [1, 32, 32], strides = [1, 1, 1]} : vector<4x32x32xbf16> to vector<1x32x32xbf16>
    %264 = vector.shape_cast %263 : vector<1x32x32xbf16> to vector<32x32xbf16>
    %cst_214 = arith.constant dense<0.000000e+00> : vector<2x32xf32>
    %265 = tpu.matmul %262, %264, %cst_214 {dimension_numbers = #tpu.dot_dimension_numbers<[1], [0], [0], [1], [0, 0, 1, 1], [], []>} : vector<2x32xbf16>, vector<32x32xbf16>, vector<2x32xf32> -> vector<2x32xf32>
    %266 = arith.addf %249, %265 : vector<2x32xf32>
    %c0_215 = arith.constant 0 : index
    %c0_216 = arith.constant 0 : index
    %c2_217 = arith.constant 2 : index
    %c0_218 = arith.constant 0 : index
    %267 = vector.load %arg16[%c0_215, %c0_216, %c2_217, %c0_218] : memref<2x4x4x32xf32, #tpu.memory_space<vmem>>, vector<2x2x2x32xf32>
    %268 = vector.extract_strided_slice %267 {offsets = [0, 0, 0, 0], sizes = [2, 1, 1, 32], strides = [1, 1, 1, 1]} : vector<2x2x2x32xf32> to vector<2x1x1x32xf32>
    %269 = vector.shape_cast %268 : vector<2x1x1x32xf32> to vector<2x32xf32>
    %270 = vector.extract_strided_slice %267 {offsets = [0, 0, 1, 0], sizes = [2, 1, 1, 32], strides = [1, 1, 1, 1]} : vector<2x2x2x32xf32> to vector<2x1x1x32xf32>
    %271 = vector.shape_cast %270 : vector<2x1x1x32xf32> to vector<2x32xf32>
    %272 = arith.maximumf %269, %271 : vector<2x32xf32>
    %273 = vector.extract_strided_slice %267 {offsets = [0, 1, 0, 0], sizes = [2, 1, 1, 32], strides = [1, 1, 1, 1]} : vector<2x2x2x32xf32> to vector<2x1x1x32xf32>
    %274 = vector.shape_cast %273 : vector<2x1x1x32xf32> to vector<2x32xf32>
    %275 = vector.extract_strided_slice %267 {offsets = [0, 1, 1, 0], sizes = [2, 1, 1, 32], strides = [1, 1, 1, 1]} : vector<2x2x2x32xf32> to vector<2x1x1x32xf32>
    %276 = vector.shape_cast %275 : vector<2x1x1x32xf32> to vector<2x32xf32>
    %277 = arith.maximumf %274, %276 : vector<2x32xf32>
    %278 = arith.maximumf %272, %277 : vector<2x32xf32>
    %279 = arith.truncf %278 : vector<2x32xf32> to vector<2x32xbf16>
    %280 = vector.extract_strided_slice %245 {offsets = [1, 0, 0], sizes = [1, 32, 32], strides = [1, 1, 1]} : vector<4x32x32xbf16> to vector<1x32x32xbf16>
    %281 = vector.shape_cast %280 : vector<1x32x32xbf16> to vector<32x32xbf16>
    %cst_219 = arith.constant dense<0.000000e+00> : vector<2x32xf32>
    %282 = tpu.matmul %279, %281, %cst_219 {dimension_numbers = #tpu.dot_dimension_numbers<[1], [0], [0], [1], [0, 0, 1, 1], [], []>} : vector<2x32xbf16>, vector<32x32xbf16>, vector<2x32xf32> -> vector<2x32xf32>
    %283 = arith.addf %266, %282 : vector<2x32xf32>
    %c0_220 = arith.constant 0 : index
    %c2_221 = arith.constant 2 : index
    %c0_222 = arith.constant 0 : index
    %c0_223 = arith.constant 0 : index
    %284 = vector.load %arg16[%c0_220, %c2_221, %c0_222, %c0_223] : memref<2x4x4x32xf32, #tpu.memory_space<vmem>>, vector<2x2x2x32xf32>
    %285 = vector.extract_strided_slice %284 {offsets = [0, 0, 0, 0], sizes = [2, 1, 1, 32], strides = [1, 1, 1, 1]} : vector<2x2x2x32xf32> to vector<2x1x1x32xf32>
    %286 = vector.shape_cast %285 : vector<2x1x1x32xf32> to vector<2x32xf32>
    %287 = vector.extract_strided_slice %284 {offsets = [0, 0, 1, 0], sizes = [2, 1, 1, 32], strides = [1, 1, 1, 1]} : vector<2x2x2x32xf32> to vector<2x1x1x32xf32>
    %288 = vector.shape_cast %287 : vector<2x1x1x32xf32> to vector<2x32xf32>
    %289 = arith.maximumf %286, %288 : vector<2x32xf32>
    %290 = vector.extract_strided_slice %284 {offsets = [0, 1, 0, 0], sizes = [2, 1, 1, 32], strides = [1, 1, 1, 1]} : vector<2x2x2x32xf32> to vector<2x1x1x32xf32>
    %291 = vector.shape_cast %290 : vector<2x1x1x32xf32> to vector<2x32xf32>
    %292 = vector.extract_strided_slice %284 {offsets = [0, 1, 1, 0], sizes = [2, 1, 1, 32], strides = [1, 1, 1, 1]} : vector<2x2x2x32xf32> to vector<2x1x1x32xf32>
    %293 = vector.shape_cast %292 : vector<2x1x1x32xf32> to vector<2x32xf32>
    %294 = arith.maximumf %291, %293 : vector<2x32xf32>
    %295 = arith.maximumf %289, %294 : vector<2x32xf32>
    %296 = arith.truncf %295 : vector<2x32xf32> to vector<2x32xbf16>
    %297 = vector.extract_strided_slice %245 {offsets = [2, 0, 0], sizes = [1, 32, 32], strides = [1, 1, 1]} : vector<4x32x32xbf16> to vector<1x32x32xbf16>
    %298 = vector.shape_cast %297 : vector<1x32x32xbf16> to vector<32x32xbf16>
    %cst_224 = arith.constant dense<0.000000e+00> : vector<2x32xf32>
    %299 = tpu.matmul %296, %298, %cst_224 {dimension_numbers = #tpu.dot_dimension_numbers<[1], [0], [0], [1], [0, 0, 1, 1], [], []>} : vector<2x32xbf16>, vector<32x32xbf16>, vector<2x32xf32> -> vector<2x32xf32>
    %300 = arith.addf %283, %299 : vector<2x32xf32>
    %c0_225 = arith.constant 0 : index
    %c2_226 = arith.constant 2 : index
    %c2_227 = arith.constant 2 : index
    %c0_228 = arith.constant 0 : index
    %301 = vector.load %arg16[%c0_225, %c2_226, %c2_227, %c0_228] : memref<2x4x4x32xf32, #tpu.memory_space<vmem>>, vector<2x2x2x32xf32>
    %302 = vector.extract_strided_slice %301 {offsets = [0, 0, 0, 0], sizes = [2, 1, 1, 32], strides = [1, 1, 1, 1]} : vector<2x2x2x32xf32> to vector<2x1x1x32xf32>
    %303 = vector.shape_cast %302 : vector<2x1x1x32xf32> to vector<2x32xf32>
    %304 = vector.extract_strided_slice %301 {offsets = [0, 0, 1, 0], sizes = [2, 1, 1, 32], strides = [1, 1, 1, 1]} : vector<2x2x2x32xf32> to vector<2x1x1x32xf32>
    %305 = vector.shape_cast %304 : vector<2x1x1x32xf32> to vector<2x32xf32>
    %306 = arith.maximumf %303, %305 : vector<2x32xf32>
    %307 = vector.extract_strided_slice %301 {offsets = [0, 1, 0, 0], sizes = [2, 1, 1, 32], strides = [1, 1, 1, 1]} : vector<2x2x2x32xf32> to vector<2x1x1x32xf32>
    %308 = vector.shape_cast %307 : vector<2x1x1x32xf32> to vector<2x32xf32>
    %309 = vector.extract_strided_slice %301 {offsets = [0, 1, 1, 0], sizes = [2, 1, 1, 32], strides = [1, 1, 1, 1]} : vector<2x2x2x32xf32> to vector<2x1x1x32xf32>
    %310 = vector.shape_cast %309 : vector<2x1x1x32xf32> to vector<2x32xf32>
    %311 = arith.maximumf %308, %310 : vector<2x32xf32>
    %312 = arith.maximumf %306, %311 : vector<2x32xf32>
    %313 = arith.truncf %312 : vector<2x32xf32> to vector<2x32xbf16>
    %314 = vector.extract_strided_slice %245 {offsets = [3, 0, 0], sizes = [1, 32, 32], strides = [1, 1, 1]} : vector<4x32x32xbf16> to vector<1x32x32xbf16>
    %315 = vector.shape_cast %314 : vector<1x32x32xbf16> to vector<32x32xbf16>
    %cst_229 = arith.constant dense<0.000000e+00> : vector<2x32xf32>
    %316 = tpu.matmul %313, %315, %cst_229 {dimension_numbers = #tpu.dot_dimension_numbers<[1], [0], [0], [1], [0, 0, 1, 1], [], []>} : vector<2x32xbf16>, vector<32x32xbf16>, vector<2x32xf32> -> vector<2x32xf32>
    %317 = arith.addf %300, %316 : vector<2x32xf32>
    %cst_230 = arith.constant 0.000000e+00 : f32
    %318 = vector.broadcast %cst_230 : f32 to vector<2x32xf32>
    %319 = arith.maximumf %317, %318 : vector<2x32xf32>
    %320 = arith.truncf %319 : vector<2x32xf32> to vector<2x32xbf16>
    %c0_231 = arith.constant 0 : index
    %c0_232 = arith.constant 0 : index
    %321 = vector.load %arg9[%c0_231, %c0_232] : memref<32x10xbf16, #tpu.memory_space<vmem>>, vector<32x10xbf16>
    %cst_233 = arith.constant dense<0.000000e+00> : vector<2x10xf32>
    %322 = tpu.matmul %320, %321, %cst_233 {dimension_numbers = #tpu.dot_dimension_numbers<[1], [0], [0], [1], [0, 0, 1, 1], [], []>} : vector<2x32xbf16>, vector<32x10xbf16>, vector<2x10xf32> -> vector<2x10xf32>
    %c0_234 = arith.constant 0 : index
    %c0_235 = arith.constant 0 : index
    %323 = vector.load %arg10[%c0_234, %c0_235] : memref<1x10xf32, #tpu.memory_space<vmem>>, vector<1x10xf32>
    %324 = vector.broadcast %323 : vector<1x10xf32> to vector<2x10xf32>
    %325 = arith.addf %322, %324 : vector<2x10xf32>
    %c0_236 = arith.constant 0 : index
    %c0_237 = arith.constant 0 : index
    %326 = vector.load %arg11[%c0_236, %c0_237] : memref<2x10xf32, #tpu.memory_space<vmem>>, vector<2x10xf32>
    tpu.vector_store %arg11[%c0_236, %c0_237], %325 {strides = array<i32>} : memref<2x10xf32, #tpu.memory_space<vmem>>, vector<2x10xf32>,
    return
  }
}

</mosaic_0001>

<llo_original>
// kernel: small_cnn_forward.1
$region0: #{small_cnn_forward.1}
  #allocation0 [shape = 'u32[]', space=smem, size = 0x4, offset = 0x4, fixed_abs, tag = 'smem constant byte address 0x4 - core index']
  #allocation1 [shape = 'u32[144,128]{1,0:T(1,128)}', space=vmem, size = 0x12000, scoped, tag = 'internal scratch']
  #allocation2 [shape = 'f32[2,16,16,16]{3,2,1,0:T(8,128)}', space=vmem, size = 0x40000, scoped, tag = 'scratch operand']
  #allocation3 [shape = 'f32[2,10,10,16]{3,2,1,0:T(8,128)}', space=vmem, size = 0x28000, scoped, tag = 'scratch operand']
  #allocation4 [shape = 'f32[2,8,8,16]{3,2,1,0:T(8,128)}', space=vmem, size = 0x10000, scoped, tag = 'scratch operand']
  #allocation5 [shape = 'f32[2,6,6,16]{3,2,1,0:T(8,128)}', space=vmem, size = 0xc000, scoped, tag = 'scratch operand']
  #allocation6 [shape = 'f32[2,4,4,32]{3,2,1,0:T(4,128)}', space=vmem, size = 0x4000, scoped, tag = 'scratch operand']
  %s0 = inlined_call_operand.vmem [shape: f32[2,18,18,1], index: 0, kind: input, shape index: {}]
  %s1 = inlined_call_operand.vmem [shape: f32[9,16], index: 1, kind: input, shape index: {}]
  %s2 = inlined_call_operand.vmem [shape: f32[1,16], index: 2, kind: input, shape index: {}]
  %s3 = inlined_call_operand.vmem [shape: bf16[9,16,16], index: 3, kind: input, shape index: {}]
  %s4 = inlined_call_operand.vmem [shape: f32[1,16], index: 4, kind: input, shape index: {}]
  %s5 = inlined_call_operand.vmem [shape: bf16[9,16,32], index: 5, kind: input, shape index: {}]
  %s6 = inlined_call_operand.vmem [shape: f32[1,32], index: 6, kind: input, shape index: {}]
  %s7 = inlined_call_operand.vmem [shape: bf16[4,32,32], index: 7, kind: input, shape index: {}]
  %s8 = inlined_call_operand.vmem [shape: f32[1,32], index: 8, kind: input, shape index: {}]
  %s9 = inlined_call_operand.vmem [shape: bf16[32,10], index: 9, kind: input, shape index: {}]
  %s10 = inlined_call_operand.vmem [shape: f32[1,10], index: 10, kind: input, shape index: {}]
  %s11 = inlined_call_operand.hbm [shape: f32[2,10], index: 11, kind: output, shape index: {}]
  %s12 = sld [smem:[#allocation0]]
  $region54: #{small_cnn_forward.1} parent=0
    _
  %s14 = ssub.s32 1, %s12
  %s15 = scalar_select 0, %s14, %s12
  $region1: #{small_cnn_forward.1} parent=0
    #allocation7 [shape = 'u8[1024]{0}', space=vmem, size = 0x400, scoped, tag = 'output window, operand 0, single buffered']
    #allocation8 [shape = 's32[1]{0}', space=sflag, size = 0x4, scoped, tag = 'scoped memory for small_cnn_forward.1']
    %16 = vsyncpa [#allocation8], 0
    // Predicated region
    $region2: #{small_cnn_forward.1} parent=1 // pred_check
      _
    $region3: #{small_cnn_forward.1} parent=1 // pred_check_branch
      %18 = sbr.rel (0) target = $region5
    $region4: #{small_cnn_forward.1} parent=1 // pred_region
      _
    $region5: #{small_cnn_forward.1} parent=1 // pred_fallthru
      _
    // Predicated region
    $region6: #{small_cnn_forward.1} parent=1 // pred_check
      _
    $region7: #{small_cnn_forward.1} parent=1 // pred_check_branch
      %20 = sbr.rel (0) target = $region9
    $region8: #{small_cnn_forward.1} parent=1 // pred_region
      _
    $region9: #{small_cnn_forward.1} parent=1 // pred_fallthru
      _
    // Predicated region
    $region10: #{small_cnn_forward.1} parent=1 // pred_check
      _
    $region11: #{small_cnn_forward.1} parent=1 // pred_check_branch
      %22 = sbr.rel (0) target = $region13
    $region12: #{small_cnn_forward.1} parent=1 // pred_region
      _
    $region13: #{small_cnn_forward.1} parent=1 // pred_fallthru
      _
    // Predicated region
    $region14: #{small_cnn_forward.1} parent=1 // pred_check
      _
    $region15: #{small_cnn_forward.1} parent=1 // pred_check_branch
      %24 = sbr.rel (0) target = $region17
    $region16: #{small_cnn_forward.1} parent=1 // pred_region
      _
    $region17: #{small_cnn_forward.1} parent=1 // pred_fallthru
      _
    // Predicated region
    $region18: #{small_cnn_forward.1} parent=1 // pred_check
      _
    $region19: #{small_cnn_forward.1} parent=1 // pred_check_branch
      %26 = sbr.rel (0) target = $region21
    $region20: #{small_cnn_forward.1} parent=1 // pred_region
      _
    $region21: #{small_cnn_forward.1} parent=1 // pred_fallthru
      _
    // Predicated region
    $region22: #{small_cnn_forward.1} parent=1 // pred_check
      _
    $region23: #{small_cnn_forward.1} parent=1 // pred_check_branch
      %28 = sbr.rel (0) target = $region25
    $region24: #{small_cnn_forward.1} parent=1 // pred_region
      _
    $region25: #{small_cnn_forward.1} parent=1 // pred_fallthru
      _
    // Predicated region
    $region26: #{small_cnn_forward.1} parent=1 // pred_check
      _
    $region27: #{small_cnn_forward.1} parent=1 // pred_check_branch
      %30 = sbr.rel (0) target = $region29
    $region28: #{small_cnn_forward.1} parent=1 // pred_region
      _
    $region29: #{small_cnn_forward.1} parent=1 // pred_fallthru
      _
    // Predicated region
    $region30: #{small_cnn_forward.1} parent=1 // pred_check
      _
    $region31: #{small_cnn_forward.1} parent=1 // pred_check_branch
      %32 = sbr.rel (0) target = $region33
    $region32: #{small_cnn_forward.1} parent=1 // pred_region
      _
    $region33: #{small_cnn_forward.1} parent=1 // pred_fallthru
      _
    // Predicated region
    $region34: #{small_cnn_forward.1} parent=1 // pred_check
      _
    $region35: #{small_cnn_forward.1} parent=1 // pred_check_branch
      %34 = sbr.rel (0) target = $region37
    $region36: #{small_cnn_forward.1} parent=1 // pred_region
      _
    $region37: #{small_cnn_forward.1} parent=1 // pred_fallthru
      _
    // Predicated region
    $region38: #{small_cnn_forward.1} parent=1 // pred_check
      _
    $region39: #{small_cnn_forward.1} parent=1 // pred_check_branch
      %36 = sbr.rel (0) target = $region41
    $region40: #{small_cnn_forward.1} parent=1 // pred_region
      _
    $region41: #{small_cnn_forward.1} parent=1 // pred_fallthru
      _
    // Predicated region
    $region42: #{small_cnn_forward.1} parent=1 // pred_check
      _
    $region43: #{small_cnn_forward.1} parent=1 // pred_check_branch
      %38 = sbr.rel (0) target = $region45
    $region44: #{small_cnn_forward.1} parent=1 // pred_region
      _
    $region45: #{small_cnn_forward.1} parent=1 // pred_fallthru
      _
    %v40 = vld [vmem:[%s1] sm:$0xff]
    %v41 = vld [vmem:[%s1 + $0x8] sm:$0x1]
    %v42 = vld [vmem:[%s2] sm:$0x1]
    %v44 = vlaneseq
    %v45 = vshrl.u32 %v44, 7
    %v46 = vsub.s32 0, %v45
    %v47 = vrot.slane %v42, %v46
    %v49 = vadd.f32 %v47, 0.0
    %v50 = vld [vmem:[%s0] sm:$0xff]
    %v51 = vld [vmem:[%s0 + $0x8] sm:$0xff]
    %v52 = vld [vmem:[%s0 + $0x18] sm:$0xff]
    %v53 = vld [vmem:[%s0 + $0x20] sm:$0xff]
    %v54 = vld [vmem:[%s0 + $0x30] sm:$0xff]
    %v55 = vld [vmem:[%s0 + $0x38] sm:$0xff]
    %v56 = vld [vmem:[%s0 + $0x48] sm:$0xff]
    %v57 = vld [vmem:[%s0 + $0x50] sm:$0xff]
    %v58 = vld [vmem:[%s0 + $0x60] sm:$0xff]
    %v59 = vld [vmem:[%s0 + $0x68] sm:$0xff]
    %v60 = vld [vmem:[%s0 + $0x78] sm:$0xff]
    %v61 = vld [vmem:[%s0 + $0x80] sm:$0xff]
    %v62 = vld [vmem:[%s0 + $0x90] sm:$0xff]
    %v63 = vld [vmem:[%s0 + $0x98] sm:$0xff]
    %v64 = vld [vmem:[%s0 + $0xa8] sm:$0xff]
    %v65 = vld [vmem:[%s0 + $0xb0] sm:$0xff]
    %v66 = vld [vmem:[%s0 + $0xc0] sm:$0xff]
    %v67 = vld [vmem:[%s0 + $0xc8] sm:$0xff]
    %v68 = vld [vmem:[%s0 + $0xd8] sm:$0xff]
    %v69 = vld [vmem:[%s0 + $0xe0] sm:$0xff]
    %v70 = vld [vmem:[%s0 + $0xf0] sm:$0xff]
    %v71 = vld [vmem:[%s0 + $0xf8] sm:$0xff]
    %v72 = vld [vmem:[%s0 + $0x108] sm:$0xff]
    %v73 = vld [vmem:[%s0 + $0x110] sm:$0xff]
    %v74 = vld [vmem:[%s0 + $0x120] sm:$0xff]
    %v75 = vld [vmem:[%s0 + $0x128] sm:$0xff]
    %v76 = vld [vmem:[%s0 + $0x138] sm:$0xff]
    %v77 = vld [vmem:[%s0 + $0x140] sm:$0xff]
    %v78 = vld [vmem:[%s0 + $0x150] sm:$0xff]
    %v79 = vld [vmem:[%s0 + $0x158] sm:$0xff]
    %v80 = vld [vmem:[%s0 + $0x168] sm:$0xff]
    %v81 = vld [vmem:[%s0 + $0x170] sm:$0xff]
    %v82 = vld [vmem:[%s0 + $0x1b0] sm:$0xff]
    %v83 = vld [vmem:[%s0 + $0x1b8] sm:$0xff]
    %v84 = vld [vmem:[%s0 + $0x1c8] sm:$0xff]
    %v85 = vld [vmem:[%s0 + $0x1d0] sm:$0xff]
    %v86 = vld [vmem:[%s0 + $0x1e0] sm:$0xff]
    %v87 = vld [vmem:[%s0 + $0x1e8] sm:$0xff]
    %v88 = vld [vmem:[%s0 + $0x1f8] sm:$0xff]
    %v89 = vld [vmem:[%s0 + $0x200] sm:$0xff]
    %v90 = vld [vmem:[%s0 + $0x210] sm:$0xff]
    %v91 = vld [vmem:[%s0 + $0x218] sm:$0xff]
    %v92 = vld [vmem:[%s0 + $0x228] sm:$0xff]
    %v93 = vld [vmem:[%s0 + $0x230] sm:$0xff]
    %v94 = vld [vmem:[%s0 + $0x240] sm:$0xff]
    %v95 = vld [vmem:[%s0 + $0x248] sm:$0xff]
    %v96 = vld [vmem:[%s0 + $0x258] sm:$0xff]
    %v97 = vld [vmem:[%s0 + $0x260] sm:$0xff]
    %v98 = vld [vmem:[%s0 + $0x270] sm:$0xff]
    %v99 = vld [vmem:[%s0 + $0x278] sm:$0xff]
    %v100 = vld [vmem:[%s0 + $0x288] sm:$0xff]
    %v101 = vld [vmem:[%s0 + $0x290] sm:$0xff]
    %v102 = vld [vmem:[%s0 + $0x2a0] sm:$0xff]
    %v103 = vld [vmem:[%s0 + $0x2a8] sm:$0xff]
    %v104 = vld [vmem:[%s0 + $0x2b8] sm:$0xff]
    %v105 = vld [vmem:[%s0 + $0x2c0] sm:$0xff]
    %v106 = vld [vmem:[%s0 + $0x2d0] sm:$0xff]
    %v107 = vld [vmem:[%s0 + $0x2d8] sm:$0xff]
    %v108 = vld [vmem:[%s0 + $0x2e8] sm:$0xff]
    %v109 = vld [vmem:[%s0 + $0x2f0] sm:$0xff]
    %v110 = vld [vmem:[%s0 + $0x300] sm:$0xff]
    %v111 = vld [vmem:[%s0 + $0x308] sm:$0xff]
    %v112 = vld [vmem:[%s0 + $0x318] sm:$0xff]
    %v113 = vld [vmem:[%s0 + $0x320] sm:$0xff]
    %115 = vset.pattern.permute.xlu0 0
    %116 = vperm.xlu0 %115, %v50
    %v117 = vpop.permute.xlu0 %116
    %120 = vset.pattern.permute.xlu0 0
    %121 = vperm.xlu0 %120, %v51
    %v122 = vpop.permute.xlu0 %121
    %125 = vset.pattern.permute.xlu0 0
    %126 = vperm.xlu0 %125, %v52
    %v127 = vpop.permute.xlu0 %126
    %130 = vset.pattern.permute.xlu0 0
    %131 = vperm.xlu0 %130, %v53
    %v132 = vpop.permute.xlu0 %131
    %135 = vset.pattern.permute.xlu0 0
    %136 = vperm.xlu0 %135, %v54
    %v137 = vpop.permute.xlu0 %136
    %140 = vset.pattern.permute.xlu0 0
    %141 = vperm.xlu0 %140, %v55
    %v142 = vpop.permute.xlu0 %141
    %145 = vset.pattern.permute.xlu0 0
    %146 = vperm.xlu0 %145, %v56
    %v147 = vpop.permute.xlu0 %146
    %150 = vset.pattern.permute.xlu0 0
    %151 = vperm.xlu0 %150, %v57
    %v152 = vpop.permute.xlu0 %151
    %155 = vset.pattern.permute.xlu0 0
    %156 = vperm.xlu0 %155, %v58
    %v157 = vpop.permute.xlu0 %156
    %160 = vset.pattern.permute.xlu0 0
    %161 = vperm.xlu0 %160, %v59
    %v162 = vpop.permute.xlu0 %161
    %165 = vset.pattern.permute.xlu0 0
    %166 = vperm.xlu0 %165, %v60
    %v167 = vpop.permute.xlu0 %166
    %170 = vset.pattern.permute.xlu0 0
    %171 = vperm.xlu0 %170, %v61
    %v172 = vpop.permute.xlu0 %171
    %175 = vset.pattern.permute.xlu0 0
    %176 = vperm.xlu0 %175, %v62
    %v177 = vpop.permute.xlu0 %176
    %180 = vset.pattern.permute.xlu0 0
    %181 = vperm.xlu0 %180, %v63
    %v182 = vpop.permute.xlu0 %181
    %185 = vset.pattern.permute.xlu0 0
    %186 = vperm.xlu0 %185, %v64
    %v187 = vpop.permute.xlu0 %186
    %190 = vset.pattern.permute.xlu0 0
    %191 = vperm.xlu0 %190, %v65
    %v192 = vpop.permute.xlu0 %191
    %195 = vset.pattern.permute.xlu0 0
    %196 = vperm.xlu0 %195, %v66
    %v197 = vpop.permute.xlu0 %196
    %200 = vset.pattern.permute.xlu0 0
    %201 = vperm.xlu0 %200, %v67
    %v202 = vpop.permute.xlu0 %201
    %205 = vset.pattern.permute.xlu0 0
    %206 = vperm.xlu0 %205, %v68
    %v207 = vpop.permute.xlu0 %206
    %210 = vset.pattern.permute.xlu0 0
    %211 = vperm.xlu0 %210, %v69
    %v212 = vpop.permute.xlu0 %211
    %215 = vset.pattern.permute.xlu0 0
    %216 = vperm.xlu0 %215, %v70
    %v217 = vpop.permute.xlu0 %216
    %220 = vset.pattern.permute.xlu0 0
    %221 = vperm.xlu0 %220, %v71
    %v222 = vpop.permute.xlu0 %221
    %225 = vset.pattern.permute.xlu0 0
    %226 = vperm.xlu0 %225, %v72
    %v227 = vpop.permute.xlu0 %226
    %230 = vset.pattern.permute.xlu0 0
    %231 = vperm.xlu0 %230, %v73
    %v232 = vpop.permute.xlu0 %231
    %235 = vset.pattern.permute.xlu0 0
    %236 = vperm.xlu0 %235, %v74
    %v237 = vpop.permute.xlu0 %236
    %240 = vset.pattern.permute.xlu0 0
    %241 = vperm.xlu0 %240, %v75
    %v242 = vpop.permute.xlu0 %241
    %245 = vset.pattern.permute.xlu0 0
    %246 = vperm.xlu0 %245, %v76
    %v247 = vpop.permute.xlu0 %246
    %250 = vset.pattern.permute.xlu0 0
    %251 = vperm.xlu0 %250, %v77
    %v252 = vpop.permute.xlu0 %251
    %255 = vset.pattern.permute.xlu0 0
    %256 = vperm.xlu0 %255, %v78
    %v257 = vpop.permute.xlu0 %256
    %260 = vset.pattern.permute.xlu0 0
    %261 = vperm.xlu0 %260, %v79
    %v262 = vpop.permute.xlu0 %261
    %265 = vset.pattern.permute.xlu0 0
    %266 = vperm.xlu0 %265, %v80
    %v267 = vpop.permute.xlu0 %266
    %270 = vset.pattern.permute.xlu0 0
    %271 = vperm.xlu0 %270, %v81
    %v272 = vpop.permute.xlu0 %271
    %275 = vset.pattern.permute.xlu0 0
    %276 = vperm.xlu0 %275, %v82
    %v277 = vpop.permute.xlu0 %276
    %280 = vset.pattern.permute.xlu0 0
    %281 = vperm.xlu0 %280, %v83
    %v282 = vpop.permute.xlu0 %281
    %285 = vset.pattern.permute.xlu0 0
    %286 = vperm.xlu0 %285, %v84
    %v287 = vpop.permute.xlu0 %286
    %290 = vset.pattern.permute.xlu0 0
    %291 = vperm.xlu0 %290, %v85
    %v292 = vpop.permute.xlu0 %291
    %295 = vset.pattern.permute.xlu0 0
    %296 = vperm.xlu0 %295, %v86
    %v297 = vpop.permute.xlu0 %296
    %300 = vset.pattern.permute.xlu0 0
    %301 = vperm.xlu0 %300, %v87
    %v302 = vpop.permute.xlu0 %301
    %305 = vset.pattern.permute.xlu0 0
    %306 = vperm.xlu0 %305, %v88
    %v307 = vpop.permute.xlu0 %306
    %310 = vset.pattern.permute.xlu0 0
    %311 = vperm.xlu0 %310, %v89
    %v312 = vpop.permute.xlu0 %311
    %315 = vset.pattern.permute.xlu0 0
    %316 = vperm.xlu0 %315, %v90
    %v317 = vpop.permute.xlu0 %316
    %320 = vset.pattern.permute.xlu0 0
    %321 = vperm.xlu0 %320, %v91
    %v322 = vpop.permute.xlu0 %321
    %325 = vset.pattern.permute.xlu0 0
    %326 = vperm.xlu0 %325, %v92
    %v327 = vpop.permute.xlu0 %326
    %330 = vset.pattern.permute.xlu0 0
    %331 = vperm.xlu0 %330, %v93
    %v332 = vpop.permute.xlu0 %331
    %335 = vset.pattern.permute.xlu0 0
    %336 = vperm.xlu0 %335, %v94
    %v337 = vpop.permute.xlu0 %336
    %340 = vset.pattern.permute.xlu0 0
    %341 = vperm.xlu0 %340, %v95
    %v342 = vpop.permute.xlu0 %341
    %345 = vset.pattern.permute.xlu0 0
    %346 = vperm.xlu0 %345, %v96
    %v347 = vpop.permute.xlu0 %346
    %350 = vset.pattern.permute.xlu0 0
    %351 = vperm.xlu0 %350, %v97
    %v352 = vpop.permute.xlu0 %351
    %355 = vset.pattern.permute.xlu0 0
    %356 = vperm.xlu0 %355, %v98
    %v357 = vpop.permute.xlu0 %356
    %360 = vset.pattern.permute.xlu0 0
    %361 = vperm.xlu0 %360, %v99
    %v362 = vpop.permute.xlu0 %361
    %365 = vset.pattern.permute.xlu0 0
    %366 = vperm.xlu0 %365, %v100
    %v367 = vpop.permute.xlu0 %366
    %370 = vset.pattern.permute.xlu0 0
    %371 = vperm.xlu0 %370, %v101
    %v372 = vpop.permute.xlu0 %371
    %375 = vset.pattern.permute.xlu0 0
    %376 = vperm.xlu0 %375, %v102
    %v377 = vpop.permute.xlu0 %376
    %380 = vset.pattern.permute.xlu0 0
    %381 = vperm.xlu0 %380, %v103
    %v382 = vpop.permute.xlu0 %381
    %385 = vset.pattern.permute.xlu0 0
    %386 = vperm.xlu0 %385, %v104
    %v387 = vpop.permute.xlu0 %386
    %390 = vset.pattern.permute.xlu0 0
    %391 = vperm.xlu0 %390, %v105
    %v392 = vpop.permute.xlu0 %391
    %395 = vset.pattern.permute.xlu0 0
    %396 = vperm.xlu0 %395, %v106
    %v397 = vpop.permute.xlu0 %396
    %400 = vset.pattern.permute.xlu0 0
    %401 = vperm.xlu0 %400, %v107
    %v402 = vpop.permute.xlu0 %401
    %405 = vset.pattern.permute.xlu0 0
    %406 = vperm.xlu0 %405, %v108
    %v407 = vpop.permute.xlu0 %406
    %410 = vset.pattern.permute.xlu0 0
    %411 = vperm.xlu0 %410, %v109
    %v412 = vpop.permute.xlu0 %411
    %415 = vset.pattern.permute.xlu0 0
    %416 = vperm.xlu0 %415, %v110
    %v417 = vpop.permute.xlu0 %416
    %420 = vset.pattern.permute.xlu0 0
    %421 = vperm.xlu0 %420, %v111
    %v422 = vpop.permute.xlu0 %421
    %425 = vset.pattern.permute.xlu0 0
    %426 = vperm.xlu0 %425, %v112
    %v427 = vpop.permute.xlu0 %426
    %430 = vset.pattern.permute.xlu0 0
    %431 = vperm.xlu0 %430, %v113
    %v432 = vpop.permute.xlu0 %431
    %v434 = vlaneseq
    %v435 = vshrl.u32 %v434, 7
    %v436 = vsub.s32 0, %v435
    %v437 = vrot.slane %v40, %v436
    %v438 = vmul.f32 %v117, %v437
    %v439 = vmul.f32 %v122, %v437
    %v440 = vmul.f32 %v127, %v437
    %v441 = vmul.f32 %v132, %v437
    %v442 = vmul.f32 %v137, %v437
    %v443 = vmul.f32 %v142, %v437
    %v444 = vmul.f32 %v147, %v437
    %v445 = vmul.f32 %v152, %v437
    %v446 = vmul.f32 %v157, %v437
    %v447 = vmul.f32 %v162, %v437
    %v448 = vmul.f32 %v167, %v437
    %v449 = vmul.f32 %v172, %v437
    %v450 = vmul.f32 %v177, %v437
    %v451 = vmul.f32 %v182, %v437
    %v452 = vmul.f32 %v187, %v437
    %v453 = vmul.f32 %v192, %v437
    %v454 = vmul.f32 %v197, %v437
    %v455 = vmul.f32 %v202, %v437
    %v456 = vmul.f32 %v207, %v437
    %v457 = vmul.f32 %v212, %v437
    %v458 = vmul.f32 %v217, %v437
    %v459 = vmul.f32 %v222, %v437
    %v460 = vmul.f32 %v227, %v437
    %v461 = vmul.f32 %v232, %v437
    %v462 = vmul.f32 %v237, %v437
    %v463 = vmul.f32 %v242, %v437
    %v464 = vmul.f32 %v247, %v437
    %v465 = vmul.f32 %v252, %v437
    %v466 = vmul.f32 %v257, %v437
    %v467 = vmul.f32 %v262, %v437
    %v468 = vmul.f32 %v267, %v437
    %v469 = vmul.f32 %v272, %v437
    %v470 = vmul.f32 %v277, %v437
    %v471 = vmul.f32 %v282, %v437
    %v472 = vmul.f32 %v287, %v437
    %v473 = vmul.f32 %v292, %v437
    %v474 = vmul.f32 %v297, %v437
    %v475 = vmul.f32 %v302, %v437
    %v476 = vmul.f32 %v307, %v437
    %v477 = vmul.f32 %v312, %v437
    %v478 = vmul.f32 %v317, %v437
    %v479 = vmul.f32 %v322, %v437
    %v480 = vmul.f32 %v327, %v437
    %v481 = vmul.f32 %v332, %v437
    %v482 = vmul.f32 %v337, %v437
    %v483 = vmul.f32 %v342, %v437
    %v484 = vmul.f32 %v347, %v437
    %v485 = vmul.f32 %v352, %v437
    %v486 = vmul.f32 %v357, %v437
    %v487 = vmul.f32 %v362, %v437
    %v488 = vmul.f32 %v367, %v437
    %v489 = vmul.f32 %v372, %v437
    %v490 = vmul.f32 %v377, %v437
    %v491 = vmul.f32 %v382, %v437
    %v492 = vmul.f32 %v387, %v437
    %v493 = vmul.f32 %v392, %v437
    %v494 = vmul.f32 %v397, %v437
    %v495 = vmul.f32 %v402, %v437
    %v496 = vmul.f32 %v407, %v437
    %v497 = vmul.f32 %v412, %v437
    %v498 = vmul.f32 %v417, %v437
    %v499 = vmul.f32 %v422, %v437
    %v500 = vmul.f32 %v427, %v437
    %v501 = vmul.f32 %v432, %v437
    %v502 = vadd.f32 %v49, %v438
    %v503 = vadd.f32 %v49, %v439
    %v504 = vadd.f32 %v49, %v440
    %v505 = vadd.f32 %v49, %v441
    %v506 = vadd.f32 %v49, %v442
    %v507 = vadd.f32 %v49, %v443
    %v508 = vadd.f32 %v49, %v444
    %v509 = vadd.f32 %v49, %v445
    %v510 = vadd.f32 %v49, %v446
    %v511 = vadd.f32 %v49, %v447
    %v512 = vadd.f32 %v49, %v448
    %v513 = vadd.f32 %v49, %v449
    %v514 = vadd.f32 %v49, %v450
    %v515 = vadd.f32 %v49, %v451
    %v516 = vadd.f32 %v49, %v452
    %v517 = vadd.f32 %v49, %v453
    %v518 = vadd.f32 %v49, %v454
    %v519 = vadd.f32 %v49, %v455
    %v520 = vadd.f32 %v49, %v456
    %v521 = vadd.f32 %v49, %v457
    %v522 = vadd.f32 %v49, %v458
    %v523 = vadd.f32 %v49, %v459
    %v524 = vadd.f32 %v49, %v460
    %v525 = vadd.f32 %v49, %v461
    %v526 = vadd.f32 %v49, %v462
    %v527 = vadd.f32 %v49, %v463
    %v528 = vadd.f32 %v49, %v464
    %v529 = vadd.f32 %v49, %v465
    %v530 = vadd.f32 %v49, %v466
    %v531 = vadd.f32 %v49, %v467
    %v532 = vadd.f32 %v49, %v468
    %v533 = vadd.f32 %v49, %v469
    %v534 = vadd.f32 %v49, %v470
    %v535 = vadd.f32 %v49, %v471
    %v536 = vadd.f32 %v49, %v472
    %v537 = vadd.f32 %v49, %v473
    %v538 = vadd.f32 %v49, %v474
    %v539 = vadd.f32 %v49, %v475
    %v540 = vadd.f32 %v49, %v476
    %v541 = vadd.f32 %v49, %v477
    %v542 = vadd.f32 %v49, %v478
    %v543 = vadd.f32 %v49, %v479
    %v544 = vadd.f32 %v49, %v480
    %v545 = vadd.f32 %v49, %v481
    %v546 = vadd.f32 %v49, %v482
    %v547 = vadd.f32 %v49, %v483
    %v548 = vadd.f32 %v49, %v484
    %v549 = vadd.f32 %v49, %v485
    %v550 = vadd.f32 %v49, %v486
    %v551 = vadd.f32 %v49, %v487
    %v552 = vadd.f32 %v49, %v488
    %v553 = vadd.f32 %v49, %v489
    %v554 = vadd.f32 %v49, %v490
    %v555 = vadd.f32 %v49, %v491
    %v556 = vadd.f32 %v49, %v492
    %v557 = vadd.f32 %v49, %v493
    %v558 = vadd.f32 %v49, %v494
    %v559 = vadd.f32 %v49, %v495
    %v560 = vadd.f32 %v49, %v496
    %v561 = vadd.f32 %v49, %v497
    %v562 = vadd.f32 %v49, %v498
    %v563 = vadd.f32 %v49, %v499
    %v564 = vadd.f32 %v49, %v500
    %v565 = vadd.f32 %v49, %v501
    %v566 = vld [vmem:[%s0 + $0x1] sm:$0xff]
    %v567 = vld [vmem:[%s0 + $0x9] sm:$0xff]
    %v568 = vld [vmem:[%s0 + $0x19] sm:$0xff]
    %v569 = vld [vmem:[%s0 + $0x21] sm:$0xff]
    %v570 = vld [vmem:[%s0 + $0x31] sm:$0xff]
    %v571 = vld [vmem:[%s0 + $0x39] sm:$0xff]
    %v572 = vld [vmem:[%s0 + $0x49] sm:$0xff]
    %v573 = vld [vmem:[%s0 + $0x51] sm:$0xff]
    %v574 = vld [vmem:[%s0 + $0x61] sm:$0xff]
    %v575 = vld [vmem:[%s0 + $0x69] sm:$0xff]
    %v576 = vld [vmem:[%s0 + $0x79] sm:$0xff]
    %v577 = vld [vmem:[%s0 + $0x81] sm:$0xff]
    %v578 = vld [vmem:[%s0 + $0x91] sm:$0xff]
    %v579 = vld [vmem:[%s0 + $0x99] sm:$0xff]
    %v580 = vld [vmem:[%s0 + $0xa9] sm:$0xff]
    %v581 = vld [vmem:[%s0 + $0xb1] sm:$0xff]
    %v582 = vld [vmem:[%s0 + $0xc1] sm:$0xff]
    %v583 = vld [vmem:[%s0 + $0xc9] sm:$0xff]
    %v584 = vld [vmem:[%s0 + $0xd9] sm:$0xff]
    %v585 = vld [vmem:[%s0 + $0xe1] sm:$0xff]
    %v586 = vld [vmem:[%s0 + $0xf1] sm:$0xff]
    %v587 = vld [vmem:[%s0 + $0xf9] sm:$0xff]
    %v588 = vld [vmem:[%s0 + $0x109] sm:$0xff]
    %v589 = vld [vmem:[%s0 + $0x111] sm:$0xff]
    %v590 = vld [vmem:[%s0 + $0x121] sm:$0xff]
    %v591 = vld [vmem:[%s0 + $0x129] sm:$0xff]
    %v592 = vld [vmem:[%s0 + $0x139] sm:$0xff]
    %v593 = vld [vmem:[%s0 + $0x141] sm:$0xff]
    %v594 = vld [vmem:[%s0 + $0x151] sm:$0xff]
    %v595 = vld [vmem:[%s0 + $0x159] sm:$0xff]
    %v596 = vld [vmem:[%s0 + $0x169] sm:$0xff]
    %v597 = vld [vmem:[%s0 + $0x171] sm:$0xff]
    %v598 = vld [vmem:[%s0 + $0x1b1] sm:$0xff]
    %v599 = vld [vmem:[%s0 + $0x1b9] sm:$0xff]
    %v600 = vld [vmem:[%s0 + $0x1c9] sm:$0xff]
    %v601 = vld [vmem:[%s0 + $0x1d1] sm:$0xff]
    %v602 = vld [vmem:[%s0 + $0x1e1] sm:$0xff]
    %v603 = vld [vmem:[%s0 + $0x1e9] sm:$0xff]
    %v604 = vld [vmem:[%s0 + $0x1f9] sm:$0xff]
    %v605 = vld [vmem:[%s0 + $0x201] sm:$0xff]
    %v606 = vld [vmem:[%s0 + $0x211] sm:$0xff]
    %v607 = vld [vmem:[%s0 + $0x219] sm:$0xff]
    %v608 = vld [vmem:[%s0 + $0x229] sm:$0xff]
    %v609 = vld [vmem:[%s0 + $0x231] sm:$0xff]
    %v610 = vld [vmem:[%s0 + $0x241] sm:$0xff]
    %v611 = vld [vmem:[%s0 + $0x249] sm:$0xff]
    %v612 = vld [vmem:[%s0 + $0x259] sm:$0xff]
    %v613 = vld [vmem:[%s0 + $0x261] sm:$0xff]
    %v614 = vld [vmem:[%s0 + $0x271] sm:$0xff]
    %v615 = vld [vmem:[%s0 + $0x279] sm:$0xff]
    %v616 = vld [vmem:[%s0 + $0x289] sm:$0xff]
    %v617 = vld [vmem:[%s0 + $0x291] sm:$0xff]
    %v618 = vld [vmem:[%s0 + $0x2a1] sm:$0xff]
    %v619 = vld [vmem:[%s0 + $0x2a9] sm:$0xff]
    %v620 = vld [vmem:[%s0 + $0x2b9] sm:$0xff]
    %v621 = vld [vmem:[%s0 + $0x2c1] sm:$0xff]
    %v622 = vld [vmem:[%s0 + $0x2d1] sm:$0xff]
    %v623 = vld [vmem:[%s0 + $0x2d9] sm:$0xff]
    %v624 = vld [vmem:[%s0 + $0x2e9] sm:$0xff]
    %v625 = vld [vmem:[%s0 + $0x2f1] sm:$0xff]
    %v626 = vld [vmem:[%s0 + $0x301] sm:$0xff]
    %v627 = vld [vmem:[%s0 + $0x309] sm:$0xff]
    %v628 = vld [vmem:[%s0 + $0x319] sm:$0xff]
    %v629 = vld [vmem:[%s0 + $0x321] sm:$0xff]
    %631 = vset.pattern.permute.xlu0 0
    %632 = vperm.xlu0 %631, %v566
    %v633 = vpop.permute.xlu0 %632
    %636 = vset.pattern.permute.xlu0 0
    %637 = vperm.xlu0 %636, %v567
    %v638 = vpop.permute.xlu0 %637
    %641 = vset.pattern.permute.xlu0 0
    %642 = vperm.xlu0 %641, %v568
    %v643 = vpop.permute.xlu0 %642
    %646 = vset.pattern.permute.xlu0 0
    %647 = vperm.xlu0 %646, %v569
    %v648 = vpop.permute.xlu0 %647
    %651 = vset.pattern.permute.xlu0 0
    %652 = vperm.xlu0 %651, %v570
    %v653 = vpop.permute.xlu0 %652
    %656 = vset.pattern.permute.xlu0 0
    %657 = vperm.xlu0 %656, %v571
    %v658 = vpop.permute.xlu0 %657
    %661 = vset.pattern.permute.xlu0 0
    %662 = vperm.xlu0 %661, %v572
    %v663 = vpop.permute.xlu0 %662
    %666 = vset.pattern.permute.xlu0 0
    %667 = vperm.xlu0 %666, %v573
    %v668 = vpop.permute.xlu0 %667
    %671 = vset.pattern.permute.xlu0 0
    %672 = vperm.xlu0 %671, %v574
    %v673 = vpop.permute.xlu0 %672
    %676 = vset.pattern.permute.xlu0 0
    %677 = vperm.xlu0 %676, %v575
    %v678 = vpop.permute.xlu0 %677
    %681 = vset.pattern.permute.xlu0 0
    %682 = vperm.xlu0 %681, %v576
    %v683 = vpop.permute.xlu0 %682
    %686 = vset.pattern.permute.xlu0 0
    %687 = vperm.xlu0 %686, %v577
    %v688 = vpop.permute.xlu0 %687
    %691 = vset.pattern.permute.xlu0 0
    %692 = vperm.xlu0 %691, %v578
    %v693 = vpop.permute.xlu0 %692
    %696 = vset.pattern.permute.xlu0 0
    %697 = vperm.xlu0 %696, %v579
    %v698 = vpop.permute.xlu0 %697
    %701 = vset.pattern.permute.xlu0 0
    %702 = vperm.xlu0 %701, %v580
    %v703 = vpop.permute.xlu0 %702
    %706 = vset.pattern.permute.xlu0 0
    %707 = vperm.xlu0 %706, %v581
    %v708 = vpop.permute.xlu0 %707
    %711 = vset.pattern.permute.xlu0 0
    %712 = vperm.xlu0 %711, %v582
    %v713 = vpop.permute.xlu0 %712
    %716 = vset.pattern.permute.xlu0 0
    %717 = vperm.xlu0 %716, %v583
    %v718 = vpop.permute.xlu0 %717
    %721 = vset.pattern.permute.xlu0 0
    %722 = vperm.xlu0 %721, %v584
    %v723 = vpop.permute.xlu0 %722
    %726 = vset.pattern.permute.xlu0 0
    %727 = vperm.xlu0 %726, %v585
    %v728 = vpop.permute.xlu0 %727
    %731 = vset.pattern.permute.xlu0 0
    %732 = vperm.xlu0 %731, %v586
    %v733 = vpop.permute.xlu0 %732
    %736 = vset.pattern.permute.xlu0 0
    %737 = vperm.xlu0 %736, %v587
    %v738 = vpop.permute.xlu0 %737
    %741 = vset.pattern.permute.xlu0 0
    %742 = vperm.xlu0 %741, %v588
    %v743 = vpop.permute.xlu0 %742
    %746 = vset.pattern.permute.xlu0 0
    %747 = vperm.xlu0 %746, %v589
    %v748 = vpop.permute.xlu0 %747
    %751 = vset.pattern.permute.xlu0 0
    %752 = vperm.xlu0 %751, %v590
    %v753 = vpop.permute.xlu0 %752
    %756 = vset.pattern.permute.xlu0 0
    %757 = vperm.xlu0 %756, %v591
    %v758 = vpop.permute.xlu0 %757
    %761 = vset.pattern.permute.xlu0 0
    %762 = vperm.xlu0 %761, %v592
    %v763 = vpop.permute.xlu0 %762
    %766 = vset.pattern.permute.xlu0 0
    %767 = vperm.xlu0 %766, %v593
    %v768 = vpop.permute.xlu0 %767
    %771 = vset.pattern.permute.xlu0 0
    %772 = vperm.xlu0 %771, %v594
    %v773 = vpop.permute.xlu0 %772
    %776 = vset.pattern.permute.xlu0 0
    %777 = vperm.xlu0 %776, %v595
    %v778 = vpop.permute.xlu0 %777
    %781 = vset.pattern.permute.xlu0 0
    %782 = vperm.xlu0 %781, %v596
    %v783 = vpop.permute.xlu0 %782
    %786 = vset.pattern.permute.xlu0 0
    %787 = vperm.xlu0 %786, %v597
    %v788 = vpop.permute.xlu0 %787
    %791 = vset.pattern.permute.xlu0 0
    %792 = vperm.xlu0 %791, %v598
    %v793 = vpop.permute.xlu0 %792
    %796 = vset.pattern.permute.xlu0 0
    %797 = vperm.xlu0 %796, %v599
    %v798 = vpop.permute.xlu0 %797
    %801 = vset.pattern.permute.xlu0 0
    %802 = vperm.xlu0 %801, %v600
    %v803 = vpop.permute.xlu0 %802
    %806 = vset.pattern.permute.xlu0 0
    %807 = vperm.xlu0 %806, %v601
    %v808 = vpop.permute.xlu0 %807
    %811 = vset.pattern.permute.xlu0 0
    %812 = vperm.xlu0 %811, %v602
    %v813 = vpop.permute.xlu0 %812
    %816 = vset.pattern.permute.xlu0 0
    %817 = vperm.xlu0 %816, %v603
    %v818 = vpop.permute.xlu0 %817
    %821 = vset.pattern.permute.xlu0 0
    %822 = vperm.xlu0 %821, %v604
    %v823 = vpop.permute.xlu0 %822
    %826 = vset.pattern.permute.xlu0 0
    %827 = vperm.xlu0 %826, %v605
    %v828 = vpop.permute.xlu0 %827
    %831 = vset.pattern.permute.xlu0 0
    %832 = vperm.xlu0 %831, %v606
    %v833 = vpop.permute.xlu0 %832
    %836 = vset.pattern.permute.xlu0 0
    %837 = vperm.xlu0 %836, %v607
    %v838 = vpop.permute.xlu0 %837
    %841 = vset.pattern.permute.xlu0 0
    %842 = vperm.xlu0 %841, %v608
    %v843 = vpop.permute.xlu0 %842
    %846 = vset.pattern.permute.xlu0 0
    %847 = vperm.xlu0 %846, %v609
    %v848 = vpop.permute.xlu0 %847
    %851 = vset.pattern.permute.xlu0 0
    %852 = vperm.xlu0 %851, %v610
    %v853 = vpop.permute.xlu0 %852
    %856 = vset.pattern.permute.xlu0 0
    %857 = vperm.xlu0 %856, %v611
    %v858 = vpop.permute.xlu0 %857
    %861 = vset.pattern.permute.xlu0 0
    %862 = vperm.xlu0 %861, %v612
    %v863 = vpop.permute.xlu0 %862
    %866 = vset.pattern.permute.xlu0 0
    %867 = vperm.xlu0 %866, %v613
    %v868 = vpop.permute.xlu0 %867
    %871 = vset.pattern.permute.xlu0 0
    %872 = vperm.xlu0 %871, %v614
    %v873 = vpop.permute.xlu0 %872
    %876 = vset.pattern.permute.xlu0 0
    %877 = vperm.xlu0 %876, %v615
    %v878 = vpop.permute.xlu0 %877
    %881 = vset.pattern.permute.xlu0 0
    %882 = vperm.xlu0 %881, %v616
    %v883 = vpop.permute.xlu0 %882
    %886 = vset.pattern.permute.xlu0 0
    %887 = vperm.xlu0 %886, %v617
    %v888 = vpop.permute.xlu0 %887
    %891 = vset.pattern.permute.xlu0 0
    %892 = vperm.xlu0 %891, %v618
    %v893 = vpop.permute.xlu0 %892
    %896 = vset.pattern.permute.xlu0 0
    %897 = vperm.xlu0 %896, %v619
    %v898 = vpop.permute.xlu0 %897
    %901 = vset.pattern.permute.xlu0 0
    %902 = vperm.xlu0 %901, %v620
    %v903 = vpop.permute.xlu0 %902
    %906 = vset.pattern.permute.xlu0 0
    %907 = vperm.xlu0 %906, %v621
    %v908 = vpop.permute.xlu0 %907
    %911 = vset.pattern.permute.xlu0 0
    %912 = vperm.xlu0 %911, %v622
    %v913 = vpop.permute.xlu0 %912
    %916 = vset.pattern.permute.xlu0 0
    %917 = vperm.xlu0 %916, %v623
    %v918 = vpop.permute.xlu0 %917
    %921 = vset.pattern.permute.xlu0 0
    %922 = vperm.xlu0 %921, %v624
    %v923 = vpop.permute.xlu0 %922
    %926 = vset.pattern.permute.xlu0 0
    %927 = vperm.xlu0 %926, %v625
    %v928 = vpop.permute.xlu0 %927
    %931 = vset.pattern.permute.xlu0 0
    %932 = vperm.xlu0 %931, %v626
    %v933 = vpop.permute.xlu0 %932
    %936 = vset.pattern.permute.xlu0 0
    %937 = vperm.xlu0 %936, %v627
    %v938 = vpop.permute.xlu0 %937
    %941 = vset.pattern.permute.xlu0 0
    %942 = vperm.xlu0 %941, %v628
    %v943 = vpop.permute.xlu0 %942
    %946 = vset.pattern.permute.xlu0 0
    %947 = vperm.xlu0 %946, %v629
    %v948 = vpop.permute.xlu0 %947
    %v950 = vlaneseq
    %v951 = vshrl.u32 %v950, 7
    %v952 = vsub.s32 1, %v951
    %v953 = vrot.slane %v40, %v952
    %v954 = vmul.f32 %v633, %v953
    %v955 = vmul.f32 %v638, %v953
    %v956 = vmul.f32 %v643, %v953
    %v957 = vmul.f32 %v648, %v953
    %v958 = vmul.f32 %v653, %v953
    %v959 = vmul.f32 %v658, %v953
    %v960 = vmul.f32 %v663, %v953
    %v961 = vmul.f32 %v668, %v953
    %v962 = vmul.f32 %v673, %v953
    %v963 = vmul.f32 %v678, %v953
    %v964 = vmul.f32 %v683, %v953
    %v965 = vmul.f32 %v688, %v953
    %v966 = vmul.f32 %v693, %v953
    %v967 = vmul.f32 %v698, %v953
    %v968 = vmul.f32 %v703, %v953
    %v969 = vmul.f32 %v708, %v953
    %v970 = vmul.f32 %v713, %v953
    %v971 = vmul.f32 %v718, %v953
    %v972 = vmul.f32 %v723, %v953
    %v973 = vmul.f32 %v728, %v953
    %v974 = vmul.f32 %v733, %v953
    %v975 = vmul.f32 %v738, %v953
    %v976 = vmul.f32 %v743, %v953
    %v977 = vmul.f32 %v748, %v953
    %v978 = vmul.f32 %v753, %v953
    %v979 = vmul.f32 %v758, %v953
    %v980 = vmul.f32 %v763, %v953
    %v981 = vmul.f32 %v768, %v953
    %v982 = vmul.f32 %v773, %v953
    %v983 = vmul.f32 %v778, %v953
    %v984 = vmul.f32 %v783, %v953
    %v985 = vmul.f32 %v788, %v953
    %v986 = vmul.f32 %v793, %v953
    %v987 = vmul.f32 %v798, %v953
    %v988 = vmul.f32 %v803, %v953
    %v989 = vmul.f32 %v808, %v953
    %v990 = vmul.f32 %v813, %v953
    %v991 = vmul.f32 %v818, %v953
    %v992 = vmul.f32 %v823, %v953
    %v993 = vmul.f32 %v828, %v953
    %v994 = vmul.f32 %v833, %v953
    %v995 = vmul.f32 %v838, %v953
    %v996 = vmul.f32 %v843, %v953
    %v997 = vmul.f32 %v848, %v953
    %v998 = vmul.f32 %v853, %v953
    %v999 = vmul.f32 %v858, %v953
    %v1000 = vmul.f32 %v863, %v953
    %v1001 = vmul.f32 %v868, %v953
    %v1002 = vmul.f32 %v873, %v953
    %v1003 = vmul.f32 %v878, %v953
    %v1004 = vmul.f32 %v883, %v953
    %v1005 = vmul.f32 %v888, %v953
    %v1006 = vmul.f32 %v893, %v953
    %v1007 = vmul.f32 %v898, %v953
    %v1008 = vmul.f32 %v903, %v953
    %v1009 = vmul.f32 %v908, %v953
    %v1010 = vmul.f32 %v913, %v953
    %v1011 = vmul.f32 %v918, %v953
    %v1012 = vmul.f32 %v923, %v953
    %v1013 = vmul.f32 %v928, %v953
    %v1014 = vmul.f32 %v933, %v953
    %v1015 = vmul.f32 %v938, %v953
    %v1016 = vmul.f32 %v943, %v953
    %v1017 = vmul.f32 %v948, %v953
    %v1018 = vadd.f32 %v502, %v954
    %v1019 = vadd.f32 %v503, %v955
    %v1020 = vadd.f32 %v504, %v956
    %v1021 = vadd.f32 %v505, %v957
    %v1022 = vadd.f32 %v506, %v958
    %v1023 = vadd.f32 %v507, %v959
    %v1024 = vadd.f32 %v508, %v960
    %v1025 = vadd.f32 %v509, %v961
    %v1026 = vadd.f32 %v510, %v962
    %v1027 = vadd.f32 %v511, %v963
    %v1028 = vadd.f32 %v512, %v964
    %v1029 = vadd.f32 %v513, %v965
    %v1030 = vadd.f32 %v514, %v966
    %v1031 = vadd.f32 %v515, %v967
    %v1032 = vadd.f32 %v516, %v968
    %v1033 = vadd.f32 %v517, %v969
    %v1034 = vadd.f32 %v518, %v970
    %v1035 = vadd.f32 %v519, %v971
    %v1036 = vadd.f32 %v520, %v972
    %v1037 = vadd.f32 %v521, %v973
    %v1038 = vadd.f32 %v522, %v974
    %v1039 = vadd.f32 %v523, %v975
    %v1040 = vadd.f32 %v524, %v976
    %v1041 = vadd.f32 %v525, %v977
    %v1042 = vadd.f32 %v526, %v978
    %v1043 = vadd.f32 %v527, %v979
    %v1044 = vadd.f32 %v528, %v980
    %v1045 = vadd.f32 %v529, %v981
    %v1046 = vadd.f32 %v530, %v982
    %v1047 = vadd.f32 %v531, %v983
    %v1048 = vadd.f32 %v532, %v984
    %v1049 = vadd.f32 %v533, %v985
    %v1050 = vadd.f32 %v534, %v986
    %v1051 = vadd.f32 %v535, %v987
    %v1052 = vadd.f32 %v536, %v988
    %v1053 = vadd.f32 %v537, %v989
    %v1054 = vadd.f32 %v538, %v990
    %v1055 = vadd.f32 %v539, %v991
    %v1056 = vadd.f32 %v540, %v992
    %v1057 = vadd.f32 %v541, %v993
    %v1058 = vadd.f32 %v542, %v994
    %v1059 = vadd.f32 %v543, %v995
    %v1060 = vadd.f32 %v544, %v996
    %v1061 = vadd.f32 %v545, %v997
    %v1062 = vadd.f32 %v546, %v998
    %v1063 = vadd.f32 %v547, %v999
    %v1064 = vadd.f32 %v548, %v1000
    %v1065 = vadd.f32 %v549, %v1001
    %v1066 = vadd.f32 %v550, %v1002
    %v1067 = vadd.f32 %v551, %v1003
    %v1068 = vadd.f32 %v552, %v1004
    %v1069 = vadd.f32 %v553, %v1005
    %v1070 = vadd.f32 %v554, %v1006
    %v1071 = vadd.f32 %v555, %v1007
    %v1072 = vadd.f32 %v556, %v1008
    %v1073 = vadd.f32 %v557, %v1009
    %v1074 = vadd.f32 %v558, %v1010
    %v1075 = vadd.f32 %v559, %v1011
    %v1076 = vadd.f32 %v560, %v1012
    %v1077 = vadd.f32 %v561, %v1013
    %v1078 = vadd.f32 %v562, %v1014
    %v1079 = vadd.f32 %v563, %v1015
    %v1080 = vadd.f32 %v564, %v1016
    %v1081 = vadd.f32 %v565, %v1017
    %v1082 = vld [vmem:[%s0 + $0x2] sm:$0xff]
    %v1083 = vld [vmem:[%s0 + $0xa] sm:$0xff]
    %v1084 = vld [vmem:[%s0 + $0x1a] sm:$0xff]
    %v1085 = vld [vmem:[%s0 + $0x22] sm:$0xff]
    %v1086 = vld [vmem:[%s0 + $0x32] sm:$0xff]
    %v1087 = vld [vmem:[%s0 + $0x3a] sm:$0xff]
    %v1088 = vld [vmem:[%s0 + $0x4a] sm:$0xff]
    %v1089 = vld [vmem:[%s0 + $0x52] sm:$0xff]
    %v1090 = vld [vmem:[%s0 + $0x62] sm:$0xff]
    %v1091 = vld [vmem:[%s0 + $0x6a] sm:$0xff]
    %v1092 = vld [vmem:[%s0 + $0x7a] sm:$0xff]
    %v1093 = vld [vmem:[%s0 + $0x82] sm:$0xff]
    %v1094 = vld [vmem:[%s0 + $0x92] sm:$0xff]
    %v1095 = vld [vmem:[%s0 + $0x9a] sm:$0xff]
    %v1096 = vld [vmem:[%s0 + $0xaa] sm:$0xff]
    %v1097 = vld [vmem:[%s0 + $0xb2] sm:$0xff]
    %v1098 = vld [vmem:[%s0 + $0xc2] sm:$0xff]
    %v1099 = vld [vmem:[%s0 + $0xca] sm:$0xff]
    %v1100 = vld [vmem:[%s0 + $0xda] sm:$0xff]
    %v1101 = vld [vmem:[%s0 + $0xe2] sm:$0xff]
    %v1102 = vld [vmem:[%s0 + $0xf2] sm:$0xff]
    %v1103 = vld [vmem:[%s0 + $0xfa] sm:$0xff]
    %v1104 = vld [vmem:[%s0 + $0x10a] sm:$0xff]
    %v1105 = vld [vmem:[%s0 + $0x112] sm:$0xff]
    %v1106 = vld [vmem:[%s0 + $0x122] sm:$0xff]
    %v1107 = vld [vmem:[%s0 + $0x12a] sm:$0xff]
    %v1108 = vld [vmem:[%s0 + $0x13a] sm:$0xff]
    %v1109 = vld [vmem:[%s0 + $0x142] sm:$0xff]
    %v1110 = vld [vmem:[%s0 + $0x152] sm:$0xff]
    %v1111 = vld [vmem:[%s0 + $0x15a] sm:$0xff]
    %v1112 = vld [vmem:[%s0 + $0x16a] sm:$0xff]
    %v1113 = vld [vmem:[%s0 + $0x172] sm:$0xff]
    %v1114 = vld [vmem:[%s0 + $0x1b2] sm:$0xff]
    %v1115 = vld [vmem:[%s0 + $0x1ba] sm:$0xff]
    %v1116 = vld [vmem:[%s0 + $0x1ca] sm:$0xff]
    %v1117 = vld [vmem:[%s0 + $0x1d2] sm:$0xff]
    %v1118 = vld [vmem:[%s0 + $0x1e2] sm:$0xff]
    %v1119 = vld [vmem:[%s0 + $0x1ea] sm:$0xff]
    %v1120 = vld [vmem:[%s0 + $0x1fa] sm:$0xff]
    %v1121 = vld [vmem:[%s0 + $0x202] sm:$0xff]
    %v1122 = vld [vmem:[%s0 + $0x212] sm:$0xff]
    %v1123 = vld [vmem:[%s0 + $0x21a] sm:$0xff]
    %v1124 = vld [vmem:[%s0 + $0x22a] sm:$0xff]
    %v1125 = vld [vmem:[%s0 + $0x232] sm:$0xff]
    %v1126 = vld [vmem:[%s0 + $0x242] sm:$0xff]
    %v1127 = vld [vmem:[%s0 + $0x24a] sm:$0xff]
    %v1128 = vld [vmem:[%s0 + $0x25a] sm:$0xff]
    %v1129 = vld [vmem:[%s0 + $0x262] sm:$0xff]
    %v1130 = vld [vmem:[%s0 + $0x272] sm:$0xff]
    %v1131 = vld [vmem:[%s0 + $0x27a] sm:$0xff]
    %v1132 = vld [vmem:[%s0 + $0x28a] sm:$0xff]
    %v1133 = vld [vmem:[%s0 + $0x292] sm:$0xff]
    %v1134 = vld [vmem:[%s0 + $0x2a2] sm:$0xff]
    %v1135 = vld [vmem:[%s0 + $0x2aa] sm:$0xff]
    %v1136 = vld [vmem:[%s0 + $0x2ba] sm:$0xff]
    %v1137 = vld [vmem:[%s0 + $0x2c2] sm:$0xff]
    %v1138 = vld [vmem:[%s0 + $0x2d2] sm:$0xff]
    %v1139 = vld [vmem:[%s0 + $0x2da] sm:$0xff]
    %v1140 = vld [vmem:[%s0 + $0x2ea] sm:$0xff]
    %v1141 = vld [vmem:[%s0 + $0x2f2] sm:$0xff]
    %v1142 = vld [vmem:[%s0 + $0x302] sm:$0xff]
    %v1143 = vld [vmem:[%s0 + $0x30a] sm:$0xff]
    %v1144 = vld [vmem:[%s0 + $0x31a] sm:$0xff]
    %v1145 = vld [vmem:[%s0 + $0x322] sm:$0xff]
    %1147 = vset.pattern.permute.xlu0 0
    %1148 = vperm.xlu0 %1147, %v1082
    %v1149 = vpop.permute.xlu0 %1148
    %1152 = vset.pattern.permute.xlu0 0
    %1153 = vperm.xlu0 %1152, %v1083
    %v1154 = vpop.permute.xlu0 %1153
    %1157 = vset.pattern.permute.xlu0 0
    %1158 = vperm.xlu0 %1157, %v1084
    %v1159 = vpop.permute.xlu0 %1158
    %1162 = vset.pattern.permute.xlu0 0
    %1163 = vperm.xlu0 %1162, %v1085
    %v1164 = vpop.permute.xlu0 %1163
    %1167 = vset.pattern.permute.xlu0 0
    %1168 = vperm.xlu0 %1167, %v1086
    %v1169 = vpop.permute.xlu0 %1168
    %1172 = vset.pattern.permute.xlu0 0
    %1173 = vperm.xlu0 %1172, %v1087
    %v1174 = vpop.permute.xlu0 %1173
    %1177 = vset.pattern.permute.xlu0 0
    %1178 = vperm.xlu0 %1177, %v1088
    %v1179 = vpop.permute.xlu0 %1178
    %1182 = vset.pattern.permute.xlu0 0
    %1183 = vperm.xlu0 %1182, %v1089
    %v1184 = vpop.permute.xlu0 %1183
    %1187 = vset.pattern.permute.xlu0 0
    %1188 = vperm.xlu0 %1187, %v1090
    %v1189 = vpop.permute.xlu0 %1188
    %1192 = vset.pattern.permute.xlu0 0
    %1193 = vperm.xlu0 %1192, %v1091
    %v1194 = vpop.permute.xlu0 %1193
    %1197 = vset.pattern.permute.xlu0 0
    %1198 = vperm.xlu0 %1197, %v1092
    %v1199 = vpop.permute.xlu0 %1198
    %1202 = vset.pattern.permute.xlu0 0
    %1203 = vperm.xlu0 %1202, %v1093
    %v1204 = vpop.permute.xlu0 %1203
    %1207 = vset.pattern.permute.xlu0 0
    %1208 = vperm.xlu0 %1207, %v1094
    %v1209 = vpop.permute.xlu0 %1208
    %1212 = vset.pattern.permute.xlu0 0
    %1213 = vperm.xlu0 %1212, %v1095
    %v1214 = vpop.permute.xlu0 %1213
    %1217 = vset.pattern.permute.xlu0 0
    %1218 = vperm.xlu0 %1217, %v1096
    %v1219 = vpop.permute.xlu0 %1218
    %1222 = vset.pattern.permute.xlu0 0
    %1223 = vperm.xlu0 %1222, %v1097
    %v1224 = vpop.permute.xlu0 %1223
    %1227 = vset.pattern.permute.xlu0 0
    %1228 = vperm.xlu0 %1227, %v1098
    %v1229 = vpop.permute.xlu0 %1228
    %1232 = vset.pattern.permute.xlu0 0
    %1233 = vperm.xlu0 %1232, %v1099
    %v1234 = vpop.permute.xlu0 %1233
    %1237 = vset.pattern.permute.xlu0 0
    %1238 = vperm.xlu0 %1237, %v1100
    %v1239 = vpop.permute.xlu0 %1238
    %1242 = vset.pattern.permute.xlu0 0
    %1243 = vperm.xlu0 %1242, %v1101
    %v1244 = vpop.permute.xlu0 %1243
    %1247 = vset.pattern.permute.xlu0 0
    %1248 = vperm.xlu0 %1247, %v1102
    %v1249 = vpop.permute.xlu0 %1248
    %1252 = vset.pattern.permute.xlu0 0
    %1253 = vperm.xlu0 %1252, %v1103
    %v1254 = vpop.permute.xlu0 %1253
    %1257 = vset.pattern.permute.xlu0 0
    %1258 = vperm.xlu0 %1257, %v1104
    %v1259 = vpop.permute.xlu0 %1258
    %1262 = vset.pattern.permute.xlu0 0
    %1263 = vperm.xlu0 %1262, %v1105
    %v1264 = vpop.permute.xlu0 %1263
    %1267 = vset.pattern.permute.xlu0 0
    %1268 = vperm.xlu0 %1267, %v1106
    %v1269 = vpop.permute.xlu0 %1268
    %1272 = vset.pattern.permute.xlu0 0
    %1273 = vperm.xlu0 %1272, %v1107
    %v1274 = vpop.permute.xlu0 %1273
    %1277 = vset.pattern.permute.xlu0 0
    %1278 = vperm.xlu0 %1277, %v1108
    %v1279 = vpop.permute.xlu0 %1278
    %1282 = vset.pattern.permute.xlu0 0
    %1283 = vperm.xlu0 %1282, %v1109
    %v1284 = vpop.permute.xlu0 %1283
    %1287 = vset.pattern.permute.xlu0 0
    %1288 = vperm.xlu0 %1287, %v1110
    %v1289 = vpop.permute.xlu0 %1288
    %1292 = vset.pattern.permute.xlu0 0
    %1293 = vperm.xlu0 %1292, %v1111
    %v1294 = vpop.permute.xlu0 %1293
    %1297 = vset.pattern.permute.xlu0 0
    %1298 = vperm.xlu0 %1297, %v1112
    %v1299 = vpop.permute.xlu0 %1298
    %1302 = vset.pattern.permute.xlu0 0
    %1303 = vperm.xlu0 %1302, %v1113
    %v1304 = vpop.permute.xlu0 %1303
    %1307 = vset.pattern.permute.xlu0 0
    %1308 = vperm.xlu0 %1307, %v1114
    %v1309 = vpop.permute.xlu0 %1308
    %1312 = vset.pattern.permute.xlu0 0
    %1313 = vperm.xlu0 %1312, %v1115
    %v1314 = vpop.permute.xlu0 %1313
    %1317 = vset.pattern.permute.xlu0 0
    %1318 = vperm.xlu0 %1317, %v1116
    %v1319 = vpop.permute.xlu0 %1318
    %1322 = vset.pattern.permute.xlu0 0
    %1323 = vperm.xlu0 %1322, %v1117
    %v1324 = vpop.permute.xlu0 %1323
    %1327 = vset.pattern.permute.xlu0 0
    %1328 = vperm.xlu0 %1327, %v1118
    %v1329 = vpop.permute.xlu0 %1328
    %1332 = vset.pattern.permute.xlu0 0
    %1333 = vperm.xlu0 %1332, %v1119
    %v1334 = vpop.permute.xlu0 %1333
    %1337 = vset.pattern.permute.xlu0 0
    %1338 = vperm.xlu0 %1337, %v1120
    %v1339 = vpop.permute.xlu0 %1338
    %1342 = vset.pattern.permute.xlu0 0
    %1343 = vperm.xlu0 %1342, %v1121
    %v1344 = vpop.permute.xlu0 %1343
    %1347 = vset.pattern.permute.xlu0 0
    %1348 = vperm.xlu0 %1347, %v1122
    %v1349 = vpop.permute.xlu0 %1348
    %1352 = vset.pattern.permute.xlu0 0
    %1353 = vperm.xlu0 %1352, %v1123
    %v1354 = vpop.permute.xlu0 %1353
    %1357 = vset.pattern.permute.xlu0 0
    %1358 = vperm.xlu0 %1357, %v1124
    %v1359 = vpop.permute.xlu0 %1358
    %1362 = vset.pattern.permute.xlu0 0
    %1363 = vperm.xlu0 %1362, %v1125
    %v1364 = vpop.permute.xlu0 %1363
    %1367 = vset.pattern.permute.xlu0 0
    %1368 = vperm.xlu0 %1367, %v1126
    %v1369 = vpop.permute.xlu0 %1368
    %1372 = vset.pattern.permute.xlu0 0
    %1373 = vperm.xlu0 %1372, %v1127
    %v1374 = vpop.permute.xlu0 %1373
    %1377 = vset.pattern.permute.xlu0 0
    %1378 = vperm.xlu0 %1377, %v1128
    %v1379 = vpop.permute.xlu0 %1378
    %1382 = vset.pattern.permute.xlu0 0
    %1383 = vperm.xlu0 %1382, %v1129
    %v1384 = vpop.permute.xlu0 %1383
    %1387 = vset.pattern.permute.xlu0 0
    %1388 = vperm.xlu0 %1387, %v1130
    %v1389 = vpop.permute.xlu0 %1388
    %1392 = vset.pattern.permute.xlu0 0
    %1393 = vperm.xlu0 %1392, %v1131
    %v1394 = vpop.permute.xlu0 %1393
    %1397 = vset.pattern.permute.xlu0 0
    %1398 = vperm.xlu0 %1397, %v1132
    %v1399 = vpop.permute.xlu0 %1398
    %1402 = vset.pattern.permute.xlu0 0
    %1403 = vperm.xlu0 %1402, %v1133
    %v1404 = vpop.permute.xlu0 %1403
    %1407 = vset.pattern.permute.xlu0 0
    %1408 = vperm.xlu0 %1407, %v1134
    %v1409 = vpop.permute.xlu0 %1408
    %1412 = vset.pattern.permute.xlu0 0
    %1413 = vperm.xlu0 %1412, %v1135
    %v1414 = vpop.permute.xlu0 %1413
    %1417 = vset.pattern.permute.xlu0 0
    %1418 = vperm.xlu0 %1417, %v1136
    %v1419 = vpop.permute.xlu0 %1418
    %1422 = vset.pattern.permute.xlu0 0
    %1423 = vperm.xlu0 %1422, %v1137
    %v1424 = vpop.permute.xlu0 %1423
    %1427 = vset.pattern.permute.xlu0 0
    %1428 = vperm.xlu0 %1427, %v1138
    %v1429 = vpop.permute.xlu0 %1428
    %1432 = vset.pattern.permute.xlu0 0
    %1433 = vperm.xlu0 %1432, %v1139
    %v1434 = vpop.permute.xlu0 %1433
    %1437 = vset.pattern.permute.xlu0 0
    %1438 = vperm.xlu0 %1437, %v1140
    %v1439 = vpop.permute.xlu0 %1438
    %1442 = vset.pattern.permute.xlu0 0
    %1443 = vperm.xlu0 %1442, %v1141
    %v1444 = vpop.permute.xlu0 %1443
    %1447 = vset.pattern.permute.xlu0 0
    %1448 = vperm.xlu0 %1447, %v1142
    %v1449 = vpop.permute.xlu0 %1448
    %1452 = vset.pattern.permute.xlu0 0
    %1453 = vperm.xlu0 %1452, %v1143
    %v1454 = vpop.permute.xlu0 %1453
    %1457 = vset.pattern.permute.xlu0 0
    %1458 = vperm.xlu0 %1457, %v1144
    %v1459 = vpop.permute.xlu0 %1458
    %1462 = vset.pattern.permute.xlu0 0
    %1463 = vperm.xlu0 %1462, %v1145
    %v1464 = vpop.permute.xlu0 %1463
    %v1466 = vlaneseq
    %v1467 = vshrl.u32 %v1466, 7
    %v1468 = vsub.s32 2, %v1467
    %v1469 = vrot.slane %v40, %v1468
    %v1470 = vmul.f32 %v1149, %v1469
    %v1471 = vmul.f32 %v1154, %v1469
    %v1472 = vmul.f32 %v1159, %v1469
    %v1473 = vmul.f32 %v1164, %v1469
    %v1474 = vmul.f32 %v1169, %v1469
    %v1475 = vmul.f32 %v1174, %v1469
    %v1476 = vmul.f32 %v1179, %v1469
    %v1477 = vmul.f32 %v1184, %v1469
    %v1478 = vmul.f32 %v1189, %v1469
    %v1479 = vmul.f32 %v1194, %v1469
    %v1480 = vmul.f32 %v1199, %v1469
    %v1481 = vmul.f32 %v1204, %v1469
    %v1482 = vmul.f32 %v1209, %v1469
    %v1483 = vmul.f32 %v1214, %v1469
    %v1484 = vmul.f32 %v1219, %v1469
    %v1485 = vmul.f32 %v1224, %v1469
    %v1486 = vmul.f32 %v1229, %v1469
    %v1487 = vmul.f32 %v1234, %v1469
    %v1488 = vmul.f32 %v1239, %v1469
    %v1489 = vmul.f32 %v1244, %v1469
    %v1490 = vmul.f32 %v1249, %v1469
    %v1491 = vmul.f32 %v1254, %v1469
    %v1492 = vmul.f32 %v1259, %v1469
    %v1493 = vmul.f32 %v1264, %v1469
    %v1494 = vmul.f32 %v1269, %v1469
    %v1495 = vmul.f32 %v1274, %v1469
    %v1496 = vmul.f32 %v1279, %v1469
    %v1497 = vmul.f32 %v1284, %v1469
    %v1498 = vmul.f32 %v1289, %v1469
    %v1499 = vmul.f32 %v1294, %v1469
    %v1500 = vmul.f32 %v1299, %v1469
    %v1501 = vmul.f32 %v1304, %v1469
    %v1502 = vmul.f32 %v1309, %v1469
    %v1503 = vmul.f32 %v1314, %v1469
    %v1504 = vmul.f32 %v1319, %v1469
    %v1505 = vmul.f32 %v1324, %v1469
    %v1506 = vmul.f32 %v1329, %v1469
    %v1507 = vmul.f32 %v1334, %v1469
    %v1508 = vmul.f32 %v1339, %v1469
    %v1509 = vmul.f32 %v1344, %v1469
    %v1510 = vmul.f32 %v1349, %v1469
    %v1511 = vmul.f32 %v1354, %v1469
    %v1512 = vmul.f32 %v1359, %v1469
    %v1513 = vmul.f32 %v1364, %v1469
    %v1514 = vmul.f32 %v1369, %v1469
    %v1515 = vmul.f32 %v1374, %v1469
    %v1516 = vmul.f32 %v1379, %v1469
    %v1517 = vmul.f32 %v1384, %v1469
    %v1518 = vmul.f32 %v1389, %v1469
    %v1519 = vmul.f32 %v1394, %v1469
    %v1520 = vmul.f32 %v1399, %v1469
    %v1521 = vmul.f32 %v1404, %v1469
    %v1522 = vmul.f32 %v1409, %v1469
    %v1523 = vmul.f32 %v1414, %v1469
    %v1524 = vmul.f32 %v1419, %v1469
    %v1525 = vmul.f32 %v1424, %v1469
    %v1526 = vmul.f32 %v1429, %v1469
    %v1527 = vmul.f32 %v1434, %v1469
    %v1528 = vmul.f32 %v1439, %v1469
    %v1529 = vmul.f32 %v1444, %v1469
    %v1530 = vmul.f32 %v1449, %v1469
    %v1531 = vmul.f32 %v1454, %v1469
    %v1532 = vmul.f32 %v1459, %v1469
    %v1533 = vmul.f32 %v1464, %v1469
    %v1534 = vadd.f32 %v1018, %v1470
    %v1535 = vadd.f32 %v1019, %v1471
    %v1536 = vadd.f32 %v1020, %v1472
    %v1537 = vadd.f32 %v1021, %v1473
    %v1538 = vadd.f32 %v1022, %v1474
    %v1539 = vadd.f32 %v1023, %v1475
    %v1540 = vadd.f32 %v1024, %v1476
    %v1541 = vadd.f32 %v1025, %v1477
    %v1542 = vadd.f32 %v1026, %v1478
    %v1543 = vadd.f32 %v1027, %v1479
    %v1544 = vadd.f32 %v1028, %v1480
    %v1545 = vadd.f32 %v1029, %v1481
    %v1546 = vadd.f32 %v1030, %v1482
    %v1547 = vadd.f32 %v1031, %v1483
    %v1548 = vadd.f32 %v1032, %v1484
    %v1549 = vadd.f32 %v1033, %v1485
    %v1550 = vadd.f32 %v1034, %v1486
    %v1551 = vadd.f32 %v1035, %v1487
    %v1552 = vadd.f32 %v1036, %v1488
    %v1553 = vadd.f32 %v1037, %v1489
    %v1554 = vadd.f32 %v1038, %v1490
    %v1555 = vadd.f32 %v1039, %v1491
    %v1556 = vadd.f32 %v1040, %v1492
    %v1557 = vadd.f32 %v1041, %v1493
    %v1558 = vadd.f32 %v1042, %v1494
    %v1559 = vadd.f32 %v1043, %v1495
    %v1560 = vadd.f32 %v1044, %v1496
    %v1561 = vadd.f32 %v1045, %v1497
    %v1562 = vadd.f32 %v1046, %v1498
    %v1563 = vadd.f32 %v1047, %v1499
    %v1564 = vadd.f32 %v1048, %v1500
    %v1565 = vadd.f32 %v1049, %v1501
    %v1566 = vadd.f32 %v1050, %v1502
    %v1567 = vadd.f32 %v1051, %v1503
    %v1568 = vadd.f32 %v1052, %v1504
    %v1569 = vadd.f32 %v1053, %v1505
    %v1570 = vadd.f32 %v1054, %v1506
    %v1571 = vadd.f32 %v1055, %v1507
    %v1572 = vadd.f32 %v1056, %v1508
    %v1573 = vadd.f32 %v1057, %v1509
    %v1574 = vadd.f32 %v1058, %v1510
    %v1575 = vadd.f32 %v1059, %v1511
    %v1576 = vadd.f32 %v1060, %v1512
    %v1577 = vadd.f32 %v1061, %v1513
    %v1578 = vadd.f32 %v1062, %v1514
    %v1579 = vadd.f32 %v1063, %v1515
    %v1580 = vadd.f32 %v1064, %v1516
    %v1581 = vadd.f32 %v1065, %v1517
    %v1582 = vadd.f32 %v1066, %v1518
    %v1583 = vadd.f32 %v1067, %v1519
    %v1584 = vadd.f32 %v1068, %v1520
    %v1585 = vadd.f32 %v1069, %v1521
    %v1586 = vadd.f32 %v1070, %v1522
    %v1587 = vadd.f32 %v1071, %v1523
    %v1588 = vadd.f32 %v1072, %v1524
    %v1589 = vadd.f32 %v1073, %v1525
    %v1590 = vadd.f32 %v1074, %v1526
    %v1591 = vadd.f32 %v1075, %v1527
    %v1592 = vadd.f32 %v1076, %v1528
    %v1593 = vadd.f32 %v1077, %v1529
    %v1594 = vadd.f32 %v1078, %v1530
    %v1595 = vadd.f32 %v1079, %v1531
    %v1596 = vadd.f32 %v1080, %v1532
    %v1597 = vadd.f32 %v1081, %v1533
    %s1598 = scalar_lea.vmem %s0, 24
    %v1599 = vld [vmem:[%s1598] sm:$0xff]
    %v1600 = vld [vmem:[%s1598 + $0x8] sm:$0xff]
    %v1601 = vld [vmem:[%s1598 + $0x18] sm:$0xff]
    %v1602 = vld [vmem:[%s1598 + $0x20] sm:$0xff]
    %v1603 = vld [vmem:[%s1598 + $0x30] sm:$0xff]
    %v1604 = vld [vmem:[%s1598 + $0x38] sm:$0xff]
    %v1605 = vld [vmem:[%s1598 + $0x48] sm:$0xff]
    %v1606 = vld [vmem:[%s1598 + $0x50] sm:$0xff]
    %v1607 = vld [vmem:[%s1598 + $0x60] sm:$0xff]
    %v1608 = vld [vmem:[%s1598 + $0x68] sm:$0xff]
    %v1609 = vld [vmem:[%s1598 + $0x78] sm:$0xff]
    %v1610 = vld [vmem:[%s1598 + $0x80] sm:$0xff]
    %v1611 = vld [vmem:[%s1598 + $0x90] sm:$0xff]
    %v1612 = vld [vmem:[%s1598 + $0x98] sm:$0xff]
    %v1613 = vld [vmem:[%s1598 + $0xa8] sm:$0xff]
    %v1614 = vld [vmem:[%s1598 + $0xb0] sm:$0xff]
    %v1615 = vld [vmem:[%s1598 + $0xc0] sm:$0xff]
    %v1616 = vld [vmem:[%s1598 + $0xc8] sm:$0xff]
    %v1617 = vld [vmem:[%s1598 + $0xd8] sm:$0xff]
    %v1618 = vld [vmem:[%s1598 + $0xe0] sm:$0xff]
    %v1619 = vld [vmem:[%s1598 + $0xf0] sm:$0xff]
    %v1620 = vld [vmem:[%s1598 + $0xf8] sm:$0xff]
    %v1621 = vld [vmem:[%s1598 + $0x108] sm:$0xff]
    %v1622 = vld [vmem:[%s1598 + $0x110] sm:$0xff]
    %v1623 = vld [vmem:[%s1598 + $0x120] sm:$0xff]
    %v1624 = vld [vmem:[%s1598 + $0x128] sm:$0xff]
    %v1625 = vld [vmem:[%s1598 + $0x138] sm:$0xff]
    %v1626 = vld [vmem:[%s1598 + $0x140] sm:$0xff]
    %v1627 = vld [vmem:[%s1598 + $0x150] sm:$0xff]
    %v1628 = vld [vmem:[%s1598 + $0x158] sm:$0xff]
    %v1629 = vld [vmem:[%s1598 + $0x168] sm:$0xff]
    %v1630 = vld [vmem:[%s1598 + $0x170] sm:$0xff]
    %v1631 = vld [vmem:[%s1598 + $0x1b0] sm:$0xff]
    %v1632 = vld [vmem:[%s1598 + $0x1b8] sm:$0xff]
    %v1633 = vld [vmem:[%s1598 + $0x1c8] sm:$0xff]
    %v1634 = vld [vmem:[%s1598 + $0x1d0] sm:$0xff]
    %v1635 = vld [vmem:[%s1598 + $0x1e0] sm:$0xff]
    %v1636 = vld [vmem:[%s1598 + $0x1e8] sm:$0xff]
    %v1637 = vld [vmem:[%s1598 + $0x1f8] sm:$0xff]
    %v1638 = vld [vmem:[%s1598 + $0x200] sm:$0xff]
    %v1639 = vld [vmem:[%s1598 + $0x210] sm:$0xff]
    %v1640 = vld [vmem:[%s1598 + $0x218] sm:$0xff]
    %v1641 = vld [vmem:[%s1598 + $0x228] sm:$0xff]
    %v1642 = vld [vmem:[%s1598 + $0x230] sm:$0xff]
    %v1643 = vld [vmem:[%s1598 + $0x240] sm:$0xff]
    %v1644 = vld [vmem:[%s1598 + $0x248] sm:$0xff]
    %v1645 = vld [vmem:[%s1598 + $0x258] sm:$0xff]
    %v1646 = vld [vmem:[%s1598 + $0x260] sm:$0xff]
    %v1647 = vld [vmem:[%s1598 + $0x270] sm:$0xff]
    %v1648 = vld [vmem:[%s1598 + $0x278] sm:$0xff]
    %v1649 = vld [vmem:[%s1598 + $0x288] sm:$0xff]
    %v1650 = vld [vmem:[%s1598 + $0x290] sm:$0xff]
    %v1651 = vld [vmem:[%s1598 + $0x2a0] sm:$0xff]
    %v1652 = vld [vmem:[%s1598 + $0x2a8] sm:$0xff]
    %v1653 = vld [vmem:[%s1598 + $0x2b8] sm:$0xff]
    %v1654 = vld [vmem:[%s1598 + $0x2c0] sm:$0xff]
    %v1655 = vld [vmem:[%s1598 + $0x2d0] sm:$0xff]
    %v1656 = vld [vmem:[%s1598 + $0x2d8] sm:$0xff]
    %v1657 = vld [vmem:[%s1598 + $0x2e8] sm:$0xff]
    %v1658 = vld [vmem:[%s1598 + $0x2f0] sm:$0xff]
    %v1659 = vld [vmem:[%s1598 + $0x300] sm:$0xff]
    %v1660 = vld [vmem:[%s1598 + $0x308] sm:$0xff]
    %v1661 = vld [vmem:[%s1598 + $0x318] sm:$0xff]
    %v1662 = vld [vmem:[%s1598 + $0x320] sm:$0xff]
    %1664 = vset.pattern.permute.xlu0 0
    %1665 = vperm.xlu0 %1664, %v1599
    %v1666 = vpop.permute.xlu0 %1665
    %1669 = vset.pattern.permute.xlu0 0
    %1670 = vperm.xlu0 %1669, %v1600
    %v1671 = vpop.permute.xlu0 %1670
    %1674 = vset.pattern.permute.xlu0 0
    %1675 = vperm.xlu0 %1674, %v1601
    %v1676 = vpop.permute.xlu0 %1675
    %1679 = vset.pattern.permute.xlu0 0
    %1680 = vperm.xlu0 %1679, %v1602
    %v1681 = vpop.permute.xlu0 %1680
    %1684 = vset.pattern.permute.xlu0 0
    %1685 = vperm.xlu0 %1684, %v1603
    %v1686 = vpop.permute.xlu0 %1685
    %1689 = vset.pattern.permute.xlu0 0
    %1690 = vperm.xlu0 %1689, %v1604
    %v1691 = vpop.permute.xlu0 %1690
    %1694 = vset.pattern.permute.xlu0 0
    %1695 = vperm.xlu0 %1694, %v1605
    %v1696 = vpop.permute.xlu0 %1695
    %1699 = vset.pattern.permute.xlu0 0
    %1700 = vperm.xlu0 %1699, %v1606
    %v1701 = vpop.permute.xlu0 %1700
    %1704 = vset.pattern.permute.xlu0 0
    %1705 = vperm.xlu0 %1704, %v1607
    %v1706 = vpop.permute.xlu0 %1705
    %1709 = vset.pattern.permute.xlu0 0
    %1710 = vperm.xlu0 %1709, %v1608
    %v1711 = vpop.permute.xlu0 %1710
    %1714 = vset.pattern.permute.xlu0 0
    %1715 = vperm.xlu0 %1714, %v1609
    %v1716 = vpop.permute.xlu0 %1715
    %1719 = vset.pattern.permute.xlu0 0
    %1720 = vperm.xlu0 %1719, %v1610
    %v1721 = vpop.permute.xlu0 %1720
    %1724 = vset.pattern.permute.xlu0 0
    %1725 = vperm.xlu0 %1724, %v1611
    %v1726 = vpop.permute.xlu0 %1725
    %1729 = vset.pattern.permute.xlu0 0
    %1730 = vperm.xlu0 %1729, %v1612
    %v1731 = vpop.permute.xlu0 %1730
    %1734 = vset.pattern.permute.xlu0 0
    %1735 = vperm.xlu0 %1734, %v1613
    %v1736 = vpop.permute.xlu0 %1735
    %1739 = vset.pattern.permute.xlu0 0
    %1740 = vperm.xlu0 %1739, %v1614
    %v1741 = vpop.permute.xlu0 %1740
    %1744 = vset.pattern.permute.xlu0 0
    %1745 = vperm.xlu0 %1744, %v1615
    %v1746 = vpop.permute.xlu0 %1745
    %1749 = vset.pattern.permute.xlu0 0
    %1750 = vperm.xlu0 %1749, %v1616
    %v1751 = vpop.permute.xlu0 %1750
    %1754 = vset.pattern.permute.xlu0 0
    %1755 = vperm.xlu0 %1754, %v1617
    %v1756 = vpop.permute.xlu0 %1755
    %1759 = vset.pattern.permute.xlu0 0
    %1760 = vperm.xlu0 %1759, %v1618
    %v1761 = vpop.permute.xlu0 %1760
    %1764 = vset.pattern.permute.xlu0 0
    %1765 = vperm.xlu0 %1764, %v1619
    %v1766 = vpop.permute.xlu0 %1765
    %1769 = vset.pattern.permute.xlu0 0
    %1770 = vperm.xlu0 %1769, %v1620
    %v1771 = vpop.permute.xlu0 %1770
    %1774 = vset.pattern.permute.xlu0 0
    %1775 = vperm.xlu0 %1774, %v1621
    %v1776 = vpop.permute.xlu0 %1775
    %1779 = vset.pattern.permute.xlu0 0
    %1780 = vperm.xlu0 %1779, %v1622
    %v1781 = vpop.permute.xlu0 %1780
    %1784 = vset.pattern.permute.xlu0 0
    %1785 = vperm.xlu0 %1784, %v1623
    %v1786 = vpop.permute.xlu0 %1785
    %1789 = vset.pattern.permute.xlu0 0
    %1790 = vperm.xlu0 %1789, %v1624
    %v1791 = vpop.permute.xlu0 %1790
    %1794 = vset.pattern.permute.xlu0 0
    %1795 = vperm.xlu0 %1794, %v1625
    %v1796 = vpop.permute.xlu0 %1795
    %1799 = vset.pattern.permute.xlu0 0
    %1800 = vperm.xlu0 %1799, %v1626
    %v1801 = vpop.permute.xlu0 %1800
    %1804 = vset.pattern.permute.xlu0 0
    %1805 = vperm.xlu0 %1804, %v1627
    %v1806 = vpop.permute.xlu0 %1805
    %1809 = vset.pattern.permute.xlu0 0
    %1810 = vperm.xlu0 %1809, %v1628
    %v1811 = vpop.permute.xlu0 %1810
    %1814 = vset.pattern.permute.xlu0 0
    %1815 = vperm.xlu0 %1814, %v1629
    %v1816 = vpop.permute.xlu0 %1815
    %1819 = vset.pattern.permute.xlu0 0
    %1820 = vperm.xlu0 %1819, %v1630
    %v1821 = vpop.permute.xlu0 %1820
    %1824 = vset.pattern.permute.xlu0 0
    %1825 = vperm.xlu0 %1824, %v1631
    %v1826 = vpop.permute.xlu0 %1825
    %1829 = vset.pattern.permute.xlu0 0
    %1830 = vperm.xlu0 %1829, %v1632
    %v1831 = vpop.permute.xlu0 %1830
    %1834 = vset.pattern.permute.xlu0 0
    %1835 = vperm.xlu0 %1834, %v1633
    %v1836 = vpop.permute.xlu0 %1835
    %1839 = vset.pattern.permute.xlu0 0
    %1840 = vperm.xlu0 %1839, %v1634
    %v1841 = vpop.permute.xlu0 %1840
    %1844 = vset.pattern.permute.xlu0 0
    %1845 = vperm.xlu0 %1844, %v1635
    %v1846 = vpop.permute.xlu0 %1845
    %1849 = vset.pattern.permute.xlu0 0
    %1850 = vperm.xlu0 %1849, %v1636
    %v1851 = vpop.permute.xlu0 %1850
    %1854 = vset.pattern.permute.xlu0 0
    %1855 = vperm.xlu0 %1854, %v1637
    %v1856 = vpop.permute.xlu0 %1855
    %1859 = vset.pattern.permute.xlu0 0
    %1860 = vperm.xlu0 %1859, %v1638
    %v1861 = vpop.permute.xlu0 %1860
    %1864 = vset.pattern.permute.xlu0 0
    %1865 = vperm.xlu0 %1864, %v1639
    %v1866 = vpop.permute.xlu0 %1865
    %1869 = vset.pattern.permute.xlu0 0
    %1870 = vperm.xlu0 %1869, %v1640
    %v1871 = vpop.permute.xlu0 %1870
    %1874 = vset.pattern.permute.xlu0 0
    %1875 = vperm.xlu0 %1874, %v1641
    %v1876 = vpop.permute.xlu0 %1875
    %1879 = vset.pattern.permute.xlu0 0
    %1880 = vperm.xlu0 %1879, %v1642
    %v1881 = vpop.permute.xlu0 %1880
    %1884 = vset.pattern.permute.xlu0 0
    %1885 = vperm.xlu0 %1884, %v1643
    %v1886 = vpop.permute.xlu0 %1885
    %1889 = vset.pattern.permute.xlu0 0
    %1890 = vperm.xlu0 %1889, %v1644
    %v1891 = vpop.permute.xlu0 %1890
    %1894 = vset.pattern.permute.xlu0 0
    %1895 = vperm.xlu0 %1894, %v1645
    %v1896 = vpop.permute.xlu0 %1895
    %1899 = vset.pattern.permute.xlu0 0
    %1900 = vperm.xlu0 %1899, %v1646
    %v1901 = vpop.permute.xlu0 %1900
    %1904 = vset.pattern.permute.xlu0 0
    %1905 = vperm.xlu0 %1904, %v1647
    %v1906 = vpop.permute.xlu0 %1905
    %1909 = vset.pattern.permute.xlu0 0
    %1910 = vperm.xlu0 %1909, %v1648
    %v1911 = vpop.permute.xlu0 %1910
    %1914 = vset.pattern.permute.xlu0 0
    %1915 = vperm.xlu0 %1914, %v1649
    %v1916 = vpop.permute.xlu0 %1915
    %1919 = vset.pattern.permute.xlu0 0
    %1920 = vperm.xlu0 %1919, %v1650
    %v1921 = vpop.permute.xlu0 %1920
    %1924 = vset.pattern.permute.xlu0 0
    %1925 = vperm.xlu0 %1924, %v1651
    %v1926 = vpop.permute.xlu0 %1925
    %1929 = vset.pattern.permute.xlu0 0
    %1930 = vperm.xlu0 %1929, %v1652
    %v1931 = vpop.permute.xlu0 %1930
    %1934 = vset.pattern.permute.xlu0 0
    %1935 = vperm.xlu0 %1934, %v1653
    %v1936 = vpop.permute.xlu0 %1935
    %1939 = vset.pattern.permute.xlu0 0
    %1940 = vperm.xlu0 %1939, %v1654
    %v1941 = vpop.permute.xlu0 %1940
    %1944 = vset.pattern.permute.xlu0 0
    %1945 = vperm.xlu0 %1944, %v1655
    %v1946 = vpop.permute.xlu0 %1945
    %1949 = vset.pattern.permute.xlu0 0
    %1950 = vperm.xlu0 %1949, %v1656
    %v1951 = vpop.permute.xlu0 %1950
    %1954 = vset.pattern.permute.xlu0 0
    %1955 = vperm.xlu0 %1954, %v1657
    %v1956 = vpop.permute.xlu0 %1955
    %1959 = vset.pattern.permute.xlu0 0
    %1960 = vperm.xlu0 %1959, %v1658
    %v1961 = vpop.permute.xlu0 %1960
    %1964 = vset.pattern.permute.xlu0 0
    %1965 = vperm.xlu0 %1964, %v1659
    %v1966 = vpop.permute.xlu0 %1965
    %1969 = vset.pattern.permute.xlu0 0
    %1970 = vperm.xlu0 %1969, %v1660
    %v1971 = vpop.permute.xlu0 %1970
    %1974 = vset.pattern.permute.xlu0 0
    %1975 = vperm.xlu0 %1974, %v1661
    %v1976 = vpop.permute.xlu0 %1975
    %1979 = vset.pattern.permute.xlu0 0
    %1980 = vperm.xlu0 %1979, %v1662
    %v1981 = vpop.permute.xlu0 %1980
    %v1983 = vlaneseq
    %v1984 = vshrl.u32 %v1983, 7
    %v1985 = vsub.s32 3, %v1984
    %v1986 = vrot.slane %v40, %v1985
    %v1987 = vmul.f32 %v1666, %v1986
    %v1988 = vmul.f32 %v1671, %v1986
    %v1989 = vmul.f32 %v1676, %v1986
    %v1990 = vmul.f32 %v1681, %v1986
    %v1991 = vmul.f32 %v1686, %v1986
    %v1992 = vmul.f32 %v1691, %v1986
    %v1993 = vmul.f32 %v1696, %v1986
    %v1994 = vmul.f32 %v1701, %v1986
    %v1995 = vmul.f32 %v1706, %v1986
    %v1996 = vmul.f32 %v1711, %v1986
    %v1997 = vmul.f32 %v1716, %v1986
    %v1998 = vmul.f32 %v1721, %v1986
    %v1999 = vmul.f32 %v1726, %v1986
    %v2000 = vmul.f32 %v1731, %v1986
    %v2001 = vmul.f32 %v1736, %v1986
    %v2002 = vmul.f32 %v1741, %v1986
    %v2003 = vmul.f32 %v1746, %v1986
    %v2004 = vmul.f32 %v1751, %v1986
    %v2005 = vmul.f32 %v1756, %v1986
    %v2006 = vmul.f32 %v1761, %v1986
    %v2007 = vmul.f32 %v1766, %v1986
    %v2008 = vmul.f32 %v1771, %v1986
    %v2009 = vmul.f32 %v1776, %v1986
    %v2010 = vmul.f32 %v1781, %v1986
    %v2011 = vmul.f32 %v1786, %v1986
    %v2012 = vmul.f32 %v1791, %v1986
    %v2013 = vmul.f32 %v1796, %v1986
    %v2014 = vmul.f32 %v1801, %v1986
    %v2015 = vmul.f32 %v1806, %v1986
    %v2016 = vmul.f32 %v1811, %v1986
    %v2017 = vmul.f32 %v1816, %v1986
    %v2018 = vmul.f32 %v1821, %v1986
    %v2019 = vmul.f32 %v1826, %v1986
    %v2020 = vmul.f32 %v1831, %v1986
    %v2021 = vmul.f32 %v1836, %v1986
    %v2022 = vmul.f32 %v1841, %v1986
    %v2023 = vmul.f32 %v1846, %v1986
    %v2024 = vmul.f32 %v1851, %v1986
    %v2025 = vmul.f32 %v1856, %v1986
    %v2026 = vmul.f32 %v1861, %v1986
    %v2027 = vmul.f32 %v1866, %v1986
    %v2028 = vmul.f32 %v1871, %v1986
    %v2029 = vmul.f32 %v1876, %v1986
    %v2030 = vmul.f32 %v1881, %v1986
    %v2031 = vmul.f32 %v1886, %v1986
    %v2032 = vmul.f32 %v1891, %v1986
    %v2033 = vmul.f32 %v1896, %v1986
    %v2034 = vmul.f32 %v1901, %v1986
    %v2035 = vmul.f32 %v1906, %v1986
    %v2036 = vmul.f32 %v1911, %v1986
    %v2037 = vmul.f32 %v1916, %v1986
    %v2038 = vmul.f32 %v1921, %v1986
    %v2039 = vmul.f32 %v1926, %v1986
    %v2040 = vmul.f32 %v1931, %v1986
    %v2041 = vmul.f32 %v1936, %v1986
    %v2042 = vmul.f32 %v1941, %v1986
    %v2043 = vmul.f32 %v1946, %v1986
    %v2044 = vmul.f32 %v1951, %v1986
    %v2045 = vmul.f32 %v1956, %v1986
    %v2046 = vmul.f32 %v1961, %v1986
    %v2047 = vmul.f32 %v1966, %v1986
    %v2048 = vmul.f32 %v1971, %v1986
    %v2049 = vmul.f32 %v1976, %v1986
    %v2050 = vmul.f32 %v1981, %v1986
    %v2051 = vadd.f32 %v1534, %v1987
    %v2052 = vadd.f32 %v1535, %v1988
    %v2053 = vadd.f32 %v1536, %v1989
    %v2054 = vadd.f32 %v1537, %v1990
    %v2055 = vadd.f32 %v1538, %v1991
    %v2056 = vadd.f32 %v1539, %v1992
    %v2057 = vadd.f32 %v1540, %v1993
    %v2058 = vadd.f32 %v1541, %v1994
    %v2059 = vadd.f32 %v1542, %v1995
    %v2060 = vadd.f32 %v1543, %v1996
    %v2061 = vadd.f32 %v1544, %v1997
    %v2062 = vadd.f32 %v1545, %v1998
    %v2063 = vadd.f32 %v1546, %v1999
    %v2064 = vadd.f32 %v1547, %v2000
    %v2065 = vadd.f32 %v1548, %v2001
    %v2066 = vadd.f32 %v1549, %v2002
    %v2067 = vadd.f32 %v1550, %v2003
    %v2068 = vadd.f32 %v1551, %v2004
    %v2069 = vadd.f32 %v1552, %v2005
    %v2070 = vadd.f32 %v1553, %v2006
    %v2071 = vadd.f32 %v1554, %v2007
    %v2072 = vadd.f32 %v1555, %v2008
    %v2073 = vadd.f32 %v1556, %v2009
    %v2074 = vadd.f32 %v1557, %v2010
    %v2075 = vadd.f32 %v1558, %v2011
    %v2076 = vadd.f32 %v1559, %v2012
    %v2077 = vadd.f32 %v1560, %v2013
    %v2078 = vadd.f32 %v1561, %v2014
    %v2079 = vadd.f32 %v1562, %v2015
    %v2080 = vadd.f32 %v1563, %v2016
    %v2081 = vadd.f32 %v1564, %v2017
    %v2082 = vadd.f32 %v1565, %v2018
    %v2083 = vadd.f32 %v1566, %v2019
    %v2084 = vadd.f32 %v1567, %v2020
    %v2085 = vadd.f32 %v1568, %v2021
    %v2086 = vadd.f32 %v1569, %v2022
    %v2087 = vadd.f32 %v1570, %v2023
    %v2088 = vadd.f32 %v1571, %v2024
    %v2089 = vadd.f32 %v1572, %v2025
    %v2090 = vadd.f32 %v1573, %v2026
    %v2091 = vadd.f32 %v1574, %v2027
    %v2092 = vadd.f32 %v1575, %v2028
    %v2093 = vadd.f32 %v1576, %v2029
    %v2094 = vadd.f32 %v1577, %v2030
    %v2095 = vadd.f32 %v1578, %v2031
    %v2096 = vadd.f32 %v1579, %v2032
    %v2097 = vadd.f32 %v1580, %v2033
    %v2098 = vadd.f32 %v1581, %v2034
    %v2099 = vadd.f32 %v1582, %v2035
    %v2100 = vadd.f32 %v1583, %v2036
    %v2101 = vadd.f32 %v1584, %v2037
    %v2102 = vadd.f32 %v1585, %v2038
    %v2103 = vadd.f32 %v1586, %v2039
    %v2104 = vadd.f32 %v1587, %v2040
    %v2105 = vadd.f32 %v1588, %v2041
    %v2106 = vadd.f32 %v1589, %v2042
    %v2107 = vadd.f32 %v1590, %v2043
    %v2108 = vadd.f32 %v1591, %v2044
    %v2109 = vadd.f32 %v1592, %v2045
    %v2110 = vadd.f32 %v1593, %v2046
    %v2111 = vadd.f32 %v1594, %v2047
    %v2112 = vadd.f32 %v1595, %v2048
    %v2113 = vadd.f32 %v1596, %v2049
    %v2114 = vadd.f32 %v1597, %v2050
    %v2115 = vld [vmem:[%s1598 + $0x1] sm:$0xff]
    %v2116 = vld [vmem:[%s1598 + $0x9] sm:$0xff]
    %v2117 = vld [vmem:[%s1598 + $0x19] sm:$0xff]
    %v2118 = vld [vmem:[%s1598 + $0x21] sm:$0xff]
    %v2119 = vld [vmem:[%s1598 + $0x31] sm:$0xff]
    %v2120 = vld [vmem:[%s1598 + $0x39] sm:$0xff]
    %v2121 = vld [vmem:[%s1598 + $0x49] sm:$0xff]
    %v2122 = vld [vmem:[%s1598 + $0x51] sm:$0xff]
    %v2123 = vld [vmem:[%s1598 + $0x61] sm:$0xff]
    %v2124 = vld [vmem:[%s1598 + $0x69] sm:$0xff]
    %v2125 = vld [vmem:[%s1598 + $0x79] sm:$0xff]
    %v2126 = vld [vmem:[%s1598 + $0x81] sm:$0xff]
    %v2127 = vld [vmem:[%s1598 + $0x91] sm:$0xff]
    %v2128 = vld [vmem:[%s1598 + $0x99] sm:$0xff]
    %v2129 = vld [vmem:[%s1598 + $0xa9] sm:$0xff]
    %v2130 = vld [vmem:[%s1598 + $0xb1] sm:$0xff]
    %v2131 = vld [vmem:[%s1598 + $0xc1] sm:$0xff]
    %v2132 = vld [vmem:[%s1598 + $0xc9] sm:$0xff]
    %v2133 = vld [vmem:[%s1598 + $0xd9] sm:$0xff]
    %v2134 = vld [vmem:[%s1598 + $0xe1] sm:$0xff]
    %v2135 = vld [vmem:[%s1598 + $0xf1] sm:$0xff]
    %v2136 = vld [vmem:[%s1598 + $0xf9] sm:$0xff]
    %v2137 = vld [vmem:[%s1598 + $0x109] sm:$0xff]
    %v2138 = vld [vmem:[%s1598 + $0x111] sm:$0xff]
    %v2139 = vld [vmem:[%s1598 + $0x121] sm:$0xff]
    %v2140 = vld [vmem:[%s1598 + $0x129] sm:$0xff]
    %v2141 = vld [vmem:[%s1598 + $0x139] sm:$0xff]
    %v2142 = vld [vmem:[%s1598 + $0x141] sm:$0xff]
    %v2143 = vld [vmem:[%s1598 + $0x151] sm:$0xff]
    %v2144 = vld [vmem:[%s1598 + $0x159] sm:$0xff]
    %v2145 = vld [vmem:[%s1598 + $0x169] sm:$0xff]
    %v2146 = vld [vmem:[%s1598 + $0x171] sm:$0xff]
    %v2147 = vld [vmem:[%s1598 + $0x1b1] sm:$0xff]
    %v2148 = vld [vmem:[%s1598 + $0x1b9] sm:$0xff]
    %v2149 = vld [vmem:[%s1598 + $0x1c9] sm:$0xff]
    %v2150 = vld [vmem:[%s1598 + $0x1d1] sm:$0xff]
    %v2151 = vld [vmem:[%s1598 + $0x1e1] sm:$0xff]
    %v2152 = vld [vmem:[%s1598 + $0x1e9] sm:$0xff]
    %v2153 = vld [vmem:[%s1598 + $0x1f9] sm:$0xff]
    %v2154 = vld [vmem:[%s1598 + $0x201] sm:$0xff]
    %v2155 = vld [vmem:[%s1598 + $0x211] sm:$0xff]
    %v2156 = vld [vmem:[%s1598 + $0x219] sm:$0xff]
    %v2157 = vld [vmem:[%s1598 + $0x229] sm:$0xff]
    %v2158 = vld [vmem:[%s1598 + $0x231] sm:$0xff]
    %v2159 = vld [vmem:[%s1598 + $0x241] sm:$0xff]
    %v2160 = vld [vmem:[%s1598 + $0x249] sm:$0xff]
    %v2161 = vld [vmem:[%s1598 + $0x259] sm:$0xff]
    %v2162 = vld [vmem:[%s1598 + $0x261] sm:$0xff]
    %v2163 = vld [vmem:[%s1598 + $0x271] sm:$0xff]
    %v2164 = vld [vmem:[%s1598 + $0x279] sm:$0xff]
    %v2165 = vld [vmem:[%s1598 + $0x289] sm:$0xff]
    %v2166 = vld [vmem:[%s1598 + $0x291] sm:$0xff]
    %v2167 = vld [vmem:[%s1598 + $0x2a1] sm:$0xff]
    %v2168 = vld [vmem:[%s1598 + $0x2a9] sm:$0xff]
    %v2169 = vld [vmem:[%s1598 + $0x2b9] sm:$0xff]
    %v2170 = vld [vmem:[%s1598 + $0x2c1] sm:$0xff]
    %v2171 = vld [vmem:[%s1598 + $0x2d1] sm:$0xff]
    %v2172 = vld [vmem:[%s1598 + $0x2d9] sm:$0xff]
    %v2173 = vld [vmem:[%s1598 + $0x2e9] sm:$0xff]
    %v2174 = vld [vmem:[%s1598 + $0x2f1] sm:$0xff]
    %v2175 = vld [vmem:[%s1598 + $0x301] sm:$0xff]
    %v2176 = vld [vmem:[%s1598 + $0x309] sm:$0xff]
    %v2177 = vld [vmem:[%s1598 + $0x319] sm:$0xff]
    %v2178 = vld [vmem:[%s1598 + $0x321] sm:$0xff]
    %2180 = vset.pattern.permute.xlu0 0
    %2181 = vperm.xlu0 %2180, %v2115
    %v2182 = vpop.permute.xlu0 %2181
    %2185 = vset.pattern.permute.xlu0 0
    %2186 = vperm.xlu0 %2185, %v2116
    %v2187 = vpop.permute.xlu0 %2186
    %2190 = vset.pattern.permute.xlu0 0
    %2191 = vperm.xlu0 %2190, %v2117
    %v2192 = vpop.permute.xlu0 %2191
    %2195 = vset.pattern.permute.xlu0 0
    %2196 = vperm.xlu0 %2195, %v2118
    %v2197 = vpop.permute.xlu0 %2196
    %2200 = vset.pattern.permute.xlu0 0
    %2201 = vperm.xlu0 %2200, %v2119
    %v2202 = vpop.permute.xlu0 %2201
    %2205 = vset.pattern.permute.xlu0 0
    %2206 = vperm.xlu0 %2205, %v2120
    %v2207 = vpop.permute.xlu0 %2206
    %2210 = vset.pattern.permute.xlu0 0
    %2211 = vperm.xlu0 %2210, %v2121
    %v2212 = vpop.permute.xlu0 %2211
    %2215 = vset.pattern.permute.xlu0 0
    %2216 = vperm.xlu0 %2215, %v2122
    %v2217 = vpop.permute.xlu0 %2216
    %2220 = vset.pattern.permute.xlu0 0
    %2221 = vperm.xlu0 %2220, %v2123
    %v2222 = vpop.permute.xlu0 %2221
    %2225 = vset.pattern.permute.xlu0 0
    %2226 = vperm.xlu0 %2225, %v2124
    %v2227 = vpop.permute.xlu0 %2226
    %2230 = vset.pattern.permute.xlu0 0
    %2231 = vperm.xlu0 %2230, %v2125
    %v2232 = vpop.permute.xlu0 %2231
    %2235 = vset.pattern.permute.xlu0 0
    %2236 = vperm.xlu0 %2235, %v2126
    %v2237 = vpop.permute.xlu0 %2236
    %2240 = vset.pattern.permute.xlu0 0
    %2241 = vperm.xlu0 %2240, %v2127
    %v2242 = vpop.permute.xlu0 %2241
    %2245 = vset.pattern.permute.xlu0 0
    %2246 = vperm.xlu0 %2245, %v2128
    %v2247 = vpop.permute.xlu0 %2246
    %2250 = vset.pattern.permute.xlu0 0
    %2251 = vperm.xlu0 %2250, %v2129
    %v2252 = vpop.permute.xlu0 %2251
    %2255 = vset.pattern.permute.xlu0 0
    %2256 = vperm.xlu0 %2255, %v2130
    %v2257 = vpop.permute.xlu0 %2256
    %2260 = vset.pattern.permute.xlu0 0
    %2261 = vperm.xlu0 %2260, %v2131
    %v2262 = vpop.permute.xlu0 %2261
    %2265 = vset.pattern.permute.xlu0 0
    %2266 = vperm.xlu0 %2265, %v2132
    %v2267 = vpop.permute.xlu0 %2266
    %2270 = vset.pattern.permute.xlu0 0
    %2271 = vperm.xlu0 %2270, %v2133
    %v2272 = vpop.permute.xlu0 %2271
    %2275 = vset.pattern.permute.xlu0 0
    %2276 = vperm.xlu0 %2275, %v2134
    %v2277 = vpop.permute.xlu0 %2276
    %2280 = vset.pattern.permute.xlu0 0
    %2281 = vperm.xlu0 %2280, %v2135
    %v2282 = vpop.permute.xlu0 %2281
    %2285 = vset.pattern.permute.xlu0 0
    %2286 = vperm.xlu0 %2285, %v2136
    %v2287 = vpop.permute.xlu0 %2286
    %2290 = vset.pattern.permute.xlu0 0
    %2291 = vperm.xlu0 %2290, %v2137
    %v2292 = vpop.permute.xlu0 %2291
    %2295 = vset.pattern.permute.xlu0 0
    %2296 = vperm.xlu0 %2295, %v2138
    %v2297 = vpop.permute.xlu0 %2296
    %2300 = vset.pattern.permute.xlu0 0
    %2301 = vperm.xlu0 %2300, %v2139
    %v2302 = vpop.permute.xlu0 %2301
    %2305 = vset.pattern.permute.xlu0 0
    %2306 = vperm.xlu0 %2305, %v2140
    %v2307 = vpop.permute.xlu0 %2306
    %2310 = vset.pattern.permute.xlu0 0
    %2311 = vperm.xlu0 %2310, %v2141
    %v2312 = vpop.permute.xlu0 %2311
    %2315 = vset.pattern.permute.xlu0 0
    %2316 = vperm.xlu0 %2315, %v2142
    %v2317 = vpop.permute.xlu0 %2316
    %2320 = vset.pattern.permute.xlu0 0
    %2321 = vperm.xlu0 %2320, %v2143
    %v2322 = vpop.permute.xlu0 %2321
    %2325 = vset.pattern.permute.xlu0 0
    %2326 = vperm.xlu0 %2325, %v2144
    %v2327 = vpop.permute.xlu0 %2326
    %2330 = vset.pattern.permute.xlu0 0
    %2331 = vperm.xlu0 %2330, %v2145
    %v2332 = vpop.permute.xlu0 %2331
    %2335 = vset.pattern.permute.xlu0 0
    %2336 = vperm.xlu0 %2335, %v2146
    %v2337 = vpop.permute.xlu0 %2336
    %2340 = vset.pattern.permute.xlu0 0
    %2341 = vperm.xlu0 %2340, %v2147
    %v2342 = vpop.permute.xlu0 %2341
    %2345 = vset.pattern.permute.xlu0 0
    %2346 = vperm.xlu0 %2345, %v2148
    %v2347 = vpop.permute.xlu0 %2346
    %2350 = vset.pattern.permute.xlu0 0
    %2351 = vperm.xlu0 %2350, %v2149
    %v2352 = vpop.permute.xlu0 %2351
    %2355 = vset.pattern.permute.xlu0 0
    %2356 = vperm.xlu0 %2355, %v2150
    %v2357 = vpop.permute.xlu0 %2356
    %2360 = vset.pattern.permute.xlu0 0
    %2361 = vperm.xlu0 %2360, %v2151
    %v2362 = vpop.permute.xlu0 %2361
    %2365 = vset.pattern.permute.xlu0 0
    %2366 = vperm.xlu0 %2365, %v2152
    %v2367 = vpop.permute.xlu0 %2366
    %2370 = vset.pattern.permute.xlu0 0
    %2371 = vperm.xlu0 %2370, %v2153
    %v2372 = vpop.permute.xlu0 %2371
    %2375 = vset.pattern.permute.xlu0 0
    %2376 = vperm.xlu0 %2375, %v2154
    %v2377 = vpop.permute.xlu0 %2376
    %2380 = vset.pattern.permute.xlu0 0
    %2381 = vperm.xlu0 %2380, %v2155
    %v2382 = vpop.permute.xlu0 %2381
    %2385 = vset.pattern.permute.xlu0 0
    %2386 = vperm.xlu0 %2385, %v2156
    %v2387 = vpop.permute.xlu0 %2386
    %2390 = vset.pattern.permute.xlu0 0
    %2391 = vperm.xlu0 %2390, %v2157
    %v2392 = vpop.permute.xlu0 %2391
    %2395 = vset.pattern.permute.xlu0 0
    %2396 = vperm.xlu0 %2395, %v2158
    %v2397 = vpop.permute.xlu0 %2396
    %2400 = vset.pattern.permute.xlu0 0
    %2401 = vperm.xlu0 %2400, %v2159
    %v2402 = vpop.permute.xlu0 %2401
    %2405 = vset.pattern.permute.xlu0 0
    %2406 = vperm.xlu0 %2405, %v2160
    %v2407 = vpop.permute.xlu0 %2406
    %2410 = vset.pattern.permute.xlu0 0
    %2411 = vperm.xlu0 %2410, %v2161
    %v2412 = vpop.permute.xlu0 %2411
    %2415 = vset.pattern.permute.xlu0 0
    %2416 = vperm.xlu0 %2415, %v2162
    %v2417 = vpop.permute.xlu0 %2416
    %2420 = vset.pattern.permute.xlu0 0
    %2421 = vperm.xlu0 %2420, %v2163
    %v2422 = vpop.permute.xlu0 %2421
    %2425 = vset.pattern.permute.xlu0 0
    %2426 = vperm.xlu0 %2425, %v2164
    %v2427 = vpop.permute.xlu0 %2426
    %2430 = vset.pattern.permute.xlu0 0
    %2431 = vperm.xlu0 %2430, %v2165
    %v2432 = vpop.permute.xlu0 %2431
    %2435 = vset.pattern.permute.xlu0 0
    %2436 = vperm.xlu0 %2435, %v2166
    %v2437 = vpop.permute.xlu0 %2436
    %2440 = vset.pattern.permute.xlu0 0
    %2441 = vperm.xlu0 %2440, %v2167
    %v2442 = vpop.permute.xlu0 %2441
    %2445 = vset.pattern.permute.xlu0 0
    %2446 = vperm.xlu0 %2445, %v2168
    %v2447 = vpop.permute.xlu0 %2446
    %2450 = vset.pattern.permute.xlu0 0
    %2451 = vperm.xlu0 %2450, %v2169
    %v2452 = vpop.permute.xlu0 %2451
    %2455 = vset.pattern.permute.xlu0 0
    %2456 = vperm.xlu0 %2455, %v2170
    %v2457 = vpop.permute.xlu0 %2456
    %2460 = vset.pattern.permute.xlu0 0
    %2461 = vperm.xlu0 %2460, %v2171
    %v2462 = vpop.permute.xlu0 %2461
    %2465 = vset.pattern.permute.xlu0 0
    %2466 = vperm.xlu0 %2465, %v2172
    %v2467 = vpop.permute.xlu0 %2466
    %2470 = vset.pattern.permute.xlu0 0
    %2471 = vperm.xlu0 %2470, %v2173
    %v2472 = vpop.permute.xlu0 %2471
    %2475 = vset.pattern.permute.xlu0 0
    %2476 = vperm.xlu0 %2475, %v2174
    %v2477 = vpop.permute.xlu0 %2476
    %2480 = vset.pattern.permute.xlu0 0
    %2481 = vperm.xlu0 %2480, %v2175
    %v2482 = vpop.permute.xlu0 %2481
    %2485 = vset.pattern.permute.xlu0 0
    %2486 = vperm.xlu0 %2485, %v2176
    %v2487 = vpop.permute.xlu0 %2486
    %2490 = vset.pattern.permute.xlu0 0
    %2491 = vperm.xlu0 %2490, %v2177
    %v2492 = vpop.permute.xlu0 %2491
    %2495 = vset.pattern.permute.xlu0 0
    %2496 = vperm.xlu0 %2495, %v2178
    %v2497 = vpop.permute.xlu0 %2496
    %v2499 = vlaneseq
    %v2500 = vshrl.u32 %v2499, 7
    %v2501 = vsub.s32 4, %v2500
    %v2502 = vrot.slane %v40, %v2501
    %v2503 = vmul.f32 %v2182, %v2502
    %v2504 = vmul.f32 %v2187, %v2502
    %v2505 = vmul.f32 %v2192, %v2502
    %v2506 = vmul.f32 %v2197, %v2502
    %v2507 = vmul.f32 %v2202, %v2502
    %v2508 = vmul.f32 %v2207, %v2502
    %v2509 = vmul.f32 %v2212, %v2502
    %v2510 = vmul.f32 %v2217, %v2502
    %v2511 = vmul.f32 %v2222, %v2502
    %v2512 = vmul.f32 %v2227, %v2502
    %v2513 = vmul.f32 %v2232, %v2502
    %v2514 = vmul.f32 %v2237, %v2502
    %v2515 = vmul.f32 %v2242, %v2502
    %v2516 = vmul.f32 %v2247, %v2502
    %v2517 = vmul.f32 %v2252, %v2502
    %v2518 = vmul.f32 %v2257, %v2502
    %v2519 = vmul.f32 %v2262, %v2502
    %v2520 = vmul.f32 %v2267, %v2502
    %v2521 = vmul.f32 %v2272, %v2502
    %v2522 = vmul.f32 %v2277, %v2502
    %v2523 = vmul.f32 %v2282, %v2502
    %v2524 = vmul.f32 %v2287, %v2502
    %v2525 = vmul.f32 %v2292, %v2502
    %v2526 = vmul.f32 %v2297, %v2502
    %v2527 = vmul.f32 %v2302, %v2502
    %v2528 = vmul.f32 %v2307, %v2502
    %v2529 = vmul.f32 %v2312, %v2502
    %v2530 = vmul.f32 %v2317, %v2502
    %v2531 = vmul.f32 %v2322, %v2502
    %v2532 = vmul.f32 %v2327, %v2502
    %v2533 = vmul.f32 %v2332, %v2502
    %v2534 = vmul.f32 %v2337, %v2502
    %v2535 = vmul.f32 %v2342, %v2502
    %v2536 = vmul.f32 %v2347, %v2502
    %v2537 = vmul.f32 %v2352, %v2502
    %v2538 = vmul.f32 %v2357, %v2502
    %v2539 = vmul.f32 %v2362, %v2502
    %v2540 = vmul.f32 %v2367, %v2502
    %v2541 = vmul.f32 %v2372, %v2502
    %v2542 = vmul.f32 %v2377, %v2502
    %v2543 = vmul.f32 %v2382, %v2502
    %v2544 = vmul.f32 %v2387, %v2502
    %v2545 = vmul.f32 %v2392, %v2502
    %v2546 = vmul.f32 %v2397, %v2502
    %v2547 = vmul.f32 %v2402, %v2502
    %v2548 = vmul.f32 %v2407, %v2502
    %v2549 = vmul.f32 %v2412, %v2502
    %v2550 = vmul.f32 %v2417, %v2502
    %v2551 = vmul.f32 %v2422, %v2502
    %v2552 = vmul.f32 %v2427, %v2502
    %v2553 = vmul.f32 %v2432, %v2502
    %v2554 = vmul.f32 %v2437, %v2502
    %v2555 = vmul.f32 %v2442, %v2502
    %v2556 = vmul.f32 %v2447, %v2502
    %v2557 = vmul.f32 %v2452, %v2502
    %v2558 = vmul.f32 %v2457, %v2502
    %v2559 = vmul.f32 %v2462, %v2502
    %v2560 = vmul.f32 %v2467, %v2502
    %v2561 = vmul.f32 %v2472, %v2502
    %v2562 = vmul.f32 %v2477, %v2502
    %v2563 = vmul.f32 %v2482, %v2502
    %v2564 = vmul.f32 %v2487, %v2502
    %v2565 = vmul.f32 %v2492, %v2502
    %v2566 = vmul.f32 %v2497, %v2502
    %v2567 = vadd.f32 %v2051, %v2503
    %v2568 = vadd.f32 %v2052, %v2504
    %v2569 = vadd.f32 %v2053, %v2505
    %v2570 = vadd.f32 %v2054, %v2506
    %v2571 = vadd.f32 %v2055, %v2507
    %v2572 = vadd.f32 %v2056, %v2508
    %v2573 = vadd.f32 %v2057, %v2509
    %v2574 = vadd.f32 %v2058, %v2510
    %v2575 = vadd.f32 %v2059, %v2511
    %v2576 = vadd.f32 %v2060, %v2512
    %v2577 = vadd.f32 %v2061, %v2513
    %v2578 = vadd.f32 %v2062, %v2514
    %v2579 = vadd.f32 %v2063, %v2515
    %v2580 = vadd.f32 %v2064, %v2516
    %v2581 = vadd.f32 %v2065, %v2517
    %v2582 = vadd.f32 %v2066, %v2518
    %v2583 = vadd.f32 %v2067, %v2519
    %v2584 = vadd.f32 %v2068, %v2520
    %v2585 = vadd.f32 %v2069, %v2521
    %v2586 = vadd.f32 %v2070, %v2522
    %v2587 = vadd.f32 %v2071, %v2523
    %v2588 = vadd.f32 %v2072, %v2524
    %v2589 = vadd.f32 %v2073, %v2525
    %v2590 = vadd.f32 %v2074, %v2526
    %v2591 = vadd.f32 %v2075, %v2527
    %v2592 = vadd.f32 %v2076, %v2528
    %v2593 = vadd.f32 %v2077, %v2529
    %v2594 = vadd.f32 %v2078, %v2530
    %v2595 = vadd.f32 %v2079, %v2531
    %v2596 = vadd.f32 %v2080, %v2532
    %v2597 = vadd.f32 %v2081, %v2533
    %v2598 = vadd.f32 %v2082, %v2534
    %v2599 = vadd.f32 %v2083, %v2535
    %v2600 = vadd.f32 %v2084, %v2536
    %v2601 = vadd.f32 %v2085, %v2537
    %v2602 = vadd.f32 %v2086, %v2538
    %v2603 = vadd.f32 %v2087, %v2539
    %v2604 = vadd.f32 %v2088, %v2540
    %v2605 = vadd.f32 %v2089, %v2541
    %v2606 = vadd.f32 %v2090, %v2542
    %v2607 = vadd.f32 %v2091, %v2543
    %v2608 = vadd.f32 %v2092, %v2544
    %v2609 = vadd.f32 %v2093, %v2545
    %v2610 = vadd.f32 %v2094, %v2546
    %v2611 = vadd.f32 %v2095, %v2547
    %v2612 = vadd.f32 %v2096, %v2548
    %v2613 = vadd.f32 %v2097, %v2549
    %v2614 = vadd.f32 %v2098, %v2550
    %v2615 = vadd.f32 %v2099, %v2551
    %v2616 = vadd.f32 %v2100, %v2552
    %v2617 = vadd.f32 %v2101, %v2553
    %v2618 = vadd.f32 %v2102, %v2554
    %v2619 = vadd.f32 %v2103, %v2555
    %v2620 = vadd.f32 %v2104, %v2556
    %v2621 = vadd.f32 %v2105, %v2557
    %v2622 = vadd.f32 %v2106, %v2558
    %v2623 = vadd.f32 %v2107, %v2559
    %v2624 = vadd.f32 %v2108, %v2560
    %v2625 = vadd.f32 %v2109, %v2561
    %v2626 = vadd.f32 %v2110, %v2562
    %v2627 = vadd.f32 %v2111, %v2563
    %v2628 = vadd.f32 %v2112, %v2564
    %v2629 = vadd.f32 %v2113, %v2565
    %v2630 = vadd.f32 %v2114, %v2566
    %v2631 = vld [vmem:[%s1598 + $0x2] sm:$0xff]
    %v2632 = vld [vmem:[%s1598 + $0xa] sm:$0xff]
    %v2633 = vld [vmem:[%s1598 + $0x1a] sm:$0xff]
    %v2634 = vld [vmem:[%s1598 + $0x22] sm:$0xff]
    %v2635 = vld [vmem:[%s1598 + $0x32] sm:$0xff]
    %v2636 = vld [vmem:[%s1598 + $0x3a] sm:$0xff]
    %v2637 = vld [vmem:[%s1598 + $0x4a] sm:$0xff]
    %v2638 = vld [vmem:[%s1598 + $0x52] sm:$0xff]
    %v2639 = vld [vmem:[%s1598 + $0x62] sm:$0xff]
    %v2640 = vld [vmem:[%s1598 + $0x6a] sm:$0xff]
    %v2641 = vld [vmem:[%s1598 + $0x7a] sm:$0xff]
    %v2642 = vld [vmem:[%s1598 + $0x82] sm:$0xff]
    %v2643 = vld [vmem:[%s1598 + $0x92] sm:$0xff]
    %v2644 = vld [vmem:[%s1598 + $0x9a] sm:$0xff]
    %v2645 = vld [vmem:[%s1598 + $0xaa] sm:$0xff]
    %v2646 = vld [vmem:[%s1598 + $0xb2] sm:$0xff]
    %v2647 = vld [vmem:[%s1598 + $0xc2] sm:$0xff]
    %v2648 = vld [vmem:[%s1598 + $0xca] sm:$0xff]
    %v2649 = vld [vmem:[%s1598 + $0xda] sm:$0xff]
    %v2650 = vld [vmem:[%s1598 + $0xe2] sm:$0xff]
    %v2651 = vld [vmem:[%s1598 + $0xf2] sm:$0xff]
    %v2652 = vld [vmem:[%s1598 + $0xfa] sm:$0xff]
    %v2653 = vld [vmem:[%s1598 + $0x10a] sm:$0xff]
    %v2654 = vld [vmem:[%s1598 + $0x112] sm:$0xff]
    %v2655 = vld [vmem:[%s1598 + $0x122] sm:$0xff]
    %v2656 = vld [vmem:[%s1598 + $0x12a] sm:$0xff]
    %v2657 = vld [vmem:[%s1598 + $0x13a] sm:$0xff]
    %v2658 = vld [vmem:[%s1598 + $0x142] sm:$0xff]
    %v2659 = vld [vmem:[%s1598 + $0x152] sm:$0xff]
    %v2660 = vld [vmem:[%s1598 + $0x15a] sm:$0xff]
    %v2661 = vld [vmem:[%s1598 + $0x16a] sm:$0xff]
    %v2662 = vld [vmem:[%s1598 + $0x172] sm:$0xff]
    %v2663 = vld [vmem:[%s1598 + $0x1b2] sm:$0xff]
    %v2664 = vld [vmem:[%s1598 + $0x1ba] sm:$0xff]
    %v2665 = vld [vmem:[%s1598 + $0x1ca] sm:$0xff]
    %v2666 = vld [vmem:[%s1598 + $0x1d2] sm:$0xff]
    %v2667 = vld [vmem:[%s1598 + $0x1e2] sm:$0xff]
    %v2668 = vld [vmem:[%s1598 + $0x1ea] sm:$0xff]
    %v2669 = vld [vmem:[%s1598 + $0x1fa] sm:$0xff]
    %v2670 = vld [vmem:[%s1598 + $0x202] sm:$0xff]
    %v2671 = vld [vmem:[%s1598 + $0x212] sm:$0xff]
    %v2672 = vld [vmem:[%s1598 + $0x21a] sm:$0xff]
    %v2673 = vld [vmem:[%s1598 + $0x22a] sm:$0xff]
    %v2674 = vld [vmem:[%s1598 + $0x232] sm:$0xff]
    %v2675 = vld [vmem:[%s1598 + $0x242] sm:$0xff]
    %v2676 = vld [vmem:[%s1598 + $0x24a] sm:$0xff]
    %v2677 = vld [vmem:[%s1598 + $0x25a] sm:$0xff]
    %v2678 = vld [vmem:[%s1598 + $0x262] sm:$0xff]
    %v2679 = vld [vmem:[%s1598 + $0x272] sm:$0xff]
    %v2680 = vld [vmem:[%s1598 + $0x27a] sm:$0xff]
    %v2681 = vld [vmem:[%s1598 + $0x28a] sm:$0xff]
    %v2682 = vld [vmem:[%s1598 + $0x292] sm:$0xff]
    %v2683 = vld [vmem:[%s1598 + $0x2a2] sm:$0xff]
    %v2684 = vld [vmem:[%s1598 + $0x2aa] sm:$0xff]
    %v2685 = vld [vmem:[%s1598 + $0x2ba] sm:$0xff]
    %v2686 = vld [vmem:[%s1598 + $0x2c2] sm:$0xff]
    %v2687 = vld [vmem:[%s1598 + $0x2d2] sm:$0xff]
    %v2688 = vld [vmem:[%s1598 + $0x2da] sm:$0xff]
    %v2689 = vld [vmem:[%s1598 + $0x2ea] sm:$0xff]
    %v2690 = vld [vmem:[%s1598 + $0x2f2] sm:$0xff]
    %v2691 = vld [vmem:[%s1598 + $0x302] sm:$0xff]
    %v2692 = vld [vmem:[%s1598 + $0x30a] sm:$0xff]
    %v2693 = vld [vmem:[%s1598 + $0x31a] sm:$0xff]
    %v2694 = vld [vmem:[%s1598 + $0x322] sm:$0xff]
    %2696 = vset.pattern.permute.xlu0 0
    %2697 = vperm.xlu0 %2696, %v2631
    %v2698 = vpop.permute.xlu0 %2697
    %2701 = vset.pattern.permute.xlu0 0
    %2702 = vperm.xlu0 %2701, %v2632
    %v2703 = vpop.permute.xlu0 %2702
    %2706 = vset.pattern.permute.xlu0 0
    %2707 = vperm.xlu0 %2706, %v2633
    %v2708 = vpop.permute.xlu0 %2707
    %2711 = vset.pattern.permute.xlu0 0
    %2712 = vperm.xlu0 %2711, %v2634
    %v2713 = vpop.permute.xlu0 %2712
    %2716 = vset.pattern.permute.xlu0 0
    %2717 = vperm.xlu0 %2716, %v2635
    %v2718 = vpop.permute.xlu0 %2717
    %2721 = vset.pattern.permute.xlu0 0
    %2722 = vperm.xlu0 %2721, %v2636
    %v2723 = vpop.permute.xlu0 %2722
    %2726 = vset.pattern.permute.xlu0 0
    %2727 = vperm.xlu0 %2726, %v2637
    %v2728 = vpop.permute.xlu0 %2727
    %2731 = vset.pattern.permute.xlu0 0
    %2732 = vperm.xlu0 %2731, %v2638
    %v2733 = vpop.permute.xlu0 %2732
    %2736 = vset.pattern.permute.xlu0 0
    %2737 = vperm.xlu0 %2736, %v2639
    %v2738 = vpop.permute.xlu0 %2737
    %2741 = vset.pattern.permute.xlu0 0
    %2742 = vperm.xlu0 %2741, %v2640
    %v2743 = vpop.permute.xlu0 %2742
    %2746 = vset.pattern.permute.xlu0 0
    %2747 = vperm.xlu0 %2746, %v2641
    %v2748 = vpop.permute.xlu0 %2747
    %2751 = vset.pattern.permute.xlu0 0
    %2752 = vperm.xlu0 %2751, %v2642
    %v2753 = vpop.permute.xlu0 %2752
    %2756 = vset.pattern.permute.xlu0 0
    %2757 = vperm.xlu0 %2756, %v2643
    %v2758 = vpop.permute.xlu0 %2757
    %2761 = vset.pattern.permute.xlu0 0
    %2762 = vperm.xlu0 %2761, %v2644
    %v2763 = vpop.permute.xlu0 %2762
    %2766 = vset.pattern.permute.xlu0 0
    %2767 = vperm.xlu0 %2766, %v2645
    %v2768 = vpop.permute.xlu0 %2767
    %2771 = vset.pattern.permute.xlu0 0
    %2772 = vperm.xlu0 %2771, %v2646
    %v2773 = vpop.permute.xlu0 %2772
    %2776 = vset.pattern.permute.xlu0 0
    %2777 = vperm.xlu0 %2776, %v2647
    %v2778 = vpop.permute.xlu0 %2777
    %2781 = vset.pattern.permute.xlu0 0
    %2782 = vperm.xlu0 %2781, %v2648
    %v2783 = vpop.permute.xlu0 %2782
    %2786 = vset.pattern.permute.xlu0 0
    %2787 = vperm.xlu0 %2786, %v2649
    %v2788 = vpop.permute.xlu0 %2787
    %2791 = vset.pattern.permute.xlu0 0
    %2792 = vperm.xlu0 %2791, %v2650
    %v2793 = vpop.permute.xlu0 %2792
    %2796 = vset.pattern.permute.xlu0 0
    %2797 = vperm.xlu0 %2796, %v2651
    %v2798 = vpop.permute.xlu0 %2797
    %2801 = vset.pattern.permute.xlu0 0
    %2802 = vperm.xlu0 %2801, %v2652
    %v2803 = vpop.permute.xlu0 %2802
    %2806 = vset.pattern.permute.xlu0 0
    %2807 = vperm.xlu0 %2806, %v2653
    %v2808 = vpop.permute.xlu0 %2807
    %2811 = vset.pattern.permute.xlu0 0
    %2812 = vperm.xlu0 %2811, %v2654
    %v2813 = vpop.permute.xlu0 %2812
    %2816 = vset.pattern.permute.xlu0 0
    %2817 = vperm.xlu0 %2816, %v2655
    %v2818 = vpop.permute.xlu0 %2817
    %2821 = vset.pattern.permute.xlu0 0
    %2822 = vperm.xlu0 %2821, %v2656
    %v2823 = vpop.permute.xlu0 %2822
    %2826 = vset.pattern.permute.xlu0 0
    %2827 = vperm.xlu0 %2826, %v2657
    %v2828 = vpop.permute.xlu0 %2827
    %2831 = vset.pattern.permute.xlu0 0
    %2832 = vperm.xlu0 %2831, %v2658
    %v2833 = vpop.permute.xlu0 %2832
    %2836 = vset.pattern.permute.xlu0 0
    %2837 = vperm.xlu0 %2836, %v2659
    %v2838 = vpop.permute.xlu0 %2837
    %2841 = vset.pattern.permute.xlu0 0
    %2842 = vperm.xlu0 %2841, %v2660
    %v2843 = vpop.permute.xlu0 %2842
    %2846 = vset.pattern.permute.xlu0 0
    %2847 = vperm.xlu0 %2846, %v2661
    %v2848 = vpop.permute.xlu0 %2847
    %2851 = vset.pattern.permute.xlu0 0
    %2852 = vperm.xlu0 %2851, %v2662
    %v2853 = vpop.permute.xlu0 %2852
    %2856 = vset.pattern.permute.xlu0 0
    %2857 = vperm.xlu0 %2856, %v2663
    %v2858 = vpop.permute.xlu0 %2857
    %2861 = vset.pattern.permute.xlu0 0
    %2862 = vperm.xlu0 %2861, %v2664
    %v2863 = vpop.permute.xlu0 %2862
    %2866 = vset.pattern.permute.xlu0 0
    %2867 = vperm.xlu0 %2866, %v2665
    %v2868 = vpop.permute.xlu0 %2867
    %2871 = vset.pattern.permute.xlu0 0
    %2872 = vperm.xlu0 %2871, %v2666
    %v2873 = vpop.permute.xlu0 %2872
    %2876 = vset.pattern.permute.xlu0 0
    %2877 = vperm.xlu0 %2876, %v2667
    %v2878 = vpop.permute.xlu0 %2877
    %2881 = vset.pattern.permute.xlu0 0
    %2882 = vperm.xlu0 %2881, %v2668
    %v2883 = vpop.permute.xlu0 %2882
    %2886 = vset.pattern.permute.xlu0 0
    %2887 = vperm.xlu0 %2886, %v2669
    %v2888 = vpop.permute.xlu0 %2887
    %2891 = vset.pattern.permute.xlu0 0
    %2892 = vperm.xlu0 %2891, %v2670
    %v2893 = vpop.permute.xlu0 %2892
    %2896 = vset.pattern.permute.xlu0 0
    %2897 = vperm.xlu0 %2896, %v2671
    %v2898 = vpop.permute.xlu0 %2897
    %2901 = vset.pattern.permute.xlu0 0
    %2902 = vperm.xlu0 %2901, %v2672
    %v2903 = vpop.permute.xlu0 %2902
    %2906 = vset.pattern.permute.xlu0 0
    %2907 = vperm.xlu0 %2906, %v2673
    %v2908 = vpop.permute.xlu0 %2907
    %2911 = vset.pattern.permute.xlu0 0
    %2912 = vperm.xlu0 %2911, %v2674
    %v2913 = vpop.permute.xlu0 %2912
    %2916 = vset.pattern.permute.xlu0 0
    %2917 = vperm.xlu0 %2916, %v2675
    %v2918 = vpop.permute.xlu0 %2917
    %2921 = vset.pattern.permute.xlu0 0
    %2922 = vperm.xlu0 %2921, %v2676
    %v2923 = vpop.permute.xlu0 %2922
    %2926 = vset.pattern.permute.xlu0 0
    %2927 = vperm.xlu0 %2926, %v2677
    %v2928 = vpop.permute.xlu0 %2927
    %2931 = vset.pattern.permute.xlu0 0
    %2932 = vperm.xlu0 %2931, %v2678
    %v2933 = vpop.permute.xlu0 %2932
    %2936 = vset.pattern.permute.xlu0 0
    %2937 = vperm.xlu0 %2936, %v2679
    %v2938 = vpop.permute.xlu0 %2937
    %2941 = vset.pattern.permute.xlu0 0
    %2942 = vperm.xlu0 %2941, %v2680
    %v2943 = vpop.permute.xlu0 %2942
    %2946 = vset.pattern.permute.xlu0 0
    %2947 = vperm.xlu0 %2946, %v2681
    %v2948 = vpop.permute.xlu0 %2947
    %2951 = vset.pattern.permute.xlu0 0
    %2952 = vperm.xlu0 %2951, %v2682
    %v2953 = vpop.permute.xlu0 %2952
    %2956 = vset.pattern.permute.xlu0 0
    %2957 = vperm.xlu0 %2956, %v2683
    %v2958 = vpop.permute.xlu0 %2957
    %2961 = vset.pattern.permute.xlu0 0
    %2962 = vperm.xlu0 %2961, %v2684
    %v2963 = vpop.permute.xlu0 %2962
    %2966 = vset.pattern.permute.xlu0 0
    %2967 = vperm.xlu0 %2966, %v2685
    %v2968 = vpop.permute.xlu0 %2967
    %2971 = vset.pattern.permute.xlu0 0
    %2972 = vperm.xlu0 %2971, %v2686
    %v2973 = vpop.permute.xlu0 %2972
    %2976 = vset.pattern.permute.xlu0 0
    %2977 = vperm.xlu0 %2976, %v2687
    %v2978 = vpop.permute.xlu0 %2977
    %2981 = vset.pattern.permute.xlu0 0
    %2982 = vperm.xlu0 %2981, %v2688
    %v2983 = vpop.permute.xlu0 %2982
    %2986 = vset.pattern.permute.xlu0 0
    %2987 = vperm.xlu0 %2986, %v2689
    %v2988 = vpop.permute.xlu0 %2987
    %2991 = vset.pattern.permute.xlu0 0
    %2992 = vperm.xlu0 %2991, %v2690
    %v2993 = vpop.permute.xlu0 %2992
    %2996 = vset.pattern.permute.xlu0 0
    %2997 = vperm.xlu0 %2996, %v2691
    %v2998 = vpop.permute.xlu0 %2997
    %3001 = vset.pattern.permute.xlu0 0
    %3002 = vperm.xlu0 %3001, %v2692
    %v3003 = vpop.permute.xlu0 %3002
    %3006 = vset.pattern.permute.xlu0 0
    %3007 = vperm.xlu0 %3006, %v2693
    %v3008 = vpop.permute.xlu0 %3007
    %3011 = vset.pattern.permute.xlu0 0
    %3012 = vperm.xlu0 %3011, %v2694
    %v3013 = vpop.permute.xlu0 %3012
    %v3015 = vlaneseq
    %v3016 = vshrl.u32 %v3015, 7
    %v3017 = vsub.s32 5, %v3016
    %v3018 = vrot.slane %v40, %v3017
    %v3019 = vmul.f32 %v2698, %v3018
    %v3020 = vmul.f32 %v2703, %v3018
    %v3021 = vmul.f32 %v2708, %v3018
    %v3022 = vmul.f32 %v2713, %v3018
    %v3023 = vmul.f32 %v2718, %v3018
    %v3024 = vmul.f32 %v2723, %v3018
    %v3025 = vmul.f32 %v2728, %v3018
    %v3026 = vmul.f32 %v2733, %v3018
    %v3027 = vmul.f32 %v2738, %v3018
    %v3028 = vmul.f32 %v2743, %v3018
    %v3029 = vmul.f32 %v2748, %v3018
    %v3030 = vmul.f32 %v2753, %v3018
    %v3031 = vmul.f32 %v2758, %v3018
    %v3032 = vmul.f32 %v2763, %v3018
    %v3033 = vmul.f32 %v2768, %v3018
    %v3034 = vmul.f32 %v2773, %v3018
    %v3035 = vmul.f32 %v2778, %v3018
    %v3036 = vmul.f32 %v2783, %v3018
    %v3037 = vmul.f32 %v2788, %v3018
    %v3038 = vmul.f32 %v2793, %v3018
    %v3039 = vmul.f32 %v2798, %v3018
    %v3040 = vmul.f32 %v2803, %v3018
    %v3041 = vmul.f32 %v2808, %v3018
    %v3042 = vmul.f32 %v2813, %v3018
    %v3043 = vmul.f32 %v2818, %v3018
    %v3044 = vmul.f32 %v2823, %v3018
    %v3045 = vmul.f32 %v2828, %v3018
    %v3046 = vmul.f32 %v2833, %v3018
    %v3047 = vmul.f32 %v2838, %v3018
    %v3048 = vmul.f32 %v2843, %v3018
    %v3049 = vmul.f32 %v2848, %v3018
    %v3050 = vmul.f32 %v2853, %v3018
    %v3051 = vmul.f32 %v2858, %v3018
    %v3052 = vmul.f32 %v2863, %v3018
    %v3053 = vmul.f32 %v2868, %v3018
    %v3054 = vmul.f32 %v2873, %v3018
    %v3055 = vmul.f32 %v2878, %v3018
    %v3056 = vmul.f32 %v2883, %v3018
    %v3057 = vmul.f32 %v2888, %v3018
    %v3058 = vmul.f32 %v2893, %v3018
    %v3059 = vmul.f32 %v2898, %v3018
    %v3060 = vmul.f32 %v2903, %v3018
    %v3061 = vmul.f32 %v2908, %v3018
    %v3062 = vmul.f32 %v2913, %v3018
    %v3063 = vmul.f32 %v2918, %v3018
    %v3064 = vmul.f32 %v2923, %v3018
    %v3065 = vmul.f32 %v2928, %v3018
    %v3066 = vmul.f32 %v2933, %v3018
    %v3067 = vmul.f32 %v2938, %v3018
    %v3068 = vmul.f32 %v2943, %v3018
    %v3069 = vmul.f32 %v2948, %v3018
    %v3070 = vmul.f32 %v2953, %v3018
    %v3071 = vmul.f32 %v2958, %v3018
    %v3072 = vmul.f32 %v2963, %v3018
    %v3073 = vmul.f32 %v2968, %v3018
    %v3074 = vmul.f32 %v2973, %v3018
    %v3075 = vmul.f32 %v2978, %v3018
    %v3076 = vmul.f32 %v2983, %v3018
    %v3077 = vmul.f32 %v2988, %v3018
    %v3078 = vmul.f32 %v2993, %v3018
    %v3079 = vmul.f32 %v2998, %v3018
    %v3080 = vmul.f32 %v3003, %v3018
    %v3081 = vmul.f32 %v3008, %v3018
    %v3082 = vmul.f32 %v3013, %v3018
    %v3083 = vadd.f32 %v2567, %v3019
    %v3084 = vadd.f32 %v2568, %v3020
    %v3085 = vadd.f32 %v2569, %v3021
    %v3086 = vadd.f32 %v2570, %v3022
    %v3087 = vadd.f32 %v2571, %v3023
    %v3088 = vadd.f32 %v2572, %v3024
    %v3089 = vadd.f32 %v2573, %v3025
    %v3090 = vadd.f32 %v2574, %v3026
    %v3091 = vadd.f32 %v2575, %v3027
    %v3092 = vadd.f32 %v2576, %v3028
    %v3093 = vadd.f32 %v2577, %v3029
    %v3094 = vadd.f32 %v2578, %v3030
    %v3095 = vadd.f32 %v2579, %v3031
    %v3096 = vadd.f32 %v2580, %v3032
    %v3097 = vadd.f32 %v2581, %v3033
    %v3098 = vadd.f32 %v2582, %v3034
    %v3099 = vadd.f32 %v2583, %v3035
    %v3100 = vadd.f32 %v2584, %v3036
    %v3101 = vadd.f32 %v2585, %v3037
    %v3102 = vadd.f32 %v2586, %v3038
    %v3103 = vadd.f32 %v2587, %v3039
    %v3104 = vadd.f32 %v2588, %v3040
    %v3105 = vadd.f32 %v2589, %v3041
    %v3106 = vadd.f32 %v2590, %v3042
    %v3107 = vadd.f32 %v2591, %v3043
    %v3108 = vadd.f32 %v2592, %v3044
    %v3109 = vadd.f32 %v2593, %v3045
    %v3110 = vadd.f32 %v2594, %v3046
    %v3111 = vadd.f32 %v2595, %v3047
    %v3112 = vadd.f32 %v2596, %v3048
    %v3113 = vadd.f32 %v2597, %v3049
    %v3114 = vadd.f32 %v2598, %v3050
    %v3115 = vadd.f32 %v2599, %v3051
    %v3116 = vadd.f32 %v2600, %v3052
    %v3117 = vadd.f32 %v2601, %v3053
    %v3118 = vadd.f32 %v2602, %v3054
    %v3119 = vadd.f32 %v2603, %v3055
    %v3120 = vadd.f32 %v2604, %v3056
    %v3121 = vadd.f32 %v2605, %v3057
    %v3122 = vadd.f32 %v2606, %v3058
    %v3123 = vadd.f32 %v2607, %v3059
    %v3124 = vadd.f32 %v2608, %v3060
    %v3125 = vadd.f32 %v2609, %v3061
    %v3126 = vadd.f32 %v2610, %v3062
    %v3127 = vadd.f32 %v2611, %v3063
    %v3128 = vadd.f32 %v2612, %v3064
    %v3129 = vadd.f32 %v2613, %v3065
    %v3130 = vadd.f32 %v2614, %v3066
    %v3131 = vadd.f32 %v2615, %v3067
    %v3132 = vadd.f32 %v2616, %v3068
    %v3133 = vadd.f32 %v2617, %v3069
    %v3134 = vadd.f32 %v2618, %v3070
    %v3135 = vadd.f32 %v2619, %v3071
    %v3136 = vadd.f32 %v2620, %v3072
    %v3137 = vadd.f32 %v2621, %v3073
    %v3138 = vadd.f32 %v2622, %v3074
    %v3139 = vadd.f32 %v2623, %v3075
    %v3140 = vadd.f32 %v2624, %v3076
    %v3141 = vadd.f32 %v2625, %v3077
    %v3142 = vadd.f32 %v2626, %v3078
    %v3143 = vadd.f32 %v2627, %v3079
    %v3144 = vadd.f32 %v2628, %v3080
    %v3145 = vadd.f32 %v2629, %v3081
    %v3146 = vadd.f32 %v2630, %v3082
    %s3147 = scalar_lea.vmem %s0, 48
    %v3148 = vld [vmem:[%s3147] sm:$0xff]
    %v3149 = vld [vmem:[%s3147 + $0x8] sm:$0xff]
    %v3150 = vld [vmem:[%s3147 + $0x18] sm:$0xff]
    %v3151 = vld [vmem:[%s3147 + $0x20] sm:$0xff]
    %v3152 = vld [vmem:[%s3147 + $0x30] sm:$0xff]
    %v3153 = vld [vmem:[%s3147 + $0x38] sm:$0xff]
    %v3154 = vld [vmem:[%s3147 + $0x48] sm:$0xff]
    %v3155 = vld [vmem:[%s3147 + $0x50] sm:$0xff]
    %v3156 = vld [vmem:[%s3147 + $0x60] sm:$0xff]
    %v3157 = vld [vmem:[%s3147 + $0x68] sm:$0xff]
    %v3158 = vld [vmem:[%s3147 + $0x78] sm:$0xff]
    %v3159 = vld [vmem:[%s3147 + $0x80] sm:$0xff]
    %v3160 = vld [vmem:[%s3147 + $0x90] sm:$0xff]
    %v3161 = vld [vmem:[%s3147 + $0x98] sm:$0xff]
    %v3162 = vld [vmem:[%s3147 + $0xa8] sm:$0xff]
    %v3163 = vld [vmem:[%s3147 + $0xb0] sm:$0xff]
    %v3164 = vld [vmem:[%s3147 + $0xc0] sm:$0xff]
    %v3165 = vld [vmem:[%s3147 + $0xc8] sm:$0xff]
    %v3166 = vld [vmem:[%s3147 + $0xd8] sm:$0xff]
    %v3167 = vld [vmem:[%s3147 + $0xe0] sm:$0xff]
    %v3168 = vld [vmem:[%s3147 + $0xf0] sm:$0xff]
    %v3169 = vld [vmem:[%s3147 + $0xf8] sm:$0xff]
    %v3170 = vld [vmem:[%s3147 + $0x108] sm:$0xff]
    %v3171 = vld [vmem:[%s3147 + $0x110] sm:$0xff]
    %v3172 = vld [vmem:[%s3147 + $0x120] sm:$0xff]
    %v3173 = vld [vmem:[%s3147 + $0x128] sm:$0xff]
    %v3174 = vld [vmem:[%s3147 + $0x138] sm:$0xff]
    %v3175 = vld [vmem:[%s3147 + $0x140] sm:$0xff]
    %v3176 = vld [vmem:[%s3147 + $0x150] sm:$0xff]
    %v3177 = vld [vmem:[%s3147 + $0x158] sm:$0xff]
    %v3178 = vld [vmem:[%s3147 + $0x168] sm:$0xff]
    %v3179 = vld [vmem:[%s3147 + $0x170] sm:$0xff]
    %v3180 = vld [vmem:[%s3147 + $0x1b0] sm:$0xff]
    %v3181 = vld [vmem:[%s3147 + $0x1b8] sm:$0xff]
    %v3182 = vld [vmem:[%s3147 + $0x1c8] sm:$0xff]
    %v3183 = vld [vmem:[%s3147 + $0x1d0] sm:$0xff]
    %v3184 = vld [vmem:[%s3147 + $0x1e0] sm:$0xff]
    %v3185 = vld [vmem:[%s3147 + $0x1e8] sm:$0xff]
    %v3186 = vld [vmem:[%s3147 + $0x1f8] sm:$0xff]
    %v3187 = vld [vmem:[%s3147 + $0x200] sm:$0xff]
    %v3188 = vld [vmem:[%s3147 + $0x210] sm:$0xff]
    %v3189 = vld [vmem:[%s3147 + $0x218] sm:$0xff]
    %v3190 = vld [vmem:[%s3147 + $0x228] sm:$0xff]
    %v3191 = vld [vmem:[%s3147 + $0x230] sm:$0xff]
    %v3192 = vld [vmem:[%s3147 + $0x240] sm:$0xff]
    %v3193 = vld [vmem:[%s3147 + $0x248] sm:$0xff]
    %v3194 = vld [vmem:[%s3147 + $0x258] sm:$0xff]
    %v3195 = vld [vmem:[%s3147 + $0x260] sm:$0xff]
    %v3196 = vld [vmem:[%s3147 + $0x270] sm:$0xff]
    %v3197 = vld [vmem:[%s3147 + $0x278] sm:$0xff]
    %v3198 = vld [vmem:[%s3147 + $0x288] sm:$0xff]
    %v3199 = vld [vmem:[%s3147 + $0x290] sm:$0xff]
    %v3200 = vld [vmem:[%s3147 + $0x2a0] sm:$0xff]
    %v3201 = vld [vmem:[%s3147 + $0x2a8] sm:$0xff]
    %v3202 = vld [vmem:[%s3147 + $0x2b8] sm:$0xff]
    %v3203 = vld [vmem:[%s3147 + $0x2c0] sm:$0xff]
    %v3204 = vld [vmem:[%s3147 + $0x2d0] sm:$0xff]
    %v3205 = vld [vmem:[%s3147 + $0x2d8] sm:$0xff]
    %v3206 = vld [vmem:[%s3147 + $0x2e8] sm:$0xff]
    %v3207 = vld [vmem:[%s3147 + $0x2f0] sm:$0xff]
    %v3208 = vld [vmem:[%s3147 + $0x300] sm:$0xff]
    %v3209 = vld [vmem:[%s3147 + $0x308] sm:$0xff]
    %v3210 = vld [vmem:[%s3147 + $0x318] sm:$0xff]
    %v3211 = vld [vmem:[%s3147 + $0x320] sm:$0xff]
    %3213 = vset.pattern.permute.xlu0 0
    %3214 = vperm.xlu0 %3213, %v3148
    %v3215 = vpop.permute.xlu0 %3214
    %3218 = vset.pattern.permute.xlu0 0
    %3219 = vperm.xlu0 %3218, %v3149
    %v3220 = vpop.permute.xlu0 %3219
    %3223 = vset.pattern.permute.xlu0 0
    %3224 = vperm.xlu0 %3223, %v3150
    %v3225 = vpop.permute.xlu0 %3224
    %3228 = vset.pattern.permute.xlu0 0
    %3229 = vperm.xlu0 %3228, %v3151
    %v3230 = vpop.permute.xlu0 %3229
    %3233 = vset.pattern.permute.xlu0 0
    %3234 = vperm.xlu0 %3233, %v3152
    %v3235 = vpop.permute.xlu0 %3234
    %3238 = vset.pattern.permute.xlu0 0
    %3239 = vperm.xlu0 %3238, %v3153
    %v3240 = vpop.permute.xlu0 %3239
    %3243 = vset.pattern.permute.xlu0 0
    %3244 = vperm.xlu0 %3243, %v3154
    %v3245 = vpop.permute.xlu0 %3244
    %3248 = vset.pattern.permute.xlu0 0
    %3249 = vperm.xlu0 %3248, %v3155
    %v3250 = vpop.permute.xlu0 %3249
    %3253 = vset.pattern.permute.xlu0 0
    %3254 = vperm.xlu0 %3253, %v3156
    %v3255 = vpop.permute.xlu0 %3254
    %3258 = vset.pattern.permute.xlu0 0
    %3259 = vperm.xlu0 %3258, %v3157
    %v3260 = vpop.permute.xlu0 %3259
    %3263 = vset.pattern.permute.xlu0 0
    %3264 = vperm.xlu0 %3263, %v3158
    %v3265 = vpop.permute.xlu0 %3264
    %3268 = vset.pattern.permute.xlu0 0
    %3269 = vperm.xlu0 %3268, %v3159
    %v3270 = vpop.permute.xlu0 %3269
    %3273 = vset.pattern.permute.xlu0 0
    %3274 = vperm.xlu0 %3273, %v3160
    %v3275 = vpop.permute.xlu0 %3274
    %3278 = vset.pattern.permute.xlu0 0
    %3279 = vperm.xlu0 %3278, %v3161
    %v3280 = vpop.permute.xlu0 %3279
    %3283 = vset.pattern.permute.xlu0 0
    %3284 = vperm.xlu0 %3283, %v3162
    %v3285 = vpop.permute.xlu0 %3284
    %3288 = vset.pattern.permute.xlu0 0
    %3289 = vperm.xlu0 %3288, %v3163
    %v3290 = vpop.permute.xlu0 %3289
    %3293 = vset.pattern.permute.xlu0 0
    %3294 = vperm.xlu0 %3293, %v3164
    %v3295 = vpop.permute.xlu0 %3294
    %3298 = vset.pattern.permute.xlu0 0
    %3299 = vperm.xlu0 %3298, %v3165
    %v3300 = vpop.permute.xlu0 %3299
    %3303 = vset.pattern.permute.xlu0 0
    %3304 = vperm.xlu0 %3303, %v3166
    %v3305 = vpop.permute.xlu0 %3304
    %3308 = vset.pattern.permute.xlu0 0
    %3309 = vperm.xlu0 %3308, %v3167
    %v3310 = vpop.permute.xlu0 %3309
    %3313 = vset.pattern.permute.xlu0 0
    %3314 = vperm.xlu0 %3313, %v3168
    %v3315 = vpop.permute.xlu0 %3314
    %3318 = vset.pattern.permute.xlu0 0
    %3319 = vperm.xlu0 %3318, %v3169
    %v3320 = vpop.permute.xlu0 %3319
    %3323 = vset.pattern.permute.xlu0 0
    %3324 = vperm.xlu0 %3323, %v3170
    %v3325 = vpop.permute.xlu0 %3324
    %3328 = vset.pattern.permute.xlu0 0
    %3329 = vperm.xlu0 %3328, %v3171
    %v3330 = vpop.permute.xlu0 %3329
    %3333 = vset.pattern.permute.xlu0 0
    %3334 = vperm.xlu0 %3333, %v3172
    %v3335 = vpop.permute.xlu0 %3334
    %3338 = vset.pattern.permute.xlu0 0
    %3339 = vperm.xlu0 %3338, %v3173
    %v3340 = vpop.permute.xlu0 %3339
    %3343 = vset.pattern.permute.xlu0 0
    %3344 = vperm.xlu0 %3343, %v3174
    %v3345 = vpop.permute.xlu0 %3344
    %3348 = vset.pattern.permute.xlu0 0
    %3349 = vperm.xlu0 %3348, %v3175
    %v3350 = vpop.permute.xlu0 %3349
    %3353 = vset.pattern.permute.xlu0 0
    %3354 = vperm.xlu0 %3353, %v3176
    %v3355 = vpop.permute.xlu0 %3354
    %3358 = vset.pattern.permute.xlu0 0
    %3359 = vperm.xlu0 %3358, %v3177
    %v3360 = vpop.permute.xlu0 %3359
    %3363 = vset.pattern.permute.xlu0 0
    %3364 = vperm.xlu0 %3363, %v3178
    %v3365 = vpop.permute.xlu0 %3364
    %3368 = vset.pattern.permute.xlu0 0
    %3369 = vperm.xlu0 %3368, %v3179
    %v3370 = vpop.permute.xlu0 %3369
    %3373 = vset.pattern.permute.xlu0 0
    %3374 = vperm.xlu0 %3373, %v3180
    %v3375 = vpop.permute.xlu0 %3374
    %3378 = vset.pattern.permute.xlu0 0
    %3379 = vperm.xlu0 %3378, %v3181
    %v3380 = vpop.permute.xlu0 %3379
    %3383 = vset.pattern.permute.xlu0 0
    %3384 = vperm.xlu0 %3383, %v3182
    %v3385 = vpop.permute.xlu0 %3384
    %3388 = vset.pattern.permute.xlu0 0
    %3389 = vperm.xlu0 %3388, %v3183
    %v3390 = vpop.permute.xlu0 %3389
    %3393 = vset.pattern.permute.xlu0 0
    %3394 = vperm.xlu0 %3393, %v3184
    %v3395 = vpop.permute.xlu0 %3394
    %3398 = vset.pattern.permute.xlu0 0
    %3399 = vperm.xlu0 %3398, %v3185
    %v3400 = vpop.permute.xlu0 %3399
    %3403 = vset.pattern.permute.xlu0 0
    %3404 = vperm.xlu0 %3403, %v3186
    %v3405 = vpop.permute.xlu0 %3404
    %3408 = vset.pattern.permute.xlu0 0
    %3409 = vperm.xlu0 %3408, %v3187
    %v3410 = vpop.permute.xlu0 %3409
    %3413 = vset.pattern.permute.xlu0 0
    %3414 = vperm.xlu0 %3413, %v3188
    %v3415 = vpop.permute.xlu0 %3414
    %3418 = vset.pattern.permute.xlu0 0
    %3419 = vperm.xlu0 %3418, %v3189
    %v3420 = vpop.permute.xlu0 %3419
    %3423 = vset.pattern.permute.xlu0 0
    %3424 = vperm.xlu0 %3423, %v3190
    %v3425 = vpop.permute.xlu0 %3424
    %3428 = vset.pattern.permute.xlu0 0
    %3429 = vperm.xlu0 %3428, %v3191
    %v3430 = vpop.permute.xlu0 %3429
    %3433 = vset.pattern.permute.xlu0 0
    %3434 = vperm.xlu0 %3433, %v3192
    %v3435 = vpop.permute.xlu0 %3434
    %3438 = vset.pattern.permute.xlu0 0
    %3439 = vperm.xlu0 %3438, %v3193
    %v3440 = vpop.permute.xlu0 %3439
    %3443 = vset.pattern.permute.xlu0 0
    %3444 = vperm.xlu0 %3443, %v3194
    %v3445 = vpop.permute.xlu0 %3444
    %3448 = vset.pattern.permute.xlu0 0
    %3449 = vperm.xlu0 %3448, %v3195
    %v3450 = vpop.permute.xlu0 %3449
    %3453 = vset.pattern.permute.xlu0 0
    %3454 = vperm.xlu0 %3453, %v3196
    %v3455 = vpop.permute.xlu0 %3454
    %3458 = vset.pattern.permute.xlu0 0
    %3459 = vperm.xlu0 %3458, %v3197
    %v3460 = vpop.permute.xlu0 %3459
    %3463 = vset.pattern.permute.xlu0 0
    %3464 = vperm.xlu0 %3463, %v3198
    %v3465 = vpop.permute.xlu0 %3464
    %3468 = vset.pattern.permute.xlu0 0
    %3469 = vperm.xlu0 %3468, %v3199
    %v3470 = vpop.permute.xlu0 %3469
    %3473 = vset.pattern.permute.xlu0 0
    %3474 = vperm.xlu0 %3473, %v3200
    %v3475 = vpop.permute.xlu0 %3474
    %3478 = vset.pattern.permute.xlu0 0
    %3479 = vperm.xlu0 %3478, %v3201
    %v3480 = vpop.permute.xlu0 %3479
    %3483 = vset.pattern.permute.xlu0 0
    %3484 = vperm.xlu0 %3483, %v3202
    %v3485 = vpop.permute.xlu0 %3484
    %3488 = vset.pattern.permute.xlu0 0
    %3489 = vperm.xlu0 %3488, %v3203
    %v3490 = vpop.permute.xlu0 %3489
    %3493 = vset.pattern.permute.xlu0 0
    %3494 = vperm.xlu0 %3493, %v3204
    %v3495 = vpop.permute.xlu0 %3494
    %3498 = vset.pattern.permute.xlu0 0
    %3499 = vperm.xlu0 %3498, %v3205
    %v3500 = vpop.permute.xlu0 %3499
    %3503 = vset.pattern.permute.xlu0 0
    %3504 = vperm.xlu0 %3503, %v3206
    %v3505 = vpop.permute.xlu0 %3504
    %3508 = vset.pattern.permute.xlu0 0
    %3509 = vperm.xlu0 %3508, %v3207
    %v3510 = vpop.permute.xlu0 %3509
    %3513 = vset.pattern.permute.xlu0 0
    %3514 = vperm.xlu0 %3513, %v3208
    %v3515 = vpop.permute.xlu0 %3514
    %3518 = vset.pattern.permute.xlu0 0
    %3519 = vperm.xlu0 %3518, %v3209
    %v3520 = vpop.permute.xlu0 %3519
    %3523 = vset.pattern.permute.xlu0 0
    %3524 = vperm.xlu0 %3523, %v3210
    %v3525 = vpop.permute.xlu0 %3524
    %3528 = vset.pattern.permute.xlu0 0
    %3529 = vperm.xlu0 %3528, %v3211
    %v3530 = vpop.permute.xlu0 %3529
    %v3532 = vlaneseq
    %v3533 = vshrl.u32 %v3532, 7
    %v3534 = vsub.s32 6, %v3533
    %v3535 = vrot.slane %v40, %v3534
    %v3536 = vmul.f32 %v3215, %v3535
    %v3537 = vmul.f32 %v3220, %v3535
    %v3538 = vmul.f32 %v3225, %v3535
    %v3539 = vmul.f32 %v3230, %v3535
    %v3540 = vmul.f32 %v3235, %v3535
    %v3541 = vmul.f32 %v3240, %v3535
    %v3542 = vmul.f32 %v3245, %v3535
    %v3543 = vmul.f32 %v3250, %v3535
    %v3544 = vmul.f32 %v3255, %v3535
    %v3545 = vmul.f32 %v3260, %v3535
    %v3546 = vmul.f32 %v3265, %v3535
    %v3547 = vmul.f32 %v3270, %v3535
    %v3548 = vmul.f32 %v3275, %v3535
    %v3549 = vmul.f32 %v3280, %v3535
    %v3550 = vmul.f32 %v3285, %v3535
    %v3551 = vmul.f32 %v3290, %v3535
    %v3552 = vmul.f32 %v3295, %v3535
    %v3553 = vmul.f32 %v3300, %v3535
    %v3554 = vmul.f32 %v3305, %v3535
    %v3555 = vmul.f32 %v3310, %v3535
    %v3556 = vmul.f32 %v3315, %v3535
    %v3557 = vmul.f32 %v3320, %v3535
    %v3558 = vmul.f32 %v3325, %v3535
    %v3559 = vmul.f32 %v3330, %v3535
    %v3560 = vmul.f32 %v3335, %v3535
    %v3561 = vmul.f32 %v3340, %v3535
    %v3562 = vmul.f32 %v3345, %v3535
    %v3563 = vmul.f32 %v3350, %v3535
    %v3564 = vmul.f32 %v3355, %v3535
    %v3565 = vmul.f32 %v3360, %v3535
    %v3566 = vmul.f32 %v3365, %v3535
    %v3567 = vmul.f32 %v3370, %v3535
    %v3568 = vmul.f32 %v3375, %v3535
    %v3569 = vmul.f32 %v3380, %v3535
    %v3570 = vmul.f32 %v3385, %v3535
    %v3571 = vmul.f32 %v3390, %v3535
    %v3572 = vmul.f32 %v3395, %v3535
    %v3573 = vmul.f32 %v3400, %v3535
    %v3574 = vmul.f32 %v3405, %v3535
    %v3575 = vmul.f32 %v3410, %v3535
    %v3576 = vmul.f32 %v3415, %v3535
    %v3577 = vmul.f32 %v3420, %v3535
    %v3578 = vmul.f32 %v3425, %v3535
    %v3579 = vmul.f32 %v3430, %v3535
    %v3580 = vmul.f32 %v3435, %v3535
    %v3581 = vmul.f32 %v3440, %v3535
    %v3582 = vmul.f32 %v3445, %v3535
    %v3583 = vmul.f32 %v3450, %v3535
    %v3584 = vmul.f32 %v3455, %v3535
    %v3585 = vmul.f32 %v3460, %v3535
    %v3586 = vmul.f32 %v3465, %v3535
    %v3587 = vmul.f32 %v3470, %v3535
    %v3588 = vmul.f32 %v3475, %v3535
    %v3589 = vmul.f32 %v3480, %v3535
    %v3590 = vmul.f32 %v3485, %v3535
    %v3591 = vmul.f32 %v3490, %v3535
    %v3592 = vmul.f32 %v3495, %v3535
    %v3593 = vmul.f32 %v3500, %v3535
    %v3594 = vmul.f32 %v3505, %v3535
    %v3595 = vmul.f32 %v3510, %v3535
    %v3596 = vmul.f32 %v3515, %v3535
    %v3597 = vmul.f32 %v3520, %v3535
    %v3598 = vmul.f32 %v3525, %v3535
    %v3599 = vmul.f32 %v3530, %v3535
    %v3600 = vadd.f32 %v3083, %v3536
    %v3601 = vadd.f32 %v3084, %v3537
    %v3602 = vadd.f32 %v3085, %v3538
    %v3603 = vadd.f32 %v3086, %v3539
    %v3604 = vadd.f32 %v3087, %v3540
    %v3605 = vadd.f32 %v3088, %v3541
    %v3606 = vadd.f32 %v3089, %v3542
    %v3607 = vadd.f32 %v3090, %v3543
    %v3608 = vadd.f32 %v3091, %v3544
    %v3609 = vadd.f32 %v3092, %v3545
    %v3610 = vadd.f32 %v3093, %v3546
    %v3611 = vadd.f32 %v3094, %v3547
    %v3612 = vadd.f32 %v3095, %v3548
    %v3613 = vadd.f32 %v3096, %v3549
    %v3614 = vadd.f32 %v3097, %v3550
    %v3615 = vadd.f32 %v3098, %v3551
    %v3616 = vadd.f32 %v3099, %v3552
    %v3617 = vadd.f32 %v3100, %v3553
    %v3618 = vadd.f32 %v3101, %v3554
    %v3619 = vadd.f32 %v3102, %v3555
    %v3620 = vadd.f32 %v3103, %v3556
    %v3621 = vadd.f32 %v3104, %v3557
    %v3622 = vadd.f32 %v3105, %v3558
    %v3623 = vadd.f32 %v3106, %v3559
    %v3624 = vadd.f32 %v3107, %v3560
    %v3625 = vadd.f32 %v3108, %v3561
    %v3626 = vadd.f32 %v3109, %v3562
    %v3627 = vadd.f32 %v3110, %v3563
    %v3628 = vadd.f32 %v3111, %v3564
    %v3629 = vadd.f32 %v3112, %v3565
    %v3630 = vadd.f32 %v3113, %v3566
    %v3631 = vadd.f32 %v3114, %v3567
    %v3632 = vadd.f32 %v3115, %v3568
    %v3633 = vadd.f32 %v3116, %v3569
    %v3634 = vadd.f32 %v3117, %v3570
    %v3635 = vadd.f32 %v3118, %v3571
    %v3636 = vadd.f32 %v3119, %v3572
    %v3637 = vadd.f32 %v3120, %v3573
    %v3638 = vadd.f32 %v3121, %v3574
    %v3639 = vadd.f32 %v3122, %v3575
    %v3640 = vadd.f32 %v3123, %v3576
    %v3641 = vadd.f32 %v3124, %v3577
    %v3642 = vadd.f32 %v3125, %v3578
    %v3643 = vadd.f32 %v3126, %v3579
    %v3644 = vadd.f32 %v3127, %v3580
    %v3645 = vadd.f32 %v3128, %v3581
    %v3646 = vadd.f32 %v3129, %v3582
    %v3647 = vadd.f32 %v3130, %v3583
    %v3648 = vadd.f32 %v3131, %v3584
    %v3649 = vadd.f32 %v3132, %v3585
    %v3650 = vadd.f32 %v3133, %v3586
    %v3651 = vadd.f32 %v3134, %v3587
    %v3652 = vadd.f32 %v3135, %v3588
    %v3653 = vadd.f32 %v3136, %v3589
    %v3654 = vadd.f32 %v3137, %v3590
    %v3655 = vadd.f32 %v3138, %v3591
    %v3656 = vadd.f32 %v3139, %v3592
    %v3657 = vadd.f32 %v3140, %v3593
    %v3658 = vadd.f32 %v3141, %v3594
    %v3659 = vadd.f32 %v3142, %v3595
    %v3660 = vadd.f32 %v3143, %v3596
    %v3661 = vadd.f32 %v3144, %v3597
    %v3662 = vadd.f32 %v3145, %v3598
    %v3663 = vadd.f32 %v3146, %v3599
    %v3664 = vld [vmem:[%s3147 + $0x1] sm:$0xff]
    %v3665 = vld [vmem:[%s3147 + $0x9] sm:$0xff]
    %v3666 = vld [vmem:[%s3147 + $0x19] sm:$0xff]
    %v3667 = vld [vmem:[%s3147 + $0x21] sm:$0xff]
    %v3668 = vld [vmem:[%s3147 + $0x31] sm:$0xff]
    %v3669 = vld [vmem:[%s3147 + $0x39] sm:$0xff]
    %v3670 = vld [vmem:[%s3147 + $0x49] sm:$0xff]
    %v3671 = vld [vmem:[%s3147 + $0x51] sm:$0xff]
    %v3672 = vld [vmem:[%s3147 + $0x61] sm:$0xff]
    %v3673 = vld [vmem:[%s3147 + $0x69] sm:$0xff]
    %v3674 = vld [vmem:[%s3147 + $0x79] sm:$0xff]
    %v3675 = vld [vmem:[%s3147 + $0x81] sm:$0xff]
    %v3676 = vld [vmem:[%s3147 + $0x91] sm:$0xff]
    %v3677 = vld [vmem:[%s3147 + $0x99] sm:$0xff]
    %v3678 = vld [vmem:[%s3147 + $0xa9] sm:$0xff]
    %v3679 = vld [vmem:[%s3147 + $0xb1] sm:$0xff]
    %v3680 = vld [vmem:[%s3147 + $0xc1] sm:$0xff]
    %v3681 = vld [vmem:[%s3147 + $0xc9] sm:$0xff]
    %v3682 = vld [vmem:[%s3147 + $0xd9] sm:$0xff]
    %v3683 = vld [vmem:[%s3147 + $0xe1] sm:$0xff]
    %v3684 = vld [vmem:[%s3147 + $0xf1] sm:$0xff]
    %v3685 = vld [vmem:[%s3147 + $0xf9] sm:$0xff]
    %v3686 = vld [vmem:[%s3147 + $0x109] sm:$0xff]
    %v3687 = vld [vmem:[%s3147 + $0x111] sm:$0xff]
    %v3688 = vld [vmem:[%s3147 + $0x121] sm:$0xff]
    %v3689 = vld [vmem:[%s3147 + $0x129] sm:$0xff]
    %v3690 = vld [vmem:[%s3147 + $0x139] sm:$0xff]
    %v3691 = vld [vmem:[%s3147 + $0x141] sm:$0xff]
    %v3692 = vld [vmem:[%s3147 + $0x151] sm:$0xff]
    %v3693 = vld [vmem:[%s3147 + $0x159] sm:$0xff]
    %v3694 = vld [vmem:[%s3147 + $0x169] sm:$0xff]
    %v3695 = vld [vmem:[%s3147 + $0x171] sm:$0xff]
    %v3696 = vld [vmem:[%s3147 + $0x1b1] sm:$0xff]
    %v3697 = vld [vmem:[%s3147 + $0x1b9] sm:$0xff]
    %v3698 = vld [vmem:[%s3147 + $0x1c9] sm:$0xff]
    %v3699 = vld [vmem:[%s3147 + $0x1d1] sm:$0xff]
    %v3700 = vld [vmem:[%s3147 + $0x1e1] sm:$0xff]
    %v3701 = vld [vmem:[%s3147 + $0x1e9] sm:$0xff]
    %v3702 = vld [vmem:[%s3147 + $0x1f9] sm:$0xff]
    %v3703 = vld [vmem:[%s3147 + $0x201] sm:$0xff]
    %v3704 = vld [vmem:[%s3147 + $0x211] sm:$0xff]
    %v3705 = vld [vmem:[%s3147 + $0x219] sm:$0xff]
    %v3706 = vld [vmem:[%s3147 + $0x229] sm:$0xff]
    %v3707 = vld [vmem:[%s3147 + $0x231] sm:$0xff]
    %v3708 = vld [vmem:[%s3147 + $0x241] sm:$0xff]
    %v3709 = vld [vmem:[%s3147 + $0x249] sm:$0xff]
    %v3710 = vld [vmem:[%s3147 + $0x259] sm:$0xff]
    %v3711 = vld [vmem:[%s3147 + $0x261] sm:$0xff]
    %v3712 = vld [vmem:[%s3147 + $0x271] sm:$0xff]
    %v3713 = vld [vmem:[%s3147 + $0x279] sm:$0xff]
    %v3714 = vld [vmem:[%s3147 + $0x289] sm:$0xff]
    %v3715 = vld [vmem:[%s3147 + $0x291] sm:$0xff]
    %v3716 = vld [vmem:[%s3147 + $0x2a1] sm:$0xff]
    %v3717 = vld [vmem:[%s3147 + $0x2a9] sm:$0xff]
    %v3718 = vld [vmem:[%s3147 + $0x2b9] sm:$0xff]
    %v3719 = vld [vmem:[%s3147 + $0x2c1] sm:$0xff]
    %v3720 = vld [vmem:[%s3147 + $0x2d1] sm:$0xff]
    %v3721 = vld [vmem:[%s3147 + $0x2d9] sm:$0xff]
    %v3722 = vld [vmem:[%s3147 + $0x2e9] sm:$0xff]
    %v3723 = vld [vmem:[%s3147 + $0x2f1] sm:$0xff]
    %v3724 = vld [vmem:[%s3147 + $0x301] sm:$0xff]
    %v3725 = vld [vmem:[%s3147 + $0x309] sm:$0xff]
    %v3726 = vld [vmem:[%s3147 + $0x319] sm:$0xff]
    %v3727 = vld [vmem:[%s3147 + $0x321] sm:$0xff]
    %3729 = vset.pattern.permute.xlu0 0
    %3730 = vperm.xlu0 %3729, %v3664
    %v3731 = vpop.permute.xlu0 %3730
    %3734 = vset.pattern.permute.xlu0 0
    %3735 = vperm.xlu0 %3734, %v3665
    %v3736 = vpop.permute.xlu0 %3735
    %3739 = vset.pattern.permute.xlu0 0
    %3740 = vperm.xlu0 %3739, %v3666
    %v3741 = vpop.permute.xlu0 %3740
    %3744 = vset.pattern.permute.xlu0 0
    %3745 = vperm.xlu0 %3744, %v3667
    %v3746 = vpop.permute.xlu0 %3745
    %3749 = vset.pattern.permute.xlu0 0
    %3750 = vperm.xlu0 %3749, %v3668
    %v3751 = vpop.permute.xlu0 %3750
    %3754 = vset.pattern.permute.xlu0 0
    %3755 = vperm.xlu0 %3754, %v3669
    %v3756 = vpop.permute.xlu0 %3755
    %3759 = vset.pattern.permute.xlu0 0
    %3760 = vperm.xlu0 %3759, %v3670
    %v3761 = vpop.permute.xlu0 %3760
    %3764 = vset.pattern.permute.xlu0 0
    %3765 = vperm.xlu0 %3764, %v3671
    %v3766 = vpop.permute.xlu0 %3765
    %3769 = vset.pattern.permute.xlu0 0
    %3770 = vperm.xlu0 %3769, %v3672
    %v3771 = vpop.permute.xlu0 %3770
    %3774 = vset.pattern.permute.xlu0 0
    %3775 = vperm.xlu0 %3774, %v3673
    %v3776 = vpop.permute.xlu0 %3775
    %3779 = vset.pattern.permute.xlu0 0
    %3780 = vperm.xlu0 %3779, %v3674
    %v3781 = vpop.permute.xlu0 %3780
    %3784 = vset.pattern.permute.xlu0 0
    %3785 = vperm.xlu0 %3784, %v3675
    %v3786 = vpop.permute.xlu0 %3785
    %3789 = vset.pattern.permute.xlu0 0
    %3790 = vperm.xlu0 %3789, %v3676
    %v3791 = vpop.permute.xlu0 %3790
    %3794 = vset.pattern.permute.xlu0 0
    %3795 = vperm.xlu0 %3794, %v3677
    %v3796 = vpop.permute.xlu0 %3795
    %3799 = vset.pattern.permute.xlu0 0
    %3800 = vperm.xlu0 %3799, %v3678
    %v3801 = vpop.permute.xlu0 %3800
    %3804 = vset.pattern.permute.xlu0 0
    %3805 = vperm.xlu0 %3804, %v3679
    %v3806 = vpop.permute.xlu0 %3805
    %3809 = vset.pattern.permute.xlu0 0
    %3810 = vperm.xlu0 %3809, %v3680
    %v3811 = vpop.permute.xlu0 %3810
    %3814 = vset.pattern.permute.xlu0 0
    %3815 = vperm.xlu0 %3814, %v3681
    %v3816 = vpop.permute.xlu0 %3815
    %3819 = vset.pattern.permute.xlu0 0
    %3820 = vperm.xlu0 %3819, %v3682
    %v3821 = vpop.permute.xlu0 %3820
    %3824 = vset.pattern.permute.xlu0 0
    %3825 = vperm.xlu0 %3824, %v3683
    %v3826 = vpop.permute.xlu0 %3825
    %3829 = vset.pattern.permute.xlu0 0
    %3830 = vperm.xlu0 %3829, %v3684
    %v3831 = vpop.permute.xlu0 %3830
    %3834 = vset.pattern.permute.xlu0 0
    %3835 = vperm.xlu0 %3834, %v3685
    %v3836 = vpop.permute.xlu0 %3835
    %3839 = vset.pattern.permute.xlu0 0
    %3840 = vperm.xlu0 %3839, %v3686
    %v3841 = vpop.permute.xlu0 %3840
    %3844 = vset.pattern.permute.xlu0 0
    %3845 = vperm.xlu0 %3844, %v3687
    %v3846 = vpop.permute.xlu0 %3845
    %3849 = vset.pattern.permute.xlu0 0
    %3850 = vperm.xlu0 %3849, %v3688
    %v3851 = vpop.permute.xlu0 %3850
    %3854 = vset.pattern.permute.xlu0 0
    %3855 = vperm.xlu0 %3854, %v3689
    %v3856 = vpop.permute.xlu0 %3855
    %3859 = vset.pattern.permute.xlu0 0
    %3860 = vperm.xlu0 %3859, %v3690
    %v3861 = vpop.permute.xlu0 %3860
    %3864 = vset.pattern.permute.xlu0 0
    %3865 = vperm.xlu0 %3864, %v3691
    %v3866 = vpop.permute.xlu0 %3865
    %3869 = vset.pattern.permute.xlu0 0
    %3870 = vperm.xlu0 %3869, %v3692
    %v3871 = vpop.permute.xlu0 %3870
    %3874 = vset.pattern.permute.xlu0 0
    %3875 = vperm.xlu0 %3874, %v3693
    %v3876 = vpop.permute.xlu0 %3875
    %3879 = vset.pattern.permute.xlu0 0
    %3880 = vperm.xlu0 %3879, %v3694
    %v3881 = vpop.permute.xlu0 %3880
    %3884 = vset.pattern.permute.xlu0 0
    %3885 = vperm.xlu0 %3884, %v3695
    %v3886 = vpop.permute.xlu0 %3885
    %3889 = vset.pattern.permute.xlu0 0
    %3890 = vperm.xlu0 %3889, %v3696
    %v3891 = vpop.permute.xlu0 %3890
    %3894 = vset.pattern.permute.xlu0 0
    %3895 = vperm.xlu0 %3894, %v3697
    %v3896 = vpop.permute.xlu0 %3895
    %3899 = vset.pattern.permute.xlu0 0
    %3900 = vperm.xlu0 %3899, %v3698
    %v3901 = vpop.permute.xlu0 %3900
    %3904 = vset.pattern.permute.xlu0 0
    %3905 = vperm.xlu0 %3904, %v3699
    %v3906 = vpop.permute.xlu0 %3905
    %3909 = vset.pattern.permute.xlu0 0
    %3910 = vperm.xlu0 %3909, %v3700
    %v3911 = vpop.permute.xlu0 %3910
    %3914 = vset.pattern.permute.xlu0 0
    %3915 = vperm.xlu0 %3914, %v3701
    %v3916 = vpop.permute.xlu0 %3915
    %3919 = vset.pattern.permute.xlu0 0
    %3920 = vperm.xlu0 %3919, %v3702
    %v3921 = vpop.permute.xlu0 %3920
    %3924 = vset.pattern.permute.xlu0 0
    %3925 = vperm.xlu0 %3924, %v3703
    %v3926 = vpop.permute.xlu0 %3925
    %3929 = vset.pattern.permute.xlu0 0
    %3930 = vperm.xlu0 %3929, %v3704
    %v3931 = vpop.permute.xlu0 %3930
    %3934 = vset.pattern.permute.xlu0 0
    %3935 = vperm.xlu0 %3934, %v3705
    %v3936 = vpop.permute.xlu0 %3935
    %3939 = vset.pattern.permute.xlu0 0
    %3940 = vperm.xlu0 %3939, %v3706
    %v3941 = vpop.permute.xlu0 %3940
    %3944 = vset.pattern.permute.xlu0 0
    %3945 = vperm.xlu0 %3944, %v3707
    %v3946 = vpop.permute.xlu0 %3945
    %3949 = vset.pattern.permute.xlu0 0
    %3950 = vperm.xlu0 %3949, %v3708
    %v3951 = vpop.permute.xlu0 %3950
    %3954 = vset.pattern.permute.xlu0 0
    %3955 = vperm.xlu0 %3954, %v3709
    %v3956 = vpop.permute.xlu0 %3955
    %3959 = vset.pattern.permute.xlu0 0
    %3960 = vperm.xlu0 %3959, %v3710
    %v3961 = vpop.permute.xlu0 %3960
    %3964 = vset.pattern.permute.xlu0 0
    %3965 = vperm.xlu0 %3964, %v3711
    %v3966 = vpop.permute.xlu0 %3965
    %3969 = vset.pattern.permute.xlu0 0
    %3970 = vperm.xlu0 %3969, %v3712
    %v3971 = vpop.permute.xlu0 %3970
    %3974 = vset.pattern.permute.xlu0 0
    %3975 = vperm.xlu0 %3974, %v3713
    %v3976 = vpop.permute.xlu0 %3975
    %3979 = vset.pattern.permute.xlu0 0
    %3980 = vperm.xlu0 %3979, %v3714
    %v3981 = vpop.permute.xlu0 %3980
    %3984 = vset.pattern.permute.xlu0 0
    %3985 = vperm.xlu0 %3984, %v3715
    %v3986 = vpop.permute.xlu0 %3985
    %3989 = vset.pattern.permute.xlu0 0
    %3990 = vperm.xlu0 %3989, %v3716
    %v3991 = vpop.permute.xlu0 %3990
    %3994 = vset.pattern.permute.xlu0 0
    %3995 = vperm.xlu0 %3994, %v3717
    %v3996 = vpop.permute.xlu0 %3995
    %3999 = vset.pattern.permute.xlu0 0
    %4000 = vperm.xlu0 %3999, %v3718
    %v4001 = vpop.permute.xlu0 %4000
    %4004 = vset.pattern.permute.xlu0 0
    %4005 = vperm.xlu0 %4004, %v3719
    %v4006 = vpop.permute.xlu0 %4005
    %4009 = vset.pattern.permute.xlu0 0
    %4010 = vperm.xlu0 %4009, %v3720
    %v4011 = vpop.permute.xlu0 %4010
    %4014 = vset.pattern.permute.xlu0 0
    %4015 = vperm.xlu0 %4014, %v3721
    %v4016 = vpop.permute.xlu0 %4015
    %4019 = vset.pattern.permute.xlu0 0
    %4020 = vperm.xlu0 %4019, %v3722
    %v4021 = vpop.permute.xlu0 %4020
    %4024 = vset.pattern.permute.xlu0 0
    %4025 = vperm.xlu0 %4024, %v3723
    %v4026 = vpop.permute.xlu0 %4025
    %4029 = vset.pattern.permute.xlu0 0
    %4030 = vperm.xlu0 %4029, %v3724
    %v4031 = vpop.permute.xlu0 %4030
    %4034 = vset.pattern.permute.xlu0 0
    %4035 = vperm.xlu0 %4034, %v3725
    %v4036 = vpop.permute.xlu0 %4035
    %4039 = vset.pattern.permute.xlu0 0
    %4040 = vperm.xlu0 %4039, %v3726
    %v4041 = vpop.permute.xlu0 %4040
    %4044 = vset.pattern.permute.xlu0 0
    %4045 = vperm.xlu0 %4044, %v3727
    %v4046 = vpop.permute.xlu0 %4045
    %v4048 = vlaneseq
    %v4049 = vshrl.u32 %v4048, 7
    %v4050 = vsub.s32 7, %v4049
    %v4051 = vrot.slane %v40, %v4050
    %v4052 = vmul.f32 %v3731, %v4051
    %v4053 = vmul.f32 %v3736, %v4051
    %v4054 = vmul.f32 %v3741, %v4051
    %v4055 = vmul.f32 %v3746, %v4051
    %v4056 = vmul.f32 %v3751, %v4051
    %v4057 = vmul.f32 %v3756, %v4051
    %v4058 = vmul.f32 %v3761, %v4051
    %v4059 = vmul.f32 %v3766, %v4051
    %v4060 = vmul.f32 %v3771, %v4051
    %v4061 = vmul.f32 %v3776, %v4051
    %v4062 = vmul.f32 %v3781, %v4051
    %v4063 = vmul.f32 %v3786, %v4051
    %v4064 = vmul.f32 %v3791, %v4051
    %v4065 = vmul.f32 %v3796, %v4051
    %v4066 = vmul.f32 %v3801, %v4051
    %v4067 = vmul.f32 %v3806, %v4051
    %v4068 = vmul.f32 %v3811, %v4051
    %v4069 = vmul.f32 %v3816, %v4051
    %v4070 = vmul.f32 %v3821, %v4051
    %v4071 = vmul.f32 %v3826, %v4051
    %v4072 = vmul.f32 %v3831, %v4051
    %v4073 = vmul.f32 %v3836, %v4051
    %v4074 = vmul.f32 %v3841, %v4051
    %v4075 = vmul.f32 %v3846, %v4051
    %v4076 = vmul.f32 %v3851, %v4051
    %v4077 = vmul.f32 %v3856, %v4051
    %v4078 = vmul.f32 %v3861, %v4051
    %v4079 = vmul.f32 %v3866, %v4051
    %v4080 = vmul.f32 %v3871, %v4051
    %v4081 = vmul.f32 %v3876, %v4051
    %v4082 = vmul.f32 %v3881, %v4051
    %v4083 = vmul.f32 %v3886, %v4051
    %v4084 = vmul.f32 %v3891, %v4051
    %v4085 = vmul.f32 %v3896, %v4051
    %v4086 = vmul.f32 %v3901, %v4051
    %v4087 = vmul.f32 %v3906, %v4051
    %v4088 = vmul.f32 %v3911, %v4051
    %v4089 = vmul.f32 %v3916, %v4051
    %v4090 = vmul.f32 %v3921, %v4051
    %v4091 = vmul.f32 %v3926, %v4051
    %v4092 = vmul.f32 %v3931, %v4051
    %v4093 = vmul.f32 %v3936, %v4051
    %v4094 = vmul.f32 %v3941, %v4051
    %v4095 = vmul.f32 %v3946, %v4051
    %v4096 = vmul.f32 %v3951, %v4051
    %v4097 = vmul.f32 %v3956, %v4051
    %v4098 = vmul.f32 %v3961, %v4051
    %v4099 = vmul.f32 %v3966, %v4051
    %v4100 = vmul.f32 %v3971, %v4051
    %v4101 = vmul.f32 %v3976, %v4051
    %v4102 = vmul.f32 %v3981, %v4051
    %v4103 = vmul.f32 %v3986, %v4051
    %v4104 = vmul.f32 %v3991, %v4051
    %v4105 = vmul.f32 %v3996, %v4051
    %v4106 = vmul.f32 %v4001, %v4051
    %v4107 = vmul.f32 %v4006, %v4051
    %v4108 = vmul.f32 %v4011, %v4051
    %v4109 = vmul.f32 %v4016, %v4051
    %v4110 = vmul.f32 %v4021, %v4051
    %v4111 = vmul.f32 %v4026, %v4051
    %v4112 = vmul.f32 %v4031, %v4051
    %v4113 = vmul.f32 %v4036, %v4051
    %v4114 = vmul.f32 %v4041, %v4051
    %v4115 = vmul.f32 %v4046, %v4051
    %v4116 = vadd.f32 %v3600, %v4052
    %v4117 = vadd.f32 %v3601, %v4053
    %v4118 = vadd.f32 %v3602, %v4054
    %v4119 = vadd.f32 %v3603, %v4055
    %v4120 = vadd.f32 %v3604, %v4056
    %v4121 = vadd.f32 %v3605, %v4057
    %v4122 = vadd.f32 %v3606, %v4058
    %v4123 = vadd.f32 %v3607, %v4059
    %v4124 = vadd.f32 %v3608, %v4060
    %v4125 = vadd.f32 %v3609, %v4061
    %v4126 = vadd.f32 %v3610, %v4062
    %v4127 = vadd.f32 %v3611, %v4063
    %v4128 = vadd.f32 %v3612, %v4064
    %v4129 = vadd.f32 %v3613, %v4065
    %v4130 = vadd.f32 %v3614, %v4066
    %v4131 = vadd.f32 %v3615, %v4067
    %v4132 = vadd.f32 %v3616, %v4068
    %v4133 = vadd.f32 %v3617, %v4069
    %v4134 = vadd.f32 %v3618, %v4070
    %v4135 = vadd.f32 %v3619, %v4071
    %v4136 = vadd.f32 %v3620, %v4072
    %v4137 = vadd.f32 %v3621, %v4073
    %v4138 = vadd.f32 %v3622, %v4074
    %v4139 = vadd.f32 %v3623, %v4075
    %v4140 = vadd.f32 %v3624, %v4076
    %v4141 = vadd.f32 %v3625, %v4077
    %v4142 = vadd.f32 %v3626, %v4078
    %v4143 = vadd.f32 %v3627, %v4079
    %v4144 = vadd.f32 %v3628, %v4080
    %v4145 = vadd.f32 %v3629, %v4081
    %v4146 = vadd.f32 %v3630, %v4082
    %v4147 = vadd.f32 %v3631, %v4083
    %v4148 = vadd.f32 %v3632, %v4084
    %v4149 = vadd.f32 %v3633, %v4085
    %v4150 = vadd.f32 %v3634, %v4086
    %v4151 = vadd.f32 %v3635, %v4087
    %v4152 = vadd.f32 %v3636, %v4088
    %v4153 = vadd.f32 %v3637, %v4089
    %v4154 = vadd.f32 %v3638, %v4090
    %v4155 = vadd.f32 %v3639, %v4091
    %v4156 = vadd.f32 %v3640, %v4092
    %v4157 = vadd.f32 %v3641, %v4093
    %v4158 = vadd.f32 %v3642, %v4094
    %v4159 = vadd.f32 %v3643, %v4095
    %v4160 = vadd.f32 %v3644, %v4096
    %v4161 = vadd.f32 %v3645, %v4097
    %v4162 = vadd.f32 %v3646, %v4098
    %v4163 = vadd.f32 %v3647, %v4099
    %v4164 = vadd.f32 %v3648, %v4100
    %v4165 = vadd.f32 %v3649, %v4101
    %v4166 = vadd.f32 %v3650, %v4102
    %v4167 = vadd.f32 %v3651, %v4103
    %v4168 = vadd.f32 %v3652, %v4104
    %v4169 = vadd.f32 %v3653, %v4105
    %v4170 = vadd.f32 %v3654, %v4106
    %v4171 = vadd.f32 %v3655, %v4107
    %v4172 = vadd.f32 %v3656, %v4108
    %v4173 = vadd.f32 %v3657, %v4109
    %v4174 = vadd.f32 %v3658, %v4110
    %v4175 = vadd.f32 %v3659, %v4111
    %v4176 = vadd.f32 %v3660, %v4112
    %v4177 = vadd.f32 %v3661, %v4113
    %v4178 = vadd.f32 %v3662, %v4114
    %v4179 = vadd.f32 %v3663, %v4115
    %v4180 = vld [vmem:[%s3147 + $0x2] sm:$0xff]
    %v4181 = vld [vmem:[%s3147 + $0xa] sm:$0xff]
    %v4182 = vld [vmem:[%s3147 + $0x1a] sm:$0xff]
    %v4183 = vld [vmem:[%s3147 + $0x22] sm:$0xff]
    %v4184 = vld [vmem:[%s3147 + $0x32] sm:$0xff]
    %v4185 = vld [vmem:[%s3147 + $0x3a] sm:$0xff]
    %v4186 = vld [vmem:[%s3147 + $0x4a] sm:$0xff]
    %v4187 = vld [vmem:[%s3147 + $0x52] sm:$0xff]
    %v4188 = vld [vmem:[%s3147 + $0x62] sm:$0xff]
    %v4189 = vld [vmem:[%s3147 + $0x6a] sm:$0xff]
    %v4190 = vld [vmem:[%s3147 + $0x7a] sm:$0xff]
    %v4191 = vld [vmem:[%s3147 + $0x82] sm:$0xff]
    %v4192 = vld [vmem:[%s3147 + $0x92] sm:$0xff]
    %v4193 = vld [vmem:[%s3147 + $0x9a] sm:$0xff]
    %v4194 = vld [vmem:[%s3147 + $0xaa] sm:$0xff]
    %v4195 = vld [vmem:[%s3147 + $0xb2] sm:$0xff]
    %v4196 = vld [vmem:[%s3147 + $0xc2] sm:$0xff]
    %v4197 = vld [vmem:[%s3147 + $0xca] sm:$0xff]
    %v4198 = vld [vmem:[%s3147 + $0xda] sm:$0xff]
    %v4199 = vld [vmem:[%s3147 + $0xe2] sm:$0xff]
    %v4200 = vld [vmem:[%s3147 + $0xf2] sm:$0xff]
    %v4201 = vld [vmem:[%s3147 + $0xfa] sm:$0xff]
    %v4202 = vld [vmem:[%s3147 + $0x10a] sm:$0xff]
    %v4203 = vld [vmem:[%s3147 + $0x112] sm:$0xff]
    %v4204 = vld [vmem:[%s3147 + $0x122] sm:$0xff]
    %v4205 = vld [vmem:[%s3147 + $0x12a] sm:$0xff]
    %v4206 = vld [vmem:[%s3147 + $0x13a] sm:$0xff]
    %v4207 = vld [vmem:[%s3147 + $0x142] sm:$0xff]
    %v4208 = vld [vmem:[%s3147 + $0x152] sm:$0xff]
    %v4209 = vld [vmem:[%s3147 + $0x15a] sm:$0xff]
    %v4210 = vld [vmem:[%s3147 + $0x16a] sm:$0xff]
    %v4211 = vld [vmem:[%s3147 + $0x172] sm:$0xff]
    %v4212 = vld [vmem:[%s3147 + $0x1b2] sm:$0xff]
    %v4213 = vld [vmem:[%s3147 + $0x1ba] sm:$0xff]
    %v4214 = vld [vmem:[%s3147 + $0x1ca] sm:$0xff]
    %v4215 = vld [vmem:[%s3147 + $0x1d2] sm:$0xff]
    %v4216 = vld [vmem:[%s3147 + $0x1e2] sm:$0xff]
    %v4217 = vld [vmem:[%s3147 + $0x1ea] sm:$0xff]
    %v4218 = vld [vmem:[%s3147 + $0x1fa] sm:$0xff]
    %v4219 = vld [vmem:[%s3147 + $0x202] sm:$0xff]
    %v4220 = vld [vmem:[%s3147 + $0x212] sm:$0xff]
    %v4221 = vld [vmem:[%s3147 + $0x21a] sm:$0xff]
    %v4222 = vld [vmem:[%s3147 + $0x22a] sm:$0xff]
    %v4223 = vld [vmem:[%s3147 + $0x232] sm:$0xff]
    %v4224 = vld [vmem:[%s3147 + $0x242] sm:$0xff]
    %v4225 = vld [vmem:[%s3147 + $0x24a] sm:$0xff]
    %v4226 = vld [vmem:[%s3147 + $0x25a] sm:$0xff]
    %v4227 = vld [vmem:[%s3147 + $0x262] sm:$0xff]
    %v4228 = vld [vmem:[%s3147 + $0x272] sm:$0xff]
    %v4229 = vld [vmem:[%s3147 + $0x27a] sm:$0xff]
    %v4230 = vld [vmem:[%s3147 + $0x28a] sm:$0xff]
    %v4231 = vld [vmem:[%s3147 + $0x292] sm:$0xff]
    %v4232 = vld [vmem:[%s3147 + $0x2a2] sm:$0xff]
    %v4233 = vld [vmem:[%s3147 + $0x2aa] sm:$0xff]
    %v4234 = vld [vmem:[%s3147 + $0x2ba] sm:$0xff]
    %v4235 = vld [vmem:[%s3147 + $0x2c2] sm:$0xff]
    %v4236 = vld [vmem:[%s3147 + $0x2d2] sm:$0xff]
    %v4237 = vld [vmem:[%s3147 + $0x2da] sm:$0xff]
    %v4238 = vld [vmem:[%s3147 + $0x2ea] sm:$0xff]
    %v4239 = vld [vmem:[%s3147 + $0x2f2] sm:$0xff]
    %v4240 = vld [vmem:[%s3147 + $0x302] sm:$0xff]
    %v4241 = vld [vmem:[%s3147 + $0x30a] sm:$0xff]
    %v4242 = vld [vmem:[%s3147 + $0x31a] sm:$0xff]
    %v4243 = vld [vmem:[%s3147 + $0x322] sm:$0xff]
    %4245 = vset.pattern.permute.xlu0 0
    %4246 = vperm.xlu0 %4245, %v4180
    %v4247 = vpop.permute.xlu0 %4246
    %4250 = vset.pattern.permute.xlu0 0
    %4251 = vperm.xlu0 %4250, %v4181
    %v4252 = vpop.permute.xlu0 %4251
    %4255 = vset.pattern.permute.xlu0 0
    %4256 = vperm.xlu0 %4255, %v4182
    %v4257 = vpop.permute.xlu0 %4256
    %4260 = vset.pattern.permute.xlu0 0
    %4261 = vperm.xlu0 %4260, %v4183
    %v4262 = vpop.permute.xlu0 %4261
    %4265 = vset.pattern.permute.xlu0 0
    %4266 = vperm.xlu0 %4265, %v4184
    %v4267 = vpop.permute.xlu0 %4266
    %4270 = vset.pattern.permute.xlu0 0
    %4271 = vperm.xlu0 %4270, %v4185
    %v4272 = vpop.permute.xlu0 %4271
    %4275 = vset.pattern.permute.xlu0 0
    %4276 = vperm.xlu0 %4275, %v4186
    %v4277 = vpop.permute.xlu0 %4276
    %4280 = vset.pattern.permute.xlu0 0
    %4281 = vperm.xlu0 %4280, %v4187
    %v4282 = vpop.permute.xlu0 %4281
    %4285 = vset.pattern.permute.xlu0 0
    %4286 = vperm.xlu0 %4285, %v4188
    %v4287 = vpop.permute.xlu0 %4286
    %4290 = vset.pattern.permute.xlu0 0
    %4291 = vperm.xlu0 %4290, %v4189
    %v4292 = vpop.permute.xlu0 %4291
    %4295 = vset.pattern.permute.xlu0 0
    %4296 = vperm.xlu0 %4295, %v4190
    %v4297 = vpop.permute.xlu0 %4296
    %4300 = vset.pattern.permute.xlu0 0
    %4301 = vperm.xlu0 %4300, %v4191
    %v4302 = vpop.permute.xlu0 %4301
    %4305 = vset.pattern.permute.xlu0 0
    %4306 = vperm.xlu0 %4305, %v4192
    %v4307 = vpop.permute.xlu0 %4306
    %4310 = vset.pattern.permute.xlu0 0
    %4311 = vperm.xlu0 %4310, %v4193
    %v4312 = vpop.permute.xlu0 %4311
    %4315 = vset.pattern.permute.xlu0 0
    %4316 = vperm.xlu0 %4315, %v4194
    %v4317 = vpop.permute.xlu0 %4316
    %4320 = vset.pattern.permute.xlu0 0
    %4321 = vperm.xlu0 %4320, %v4195
    %v4322 = vpop.permute.xlu0 %4321
    %4325 = vset.pattern.permute.xlu0 0
    %4326 = vperm.xlu0 %4325, %v4196
    %v4327 = vpop.permute.xlu0 %4326
    %4330 = vset.pattern.permute.xlu0 0
    %4331 = vperm.xlu0 %4330, %v4197
    %v4332 = vpop.permute.xlu0 %4331
    %4335 = vset.pattern.permute.xlu0 0
    %4336 = vperm.xlu0 %4335, %v4198
    %v4337 = vpop.permute.xlu0 %4336
    %4340 = vset.pattern.permute.xlu0 0
    %4341 = vperm.xlu0 %4340, %v4199
    %v4342 = vpop.permute.xlu0 %4341
    %4345 = vset.pattern.permute.xlu0 0
    %4346 = vperm.xlu0 %4345, %v4200
    %v4347 = vpop.permute.xlu0 %4346
    %4350 = vset.pattern.permute.xlu0 0
    %4351 = vperm.xlu0 %4350, %v4201
    %v4352 = vpop.permute.xlu0 %4351
    %4355 = vset.pattern.permute.xlu0 0
    %4356 = vperm.xlu0 %4355, %v4202
    %v4357 = vpop.permute.xlu0 %4356
    %4360 = vset.pattern.permute.xlu0 0
    %4361 = vperm.xlu0 %4360, %v4203
    %v4362 = vpop.permute.xlu0 %4361
    %4365 = vset.pattern.permute.xlu0 0
    %4366 = vperm.xlu0 %4365, %v4204
    %v4367 = vpop.permute.xlu0 %4366
    %4370 = vset.pattern.permute.xlu0 0
    %4371 = vperm.xlu0 %4370, %v4205
    %v4372 = vpop.permute.xlu0 %4371
    %4375 = vset.pattern.permute.xlu0 0
    %4376 = vperm.xlu0 %4375, %v4206
    %v4377 = vpop.permute.xlu0 %4376
    %4380 = vset.pattern.permute.xlu0 0
    %4381 = vperm.xlu0 %4380, %v4207
    %v4382 = vpop.permute.xlu0 %4381
    %4385 = vset.pattern.permute.xlu0 0
    %4386 = vperm.xlu0 %4385, %v4208
    %v4387 = vpop.permute.xlu0 %4386
    %4390 = vset.pattern.permute.xlu0 0
    %4391 = vperm.xlu0 %4390, %v4209
    %v4392 = vpop.permute.xlu0 %4391
    %4395 = vset.pattern.permute.xlu0 0
    %4396 = vperm.xlu0 %4395, %v4210
    %v4397 = vpop.permute.xlu0 %4396
    %4400 = vset.pattern.permute.xlu0 0
    %4401 = vperm.xlu0 %4400, %v4211
    %v4402 = vpop.permute.xlu0 %4401
    %4405 = vset.pattern.permute.xlu0 0
    %4406 = vperm.xlu0 %4405, %v4212
    %v4407 = vpop.permute.xlu0 %4406
    %4410 = vset.pattern.permute.xlu0 0
    %4411 = vperm.xlu0 %4410, %v4213
    %v4412 = vpop.permute.xlu0 %4411
    %4415 = vset.pattern.permute.xlu0 0
    %4416 = vperm.xlu0 %4415, %v4214
    %v4417 = vpop.permute.xlu0 %4416
    %4420 = vset.pattern.permute.xlu0 0
    %4421 = vperm.xlu0 %4420, %v4215
    %v4422 = vpop.permute.xlu0 %4421
    %4425 = vset.pattern.permute.xlu0 0
    %4426 = vperm.xlu0 %4425, %v4216
    %v4427 = vpop.permute.xlu0 %4426
    %4430 = vset.pattern.permute.xlu0 0
    %4431 = vperm.xlu0 %4430, %v4217
    %v4432 = vpop.permute.xlu0 %4431
    %4435 = vset.pattern.permute.xlu0 0
    %4436 = vperm.xlu0 %4435, %v4218
    %v4437 = vpop.permute.xlu0 %4436
    %4440 = vset.pattern.permute.xlu0 0
    %4441 = vperm.xlu0 %4440, %v4219
    %v4442 = vpop.permute.xlu0 %4441
    %4445 = vset.pattern.permute.xlu0 0
    %4446 = vperm.xlu0 %4445, %v4220
    %v4447 = vpop.permute.xlu0 %4446
    %4450 = vset.pattern.permute.xlu0 0
    %4451 = vperm.xlu0 %4450, %v4221
    %v4452 = vpop.permute.xlu0 %4451
    %4455 = vset.pattern.permute.xlu0 0
    %4456 = vperm.xlu0 %4455, %v4222
    %v4457 = vpop.permute.xlu0 %4456
    %4460 = vset.pattern.permute.xlu0 0
    %4461 = vperm.xlu0 %4460, %v4223
    %v4462 = vpop.permute.xlu0 %4461
    %4465 = vset.pattern.permute.xlu0 0
    %4466 = vperm.xlu0 %4465, %v4224
    %v4467 = vpop.permute.xlu0 %4466
    %4470 = vset.pattern.permute.xlu0 0
    %4471 = vperm.xlu0 %4470, %v4225
    %v4472 = vpop.permute.xlu0 %4471
    %4475 = vset.pattern.permute.xlu0 0
    %4476 = vperm.xlu0 %4475, %v4226
    %v4477 = vpop.permute.xlu0 %4476
    %4480 = vset.pattern.permute.xlu0 0
    %4481 = vperm.xlu0 %4480, %v4227
    %v4482 = vpop.permute.xlu0 %4481
    %4485 = vset.pattern.permute.xlu0 0
    %4486 = vperm.xlu0 %4485, %v4228
    %v4487 = vpop.permute.xlu0 %4486
    %4490 = vset.pattern.permute.xlu0 0
    %4491 = vperm.xlu0 %4490, %v4229
    %v4492 = vpop.permute.xlu0 %4491
    %4495 = vset.pattern.permute.xlu0 0
    %4496 = vperm.xlu0 %4495, %v4230
    %v4497 = vpop.permute.xlu0 %4496
    %4500 = vset.pattern.permute.xlu0 0
    %4501 = vperm.xlu0 %4500, %v4231
    %v4502 = vpop.permute.xlu0 %4501
    %4505 = vset.pattern.permute.xlu0 0
    %4506 = vperm.xlu0 %4505, %v4232
    %v4507 = vpop.permute.xlu0 %4506
    %4510 = vset.pattern.permute.xlu0 0
    %4511 = vperm.xlu0 %4510, %v4233
    %v4512 = vpop.permute.xlu0 %4511
    %4515 = vset.pattern.permute.xlu0 0
    %4516 = vperm.xlu0 %4515, %v4234
    %v4517 = vpop.permute.xlu0 %4516
    %4520 = vset.pattern.permute.xlu0 0
    %4521 = vperm.xlu0 %4520, %v4235
    %v4522 = vpop.permute.xlu0 %4521
    %4525 = vset.pattern.permute.xlu0 0
    %4526 = vperm.xlu0 %4525, %v4236
    %v4527 = vpop.permute.xlu0 %4526
    %4530 = vset.pattern.permute.xlu0 0
    %4531 = vperm.xlu0 %4530, %v4237
    %v4532 = vpop.permute.xlu0 %4531
    %4535 = vset.pattern.permute.xlu0 0
    %4536 = vperm.xlu0 %4535, %v4238
    %v4537 = vpop.permute.xlu0 %4536
    %4540 = vset.pattern.permute.xlu0 0
    %4541 = vperm.xlu0 %4540, %v4239
    %v4542 = vpop.permute.xlu0 %4541
    %4545 = vset.pattern.permute.xlu0 0
    %4546 = vperm.xlu0 %4545, %v4240
    %v4547 = vpop.permute.xlu0 %4546
    %4550 = vset.pattern.permute.xlu0 0
    %4551 = vperm.xlu0 %4550, %v4241
    %v4552 = vpop.permute.xlu0 %4551
    %4555 = vset.pattern.permute.xlu0 0
    %4556 = vperm.xlu0 %4555, %v4242
    %v4557 = vpop.permute.xlu0 %4556
    %4560 = vset.pattern.permute.xlu0 0
    %4561 = vperm.xlu0 %4560, %v4243
    %v4562 = vpop.permute.xlu0 %4561
    %v4564 = vlaneseq
    %v4565 = vshrl.u32 %v4564, 7
    %v4566 = vsub.s32 0, %v4565
    %v4567 = vrot.slane %v41, %v4566
    %v4568 = vmul.f32 %v4247, %v4567
    %v4569 = vmul.f32 %v4252, %v4567
    %v4570 = vmul.f32 %v4257, %v4567
    %v4571 = vmul.f32 %v4262, %v4567
    %v4572 = vmul.f32 %v4267, %v4567
    %v4573 = vmul.f32 %v4272, %v4567
    %v4574 = vmul.f32 %v4277, %v4567
    %v4575 = vmul.f32 %v4282, %v4567
    %v4576 = vmul.f32 %v4287, %v4567
    %v4577 = vmul.f32 %v4292, %v4567
    %v4578 = vmul.f32 %v4297, %v4567
    %v4579 = vmul.f32 %v4302, %v4567
    %v4580 = vmul.f32 %v4307, %v4567
    %v4581 = vmul.f32 %v4312, %v4567
    %v4582 = vmul.f32 %v4317, %v4567
    %v4583 = vmul.f32 %v4322, %v4567
    %v4584 = vmul.f32 %v4327, %v4567
    %v4585 = vmul.f32 %v4332, %v4567
    %v4586 = vmul.f32 %v4337, %v4567
    %v4587 = vmul.f32 %v4342, %v4567
    %v4588 = vmul.f32 %v4347, %v4567
    %v4589 = vmul.f32 %v4352, %v4567
    %v4590 = vmul.f32 %v4357, %v4567
    %v4591 = vmul.f32 %v4362, %v4567
    %v4592 = vmul.f32 %v4367, %v4567
    %v4593 = vmul.f32 %v4372, %v4567
    %v4594 = vmul.f32 %v4377, %v4567
    %v4595 = vmul.f32 %v4382, %v4567
    %v4596 = vmul.f32 %v4387, %v4567
    %v4597 = vmul.f32 %v4392, %v4567
    %v4598 = vmul.f32 %v4397, %v4567
    %v4599 = vmul.f32 %v4402, %v4567
    %v4600 = vmul.f32 %v4407, %v4567
    %v4601 = vmul.f32 %v4412, %v4567
    %v4602 = vmul.f32 %v4417, %v4567
    %v4603 = vmul.f32 %v4422, %v4567
    %v4604 = vmul.f32 %v4427, %v4567
    %v4605 = vmul.f32 %v4432, %v4567
    %v4606 = vmul.f32 %v4437, %v4567
    %v4607 = vmul.f32 %v4442, %v4567
    %v4608 = vmul.f32 %v4447, %v4567
    %v4609 = vmul.f32 %v4452, %v4567
    %v4610 = vmul.f32 %v4457, %v4567
    %v4611 = vmul.f32 %v4462, %v4567
    %v4612 = vmul.f32 %v4467, %v4567
    %v4613 = vmul.f32 %v4472, %v4567
    %v4614 = vmul.f32 %v4477, %v4567
    %v4615 = vmul.f32 %v4482, %v4567
    %v4616 = vmul.f32 %v4487, %v4567
    %v4617 = vmul.f32 %v4492, %v4567
    %v4618 = vmul.f32 %v4497, %v4567
    %v4619 = vmul.f32 %v4502, %v4567
    %v4620 = vmul.f32 %v4507, %v4567
    %v4621 = vmul.f32 %v4512, %v4567
    %v4622 = vmul.f32 %v4517, %v4567
    %v4623 = vmul.f32 %v4522, %v4567
    %v4624 = vmul.f32 %v4527, %v4567
    %v4625 = vmul.f32 %v4532, %v4567
    %v4626 = vmul.f32 %v4537, %v4567
    %v4627 = vmul.f32 %v4542, %v4567
    %v4628 = vmul.f32 %v4547, %v4567
    %v4629 = vmul.f32 %v4552, %v4567
    %v4630 = vmul.f32 %v4557, %v4567
    %v4631 = vmul.f32 %v4562, %v4567
    %v4632 = vadd.f32 %v4116, %v4568
    %v4633 = vadd.f32 %v4117, %v4569
    %v4634 = vadd.f32 %v4118, %v4570
    %v4635 = vadd.f32 %v4119, %v4571
    %v4636 = vadd.f32 %v4120, %v4572
    %v4637 = vadd.f32 %v4121, %v4573
    %v4638 = vadd.f32 %v4122, %v4574
    %v4639 = vadd.f32 %v4123, %v4575
    %v4640 = vadd.f32 %v4124, %v4576
    %v4641 = vadd.f32 %v4125, %v4577
    %v4642 = vadd.f32 %v4126, %v4578
    %v4643 = vadd.f32 %v4127, %v4579
    %v4644 = vadd.f32 %v4128, %v4580
    %v4645 = vadd.f32 %v4129, %v4581
    %v4646 = vadd.f32 %v4130, %v4582
    %v4647 = vadd.f32 %v4131, %v4583
    %v4648 = vadd.f32 %v4132, %v4584
    %v4649 = vadd.f32 %v4133, %v4585
    %v4650 = vadd.f32 %v4134, %v4586
    %v4651 = vadd.f32 %v4135, %v4587
    %v4652 = vadd.f32 %v4136, %v4588
    %v4653 = vadd.f32 %v4137, %v4589
    %v4654 = vadd.f32 %v4138, %v4590
    %v4655 = vadd.f32 %v4139, %v4591
    %v4656 = vadd.f32 %v4140, %v4592
    %v4657 = vadd.f32 %v4141, %v4593
    %v4658 = vadd.f32 %v4142, %v4594
    %v4659 = vadd.f32 %v4143, %v4595
    %v4660 = vadd.f32 %v4144, %v4596
    %v4661 = vadd.f32 %v4145, %v4597
    %v4662 = vadd.f32 %v4146, %v4598
    %v4663 = vadd.f32 %v4147, %v4599
    %v4664 = vadd.f32 %v4148, %v4600
    %v4665 = vadd.f32 %v4149, %v4601
    %v4666 = vadd.f32 %v4150, %v4602
    %v4667 = vadd.f32 %v4151, %v4603
    %v4668 = vadd.f32 %v4152, %v4604
    %v4669 = vadd.f32 %v4153, %v4605
    %v4670 = vadd.f32 %v4154, %v4606
    %v4671 = vadd.f32 %v4155, %v4607
    %v4672 = vadd.f32 %v4156, %v4608
    %v4673 = vadd.f32 %v4157, %v4609
    %v4674 = vadd.f32 %v4158, %v4610
    %v4675 = vadd.f32 %v4159, %v4611
    %v4676 = vadd.f32 %v4160, %v4612
    %v4677 = vadd.f32 %v4161, %v4613
    %v4678 = vadd.f32 %v4162, %v4614
    %v4679 = vadd.f32 %v4163, %v4615
    %v4680 = vadd.f32 %v4164, %v4616
    %v4681 = vadd.f32 %v4165, %v4617
    %v4682 = vadd.f32 %v4166, %v4618
    %v4683 = vadd.f32 %v4167, %v4619
    %v4684 = vadd.f32 %v4168, %v4620
    %v4685 = vadd.f32 %v4169, %v4621
    %v4686 = vadd.f32 %v4170, %v4622
    %v4687 = vadd.f32 %v4171, %v4623
    %v4688 = vadd.f32 %v4172, %v4624
    %v4689 = vadd.f32 %v4173, %v4625
    %v4690 = vadd.f32 %v4174, %v4626
    %v4691 = vadd.f32 %v4175, %v4627
    %v4692 = vadd.f32 %v4176, %v4628
    %v4693 = vadd.f32 %v4177, %v4629
    %v4694 = vadd.f32 %v4178, %v4630
    %v4695 = vadd.f32 %v4179, %v4631
    %v4696 = vmax.f32 %v4632, 0.0
    %v4697 = vmax.f32 %v4633, 0.0
    %v4698 = vmax.f32 %v4634, 0.0
    %v4699 = vmax.f32 %v4635, 0.0
    %v4700 = vmax.f32 %v4636, 0.0
    %v4701 = vmax.f32 %v4637, 0.0
    %v4702 = vmax.f32 %v4638, 0.0
    %v4703 = vmax.f32 %v4639, 0.0
    %v4704 = vmax.f32 %v4640, 0.0
    %v4705 = vmax.f32 %v4641, 0.0
    %v4706 = vmax.f32 %v4642, 0.0
    %v4707 = vmax.f32 %v4643, 0.0
    %v4708 = vmax.f32 %v4644, 0.0
    %v4709 = vmax.f32 %v4645, 0.0
    %v4710 = vmax.f32 %v4646, 0.0
    %v4711 = vmax.f32 %v4647, 0.0
    %v4712 = vmax.f32 %v4648, 0.0
    %v4713 = vmax.f32 %v4649, 0.0
    %v4714 = vmax.f32 %v4650, 0.0
    %v4715 = vmax.f32 %v4651, 0.0
    %v4716 = vmax.f32 %v4652, 0.0
    %v4717 = vmax.f32 %v4653, 0.0
    %v4718 = vmax.f32 %v4654, 0.0
    %v4719 = vmax.f32 %v4655, 0.0
    %v4720 = vmax.f32 %v4656, 0.0
    %v4721 = vmax.f32 %v4657, 0.0
    %v4722 = vmax.f32 %v4658, 0.0
    %v4723 = vmax.f32 %v4659, 0.0
    %v4724 = vmax.f32 %v4660, 0.0
    %v4725 = vmax.f32 %v4661, 0.0
    %v4726 = vmax.f32 %v4662, 0.0
    %v4727 = vmax.f32 %v4663, 0.0
    %v4728 = vmax.f32 %v4664, 0.0
    %v4729 = vmax.f32 %v4665, 0.0
    %v4730 = vmax.f32 %v4666, 0.0
    %v4731 = vmax.f32 %v4667, 0.0
    %v4732 = vmax.f32 %v4668, 0.0
    %v4733 = vmax.f32 %v4669, 0.0
    %v4734 = vmax.f32 %v4670, 0.0
    %v4735 = vmax.f32 %v4671, 0.0
    %v4736 = vmax.f32 %v4672, 0.0
    %v4737 = vmax.f32 %v4673, 0.0
    %v4738 = vmax.f32 %v4674, 0.0
    %v4739 = vmax.f32 %v4675, 0.0
    %v4740 = vmax.f32 %v4676, 0.0
    %v4741 = vmax.f32 %v4677, 0.0
    %v4742 = vmax.f32 %v4678, 0.0
    %v4743 = vmax.f32 %v4679, 0.0
    %v4744 = vmax.f32 %v4680, 0.0
    %v4745 = vmax.f32 %v4681, 0.0
    %v4746 = vmax.f32 %v4682, 0.0
    %v4747 = vmax.f32 %v4683, 0.0
    %v4748 = vmax.f32 %v4684, 0.0
    %v4749 = vmax.f32 %v4685, 0.0
    %v4750 = vmax.f32 %v4686, 0.0
    %v4751 = vmax.f32 %v4687, 0.0
    %v4752 = vmax.f32 %v4688, 0.0
    %v4753 = vmax.f32 %v4689, 0.0
    %v4754 = vmax.f32 %v4690, 0.0
    %v4755 = vmax.f32 %v4691, 0.0
    %v4756 = vmax.f32 %v4692, 0.0
    %v4757 = vmax.f32 %v4693, 0.0
    %v4758 = vmax.f32 %v4694, 0.0
    %v4759 = vmax.f32 %v4695, 0.0
    %vm4760 = vcmask 130048
    %4761 = vst.msk [vmem:[#allocation2] sm:$0xff] %vm4760, %v4696
    %4762 = vst.msk [vmem:[#allocation2 + $0x8] sm:$0xff] %vm4760, %v4697
    %4763 = vst.msk [vmem:[#allocation2 + $0x10] sm:$0xff] %vm4760, %v4698
    %4764 = vst.msk [vmem:[#allocation2 + $0x18] sm:$0xff] %vm4760, %v4699
    %4765 = vst.msk [vmem:[#allocation2 + $0x20] sm:$0xff] %vm4760, %v4700
    %4766 = vst.msk [vmem:[#allocation2 + $0x28] sm:$0xff] %vm4760, %v4701
    %4767 = vst.msk [vmem:[#allocation2 + $0x30] sm:$0xff] %vm4760, %v4702
    %4768 = vst.msk [vmem:[#allocation2 + $0x38] sm:$0xff] %vm4760, %v4703
    %4769 = vst.msk [vmem:[#allocation2 + $0x40] sm:$0xff] %vm4760, %v4704
    %4770 = vst.msk [vmem:[#allocation2 + $0x48] sm:$0xff] %vm4760, %v4705
    %4771 = vst.msk [vmem:[#allocation2 + $0x50] sm:$0xff] %vm4760, %v4706
    %4772 = vst.msk [vmem:[#allocation2 + $0x58] sm:$0xff] %vm4760, %v4707
    %4773 = vst.msk [vmem:[#allocation2 + $0x60] sm:$0xff] %vm4760, %v4708
    %4774 = vst.msk [vmem:[#allocation2 + $0x68] sm:$0xff] %vm4760, %v4709
    %4775 = vst.msk [vmem:[#allocation2 + $0x70] sm:$0xff] %vm4760, %v4710
    %4776 = vst.msk [vmem:[#allocation2 + $0x78] sm:$0xff] %vm4760, %v4711
    %4777 = vst.msk [vmem:[#allocation2 + $0x80] sm:$0xff] %vm4760, %v4712
    %4778 = vst.msk [vmem:[#allocation2 + $0x88] sm:$0xff] %vm4760, %v4713
    %4779 = vst.msk [vmem:[#allocation2 + $0x90] sm:$0xff] %vm4760, %v4714
    %4780 = vst.msk [vmem:[#allocation2 + $0x98] sm:$0xff] %vm4760, %v4715
    %4781 = vst.msk [vmem:[#allocation2 + $0xa0] sm:$0xff] %vm4760, %v4716
    %4782 = vst.msk [vmem:[#allocation2 + $0xa8] sm:$0xff] %vm4760, %v4717
    %4783 = vst.msk [vmem:[#allocation2 + $0xb0] sm:$0xff] %vm4760, %v4718
    %4784 = vst.msk [vmem:[#allocation2 + $0xb8] sm:$0xff] %vm4760, %v4719
    %4785 = vst.msk [vmem:[#allocation2 + $0xc0] sm:$0xff] %vm4760, %v4720
    %4786 = vst.msk [vmem:[#allocation2 + $0xc8] sm:$0xff] %vm4760, %v4721
    %4787 = vst.msk [vmem:[#allocation2 + $0xd0] sm:$0xff] %vm4760, %v4722
    %4788 = vst.msk [vmem:[#allocation2 + $0xd8] sm:$0xff] %vm4760, %v4723
    %4789 = vst.msk [vmem:[#allocation2 + $0xe0] sm:$0xff] %vm4760, %v4724
    %4790 = vst.msk [vmem:[#allocation2 + $0xe8] sm:$0xff] %vm4760, %v4725
    %4791 = vst.msk [vmem:[#allocation2 + $0xf0] sm:$0xff] %vm4760, %v4726
    %4792 = vst.msk [vmem:[#allocation2 + $0xf8] sm:$0xff] %vm4760, %v4727
    %4793 = vst.msk [vmem:[#allocation2 + $0x100] sm:$0xff] %vm4760, %v4728
    %4794 = vst.msk [vmem:[#allocation2 + $0x108] sm:$0xff] %vm4760, %v4729
    %4795 = vst.msk [vmem:[#allocation2 + $0x110] sm:$0xff] %vm4760, %v4730
    %4796 = vst.msk [vmem:[#allocation2 + $0x118] sm:$0xff] %vm4760, %v4731
    %4797 = vst.msk [vmem:[#allocation2 + $0x120] sm:$0xff] %vm4760, %v4732
    %4798 = vst.msk [vmem:[#allocation2 + $0x128] sm:$0xff] %vm4760, %v4733
    %4799 = vst.msk [vmem:[#allocation2 + $0x130] sm:$0xff] %vm4760, %v4734
    %4800 = vst.msk [vmem:[#allocation2 + $0x138] sm:$0xff] %vm4760, %v4735
    %4801 = vst.msk [vmem:[#allocation2 + $0x140] sm:$0xff] %vm4760, %v4736
    %4802 = vst.msk [vmem:[#allocation2 + $0x148] sm:$0xff] %vm4760, %v4737
    %4803 = vst.msk [vmem:[#allocation2 + $0x150] sm:$0xff] %vm4760, %v4738
    %4804 = vst.msk [vmem:[#allocation2 + $0x158] sm:$0xff] %vm4760, %v4739
    %4805 = vst.msk [vmem:[#allocation2 + $0x160] sm:$0xff] %vm4760, %v4740
    %4806 = vst.msk [vmem:[#allocation2 + $0x168] sm:$0xff] %vm4760, %v4741
    %4807 = vst.msk [vmem:[#allocation2 + $0x170] sm:$0xff] %vm4760, %v4742
    %4808 = vst.msk [vmem:[#allocation2 + $0x178] sm:$0xff] %vm4760, %v4743
    %4809 = vst.msk [vmem:[#allocation2 + $0x180] sm:$0xff] %vm4760, %v4744
    %4810 = vst.msk [vmem:[#allocation2 + $0x188] sm:$0xff] %vm4760, %v4745
    %4811 = vst.msk [vmem:[#allocation2 + $0x190] sm:$0xff] %vm4760, %v4746
    %4812 = vst.msk [vmem:[#allocation2 + $0x198] sm:$0xff] %vm4760, %v4747
    %4813 = vst.msk [vmem:[#allocation2 + $0x1a0] sm:$0xff] %vm4760, %v4748
    %4814 = vst.msk [vmem:[#allocation2 + $0x1a8] sm:$0xff] %vm4760, %v4749
    %4815 = vst.msk [vmem:[#allocation2 + $0x1b0] sm:$0xff] %vm4760, %v4750
    %4816 = vst.msk [vmem:[#allocation2 + $0x1b8] sm:$0xff] %vm4760, %v4751
    %4817 = vst.msk [vmem:[#allocation2 + $0x1c0] sm:$0xff] %vm4760, %v4752
    %4818 = vst.msk [vmem:[#allocation2 + $0x1c8] sm:$0xff] %vm4760, %v4753
    %4819 = vst.msk [vmem:[#allocation2 + $0x1d0] sm:$0xff] %vm4760, %v4754
    %4820 = vst.msk [vmem:[#allocation2 + $0x1d8] sm:$0xff] %vm4760, %v4755
    %4821 = vst.msk [vmem:[#allocation2 + $0x1e0] sm:$0xff] %vm4760, %v4756
    %4822 = vst.msk [vmem:[#allocation2 + $0x1e8] sm:$0xff] %vm4760, %v4757
    %4823 = vst.msk [vmem:[#allocation2 + $0x1f0] sm:$0xff] %vm4760, %v4758
    %4824 = vst.msk [vmem:[#allocation2 + $0x1f8] sm:$0xff] %vm4760, %v4759
    %4825 = vst.msk [vmem:[#allocation3] sm:$0xff] %vm4760, 0.0
    %vm4826 = vcmask 123904
    %4827 = vst.msk [vmem:[#allocation3 + $0x8] sm:$0x3] %vm4826, 0.0
    %4828 = vst.msk [vmem:[#allocation3 + $0x10] sm:$0xff] %vm4760, 0.0
    %4829 = vst.msk [vmem:[#allocation3 + $0x18] sm:$0x3] %vm4826, 0.0
    %4830 = vst.msk [vmem:[#allocation3 + $0x20] sm:$0xff] %vm4760, 0.0
    %4831 = vst.msk [vmem:[#allocation3 + $0x28] sm:$0x3] %vm4826, 0.0
    %4832 = vst.msk [vmem:[#allocation3 + $0x30] sm:$0xff] %vm4760, 0.0
    %4833 = vst.msk [vmem:[#allocation3 + $0x38] sm:$0x3] %vm4826, 0.0
    %4834 = vst.msk [vmem:[#allocation3 + $0x40] sm:$0xff] %vm4760, 0.0
    %4835 = vst.msk [vmem:[#allocation3 + $0x48] sm:$0x3] %vm4826, 0.0
    %4836 = vst.msk [vmem:[#allocation3 + $0x50] sm:$0xff] %vm4760, 0.0
    %4837 = vst.msk [vmem:[#allocation3 + $0x58] sm:$0x3] %vm4826, 0.0
    %4838 = vst.msk [vmem:[#allocation3 + $0x60] sm:$0xff] %vm4760, 0.0
    %4839 = vst.msk [vmem:[#allocation3 + $0x68] sm:$0x3] %vm4826, 0.0
    %4840 = vst.msk [vmem:[#allocation3 + $0x70] sm:$0xff] %vm4760, 0.0
    %4841 = vst.msk [vmem:[#allocation3 + $0x78] sm:$0x3] %vm4826, 0.0
    %4842 = vst.msk [vmem:[#allocation3 + $0x80] sm:$0xff] %vm4760, 0.0
    %4843 = vst.msk [vmem:[#allocation3 + $0x88] sm:$0x3] %vm4826, 0.0
    %4844 = vst.msk [vmem:[#allocation3 + $0x90] sm:$0xff] %vm4760, 0.0
    %4845 = vst.msk [vmem:[#allocation3 + $0x98] sm:$0x3] %vm4826, 0.0
    %4846 = vst.msk [vmem:[#allocation3 + $0xa0] sm:$0xff] %vm4760, 0.0
    %4847 = vst.msk [vmem:[#allocation3 + $0xa8] sm:$0x3] %vm4826, 0.0
    %4848 = vst.msk [vmem:[#allocation3 + $0xb0] sm:$0xff] %vm4760, 0.0
    %4849 = vst.msk [vmem:[#allocation3 + $0xb8] sm:$0x3] %vm4826, 0.0
    %4850 = vst.msk [vmem:[#allocation3 + $0xc0] sm:$0xff] %vm4760, 0.0
    %4851 = vst.msk [vmem:[#allocation3 + $0xc8] sm:$0x3] %vm4826, 0.0
    %4852 = vst.msk [vmem:[#allocation3 + $0xd0] sm:$0xff] %vm4760, 0.0
    %4853 = vst.msk [vmem:[#allocation3 + $0xd8] sm:$0x3] %vm4826, 0.0
    %4854 = vst.msk [vmem:[#allocation3 + $0xe0] sm:$0xff] %vm4760, 0.0
    %4855 = vst.msk [vmem:[#allocation3 + $0xe8] sm:$0x3] %vm4826, 0.0
    %4856 = vst.msk [vmem:[#allocation3 + $0xf0] sm:$0xff] %vm4760, 0.0
    %4857 = vst.msk [vmem:[#allocation3 + $0xf8] sm:$0x3] %vm4826, 0.0
    %4858 = vst.msk [vmem:[#allocation3 + $0x100] sm:$0xff] %vm4760, 0.0
    %4859 = vst.msk [vmem:[#allocation3 + $0x108] sm:$0x3] %vm4826, 0.0
    %4860 = vst.msk [vmem:[#allocation3 + $0x110] sm:$0xff] %vm4760, 0.0
    %4861 = vst.msk [vmem:[#allocation3 + $0x118] sm:$0x3] %vm4826, 0.0
    %4862 = vst.msk [vmem:[#allocation3 + $0x120] sm:$0xff] %vm4760, 0.0
    %4863 = vst.msk [vmem:[#allocation3 + $0x128] sm:$0x3] %vm4826, 0.0
    %4864 = vst.msk [vmem:[#allocation3 + $0x130] sm:$0xff] %vm4760, 0.0
    %4865 = vst.msk [vmem:[#allocation3 + $0x138] sm:$0x3] %vm4826, 0.0
    %v4866 = vld [vmem:[#allocation2] ss:$2 sm:$0xff]
    %s4867 = scalar_lea.vmem [#allocation2], 32
    %v4868 = vld [vmem:[%s4867] ss:$2 sm:$0xff]
    %s4869 = scalar_lea.vmem [#allocation2], 64
    %v4870 = vld [vmem:[%s4869] ss:$2 sm:$0xff]
    %s4871 = scalar_lea.vmem [#allocation2], 96
    %v4872 = vld [vmem:[%s4871] ss:$2 sm:$0xff]
    %s4873 = scalar_lea.vmem [#allocation2], 128
    %v4874 = vld [vmem:[%s4873] ss:$2 sm:$0xff]
    %s4875 = scalar_lea.vmem [#allocation2], 160
    %v4876 = vld [vmem:[%s4875] ss:$2 sm:$0xff]
    %s4877 = scalar_lea.vmem [#allocation2], 192
    %v4878 = vld [vmem:[%s4877] ss:$2 sm:$0xff]
    %s4879 = scalar_lea.vmem [#allocation2], 224
    %v4880 = vld [vmem:[%s4879] ss:$2 sm:$0xff]
    %s4881 = scalar_lea.vmem [#allocation2], 256
    %v4882 = vld [vmem:[%s4881] ss:$2 sm:$0xff]
    %s4883 = scalar_lea.vmem [#allocation2], 288
    %v4884 = vld [vmem:[%s4883] ss:$2 sm:$0xff]
    %s4885 = scalar_lea.vmem [#allocation2], 320
    %v4886 = vld [vmem:[%s4885] ss:$2 sm:$0xff]
    %s4887 = scalar_lea.vmem [#allocation2], 352
    %v4888 = vld [vmem:[%s4887] ss:$2 sm:$0xff]
    %s4889 = scalar_lea.vmem [#allocation2], 384
    %v4890 = vld [vmem:[%s4889] ss:$2 sm:$0xff]
    %s4891 = scalar_lea.vmem [#allocation2], 416
    %v4892 = vld [vmem:[%s4891] ss:$2 sm:$0xff]
    %s4893 = scalar_lea.vmem [#allocation2], 448
    %v4894 = vld [vmem:[%s4893] ss:$2 sm:$0xff]
    %s4895 = scalar_lea.vmem [#allocation2], 480
    %v4896 = vld [vmem:[%s4895] ss:$2 sm:$0xff]
    %s4897 = scalar_lea.vmem [#allocation2], 1
    %v4898 = vld [vmem:[%s4897] ss:$2 sm:$0xff]
    %s4899 = scalar_lea.vmem [#allocation2], 33
    %v4900 = vld [vmem:[%s4899] ss:$2 sm:$0xff]
    %s4901 = scalar_lea.vmem [#allocation2], 65
    %v4902 = vld [vmem:[%s4901] ss:$2 sm:$0xff]
    %s4903 = scalar_lea.vmem [#allocation2], 97
    %v4904 = vld [vmem:[%s4903] ss:$2 sm:$0xff]
    %s4905 = scalar_lea.vmem [#allocation2], 129
    %v4906 = vld [vmem:[%s4905] ss:$2 sm:$0xff]
    %s4907 = scalar_lea.vmem [#allocation2], 161
    %v4908 = vld [vmem:[%s4907] ss:$2 sm:$0xff]
    %s4909 = scalar_lea.vmem [#allocation2], 193
    %v4910 = vld [vmem:[%s4909] ss:$2 sm:$0xff]
    %s4911 = scalar_lea.vmem [#allocation2], 225
    %v4912 = vld [vmem:[%s4911] ss:$2 sm:$0xff]
    %s4913 = scalar_lea.vmem [#allocation2], 257
    %v4914 = vld [vmem:[%s4913] ss:$2 sm:$0xff]
    %s4915 = scalar_lea.vmem [#allocation2], 289
    %v4916 = vld [vmem:[%s4915] ss:$2 sm:$0xff]
    %s4917 = scalar_lea.vmem [#allocation2], 321
    %v4918 = vld [vmem:[%s4917] ss:$2 sm:$0xff]
    %s4919 = scalar_lea.vmem [#allocation2], 353
    %v4920 = vld [vmem:[%s4919] ss:$2 sm:$0xff]
    %s4921 = scalar_lea.vmem [#allocation2], 385
    %v4922 = vld [vmem:[%s4921] ss:$2 sm:$0xff]
    %s4923 = scalar_lea.vmem [#allocation2], 417
    %v4924 = vld [vmem:[%s4923] ss:$2 sm:$0xff]
    %s4925 = scalar_lea.vmem [#allocation2], 449
    %v4926 = vld [vmem:[%s4925] ss:$2 sm:$0xff]
    %s4927 = scalar_lea.vmem [#allocation2], 481
    %v4928 = vld [vmem:[%s4927] ss:$2 sm:$0xff]
    %s4929 = scalar_lea.vmem [#allocation2], 16
    %v4930 = vld [vmem:[%s4929] ss:$2 sm:$0xff]
    %s4931 = scalar_lea.vmem %s4929, 32 [#allocation2]
    %v4932 = vld [vmem:[%s4931] ss:$2 sm:$0xff]
    %s4933 = scalar_lea.vmem %s4929, 64 [#allocation2]
    %v4934 = vld [vmem:[%s4933] ss:$2 sm:$0xff]
    %s4935 = scalar_lea.vmem %s4929, 96 [#allocation2]
    %v4936 = vld [vmem:[%s4935] ss:$2 sm:$0xff]
    %s4937 = scalar_lea.vmem %s4929, 128 [#allocation2]
    %v4938 = vld [vmem:[%s4937] ss:$2 sm:$0xff]
    %s4939 = scalar_lea.vmem %s4929, 160 [#allocation2]
    %v4940 = vld [vmem:[%s4939] ss:$2 sm:$0xff]
    %s4941 = scalar_lea.vmem %s4929, 192 [#allocation2]
    %v4942 = vld [vmem:[%s4941] ss:$2 sm:$0xff]
    %s4943 = scalar_lea.vmem %s4929, 224 [#allocation2]
    %v4944 = vld [vmem:[%s4943] ss:$2 sm:$0xff]
    %s4945 = scalar_lea.vmem %s4929, 256 [#allocation2]
    %v4946 = vld [vmem:[%s4945] ss:$2 sm:$0xff]
    %s4947 = scalar_lea.vmem %s4929, 288 [#allocation2]
    %v4948 = vld [vmem:[%s4947] ss:$2 sm:$0xff]
    %s4949 = scalar_lea.vmem %s4929, 320 [#allocation2]
    %v4950 = vld [vmem:[%s4949] ss:$2 sm:$0xff]
    %s4951 = scalar_lea.vmem %s4929, 352 [#allocation2]
    %v4952 = vld [vmem:[%s4951] ss:$2 sm:$0xff]
    %s4953 = scalar_lea.vmem %s4929, 384 [#allocation2]
    %v4954 = vld [vmem:[%s4953] ss:$2 sm:$0xff]
    %s4955 = scalar_lea.vmem %s4929, 416 [#allocation2]
    %v4956 = vld [vmem:[%s4955] ss:$2 sm:$0xff]
    %s4957 = scalar_lea.vmem %s4929, 448 [#allocation2]
    %v4958 = vld [vmem:[%s4957] ss:$2 sm:$0xff]
    %s4959 = scalar_lea.vmem %s4929, 480 [#allocation2]
    %v4960 = vld [vmem:[%s4959] ss:$2 sm:$0xff]
    %s4961 = scalar_lea.vmem %s4929, 1 [#allocation2]
    %v4962 = vld [vmem:[%s4961] ss:$2 sm:$0xff]
    %s4963 = scalar_lea.vmem %s4929, 33 [#allocation2]
    %v4964 = vld [vmem:[%s4963] ss:$2 sm:$0xff]
    %s4965 = scalar_lea.vmem %s4929, 65 [#allocation2]
    %v4966 = vld [vmem:[%s4965] ss:$2 sm:$0xff]
    %s4967 = scalar_lea.vmem %s4929, 97 [#allocation2]
    %v4968 = vld [vmem:[%s4967] ss:$2 sm:$0xff]
    %s4969 = scalar_lea.vmem %s4929, 129 [#allocation2]
    %v4970 = vld [vmem:[%s4969] ss:$2 sm:$0xff]
    %s4971 = scalar_lea.vmem %s4929, 161 [#allocation2]
    %v4972 = vld [vmem:[%s4971] ss:$2 sm:$0xff]
    %s4973 = scalar_lea.vmem %s4929, 193 [#allocation2]
    %v4974 = vld [vmem:[%s4973] ss:$2 sm:$0xff]
    %s4975 = scalar_lea.vmem %s4929, 225 [#allocation2]
    %v4976 = vld [vmem:[%s4975] ss:$2 sm:$0xff]
    %s4977 = scalar_lea.vmem %s4929, 257 [#allocation2]
    %v4978 = vld [vmem:[%s4977] ss:$2 sm:$0xff]
    %s4979 = scalar_lea.vmem %s4929, 289 [#allocation2]
    %v4980 = vld [vmem:[%s4979] ss:$2 sm:$0xff]
    %s4981 = scalar_lea.vmem %s4929, 321 [#allocation2]
    %v4982 = vld [vmem:[%s4981] ss:$2 sm:$0xff]
    %s4983 = scalar_lea.vmem %s4929, 353 [#allocation2]
    %v4984 = vld [vmem:[%s4983] ss:$2 sm:$0xff]
    %s4985 = scalar_lea.vmem %s4929, 385 [#allocation2]
    %v4986 = vld [vmem:[%s4985] ss:$2 sm:$0xff]
    %s4987 = scalar_lea.vmem %s4929, 417 [#allocation2]
    %v4988 = vld [vmem:[%s4987] ss:$2 sm:$0xff]
    %s4989 = scalar_lea.vmem %s4929, 449 [#allocation2]
    %v4990 = vld [vmem:[%s4989] ss:$2 sm:$0xff]
    %s4991 = scalar_lea.vmem %s4929, 481 [#allocation2]
    %v4992 = vld [vmem:[%s4991] ss:$2 sm:$0xff]
    %v4993 = vmax.f32 %v4866, %v4898
    %v4994 = vmax.f32 %v4868, %v4900
    %v4995 = vmax.f32 %v4870, %v4902
    %v4996 = vmax.f32 %v4872, %v4904
    %v4997 = vmax.f32 %v4874, %v4906
    %v4998 = vmax.f32 %v4876, %v4908
    %v4999 = vmax.f32 %v4878, %v4910
    %v5000 = vmax.f32 %v4880, %v4912
    %v5001 = vmax.f32 %v4882, %v4914
    %v5002 = vmax.f32 %v4884, %v4916
    %v5003 = vmax.f32 %v4886, %v4918
    %v5004 = vmax.f32 %v4888, %v4920
    %v5005 = vmax.f32 %v4890, %v4922
    %v5006 = vmax.f32 %v4892, %v4924
    %v5007 = vmax.f32 %v4894, %v4926
    %v5008 = vmax.f32 %v4896, %v4928
    %v5009 = vmax.f32 %v4930, %v4962
    %v5010 = vmax.f32 %v4932, %v4964
    %v5011 = vmax.f32 %v4934, %v4966
    %v5012 = vmax.f32 %v4936, %v4968
    %v5013 = vmax.f32 %v4938, %v4970
    %v5014 = vmax.f32 %v4940, %v4972
    %v5015 = vmax.f32 %v4942, %v4974
    %v5016 = vmax.f32 %v4944, %v4976
    %v5017 = vmax.f32 %v4946, %v4978
    %v5018 = vmax.f32 %v4948, %v4980
    %v5019 = vmax.f32 %v4950, %v4982
    %v5020 = vmax.f32 %v4952, %v4984
    %v5021 = vmax.f32 %v4954, %v4986
    %v5022 = vmax.f32 %v4956, %v4988
    %v5023 = vmax.f32 %v4958, %v4990
    %v5024 = vmax.f32 %v4960, %v4992
    %v5025 = vmax.f32 %v4993, %v5009
    %v5026 = vmax.f32 %v4994, %v5010
    %v5027 = vmax.f32 %v4995, %v5011
    %v5028 = vmax.f32 %v4996, %v5012
    %v5029 = vmax.f32 %v4997, %v5013
    %v5030 = vmax.f32 %v4998, %v5014
    %v5031 = vmax.f32 %v4999, %v5015
    %v5032 = vmax.f32 %v5000, %v5016
    %v5033 = vmax.f32 %v5001, %v5017
    %v5034 = vmax.f32 %v5002, %v5018
    %v5035 = vmax.f32 %v5003, %v5019
    %v5036 = vmax.f32 %v5004, %v5020
    %v5037 = vmax.f32 %v5005, %v5021
    %v5038 = vmax.f32 %v5006, %v5022
    %v5039 = vmax.f32 %v5007, %v5023
    %v5040 = vmax.f32 %v5008, %v5024
    %s5041 = scalar_lea.vmem [#allocation3], 16
    %5042 = vst.msk [vmem:[%s5041 + $0x1] sm:$0xff] %vm4760, %v5025
    %5043 = vst.msk [vmem:[%s5041 + $0x11] sm:$0xff] %vm4760, %v5026
    %5044 = vst.msk [vmem:[%s5041 + $0x21] sm:$0xff] %vm4760, %v5027
    %5045 = vst.msk [vmem:[%s5041 + $0x31] sm:$0xff] %vm4760, %v5028
    %5046 = vst.msk [vmem:[%s5041 + $0x41] sm:$0xff] %vm4760, %v5029
    %5047 = vst.msk [vmem:[%s5041 + $0x51] sm:$0xff] %vm4760, %v5030
    %5048 = vst.msk [vmem:[%s5041 + $0x61] sm:$0xff] %vm4760, %v5031
    %5049 = vst.msk [vmem:[%s5041 + $0x71] sm:$0xff] %vm4760, %v5032
    %5050 = vst.msk [vmem:[%s5041 + $0xa1] sm:$0xff] %vm4760, %v5033
    %5051 = vst.msk [vmem:[%s5041 + $0xb1] sm:$0xff] %vm4760, %v5034
    %5052 = vst.msk [vmem:[%s5041 + $0xc1] sm:$0xff] %vm4760, %v5035
    %5053 = vst.msk [vmem:[%s5041 + $0xd1] sm:$0xff] %vm4760, %v5036
    %5054 = vst.msk [vmem:[%s5041 + $0xe1] sm:$0xff] %vm4760, %v5037
    %5055 = vst.msk [vmem:[%s5041 + $0xf1] sm:$0xff] %vm4760, %v5038
    %5056 = vst.msk [vmem:[%s5041 + $0x101] sm:$0xff] %vm4760, %v5039
    %5057 = vst.msk [vmem:[%s5041 + $0x111] sm:$0xff] %vm4760, %v5040
    %v5058 = vld [vmem:[%s3] sm:$0xf]
    %v5059 = vld [vmem:[%s3 + $0x4] sm:$0xf]
    %v5060 = vld [vmem:[%s3 + $0x8] sm:$0xf]
    %v5061 = vld [vmem:[%s3 + $0xc] sm:$0xf]
    %v5062 = vld [vmem:[%s3 + $0x10] sm:$0xf]
    %v5063 = vld [vmem:[%s3 + $0x14] sm:$0xf]
    %v5064 = vld [vmem:[%s3 + $0x18] sm:$0xf]
    %v5065 = vld [vmem:[%s3 + $0x1c] sm:$0xf]
    %v5066 = vld [vmem:[%s3 + $0x20] sm:$0xf]
    %v5067 = vld [vmem:[%s3 + $0x24] sm:$0xf]
    %v5068 = vld [vmem:[%s3 + $0x28] sm:$0xf]
    %v5069 = vld [vmem:[%s3 + $0x2c] sm:$0xf]
    %v5070 = vld [vmem:[%s3 + $0x30] sm:$0xf]
    %v5071 = vld [vmem:[%s3 + $0x34] sm:$0xf]
    %v5072 = vld [vmem:[%s3 + $0x38] sm:$0xf]
    %v5073 = vld [vmem:[%s3 + $0x3c] sm:$0xf]
    %v5074 = vld [vmem:[%s3 + $0x40] sm:$0xf]
    %v5075 = vld [vmem:[%s3 + $0x44] sm:$0xf]
    %v5076 = vld [vmem:[%s4] sm:$0x1]
    %v5078 = vlaneseq
    %v5079 = vshrl.u32 %v5078, 7
    %v5080 = vsub.s32 0, %v5079
    %v5081 = vrot.slane %v5076, %v5080
    %v5083 = vadd.f32 %v5081, 0.0
    %v5084 = vld [vmem:[#allocation3] sm:$0xff]
    %v5085 = vld [vmem:[#allocation3 + $0x10] sm:$0xff]
    %v5086 = vld [vmem:[#allocation3 + $0x20] sm:$0xff]
    %v5087 = vld [vmem:[#allocation3 + $0x30] sm:$0xff]
    %v5088 = vld [vmem:[#allocation3 + $0x40] sm:$0xff]
    %v5089 = vld [vmem:[#allocation3 + $0x50] sm:$0xff]
    %v5090 = vld [vmem:[#allocation3 + $0x60] sm:$0xff]
    %v5091 = vld [vmem:[#allocation3 + $0x70] sm:$0xff]
    %v5092 = vld [vmem:[#allocation3 + $0xa0] sm:$0xff]
    %v5093 = vld [vmem:[#allocation3 + $0xb0] sm:$0xff]
    %v5094 = vld [vmem:[#allocation3 + $0xc0] sm:$0xff]
    %v5095 = vld [vmem:[#allocation3 + $0xd0] sm:$0xff]
    %v5096 = vld [vmem:[#allocation3 + $0xe0] sm:$0xff]
    %v5097 = vld [vmem:[#allocation3 + $0xf0] sm:$0xff]
    %v5098 = vld [vmem:[#allocation3 + $0x100] sm:$0xff]
    %v5099 = vld [vmem:[#allocation3 + $0x110] sm:$0xff]
    %v5100 = vpack.c.bf16 %v5085, %v5084
    %v5101 = vpack.c.bf16 %v5087, %v5086
    %v5102 = vpack.c.bf16 %v5089, %v5088
    %v5103 = vpack.c.bf16 %v5091, %v5090
    %v5104 = vpack.c.bf16 %v5093, %v5092
    %v5105 = vpack.c.bf16 %v5095, %v5094
    %v5106 = vpack.c.bf16 %v5097, %v5096
    %v5107 = vpack.c.bf16 %v5099, %v5098
    %v5110 = vunpack.c.l.b16 %v5058
    %v5111 = vunpack.c.l.b16 %v5059
    %v5112 = vpack.c.b16 %v5111, %v5110
    %v5115 = vsel %vm4760, %v5100, 0
    %v5118 = vsel %vm4760, %v5101, 0
    %v5121 = vsel %vm4760, %v5102, 0
    %v5124 = vsel %vm4760, %v5103, 0
    %v5127 = vsel %vm4760, %v5104, 0
    %v5130 = vsel %vm4760, %v5105, 0
    %v5133 = vsel %vm4760, %v5106, 0
    %v5136 = vsel %vm4760, %v5107, 0
    %5138 = vmatprep.subr.bf16.mxu0 0
    %5139 = vmatpush1.bf16.msra.mxu0 0
    %5140 = vmatprep.subr.bf16.mxu0 0
    %5141 = vmatpush1.bf16.msra.mxu0 0
    %5142 = vmatprep.subr.bf16.mxu0 0
    %5143 = vmatpush1.bf16.msra.mxu0 0
    %5144 = vmatprep.subr.bf16.mxu0 0
    %5145 = vmatpush1.bf16.msra.mxu0 0
    %5146 = vmatprep.subr.bf16.mxu0 0
    %5147 = vmatpush1.bf16.msra.mxu0 0
    %5148 = vmatprep.subr.bf16.mxu0 0
    %5149 = vmatpush1.bf16.msra.mxu0 0
    %5150 = vmatprep.subr.bf16.mxu0 0
    %5151 = vmatpush1.bf16.msra.mxu0 0
    %5152 = vmatprep.subr.bf16.mxu0 0
    %5153 = vmatpush1.bf16.msra.mxu0 %v5112
    %5154 = vmatprep.subr.bf16.mxu0 0
    %5155 = vmatpush2.bf16.msra.mxu0 0
    %5156 = vmatprep.subr.bf16.mxu0 0
    %5157 = vmatpush2.bf16.msra.mxu0 0
    %5158 = vmatprep.subr.bf16.mxu0 0
    %5159 = vmatpush2.bf16.msra.mxu0 0
    %5160 = vmatprep.subr.bf16.mxu0 0
    %5161 = vmatpush2.bf16.msra.mxu0 0
    %5162 = vmatprep.subr.bf16.mxu0 0
    %5163 = vmatpush2.bf16.msra.mxu0 0
    %5164 = vmatprep.subr.bf16.mxu0 0
    %5165 = vmatpush2.bf16.msra.mxu0 0
    %5166 = vmatprep.subr.bf16.mxu0 0
    %5167 = vmatpush2.bf16.msra.mxu0 0
    %5168 = vmatprep.subr.bf16.mxu0 0
    %5169 = vmatpush2.bf16.msra.mxu0 0
    %5170 = vmatprep.mubr.bf16.mxu0 0
    %5171 = vmatmul.mubr.bf16.gmra.mxu0 %v5115
    %v5172 = vpop.f32.mrf.mxu0
    %v5173 = vadd.f32 0.0, %v5172
    %v5174 = vpop.f32.mrf.mxu0
    %v5175 = vpop.f32.mrf.mxu0
    %v5176 = vadd.f32 0.0, %v5175
    %v5177 = vpop.f32.mrf.mxu0
    %5178 = vmatprep.mubr.bf16.mxu0 0
    %5179 = vmatmul.mubr.bf16.gmra.mxu0 %v5118
    %v5180 = vpop.f32.mrf.mxu0
    %v5181 = vadd.f32 0.0, %v5180
    %v5182 = vpop.f32.mrf.mxu0
    %v5183 = vpop.f32.mrf.mxu0
    %v5184 = vadd.f32 0.0, %v5183
    %v5185 = vpop.f32.mrf.mxu0
    %5186 = vmatprep.mubr.bf16.mxu0 0
    %5187 = vmatmul.mubr.bf16.gmra.mxu0 %v5121
    %v5188 = vpop.f32.mrf.mxu0
    %v5189 = vadd.f32 0.0, %v5188
    %v5190 = vpop.f32.mrf.mxu0
    %v5191 = vpop.f32.mrf.mxu0
    %v5192 = vadd.f32 0.0, %v5191
    %v5193 = vpop.f32.mrf.mxu0
    %5194 = vmatprep.mubr.bf16.mxu0 0
    %5195 = vmatmul.mubr.bf16.gmra.mxu0 %v5124
    %v5196 = vpop.f32.mrf.mxu0
    %v5197 = vadd.f32 0.0, %v5196
    %v5198 = vpop.f32.mrf.mxu0
    %v5199 = vpop.f32.mrf.mxu0
    %v5200 = vadd.f32 0.0, %v5199
    %v5201 = vpop.f32.mrf.mxu0
    %5202 = vmatprep.mubr.bf16.mxu0 0
    %5203 = vmatmul.mubr.bf16.gmra.mxu0 %v5127
    %v5204 = vpop.f32.mrf.mxu0
    %v5205 = vadd.f32 0.0, %v5204
    %v5206 = vpop.f32.mrf.mxu0
    %v5207 = vpop.f32.mrf.mxu0
    %v5208 = vadd.f32 0.0, %v5207
    %v5209 = vpop.f32.mrf.mxu0
    %5210 = vmatprep.mubr.bf16.mxu0 0
    %5211 = vmatmul.mubr.bf16.gmra.mxu0 %v5130
    %v5212 = vpop.f32.mrf.mxu0
    %v5213 = vadd.f32 0.0, %v5212
    %v5214 = vpop.f32.mrf.mxu0
    %v5215 = vpop.f32.mrf.mxu0
    %v5216 = vadd.f32 0.0, %v5215
    %v5217 = vpop.f32.mrf.mxu0
    %5218 = vmatprep.mubr.bf16.mxu0 0
    %5219 = vmatmul.mubr.bf16.gmra.mxu0 %v5133
    %v5220 = vpop.f32.mrf.mxu0
    %v5221 = vadd.f32 0.0, %v5220
    %v5222 = vpop.f32.mrf.mxu0
    %v5223 = vpop.f32.mrf.mxu0
    %v5224 = vadd.f32 0.0, %v5223
    %v5225 = vpop.f32.mrf.mxu0
    %5226 = vmatprep.mubr.bf16.mxu0 0
    %5227 = vmatmul.mubr.bf16.gmra.mxu0 %v5136
    %v5228 = vpop.f32.mrf.mxu0
    %v5229 = vadd.f32 0.0, %v5228
    %v5230 = vpop.f32.mrf.mxu0
    %v5231 = vpop.f32.mrf.mxu0
    %v5232 = vadd.f32 0.0, %v5231
    %v5233 = vpop.f32.mrf.mxu0
    %5234 = vdwg.mxu0
    %v5235 = vadd.f32 %v5083, %v5173
    %v5236 = vadd.f32 %v5083, %v5176
    %v5237 = vadd.f32 %v5083, %v5181
    %v5238 = vadd.f32 %v5083, %v5184
    %v5239 = vadd.f32 %v5083, %v5189
    %v5240 = vadd.f32 %v5083, %v5192
    %v5241 = vadd.f32 %v5083, %v5197
    %v5242 = vadd.f32 %v5083, %v5200
    %v5243 = vadd.f32 %v5083, %v5205
    %v5244 = vadd.f32 %v5083, %v5208
    %v5245 = vadd.f32 %v5083, %v5213
    %v5246 = vadd.f32 %v5083, %v5216
    %v5247 = vadd.f32 %v5083, %v5221
    %v5248 = vadd.f32 %v5083, %v5224
    %v5249 = vadd.f32 %v5083, %v5229
    %v5250 = vadd.f32 %v5083, %v5232
    %v5251 = vld [vmem:[#allocation3 + $0x1] sm:$0xff]
    %v5252 = vld [vmem:[#allocation3 + $0x11] sm:$0xff]
    %v5253 = vld [vmem:[#allocation3 + $0x21] sm:$0xff]
    %v5254 = vld [vmem:[#allocation3 + $0x31] sm:$0xff]
    %v5255 = vld [vmem:[#allocation3 + $0x41] sm:$0xff]
    %v5256 = vld [vmem:[#allocation3 + $0x51] sm:$0xff]
    %v5257 = vld [vmem:[#allocation3 + $0x61] sm:$0xff]
    %v5258 = vld [vmem:[#allocation3 + $0x71] sm:$0xff]
    %v5259 = vld [vmem:[#allocation3 + $0xa1] sm:$0xff]
    %v5260 = vld [vmem:[#allocation3 + $0xb1] sm:$0xff]
    %v5261 = vld [vmem:[#allocation3 + $0xc1] sm:$0xff]
    %v5262 = vld [vmem:[#allocation3 + $0xd1] sm:$0xff]
    %v5263 = vld [vmem:[#allocation3 + $0xe1] sm:$0xff]
    %v5264 = vld [vmem:[#allocation3 + $0xf1] sm:$0xff]
    %v5265 = vld [vmem:[#allocation3 + $0x101] sm:$0xff]
    %v5266 = vld [vmem:[#allocation3 + $0x111] sm:$0xff]
    %v5267 = vpack.c.bf16 %v5252, %v5251
    %v5268 = vpack.c.bf16 %v5254, %v5253
    %v5269 = vpack.c.bf16 %v5256, %v5255
    %v5270 = vpack.c.bf16 %v5258, %v5257
    %v5271 = vpack.c.bf16 %v5260, %v5259
    %v5272 = vpack.c.bf16 %v5262, %v5261
    %v5273 = vpack.c.bf16 %v5264, %v5263
    %v5274 = vpack.c.bf16 %v5266, %v5265
    %v5277 = vunpack.c.l.b16 %v5060
    %v5278 = vunpack.c.l.b16 %v5061
    %v5279 = vpack.c.b16 %v5278, %v5277
    %v5282 = vsel %vm4760, %v5267, 0
    %v5285 = vsel %vm4760, %v5268, 0
    %v5288 = vsel %vm4760, %v5269, 0
    %v5291 = vsel %vm4760, %v5270, 0
    %v5294 = vsel %vm4760, %v5271, 0
    %v5297 = vsel %vm4760, %v5272, 0
    %v5300 = vsel %vm4760, %v5273, 0
    %v5303 = vsel %vm4760, %v5274, 0
    %5305 = vmatprep.subr.bf16.mxu0 0
    %5306 = vmatpush1.bf16.msra.mxu0 0
    %5307 = vmatprep.subr.bf16.mxu0 0
    %5308 = vmatpush1.bf16.msra.mxu0 0
    %5309 = vmatprep.subr.bf16.mxu0 0
    %5310 = vmatpush1.bf16.msra.mxu0 0
    %5311 = vmatprep.subr.bf16.mxu0 0
    %5312 = vmatpush1.bf16.msra.mxu0 0
    %5313 = vmatprep.subr.bf16.mxu0 0
    %5314 = vmatpush1.bf16.msra.mxu0 0
    %5315 = vmatprep.subr.bf16.mxu0 0
    %5316 = vmatpush1.bf16.msra.mxu0 0
    %5317 = vmatprep.subr.bf16.mxu0 0
    %5318 = vmatpush1.bf16.msra.mxu0 0
    %5319 = vmatprep.subr.bf16.mxu0 0
    %5320 = vmatpush1.bf16.msra.mxu0 %v5279
    %5321 = vmatprep.subr.bf16.mxu0 0
    %5322 = vmatpush2.bf16.msra.mxu0 0
    %5323 = vmatprep.subr.bf16.mxu0 0
    %5324 = vmatpush2.bf16.msra.mxu0 0
    %5325 = vmatprep.subr.bf16.mxu0 0
    %5326 = vmatpush2.bf16.msra.mxu0 0
    %5327 = vmatprep.subr.bf16.mxu0 0
    %5328 = vmatpush2.bf16.msra.mxu0 0
    %5329 = vmatprep.subr.bf16.mxu0 0
    %5330 = vmatpush2.bf16.msra.mxu0 0
    %5331 = vmatprep.subr.bf16.mxu0 0
    %5332 = vmatpush2.bf16.msra.mxu0 0
    %5333 = vmatprep.subr.bf16.mxu0 0
    %5334 = vmatpush2.bf16.msra.mxu0 0
    %5335 = vmatprep.subr.bf16.mxu0 0
    %5336 = vmatpush2.bf16.msra.mxu0 0
    %5337 = vmatprep.mubr.bf16.mxu0 0
    %5338 = vmatmul.mubr.bf16.gmra.mxu0 %v5282
    %v5339 = vpop.f32.mrf.mxu0
    %v5340 = vadd.f32 0.0, %v5339
    %v5341 = vpop.f32.mrf.mxu0
    %v5342 = vpop.f32.mrf.mxu0
    %v5343 = vadd.f32 0.0, %v5342
    %v5344 = vpop.f32.mrf.mxu0
    %5345 = vmatprep.mubr.bf16.mxu0 0
    %5346 = vmatmul.mubr.bf16.gmra.mxu0 %v5285
    %v5347 = vpop.f32.mrf.mxu0
    %v5348 = vadd.f32 0.0, %v5347
    %v5349 = vpop.f32.mrf.mxu0
    %v5350 = vpop.f32.mrf.mxu0
    %v5351 = vadd.f32 0.0, %v5350
    %v5352 = vpop.f32.mrf.mxu0
    %5353 = vmatprep.mubr.bf16.mxu0 0
    %5354 = vmatmul.mubr.bf16.gmra.mxu0 %v5288
    %v5355 = vpop.f32.mrf.mxu0
    %v5356 = vadd.f32 0.0, %v5355
    %v5357 = vpop.f32.mrf.mxu0
    %v5358 = vpop.f32.mrf.mxu0
    %v5359 = vadd.f32 0.0, %v5358
    %v5360 = vpop.f32.mrf.mxu0
    %5361 = vmatprep.mubr.bf16.mxu0 0
    %5362 = vmatmul.mubr.bf16.gmra.mxu0 %v5291
    %v5363 = vpop.f32.mrf.mxu0
    %v5364 = vadd.f32 0.0, %v5363
    %v5365 = vpop.f32.mrf.mxu0
    %v5366 = vpop.f32.mrf.mxu0
    %v5367 = vadd.f32 0.0, %v5366
    %v5368 = vpop.f32.mrf.mxu0
    %5369 = vmatprep.mubr.bf16.mxu0 0
    %5370 = vmatmul.mubr.bf16.gmra.mxu0 %v5294
    %v5371 = vpop.f32.mrf.mxu0
    %v5372 = vadd.f32 0.0, %v5371
    %v5373 = vpop.f32.mrf.mxu0
    %v5374 = vpop.f32.mrf.mxu0
    %v5375 = vadd.f32 0.0, %v5374
    %v5376 = vpop.f32.mrf.mxu0
    %5377 = vmatprep.mubr.bf16.mxu0 0
    %5378 = vmatmul.mubr.bf16.gmra.mxu0 %v5297
    %v5379 = vpop.f32.mrf.mxu0
    %v5380 = vadd.f32 0.0, %v5379
    %v5381 = vpop.f32.mrf.mxu0
    %v5382 = vpop.f32.mrf.mxu0
    %v5383 = vadd.f32 0.0, %v5382
    %v5384 = vpop.f32.mrf.mxu0
    %5385 = vmatprep.mubr.bf16.mxu0 0
    %5386 = vmatmul.mubr.bf16.gmra.mxu0 %v5300
    %v5387 = vpop.f32.mrf.mxu0
    %v5388 = vadd.f32 0.0, %v5387
    %v5389 = vpop.f32.mrf.mxu0
    %v5390 = vpop.f32.mrf.mxu0
    %v5391 = vadd.f32 0.0, %v5390
    %v5392 = vpop.f32.mrf.mxu0
    %5393 = vmatprep.mubr.bf16.mxu0 0
    %5394 = vmatmul.mubr.bf16.gmra.mxu0 %v5303
    %v5395 = vpop.f32.mrf.mxu0
    %v5396 = vadd.f32 0.0, %v5395
    %v5397 = vpop.f32.mrf.mxu0
    %v5398 = vpop.f32.mrf.mxu0
    %v5399 = vadd.f32 0.0, %v5398
    %v5400 = vpop.f32.mrf.mxu0
    %5401 = vdwg.mxu0
    %v5402 = vadd.f32 %v5235, %v5340
    %v5403 = vadd.f32 %v5236, %v5343
    %v5404 = vadd.f32 %v5237, %v5348
    %v5405 = vadd.f32 %v5238, %v5351
    %v5406 = vadd.f32 %v5239, %v5356
    %v5407 = vadd.f32 %v5240, %v5359
    %v5408 = vadd.f32 %v5241, %v5364
    %v5409 = vadd.f32 %v5242, %v5367
    %v5410 = vadd.f32 %v5243, %v5372
    %v5411 = vadd.f32 %v5244, %v5375
    %v5412 = vadd.f32 %v5245, %v5380
    %v5413 = vadd.f32 %v5246, %v5383
    %v5414 = vadd.f32 %v5247, %v5388
    %v5415 = vadd.f32 %v5248, %v5391
    %v5416 = vadd.f32 %v5249, %v5396
    %v5417 = vadd.f32 %v5250, %v5399
    %v5418 = vld [vmem:[#allocation3 + $0x2] sm:$0xff]
    %v5419 = vld [vmem:[#allocation3 + $0x12] sm:$0xff]
    %v5420 = vld [vmem:[#allocation3 + $0x22] sm:$0xff]
    %v5421 = vld [vmem:[#allocation3 + $0x32] sm:$0xff]
    %v5422 = vld [vmem:[#allocation3 + $0x42] sm:$0xff]
    %v5423 = vld [vmem:[#allocation3 + $0x52] sm:$0xff]
    %v5424 = vld [vmem:[#allocation3 + $0x62] sm:$0xff]
    %v5425 = vld [vmem:[#allocation3 + $0x72] sm:$0xff]
    %v5426 = vld [vmem:[#allocation3 + $0xa2] sm:$0xff]
    %v5427 = vld [vmem:[#allocation3 + $0xb2] sm:$0xff]
    %v5428 = vld [vmem:[#allocation3 + $0xc2] sm:$0xff]
    %v5429 = vld [vmem:[#allocation3 + $0xd2] sm:$0xff]
    %v5430 = vld [vmem:[#allocation3 + $0xe2] sm:$0xff]
    %v5431 = vld [vmem:[#allocation3 + $0xf2] sm:$0xff]
    %v5432 = vld [vmem:[#allocation3 + $0x102] sm:$0xff]
    %v5433 = vld [vmem:[#allocation3 + $0x112] sm:$0xff]
    %v5434 = vpack.c.bf16 %v5419, %v5418
    %v5435 = vpack.c.bf16 %v5421, %v5420
    %v5436 = vpack.c.bf16 %v5423, %v5422
    %v5437 = vpack.c.bf16 %v5425, %v5424
    %v5438 = vpack.c.bf16 %v5427, %v5426
    %v5439 = vpack.c.bf16 %v5429, %v5428
    %v5440 = vpack.c.bf16 %v5431, %v5430
    %v5441 = vpack.c.bf16 %v5433, %v5432
    %v5444 = vunpack.c.l.b16 %v5062
    %v5445 = vunpack.c.l.b16 %v5063
    %v5446 = vpack.c.b16 %v5445, %v5444
    %v5449 = vsel %vm4760, %v5434, 0
    %v5452 = vsel %vm4760, %v5435, 0
    %v5455 = vsel %vm4760, %v5436, 0
    %v5458 = vsel %vm4760, %v5437, 0
    %v5461 = vsel %vm4760, %v5438, 0
    %v5464 = vsel %vm4760, %v5439, 0
    %v5467 = vsel %vm4760, %v5440, 0
    %v5470 = vsel %vm4760, %v5441, 0
    %5472 = vmatprep.subr.bf16.mxu0 0
    %5473 = vmatpush1.bf16.msra.mxu0 0
    %5474 = vmatprep.subr.bf16.mxu0 0
    %5475 = vmatpush1.bf16.msra.mxu0 0
    %5476 = vmatprep.subr.bf16.mxu0 0
    %5477 = vmatpush1.bf16.msra.mxu0 0
    %5478 = vmatprep.subr.bf16.mxu0 0
    %5479 = vmatpush1.bf16.msra.mxu0 0
    %5480 = vmatprep.subr.bf16.mxu0 0
    %5481 = vmatpush1.bf16.msra.mxu0 0
    %5482 = vmatprep.subr.bf16.mxu0 0
    %5483 = vmatpush1.bf16.msra.mxu0 0
    %5484 = vmatprep.subr.bf16.mxu0 0
    %5485 = vmatpush1.bf16.msra.mxu0 0
    %5486 = vmatprep.subr.bf16.mxu0 0
    %5487 = vmatpush1.bf16.msra.mxu0 %v5446
    %5488 = vmatprep.subr.bf16.mxu0 0
    %5489 = vmatpush2.bf16.msra.mxu0 0
    %5490 = vmatprep.subr.bf16.mxu0 0
    %5491 = vmatpush2.bf16.msra.mxu0 0
    %5492 = vmatprep.subr.bf16.mxu0 0
    %5493 = vmatpush2.bf16.msra.mxu0 0
    %5494 = vmatprep.subr.bf16.mxu0 0
    %5495 = vmatpush2.bf16.msra.mxu0 0
    %5496 = vmatprep.subr.bf16.mxu0 0
    %5497 = vmatpush2.bf16.msra.mxu0 0
    %5498 = vmatprep.subr.bf16.mxu0 0
    %5499 = vmatpush2.bf16.msra.mxu0 0
    %5500 = vmatprep.subr.bf16.mxu0 0
    %5501 = vmatpush2.bf16.msra.mxu0 0
    %5502 = vmatprep.subr.bf16.mxu0 0
    %5503 = vmatpush2.bf16.msra.mxu0 0
    %5504 = vmatprep.mubr.bf16.mxu0 0
    %5505 = vmatmul.mubr.bf16.gmra.mxu0 %v5449
    %v5506 = vpop.f32.mrf.mxu0
    %v5507 = vadd.f32 0.0, %v5506
    %v5508 = vpop.f32.mrf.mxu0
    %v5509 = vpop.f32.mrf.mxu0
    %v5510 = vadd.f32 0.0, %v5509
    %v5511 = vpop.f32.mrf.mxu0
    %5512 = vmatprep.mubr.bf16.mxu0 0
    %5513 = vmatmul.mubr.bf16.gmra.mxu0 %v5452
    %v5514 = vpop.f32.mrf.mxu0
    %v5515 = vadd.f32 0.0, %v5514
    %v5516 = vpop.f32.mrf.mxu0
    %v5517 = vpop.f32.mrf.mxu0
    %v5518 = vadd.f32 0.0, %v5517
    %v5519 = vpop.f32.mrf.mxu0
    %5520 = vmatprep.mubr.bf16.mxu0 0
    %5521 = vmatmul.mubr.bf16.gmra.mxu0 %v5455
    %v5522 = vpop.f32.mrf.mxu0
    %v5523 = vadd.f32 0.0, %v5522
    %v5524 = vpop.f32.mrf.mxu0
    %v5525 = vpop.f32.mrf.mxu0
    %v5526 = vadd.f32 0.0, %v5525
    %v5527 = vpop.f32.mrf.mxu0
    %5528 = vmatprep.mubr.bf16.mxu0 0
    %5529 = vmatmul.mubr.bf16.gmra.mxu0 %v5458
    %v5530 = vpop.f32.mrf.mxu0
    %v5531 = vadd.f32 0.0, %v5530
    %v5532 = vpop.f32.mrf.mxu0
    %v5533 = vpop.f32.mrf.mxu0
    %v5534 = vadd.f32 0.0, %v5533
    %v5535 = vpop.f32.mrf.mxu0
    %5536 = vmatprep.mubr.bf16.mxu0 0
    %5537 = vmatmul.mubr.bf16.gmra.mxu0 %v5461
    %v5538 = vpop.f32.mrf.mxu0
    %v5539 = vadd.f32 0.0, %v5538
    %v5540 = vpop.f32.mrf.mxu0
    %v5541 = vpop.f32.mrf.mxu0
    %v5542 = vadd.f32 0.0, %v5541
    %v5543 = vpop.f32.mrf.mxu0
    %5544 = vmatprep.mubr.bf16.mxu0 0
    %5545 = vmatmul.mubr.bf16.gmra.mxu0 %v5464
    %v5546 = vpop.f32.mrf.mxu0
    %v5547 = vadd.f32 0.0, %v5546
    %v5548 = vpop.f32.mrf.mxu0
    %v5549 = vpop.f32.mrf.mxu0
    %v5550 = vadd.f32 0.0, %v5549
    %v5551 = vpop.f32.mrf.mxu0
    %5552 = vmatprep.mubr.bf16.mxu0 0
    %5553 = vmatmul.mubr.bf16.gmra.mxu0 %v5467
    %v5554 = vpop.f32.mrf.mxu0
    %v5555 = vadd.f32 0.0, %v5554
    %v5556 = vpop.f32.mrf.mxu0
    %v5557 = vpop.f32.mrf.mxu0
    %v5558 = vadd.f32 0.0, %v5557
    %v5559 = vpop.f32.mrf.mxu0
    %5560 = vmatprep.mubr.bf16.mxu0 0
    %5561 = vmatmul.mubr.bf16.gmra.mxu0 %v5470
    %v5562 = vpop.f32.mrf.mxu0
    %v5563 = vadd.f32 0.0, %v5562
    %v5564 = vpop.f32.mrf.mxu0
    %v5565 = vpop.f32.mrf.mxu0
    %v5566 = vadd.f32 0.0, %v5565
    %v5567 = vpop.f32.mrf.mxu0
    %5568 = vdwg.mxu0
    %v5569 = vadd.f32 %v5402, %v5507
    %v5570 = vadd.f32 %v5403, %v5510
    %v5571 = vadd.f32 %v5404, %v5515
    %v5572 = vadd.f32 %v5405, %v5518
    %v5573 = vadd.f32 %v5406, %v5523
    %v5574 = vadd.f32 %v5407, %v5526
    %v5575 = vadd.f32 %v5408, %v5531
    %v5576 = vadd.f32 %v5409, %v5534
    %v5577 = vadd.f32 %v5410, %v5539
    %v5578 = vadd.f32 %v5411, %v5542
    %v5579 = vadd.f32 %v5412, %v5547
    %v5580 = vadd.f32 %v5413, %v5550
    %v5581 = vadd.f32 %v5414, %v5555
    %v5582 = vadd.f32 %v5415, %v5558
    %v5583 = vadd.f32 %v5416, %v5563
    %v5584 = vadd.f32 %v5417, %v5566
    %v5585 = vld [vmem:[%s5041] sm:$0xff]
    %v5586 = vld [vmem:[%s5041 + $0x10] sm:$0xff]
    %v5587 = vld [vmem:[%s5041 + $0x20] sm:$0xff]
    %v5588 = vld [vmem:[%s5041 + $0x30] sm:$0xff]
    %v5589 = vld [vmem:[%s5041 + $0x40] sm:$0xff]
    %v5590 = vld [vmem:[%s5041 + $0x50] sm:$0xff]
    %v5591 = vld [vmem:[%s5041 + $0x60] sm:$0xff]
    %v5592 = vld [vmem:[%s5041 + $0x70] sm:$0xff]
    %v5593 = vld [vmem:[%s5041 + $0xa0] sm:$0xff]
    %v5594 = vld [vmem:[%s5041 + $0xb0] sm:$0xff]
    %v5595 = vld [vmem:[%s5041 + $0xc0] sm:$0xff]
    %v5596 = vld [vmem:[%s5041 + $0xd0] sm:$0xff]
    %v5597 = vld [vmem:[%s5041 + $0xe0] sm:$0xff]
    %v5598 = vld [vmem:[%s5041 + $0xf0] sm:$0xff]
    %v5599 = vld [vmem:[%s5041 + $0x100] sm:$0xff]
    %v5600 = vld [vmem:[%s5041 + $0x110] sm:$0xff]
    %v5601 = vpack.c.bf16 %v5586, %v5585
    %v5602 = vpack.c.bf16 %v5588, %v5587
    %v5603 = vpack.c.bf16 %v5590, %v5589
    %v5604 = vpack.c.bf16 %v5592, %v5591
    %v5605 = vpack.c.bf16 %v5594, %v5593
    %v5606 = vpack.c.bf16 %v5596, %v5595
    %v5607 = vpack.c.bf16 %v5598, %v5597
    %v5608 = vpack.c.bf16 %v5600, %v5599
    %v5611 = vunpack.c.l.b16 %v5064
    %v5612 = vunpack.c.l.b16 %v5065
    %v5613 = vpack.c.b16 %v5612, %v5611
    %v5616 = vsel %vm4760, %v5601, 0
    %v5619 = vsel %vm4760, %v5602, 0
    %v5622 = vsel %vm4760, %v5603, 0
    %v5625 = vsel %vm4760, %v5604, 0
    %v5628 = vsel %vm4760, %v5605, 0
    %v5631 = vsel %vm4760, %v5606, 0
    %v5634 = vsel %vm4760, %v5607, 0
    %v5637 = vsel %vm4760, %v5608, 0
    %5639 = vmatprep.subr.bf16.mxu0 0
    %5640 = vmatpush1.bf16.msra.mxu0 0
    %5641 = vmatprep.subr.bf16.mxu0 0
    %5642 = vmatpush1.bf16.msra.mxu0 0
    %5643 = vmatprep.subr.bf16.mxu0 0
    %5644 = vmatpush1.bf16.msra.mxu0 0
    %5645 = vmatprep.subr.bf16.mxu0 0
    %5646 = vmatpush1.bf16.msra.mxu0 0
    %5647 = vmatprep.subr.bf16.mxu0 0
    %5648 = vmatpush1.bf16.msra.mxu0 0
    %5649 = vmatprep.subr.bf16.mxu0 0
    %5650 = vmatpush1.bf16.msra.mxu0 0
    %5651 = vmatprep.subr.bf16.mxu0 0
    %5652 = vmatpush1.bf16.msra.mxu0 0
    %5653 = vmatprep.subr.bf16.mxu0 0
    %5654 = vmatpush1.bf16.msra.mxu0 %v5613
    %5655 = vmatprep.subr.bf16.mxu0 0
    %5656 = vmatpush2.bf16.msra.mxu0 0
    %5657 = vmatprep.subr.bf16.mxu0 0
    %5658 = vmatpush2.bf16.msra.mxu0 0
    %5659 = vmatprep.subr.bf16.mxu0 0
    %5660 = vmatpush2.bf16.msra.mxu0 0
    %5661 = vmatprep.subr.bf16.mxu0 0
    %5662 = vmatpush2.bf16.msra.mxu0 0
    %5663 = vmatprep.subr.bf16.mxu0 0
    %5664 = vmatpush2.bf16.msra.mxu0 0
    %5665 = vmatprep.subr.bf16.mxu0 0
    %5666 = vmatpush2.bf16.msra.mxu0 0
    %5667 = vmatprep.subr.bf16.mxu0 0
    %5668 = vmatpush2.bf16.msra.mxu0 0
    %5669 = vmatprep.subr.bf16.mxu0 0
    %5670 = vmatpush2.bf16.msra.mxu0 0
    %5671 = vmatprep.mubr.bf16.mxu0 0
    %5672 = vmatmul.mubr.bf16.gmra.mxu0 %v5616
    %v5673 = vpop.f32.mrf.mxu0
    %v5674 = vadd.f32 0.0, %v5673
    %v5675 = vpop.f32.mrf.mxu0
    %v5676 = vpop.f32.mrf.mxu0
    %v5677 = vadd.f32 0.0, %v5676
    %v5678 = vpop.f32.mrf.mxu0
    %5679 = vmatprep.mubr.bf16.mxu0 0
    %5680 = vmatmul.mubr.bf16.gmra.mxu0 %v5619
    %v5681 = vpop.f32.mrf.mxu0
    %v5682 = vadd.f32 0.0, %v5681
    %v5683 = vpop.f32.mrf.mxu0
    %v5684 = vpop.f32.mrf.mxu0
    %v5685 = vadd.f32 0.0, %v5684
    %v5686 = vpop.f32.mrf.mxu0
    %5687 = vmatprep.mubr.bf16.mxu0 0
    %5688 = vmatmul.mubr.bf16.gmra.mxu0 %v5622
    %v5689 = vpop.f32.mrf.mxu0
    %v5690 = vadd.f32 0.0, %v5689
    %v5691 = vpop.f32.mrf.mxu0
    %v5692 = vpop.f32.mrf.mxu0
    %v5693 = vadd.f32 0.0, %v5692
    %v5694 = vpop.f32.mrf.mxu0
    %5695 = vmatprep.mubr.bf16.mxu0 0
    %5696 = vmatmul.mubr.bf16.gmra.mxu0 %v5625
    %v5697 = vpop.f32.mrf.mxu0
    %v5698 = vadd.f32 0.0, %v5697
    %v5699 = vpop.f32.mrf.mxu0
    %v5700 = vpop.f32.mrf.mxu0
    %v5701 = vadd.f32 0.0, %v5700
    %v5702 = vpop.f32.mrf.mxu0
    %5703 = vmatprep.mubr.bf16.mxu0 0
    %5704 = vmatmul.mubr.bf16.gmra.mxu0 %v5628
    %v5705 = vpop.f32.mrf.mxu0
    %v5706 = vadd.f32 0.0, %v5705
    %v5707 = vpop.f32.mrf.mxu0
    %v5708 = vpop.f32.mrf.mxu0
    %v5709 = vadd.f32 0.0, %v5708
    %v5710 = vpop.f32.mrf.mxu0
    %5711 = vmatprep.mubr.bf16.mxu0 0
    %5712 = vmatmul.mubr.bf16.gmra.mxu0 %v5631
    %v5713 = vpop.f32.mrf.mxu0
    %v5714 = vadd.f32 0.0, %v5713
    %v5715 = vpop.f32.mrf.mxu0
    %v5716 = vpop.f32.mrf.mxu0
    %v5717 = vadd.f32 0.0, %v5716
    %v5718 = vpop.f32.mrf.mxu0
    %5719 = vmatprep.mubr.bf16.mxu0 0
    %5720 = vmatmul.mubr.bf16.gmra.mxu0 %v5634
    %v5721 = vpop.f32.mrf.mxu0
    %v5722 = vadd.f32 0.0, %v5721
    %v5723 = vpop.f32.mrf.mxu0
    %v5724 = vpop.f32.mrf.mxu0
    %v5725 = vadd.f32 0.0, %v5724
    %v5726 = vpop.f32.mrf.mxu0
    %5727 = vmatprep.mubr.bf16.mxu0 0
    %5728 = vmatmul.mubr.bf16.gmra.mxu0 %v5637
    %v5729 = vpop.f32.mrf.mxu0
    %v5730 = vadd.f32 0.0, %v5729
    %v5731 = vpop.f32.mrf.mxu0
    %v5732 = vpop.f32.mrf.mxu0
    %v5733 = vadd.f32 0.0, %v5732
    %v5734 = vpop.f32.mrf.mxu0
    %5735 = vdwg.mxu0
    %v5736 = vadd.f32 %v5569, %v5674
    %v5737 = vadd.f32 %v5570, %v5677
    %v5738 = vadd.f32 %v5571, %v5682
    %v5739 = vadd.f32 %v5572, %v5685
    %v5740 = vadd.f32 %v5573, %v5690
    %v5741 = vadd.f32 %v5574, %v5693
    %v5742 = vadd.f32 %v5575, %v5698
    %v5743 = vadd.f32 %v5576, %v5701
    %v5744 = vadd.f32 %v5577, %v5706
    %v5745 = vadd.f32 %v5578, %v5709
    %v5746 = vadd.f32 %v5579, %v5714
    %v5747 = vadd.f32 %v5580, %v5717
    %v5748 = vadd.f32 %v5581, %v5722
    %v5749 = vadd.f32 %v5582, %v5725
    %v5750 = vadd.f32 %v5583, %v5730
    %v5751 = vadd.f32 %v5584, %v5733
    %v5752 = vld [vmem:[%s5041 + $0x1] sm:$0xff]
    %v5753 = vld [vmem:[%s5041 + $0x11] sm:$0xff]
    %v5754 = vld [vmem:[%s5041 + $0x21] sm:$0xff]
    %v5755 = vld [vmem:[%s5041 + $0x31] sm:$0xff]
    %v5756 = vld [vmem:[%s5041 + $0x41] sm:$0xff]
    %v5757 = vld [vmem:[%s5041 + $0x51] sm:$0xff]
    %v5758 = vld [vmem:[%s5041 + $0x61] sm:$0xff]
    %v5759 = vld [vmem:[%s5041 + $0x71] sm:$0xff]
    %v5760 = vld [vmem:[%s5041 + $0xa1] sm:$0xff]
    %v5761 = vld [vmem:[%s5041 + $0xb1] sm:$0xff]
    %v5762 = vld [vmem:[%s5041 + $0xc1] sm:$0xff]
    %v5763 = vld [vmem:[%s5041 + $0xd1] sm:$0xff]
    %v5764 = vld [vmem:[%s5041 + $0xe1] sm:$0xff]
    %v5765 = vld [vmem:[%s5041 + $0xf1] sm:$0xff]
    %v5766 = vld [vmem:[%s5041 + $0x101] sm:$0xff]
    %v5767 = vld [vmem:[%s5041 + $0x111] sm:$0xff]
    %v5768 = vpack.c.bf16 %v5753, %v5752
    %v5769 = vpack.c.bf16 %v5755, %v5754
    %v5770 = vpack.c.bf16 %v5757, %v5756
    %v5771 = vpack.c.bf16 %v5759, %v5758
    %v5772 = vpack.c.bf16 %v5761, %v5760
    %v5773 = vpack.c.bf16 %v5763, %v5762
    %v5774 = vpack.c.bf16 %v5765, %v5764
    %v5775 = vpack.c.bf16 %v5767, %v5766
    %v5778 = vunpack.c.l.b16 %v5066
    %v5779 = vunpack.c.l.b16 %v5067
    %v5780 = vpack.c.b16 %v5779, %v5778
    %v5783 = vsel %vm4760, %v5768, 0
    %v5786 = vsel %vm4760, %v5769, 0
    %v5789 = vsel %vm4760, %v5770, 0
    %v5792 = vsel %vm4760, %v5771, 0
    %v5795 = vsel %vm4760, %v5772, 0
    %v5798 = vsel %vm4760, %v5773, 0
    %v5801 = vsel %vm4760, %v5774, 0
    %v5804 = vsel %vm4760, %v5775, 0
    %5806 = vmatprep.subr.bf16.mxu0 0
    %5807 = vmatpush1.bf16.msra.mxu0 0
    %5808 = vmatprep.subr.bf16.mxu0 0
    %5809 = vmatpush1.bf16.msra.mxu0 0
    %5810 = vmatprep.subr.bf16.mxu0 0
    %5811 = vmatpush1.bf16.msra.mxu0 0
    %5812 = vmatprep.subr.bf16.mxu0 0
    %5813 = vmatpush1.bf16.msra.mxu0 0
    %5814 = vmatprep.subr.bf16.mxu0 0
    %5815 = vmatpush1.bf16.msra.mxu0 0
    %5816 = vmatprep.subr.bf16.mxu0 0
    %5817 = vmatpush1.bf16.msra.mxu0 0
    %5818 = vmatprep.subr.bf16.mxu0 0
    %5819 = vmatpush1.bf16.msra.mxu0 0
    %5820 = vmatprep.subr.bf16.mxu0 0
    %5821 = vmatpush1.bf16.msra.mxu0 %v5780
    %5822 = vmatprep.subr.bf16.mxu0 0
    %5823 = vmatpush2.bf16.msra.mxu0 0
    %5824 = vmatprep.subr.bf16.mxu0 0
    %5825 = vmatpush2.bf16.msra.mxu0 0
    %5826 = vmatprep.subr.bf16.mxu0 0
    %5827 = vmatpush2.bf16.msra.mxu0 0
    %5828 = vmatprep.subr.bf16.mxu0 0
    %5829 = vmatpush2.bf16.msra.mxu0 0
    %5830 = vmatprep.subr.bf16.mxu0 0
    %5831 = vmatpush2.bf16.msra.mxu0 0
    %5832 = vmatprep.subr.bf16.mxu0 0
    %5833 = vmatpush2.bf16.msra.mxu0 0
    %5834 = vmatprep.subr.bf16.mxu0 0
    %5835 = vmatpush2.bf16.msra.mxu0 0
    %5836 = vmatprep.subr.bf16.mxu0 0
    %5837 = vmatpush2.bf16.msra.mxu0 0
    %5838 = vmatprep.mubr.bf16.mxu0 0
    %5839 = vmatmul.mubr.bf16.gmra.mxu0 %v5783
    %v5840 = vpop.f32.mrf.mxu0
    %v5841 = vadd.f32 0.0, %v5840
    %v5842 = vpop.f32.mrf.mxu0
    %v5843 = vpop.f32.mrf.mxu0
    %v5844 = vadd.f32 0.0, %v5843
    %v5845 = vpop.f32.mrf.mxu0
    %5846 = vmatprep.mubr.bf16.mxu0 0
    %5847 = vmatmul.mubr.bf16.gmra.mxu0 %v5786
    %v5848 = vpop.f32.mrf.mxu0
    %v5849 = vadd.f32 0.0, %v5848
    %v5850 = vpop.f32.mrf.mxu0
    %v5851 = vpop.f32.mrf.mxu0
    %v5852 = vadd.f32 0.0, %v5851
    %v5853 = vpop.f32.mrf.mxu0
    %5854 = vmatprep.mubr.bf16.mxu0 0
    %5855 = vmatmul.mubr.bf16.gmra.mxu0 %v5789
    %v5856 = vpop.f32.mrf.mxu0
    %v5857 = vadd.f32 0.0, %v5856
    %v5858 = vpop.f32.mrf.mxu0
    %v5859 = vpop.f32.mrf.mxu0
    %v5860 = vadd.f32 0.0, %v5859
    %v5861 = vpop.f32.mrf.mxu0
    %5862 = vmatprep.mubr.bf16.mxu0 0
    %5863 = vmatmul.mubr.bf16.gmra.mxu0 %v5792
    %v5864 = vpop.f32.mrf.mxu0
    %v5865 = vadd.f32 0.0, %v5864
    %v5866 = vpop.f32.mrf.mxu0
    %v5867 = vpop.f32.mrf.mxu0
    %v5868 = vadd.f32 0.0, %v5867
    %v5869 = vpop.f32.mrf.mxu0
    %5870 = vmatprep.mubr.bf16.mxu0 0
    %5871 = vmatmul.mubr.bf16.gmra.mxu0 %v5795
    %v5872 = vpop.f32.mrf.mxu0
    %v5873 = vadd.f32 0.0, %v5872
    %v5874 = vpop.f32.mrf.mxu0
    %v5875 = vpop.f32.mrf.mxu0
    %v5876 = vadd.f32 0.0, %v5875
    %v5877 = vpop.f32.mrf.mxu0
    %5878 = vmatprep.mubr.bf16.mxu0 0
    %5879 = vmatmul.mubr.bf16.gmra.mxu0 %v5798
    %v5880 = vpop.f32.mrf.mxu0
    %v5881 = vadd.f32 0.0, %v5880
    %v5882 = vpop.f32.mrf.mxu0
    %v5883 = vpop.f32.mrf.mxu0
    %v5884 = vadd.f32 0.0, %v5883
    %v5885 = vpop.f32.mrf.mxu0
    %5886 = vmatprep.mubr.bf16.mxu0 0
    %5887 = vmatmul.mubr.bf16.gmra.mxu0 %v5801
    %v5888 = vpop.f32.mrf.mxu0
    %v5889 = vadd.f32 0.0, %v5888
    %v5890 = vpop.f32.mrf.mxu0
    %v5891 = vpop.f32.mrf.mxu0
    %v5892 = vadd.f32 0.0, %v5891
    %v5893 = vpop.f32.mrf.mxu0
    %5894 = vmatprep.mubr.bf16.mxu0 0
    %5895 = vmatmul.mubr.bf16.gmra.mxu0 %v5804
    %v5896 = vpop.f32.mrf.mxu0
    %v5897 = vadd.f32 0.0, %v5896
    %v5898 = vpop.f32.mrf.mxu0
    %v5899 = vpop.f32.mrf.mxu0
    %v5900 = vadd.f32 0.0, %v5899
    %v5901 = vpop.f32.mrf.mxu0
    %5902 = vdwg.mxu0
    %v5903 = vadd.f32 %v5736, %v5841
    %v5904 = vadd.f32 %v5737, %v5844
    %v5905 = vadd.f32 %v5738, %v5849
    %v5906 = vadd.f32 %v5739, %v5852
    %v5907 = vadd.f32 %v5740, %v5857
    %v5908 = vadd.f32 %v5741, %v5860
    %v5909 = vadd.f32 %v5742, %v5865
    %v5910 = vadd.f32 %v5743, %v5868
    %v5911 = vadd.f32 %v5744, %v5873
    %v5912 = vadd.f32 %v5745, %v5876
    %v5913 = vadd.f32 %v5746, %v5881
    %v5914 = vadd.f32 %v5747, %v5884
    %v5915 = vadd.f32 %v5748, %v5889
    %v5916 = vadd.f32 %v5749, %v5892
    %v5917 = vadd.f32 %v5750, %v5897
    %v5918 = vadd.f32 %v5751, %v5900
    %v5919 = vld [vmem:[%s5041 + $0x2] sm:$0xff]
    %v5920 = vld [vmem:[%s5041 + $0x12] sm:$0xff]
    %v5921 = vld [vmem:[%s5041 + $0x22] sm:$0xff]
    %v5922 = vld [vmem:[%s5041 + $0x32] sm:$0xff]
    %v5923 = vld [vmem:[%s5041 + $0x42] sm:$0xff]
    %v5924 = vld [vmem:[%s5041 + $0x52] sm:$0xff]
    %v5925 = vld [vmem:[%s5041 + $0x62] sm:$0xff]
    %v5926 = vld [vmem:[%s5041 + $0x72] sm:$0xff]
    %v5927 = vld [vmem:[%s5041 + $0xa2] sm:$0xff]
    %v5928 = vld [vmem:[%s5041 + $0xb2] sm:$0xff]
    %v5929 = vld [vmem:[%s5041 + $0xc2] sm:$0xff]
    %v5930 = vld [vmem:[%s5041 + $0xd2] sm:$0xff]
    %v5931 = vld [vmem:[%s5041 + $0xe2] sm:$0xff]
    %v5932 = vld [vmem:[%s5041 + $0xf2] sm:$0xff]
    %v5933 = vld [vmem:[%s5041 + $0x102] sm:$0xff]
    %v5934 = vld [vmem:[%s5041 + $0x112] sm:$0xff]
    %v5935 = vpack.c.bf16 %v5920, %v5919
    %v5936 = vpack.c.bf16 %v5922, %v5921
    %v5937 = vpack.c.bf16 %v5924, %v5923
    %v5938 = vpack.c.bf16 %v5926, %v5925
    %v5939 = vpack.c.bf16 %v5928, %v5927
    %v5940 = vpack.c.bf16 %v5930, %v5929
    %v5941 = vpack.c.bf16 %v5932, %v5931
    %v5942 = vpack.c.bf16 %v5934, %v5933
    %v5945 = vunpack.c.l.b16 %v5068
    %v5946 = vunpack.c.l.b16 %v5069
    %v5947 = vpack.c.b16 %v5946, %v5945
    %v5950 = vsel %vm4760, %v5935, 0
    %v5953 = vsel %vm4760, %v5936, 0
    %v5956 = vsel %vm4760, %v5937, 0
    %v5959 = vsel %vm4760, %v5938, 0
    %v5962 = vsel %vm4760, %v5939, 0
    %v5965 = vsel %vm4760, %v5940, 0
    %v5968 = vsel %vm4760, %v5941, 0
    %v5971 = vsel %vm4760, %v5942, 0
    %5973 = vmatprep.subr.bf16.mxu0 0
    %5974 = vmatpush1.bf16.msra.mxu0 0
    %5975 = vmatprep.subr.bf16.mxu0 0
    %5976 = vmatpush1.bf16.msra.mxu0 0
    %5977 = vmatprep.subr.bf16.mxu0 0
    %5978 = vmatpush1.bf16.msra.mxu0 0
    %5979 = vmatprep.subr.bf16.mxu0 0
    %5980 = vmatpush1.bf16.msra.mxu0 0
    %5981 = vmatprep.subr.bf16.mxu0 0
    %5982 = vmatpush1.bf16.msra.mxu0 0
    %5983 = vmatprep.subr.bf16.mxu0 0
    %5984 = vmatpush1.bf16.msra.mxu0 0
    %5985 = vmatprep.subr.bf16.mxu0 0
    %5986 = vmatpush1.bf16.msra.mxu0 0
    %5987 = vmatprep.subr.bf16.mxu0 0
    %5988 = vmatpush1.bf16.msra.mxu0 %v5947
    %5989 = vmatprep.subr.bf16.mxu0 0
    %5990 = vmatpush2.bf16.msra.mxu0 0
    %5991 = vmatprep.subr.bf16.mxu0 0
    %5992 = vmatpush2.bf16.msra.mxu0 0
    %5993 = vmatprep.subr.bf16.mxu0 0
    %5994 = vmatpush2.bf16.msra.mxu0 0
    %5995 = vmatprep.subr.bf16.mxu0 0
    %5996 = vmatpush2.bf16.msra.mxu0 0
    %5997 = vmatprep.subr.bf16.mxu0 0
    %5998 = vmatpush2.bf16.msra.mxu0 0
    %5999 = vmatprep.subr.bf16.mxu0 0
    %6000 = vmatpush2.bf16.msra.mxu0 0
    %6001 = vmatprep.subr.bf16.mxu0 0
    %6002 = vmatpush2.bf16.msra.mxu0 0
    %6003 = vmatprep.subr.bf16.mxu0 0
    %6004 = vmatpush2.bf16.msra.mxu0 0
    %6005 = vmatprep.mubr.bf16.mxu0 0
    %6006 = vmatmul.mubr.bf16.gmra.mxu0 %v5950
    %v6007 = vpop.f32.mrf.mxu0
    %v6008 = vadd.f32 0.0, %v6007
    %v6009 = vpop.f32.mrf.mxu0
    %v6010 = vpop.f32.mrf.mxu0
    %v6011 = vadd.f32 0.0, %v6010
    %v6012 = vpop.f32.mrf.mxu0
    %6013 = vmatprep.mubr.bf16.mxu0 0
    %6014 = vmatmul.mubr.bf16.gmra.mxu0 %v5953
    %v6015 = vpop.f32.mrf.mxu0
    %v6016 = vadd.f32 0.0, %v6015
    %v6017 = vpop.f32.mrf.mxu0
    %v6018 = vpop.f32.mrf.mxu0
    %v6019 = vadd.f32 0.0, %v6018
    %v6020 = vpop.f32.mrf.mxu0
    %6021 = vmatprep.mubr.bf16.mxu0 0
    %6022 = vmatmul.mubr.bf16.gmra.mxu0 %v5956
    %v6023 = vpop.f32.mrf.mxu0
    %v6024 = vadd.f32 0.0, %v6023
    %v6025 = vpop.f32.mrf.mxu0
    %v6026 = vpop.f32.mrf.mxu0
    %v6027 = vadd.f32 0.0, %v6026
    %v6028 = vpop.f32.mrf.mxu0
    %6029 = vmatprep.mubr.bf16.mxu0 0
    %6030 = vmatmul.mubr.bf16.gmra.mxu0 %v5959
    %v6031 = vpop.f32.mrf.mxu0
    %v6032 = vadd.f32 0.0, %v6031
    %v6033 = vpop.f32.mrf.mxu0
    %v6034 = vpop.f32.mrf.mxu0
    %v6035 = vadd.f32 0.0, %v6034
    %v6036 = vpop.f32.mrf.mxu0
    %6037 = vmatprep.mubr.bf16.mxu0 0
    %6038 = vmatmul.mubr.bf16.gmra.mxu0 %v5962
    %v6039 = vpop.f32.mrf.mxu0
    %v6040 = vadd.f32 0.0, %v6039
    %v6041 = vpop.f32.mrf.mxu0
    %v6042 = vpop.f32.mrf.mxu0
    %v6043 = vadd.f32 0.0, %v6042
    %v6044 = vpop.f32.mrf.mxu0
    %6045 = vmatprep.mubr.bf16.mxu0 0
    %6046 = vmatmul.mubr.bf16.gmra.mxu0 %v5965
    %v6047 = vpop.f32.mrf.mxu0
    %v6048 = vadd.f32 0.0, %v6047
    %v6049 = vpop.f32.mrf.mxu0
    %v6050 = vpop.f32.mrf.mxu0
    %v6051 = vadd.f32 0.0, %v6050
    %v6052 = vpop.f32.mrf.mxu0
    %6053 = vmatprep.mubr.bf16.mxu0 0
    %6054 = vmatmul.mubr.bf16.gmra.mxu0 %v5968
    %v6055 = vpop.f32.mrf.mxu0
    %v6056 = vadd.f32 0.0, %v6055
    %v6057 = vpop.f32.mrf.mxu0
    %v6058 = vpop.f32.mrf.mxu0
    %v6059 = vadd.f32 0.0, %v6058
    %v6060 = vpop.f32.mrf.mxu0
    %6061 = vmatprep.mubr.bf16.mxu0 0
    %6062 = vmatmul.mubr.bf16.gmra.mxu0 %v5971
    %v6063 = vpop.f32.mrf.mxu0
    %v6064 = vadd.f32 0.0, %v6063
    %v6065 = vpop.f32.mrf.mxu0
    %v6066 = vpop.f32.mrf.mxu0
    %v6067 = vadd.f32 0.0, %v6066
    %v6068 = vpop.f32.mrf.mxu0
    %6069 = vdwg.mxu0
    %v6070 = vadd.f32 %v5903, %v6008
    %v6071 = vadd.f32 %v5904, %v6011
    %v6072 = vadd.f32 %v5905, %v6016
    %v6073 = vadd.f32 %v5906, %v6019
    %v6074 = vadd.f32 %v5907, %v6024
    %v6075 = vadd.f32 %v5908, %v6027
    %v6076 = vadd.f32 %v5909, %v6032
    %v6077 = vadd.f32 %v5910, %v6035
    %v6078 = vadd.f32 %v5911, %v6040
    %v6079 = vadd.f32 %v5912, %v6043
    %v6080 = vadd.f32 %v5913, %v6048
    %v6081 = vadd.f32 %v5914, %v6051
    %v6082 = vadd.f32 %v5915, %v6056
    %v6083 = vadd.f32 %v5916, %v6059
    %v6084 = vadd.f32 %v5917, %v6064
    %v6085 = vadd.f32 %v5918, %v6067
    %s6086 = scalar_lea.vmem [#allocation3], 32
    %v6087 = vld [vmem:[%s6086] sm:$0xff]
    %v6088 = vld [vmem:[%s6086 + $0x10] sm:$0xff]
    %v6089 = vld [vmem:[%s6086 + $0x20] sm:$0xff]
    %v6090 = vld [vmem:[%s6086 + $0x30] sm:$0xff]
    %v6091 = vld [vmem:[%s6086 + $0x40] sm:$0xff]
    %v6092 = vld [vmem:[%s6086 + $0x50] sm:$0xff]
    %v6093 = vld [vmem:[%s6086 + $0x60] sm:$0xff]
    %v6094 = vld [vmem:[%s6086 + $0x70] sm:$0xff]
    %v6095 = vld [vmem:[%s6086 + $0xa0] sm:$0xff]
    %v6096 = vld [vmem:[%s6086 + $0xb0] sm:$0xff]
    %v6097 = vld [vmem:[%s6086 + $0xc0] sm:$0xff]
    %v6098 = vld [vmem:[%s6086 + $0xd0] sm:$0xff]
    %v6099 = vld [vmem:[%s6086 + $0xe0] sm:$0xff]
    %v6100 = vld [vmem:[%s6086 + $0xf0] sm:$0xff]
    %v6101 = vld [vmem:[%s6086 + $0x100] sm:$0xff]
    %v6102 = vld [vmem:[%s6086 + $0x110] sm:$0xff]
    %v6103 = vpack.c.bf16 %v6088, %v6087
    %v6104 = vpack.c.bf16 %v6090, %v6089
    %v6105 = vpack.c.bf16 %v6092, %v6091
    %v6106 = vpack.c.bf16 %v6094, %v6093
    %v6107 = vpack.c.bf16 %v6096, %v6095
    %v6108 = vpack.c.bf16 %v6098, %v6097
    %v6109 = vpack.c.bf16 %v6100, %v6099
    %v6110 = vpack.c.bf16 %v6102, %v6101
    %v6113 = vunpack.c.l.b16 %v5070
    %v6114 = vunpack.c.l.b16 %v5071
    %v6115 = vpack.c.b16 %v6114, %v6113
    %v6118 = vsel %vm4760, %v6103, 0
    %v6121 = vsel %vm4760, %v6104, 0
    %v6124 = vsel %vm4760, %v6105, 0
    %v6127 = vsel %vm4760, %v6106, 0
    %v6130 = vsel %vm4760, %v6107, 0
    %v6133 = vsel %vm4760, %v6108, 0
    %v6136 = vsel %vm4760, %v6109, 0
    %v6139 = vsel %vm4760, %v6110, 0
    %6141 = vmatprep.subr.bf16.mxu0 0
    %6142 = vmatpush1.bf16.msra.mxu0 0
    %6143 = vmatprep.subr.bf16.mxu0 0
    %6144 = vmatpush1.bf16.msra.mxu0 0
    %6145 = vmatprep.subr.bf16.mxu0 0
    %6146 = vmatpush1.bf16.msra.mxu0 0
    %6147 = vmatprep.subr.bf16.mxu0 0
    %6148 = vmatpush1.bf16.msra.mxu0 0
    %6149 = vmatprep.subr.bf16.mxu0 0
    %6150 = vmatpush1.bf16.msra.mxu0 0
    %6151 = vmatprep.subr.bf16.mxu0 0
    %6152 = vmatpush1.bf16.msra.mxu0 0
    %6153 = vmatprep.subr.bf16.mxu0 0
    %6154 = vmatpush1.bf16.msra.mxu0 0
    %6155 = vmatprep.subr.bf16.mxu0 0
    %6156 = vmatpush1.bf16.msra.mxu0 %v6115
    %6157 = vmatprep.subr.bf16.mxu0 0
    %6158 = vmatpush2.bf16.msra.mxu0 0
    %6159 = vmatprep.subr.bf16.mxu0 0
    %6160 = vmatpush2.bf16.msra.mxu0 0
    %6161 = vmatprep.subr.bf16.mxu0 0
    %6162 = vmatpush2.bf16.msra.mxu0 0
    %6163 = vmatprep.subr.bf16.mxu0 0
    %6164 = vmatpush2.bf16.msra.mxu0 0
    %6165 = vmatprep.subr.bf16.mxu0 0
    %6166 = vmatpush2.bf16.msra.mxu0 0
    %6167 = vmatprep.subr.bf16.mxu0 0
    %6168 = vmatpush2.bf16.msra.mxu0 0
    %6169 = vmatprep.subr.bf16.mxu0 0
    %6170 = vmatpush2.bf16.msra.mxu0 0
    %6171 = vmatprep.subr.bf16.mxu0 0
    %6172 = vmatpush2.bf16.msra.mxu0 0
    %6173 = vmatprep.mubr.bf16.mxu0 0
    %6174 = vmatmul.mubr.bf16.gmra.mxu0 %v6118
    %v6175 = vpop.f32.mrf.mxu0
    %v6176 = vadd.f32 0.0, %v6175
    %v6177 = vpop.f32.mrf.mxu0
    %v6178 = vpop.f32.mrf.mxu0
    %v6179 = vadd.f32 0.0, %v6178
    %v6180 = vpop.f32.mrf.mxu0
    %6181 = vmatprep.mubr.bf16.mxu0 0
    %6182 = vmatmul.mubr.bf16.gmra.mxu0 %v6121
    %v6183 = vpop.f32.mrf.mxu0
    %v6184 = vadd.f32 0.0, %v6183
    %v6185 = vpop.f32.mrf.mxu0
    %v6186 = vpop.f32.mrf.mxu0
    %v6187 = vadd.f32 0.0, %v6186
    %v6188 = vpop.f32.mrf.mxu0
    %6189 = vmatprep.mubr.bf16.mxu0 0
    %6190 = vmatmul.mubr.bf16.gmra.mxu0 %v6124
    %v6191 = vpop.f32.mrf.mxu0
    %v6192 = vadd.f32 0.0, %v6191
    %v6193 = vpop.f32.mrf.mxu0
    %v6194 = vpop.f32.mrf.mxu0
    %v6195 = vadd.f32 0.0, %v6194
    %v6196 = vpop.f32.mrf.mxu0
    %6197 = vmatprep.mubr.bf16.mxu0 0
    %6198 = vmatmul.mubr.bf16.gmra.mxu0 %v6127
    %v6199 = vpop.f32.mrf.mxu0
    %v6200 = vadd.f32 0.0, %v6199
    %v6201 = vpop.f32.mrf.mxu0
    %v6202 = vpop.f32.mrf.mxu0
    %v6203 = vadd.f32 0.0, %v6202
    %v6204 = vpop.f32.mrf.mxu0
    %6205 = vmatprep.mubr.bf16.mxu0 0
    %6206 = vmatmul.mubr.bf16.gmra.mxu0 %v6130
    %v6207 = vpop.f32.mrf.mxu0
    %v6208 = vadd.f32 0.0, %v6207
    %v6209 = vpop.f32.mrf.mxu0
    %v6210 = vpop.f32.mrf.mxu0
    %v6211 = vadd.f32 0.0, %v6210
    %v6212 = vpop.f32.mrf.mxu0
    %6213 = vmatprep.mubr.bf16.mxu0 0
    %6214 = vmatmul.mubr.bf16.gmra.mxu0 %v6133
    %v6215 = vpop.f32.mrf.mxu0
    %v6216 = vadd.f32 0.0, %v6215
    %v6217 = vpop.f32.mrf.mxu0
    %v6218 = vpop.f32.mrf.mxu0
    %v6219 = vadd.f32 0.0, %v6218
    %v6220 = vpop.f32.mrf.mxu0
    %6221 = vmatprep.mubr.bf16.mxu0 0
    %6222 = vmatmul.mubr.bf16.gmra.mxu0 %v6136
    %v6223 = vpop.f32.mrf.mxu0
    %v6224 = vadd.f32 0.0, %v6223
    %v6225 = vpop.f32.mrf.mxu0
    %v6226 = vpop.f32.mrf.mxu0
    %v6227 = vadd.f32 0.0, %v6226
    %v6228 = vpop.f32.mrf.mxu0
    %6229 = vmatprep.mubr.bf16.mxu0 0
    %6230 = vmatmul.mubr.bf16.gmra.mxu0 %v6139
    %v6231 = vpop.f32.mrf.mxu0
    %v6232 = vadd.f32 0.0, %v6231
    %v6233 = vpop.f32.mrf.mxu0
    %v6234 = vpop.f32.mrf.mxu0
    %v6235 = vadd.f32 0.0, %v6234
    %v6236 = vpop.f32.mrf.mxu0
    %6237 = vdwg.mxu0
    %v6238 = vadd.f32 %v6070, %v6176
    %v6239 = vadd.f32 %v6071, %v6179
    %v6240 = vadd.f32 %v6072, %v6184
    %v6241 = vadd.f32 %v6073, %v6187
    %v6242 = vadd.f32 %v6074, %v6192
    %v6243 = vadd.f32 %v6075, %v6195
    %v6244 = vadd.f32 %v6076, %v6200
    %v6245 = vadd.f32 %v6077, %v6203
    %v6246 = vadd.f32 %v6078, %v6208
    %v6247 = vadd.f32 %v6079, %v6211
    %v6248 = vadd.f32 %v6080, %v6216
    %v6249 = vadd.f32 %v6081, %v6219
    %v6250 = vadd.f32 %v6082, %v6224
    %v6251 = vadd.f32 %v6083, %v6227
    %v6252 = vadd.f32 %v6084, %v6232
    %v6253 = vadd.f32 %v6085, %v6235
    %v6254 = vld [vmem:[%s6086 + $0x1] sm:$0xff]
    %v6255 = vld [vmem:[%s6086 + $0x11] sm:$0xff]
    %v6256 = vld [vmem:[%s6086 + $0x21] sm:$0xff]
    %v6257 = vld [vmem:[%s6086 + $0x31] sm:$0xff]
    %v6258 = vld [vmem:[%s6086 + $0x41] sm:$0xff]
    %v6259 = vld [vmem:[%s6086 + $0x51] sm:$0xff]
    %v6260 = vld [vmem:[%s6086 + $0x61] sm:$0xff]
    %v6261 = vld [vmem:[%s6086 + $0x71] sm:$0xff]
    %v6262 = vld [vmem:[%s6086 + $0xa1] sm:$0xff]
    %v6263 = vld [vmem:[%s6086 + $0xb1] sm:$0xff]
    %v6264 = vld [vmem:[%s6086 + $0xc1] sm:$0xff]
    %v6265 = vld [vmem:[%s6086 + $0xd1] sm:$0xff]
    %v6266 = vld [vmem:[%s6086 + $0xe1] sm:$0xff]
    %v6267 = vld [vmem:[%s6086 + $0xf1] sm:$0xff]
    %v6268 = vld [vmem:[%s6086 + $0x101] sm:$0xff]
    %v6269 = vld [vmem:[%s6086 + $0x111] sm:$0xff]
    %v6270 = vpack.c.bf16 %v6255, %v6254
    %v6271 = vpack.c.bf16 %v6257, %v6256
    %v6272 = vpack.c.bf16 %v6259, %v6258
    %v6273 = vpack.c.bf16 %v6261, %v6260
    %v6274 = vpack.c.bf16 %v6263, %v6262
    %v6275 = vpack.c.bf16 %v6265, %v6264
    %v6276 = vpack.c.bf16 %v6267, %v6266
    %v6277 = vpack.c.bf16 %v6269, %v6268
    %v6280 = vunpack.c.l.b16 %v5072
    %v6281 = vunpack.c.l.b16 %v5073
    %v6282 = vpack.c.b16 %v6281, %v6280
    %v6285 = vsel %vm4760, %v6270, 0
    %v6288 = vsel %vm4760, %v6271, 0
    %v6291 = vsel %vm4760, %v6272, 0
    %v6294 = vsel %vm4760, %v6273, 0
    %v6297 = vsel %vm4760, %v6274, 0
    %v6300 = vsel %vm4760, %v6275, 0
    %v6303 = vsel %vm4760, %v6276, 0
    %v6306 = vsel %vm4760, %v6277, 0
    %6308 = vmatprep.subr.bf16.mxu0 0
    %6309 = vmatpush1.bf16.msra.mxu0 0
    %6310 = vmatprep.subr.bf16.mxu0 0
    %6311 = vmatpush1.bf16.msra.mxu0 0
    %6312 = vmatprep.subr.bf16.mxu0 0
    %6313 = vmatpush1.bf16.msra.mxu0 0
    %6314 = vmatprep.subr.bf16.mxu0 0
    %6315 = vmatpush1.bf16.msra.mxu0 0
    %6316 = vmatprep.subr.bf16.mxu0 0
    %6317 = vmatpush1.bf16.msra.mxu0 0
    %6318 = vmatprep.subr.bf16.mxu0 0
    %6319 = vmatpush1.bf16.msra.mxu0 0
    %6320 = vmatprep.subr.bf16.mxu0 0
    %6321 = vmatpush1.bf16.msra.mxu0 0
    %6322 = vmatprep.subr.bf16.mxu0 0
    %6323 = vmatpush1.bf16.msra.mxu0 %v6282
    %6324 = vmatprep.subr.bf16.mxu0 0
    %6325 = vmatpush2.bf16.msra.mxu0 0
    %6326 = vmatprep.subr.bf16.mxu0 0
    %6327 = vmatpush2.bf16.msra.mxu0 0
    %6328 = vmatprep.subr.bf16.mxu0 0
    %6329 = vmatpush2.bf16.msra.mxu0 0
    %6330 = vmatprep.subr.bf16.mxu0 0
    %6331 = vmatpush2.bf16.msra.mxu0 0
    %6332 = vmatprep.subr.bf16.mxu0 0
    %6333 = vmatpush2.bf16.msra.mxu0 0
    %6334 = vmatprep.subr.bf16.mxu0 0
    %6335 = vmatpush2.bf16.msra.mxu0 0
    %6336 = vmatprep.subr.bf16.mxu0 0
    %6337 = vmatpush2.bf16.msra.mxu0 0
    %6338 = vmatprep.subr.bf16.mxu0 0
    %6339 = vmatpush2.bf16.msra.mxu0 0
    %6340 = vmatprep.mubr.bf16.mxu0 0
    %6341 = vmatmul.mubr.bf16.gmra.mxu0 %v6285
    %v6342 = vpop.f32.mrf.mxu0
    %v6343 = vadd.f32 0.0, %v6342
    %v6344 = vpop.f32.mrf.mxu0
    %v6345 = vpop.f32.mrf.mxu0
    %v6346 = vadd.f32 0.0, %v6345
    %v6347 = vpop.f32.mrf.mxu0
    %6348 = vmatprep.mubr.bf16.mxu0 0
    %6349 = vmatmul.mubr.bf16.gmra.mxu0 %v6288
    %v6350 = vpop.f32.mrf.mxu0
    %v6351 = vadd.f32 0.0, %v6350
    %v6352 = vpop.f32.mrf.mxu0
    %v6353 = vpop.f32.mrf.mxu0
    %v6354 = vadd.f32 0.0, %v6353
    %v6355 = vpop.f32.mrf.mxu0
    %6356 = vmatprep.mubr.bf16.mxu0 0
    %6357 = vmatmul.mubr.bf16.gmra.mxu0 %v6291
    %v6358 = vpop.f32.mrf.mxu0
    %v6359 = vadd.f32 0.0, %v6358
    %v6360 = vpop.f32.mrf.mxu0
    %v6361 = vpop.f32.mrf.mxu0
    %v6362 = vadd.f32 0.0, %v6361
    %v6363 = vpop.f32.mrf.mxu0
    %6364 = vmatprep.mubr.bf16.mxu0 0
    %6365 = vmatmul.mubr.bf16.gmra.mxu0 %v6294
    %v6366 = vpop.f32.mrf.mxu0
    %v6367 = vadd.f32 0.0, %v6366
    %v6368 = vpop.f32.mrf.mxu0
    %v6369 = vpop.f32.mrf.mxu0
    %v6370 = vadd.f32 0.0, %v6369
    %v6371 = vpop.f32.mrf.mxu0
    %6372 = vmatprep.mubr.bf16.mxu0 0
    %6373 = vmatmul.mubr.bf16.gmra.mxu0 %v6297
    %v6374 = vpop.f32.mrf.mxu0
    %v6375 = vadd.f32 0.0, %v6374
    %v6376 = vpop.f32.mrf.mxu0
    %v6377 = vpop.f32.mrf.mxu0
    %v6378 = vadd.f32 0.0, %v6377
    %v6379 = vpop.f32.mrf.mxu0
    %6380 = vmatprep.mubr.bf16.mxu0 0
    %6381 = vmatmul.mubr.bf16.gmra.mxu0 %v6300
    %v6382 = vpop.f32.mrf.mxu0
    %v6383 = vadd.f32 0.0, %v6382
    %v6384 = vpop.f32.mrf.mxu0
    %v6385 = vpop.f32.mrf.mxu0
    %v6386 = vadd.f32 0.0, %v6385
    %v6387 = vpop.f32.mrf.mxu0
    %6388 = vmatprep.mubr.bf16.mxu0 0
    %6389 = vmatmul.mubr.bf16.gmra.mxu0 %v6303
    %v6390 = vpop.f32.mrf.mxu0
    %v6391 = vadd.f32 0.0, %v6390
    %v6392 = vpop.f32.mrf.mxu0
    %v6393 = vpop.f32.mrf.mxu0
    %v6394 = vadd.f32 0.0, %v6393
    %v6395 = vpop.f32.mrf.mxu0
    %6396 = vmatprep.mubr.bf16.mxu0 0
    %6397 = vmatmul.mubr.bf16.gmra.mxu0 %v6306
    %v6398 = vpop.f32.mrf.mxu0
    %v6399 = vadd.f32 0.0, %v6398
    %v6400 = vpop.f32.mrf.mxu0
    %v6401 = vpop.f32.mrf.mxu0
    %v6402 = vadd.f32 0.0, %v6401
    %v6403 = vpop.f32.mrf.mxu0
    %6404 = vdwg.mxu0
    %v6405 = vadd.f32 %v6238, %v6343
    %v6406 = vadd.f32 %v6239, %v6346
    %v6407 = vadd.f32 %v6240, %v6351
    %v6408 = vadd.f32 %v6241, %v6354
    %v6409 = vadd.f32 %v6242, %v6359
    %v6410 = vadd.f32 %v6243, %v6362
    %v6411 = vadd.f32 %v6244, %v6367
    %v6412 = vadd.f32 %v6245, %v6370
    %v6413 = vadd.f32 %v6246, %v6375
    %v6414 = vadd.f32 %v6247, %v6378
    %v6415 = vadd.f32 %v6248, %v6383
    %v6416 = vadd.f32 %v6249, %v6386
    %v6417 = vadd.f32 %v6250, %v6391
    %v6418 = vadd.f32 %v6251, %v6394
    %v6419 = vadd.f32 %v6252, %v6399
    %v6420 = vadd.f32 %v6253, %v6402
    %v6421 = vld [vmem:[%s6086 + $0x2] sm:$0xff]
    %v6422 = vld [vmem:[%s6086 + $0x12] sm:$0xff]
    %v6423 = vld [vmem:[%s6086 + $0x22] sm:$0xff]
    %v6424 = vld [vmem:[%s6086 + $0x32] sm:$0xff]
    %v6425 = vld [vmem:[%s6086 + $0x42] sm:$0xff]
    %v6426 = vld [vmem:[%s6086 + $0x52] sm:$0xff]
    %v6427 = vld [vmem:[%s6086 + $0x62] sm:$0xff]
    %v6428 = vld [vmem:[%s6086 + $0x72] sm:$0xff]
    %v6429 = vld [vmem:[%s6086 + $0xa2] sm:$0xff]
    %v6430 = vld [vmem:[%s6086 + $0xb2] sm:$0xff]
    %v6431 = vld [vmem:[%s6086 + $0xc2] sm:$0xff]
    %v6432 = vld [vmem:[%s6086 + $0xd2] sm:$0xff]
    %v6433 = vld [vmem:[%s6086 + $0xe2] sm:$0xff]
    %v6434 = vld [vmem:[%s6086 + $0xf2] sm:$0xff]
    %v6435 = vld [vmem:[%s6086 + $0x102] sm:$0xff]
    %v6436 = vld [vmem:[%s6086 + $0x112] sm:$0xff]
    %v6437 = vpack.c.bf16 %v6422, %v6421
    %v6438 = vpack.c.bf16 %v6424, %v6423
    %v6439 = vpack.c.bf16 %v6426, %v6425
    %v6440 = vpack.c.bf16 %v6428, %v6427
    %v6441 = vpack.c.bf16 %v6430, %v6429
    %v6442 = vpack.c.bf16 %v6432, %v6431
    %v6443 = vpack.c.bf16 %v6434, %v6433
    %v6444 = vpack.c.bf16 %v6436, %v6435
    %v6447 = vunpack.c.l.b16 %v5074
    %v6448 = vunpack.c.l.b16 %v5075
    %v6449 = vpack.c.b16 %v6448, %v6447
    %v6452 = vsel %vm4760, %v6437, 0
    %v6455 = vsel %vm4760, %v6438, 0
    %v6458 = vsel %vm4760, %v6439, 0
    %v6461 = vsel %vm4760, %v6440, 0
    %v6464 = vsel %vm4760, %v6441, 0
    %v6467 = vsel %vm4760, %v6442, 0
    %v6470 = vsel %vm4760, %v6443, 0
    %v6473 = vsel %vm4760, %v6444, 0
    %6475 = vmatprep.subr.bf16.mxu0 0
    %6476 = vmatpush1.bf16.msra.mxu0 0
    %6477 = vmatprep.subr.bf16.mxu0 0
    %6478 = vmatpush1.bf16.msra.mxu0 0
    %6479 = vmatprep.subr.bf16.mxu0 0
    %6480 = vmatpush1.bf16.msra.mxu0 0
    %6481 = vmatprep.subr.bf16.mxu0 0
    %6482 = vmatpush1.bf16.msra.mxu0 0
    %6483 = vmatprep.subr.bf16.mxu0 0
    %6484 = vmatpush1.bf16.msra.mxu0 0
    %6485 = vmatprep.subr.bf16.mxu0 0
    %6486 = vmatpush1.bf16.msra.mxu0 0
    %6487 = vmatprep.subr.bf16.mxu0 0
    %6488 = vmatpush1.bf16.msra.mxu0 0
    %6489 = vmatprep.subr.bf16.mxu0 0
    %6490 = vmatpush1.bf16.msra.mxu0 %v6449
    %6491 = vmatprep.subr.bf16.mxu0 0
    %6492 = vmatpush2.bf16.msra.mxu0 0
    %6493 = vmatprep.subr.bf16.mxu0 0
    %6494 = vmatpush2.bf16.msra.mxu0 0
    %6495 = vmatprep.subr.bf16.mxu0 0
    %6496 = vmatpush2.bf16.msra.mxu0 0
    %6497 = vmatprep.subr.bf16.mxu0 0
    %6498 = vmatpush2.bf16.msra.mxu0 0
    %6499 = vmatprep.subr.bf16.mxu0 0
    %6500 = vmatpush2.bf16.msra.mxu0 0
    %6501 = vmatprep.subr.bf16.mxu0 0
    %6502 = vmatpush2.bf16.msra.mxu0 0
    %6503 = vmatprep.subr.bf16.mxu0 0
    %6504 = vmatpush2.bf16.msra.mxu0 0
    %6505 = vmatprep.subr.bf16.mxu0 0
    %6506 = vmatpush2.bf16.msra.mxu0 0
    %6507 = vmatprep.mubr.bf16.mxu0 0
    %6508 = vmatmul.mubr.bf16.gmra.mxu0 %v6452
    %v6509 = vpop.f32.mrf.mxu0
    %v6510 = vadd.f32 0.0, %v6509
    %v6511 = vpop.f32.mrf.mxu0
    %v6512 = vpop.f32.mrf.mxu0
    %v6513 = vadd.f32 0.0, %v6512
    %v6514 = vpop.f32.mrf.mxu0
    %6515 = vmatprep.mubr.bf16.mxu0 0
    %6516 = vmatmul.mubr.bf16.gmra.mxu0 %v6455
    %v6517 = vpop.f32.mrf.mxu0
    %v6518 = vadd.f32 0.0, %v6517
    %v6519 = vpop.f32.mrf.mxu0
    %v6520 = vpop.f32.mrf.mxu0
    %v6521 = vadd.f32 0.0, %v6520
    %v6522 = vpop.f32.mrf.mxu0
    %6523 = vmatprep.mubr.bf16.mxu0 0
    %6524 = vmatmul.mubr.bf16.gmra.mxu0 %v6458
    %v6525 = vpop.f32.mrf.mxu0
    %v6526 = vadd.f32 0.0, %v6525
    %v6527 = vpop.f32.mrf.mxu0
    %v6528 = vpop.f32.mrf.mxu0
    %v6529 = vadd.f32 0.0, %v6528
    %v6530 = vpop.f32.mrf.mxu0
    %6531 = vmatprep.mubr.bf16.mxu0 0
    %6532 = vmatmul.mubr.bf16.gmra.mxu0 %v6461
    %v6533 = vpop.f32.mrf.mxu0
    %v6534 = vadd.f32 0.0, %v6533
    %v6535 = vpop.f32.mrf.mxu0
    %v6536 = vpop.f32.mrf.mxu0
    %v6537 = vadd.f32 0.0, %v6536
    %v6538 = vpop.f32.mrf.mxu0
    %6539 = vmatprep.mubr.bf16.mxu0 0
    %6540 = vmatmul.mubr.bf16.gmra.mxu0 %v6464
    %v6541 = vpop.f32.mrf.mxu0
    %v6542 = vadd.f32 0.0, %v6541
    %v6543 = vpop.f32.mrf.mxu0
    %v6544 = vpop.f32.mrf.mxu0
    %v6545 = vadd.f32 0.0, %v6544
    %v6546 = vpop.f32.mrf.mxu0
    %6547 = vmatprep.mubr.bf16.mxu0 0
    %6548 = vmatmul.mubr.bf16.gmra.mxu0 %v6467
    %v6549 = vpop.f32.mrf.mxu0
    %v6550 = vadd.f32 0.0, %v6549
    %v6551 = vpop.f32.mrf.mxu0
    %v6552 = vpop.f32.mrf.mxu0
    %v6553 = vadd.f32 0.0, %v6552
    %v6554 = vpop.f32.mrf.mxu0
    %6555 = vmatprep.mubr.bf16.mxu0 0
    %6556 = vmatmul.mubr.bf16.gmra.mxu0 %v6470
    %v6557 = vpop.f32.mrf.mxu0
    %v6558 = vadd.f32 0.0, %v6557
    %v6559 = vpop.f32.mrf.mxu0
    %v6560 = vpop.f32.mrf.mxu0
    %v6561 = vadd.f32 0.0, %v6560
    %v6562 = vpop.f32.mrf.mxu0
    %6563 = vmatprep.mubr.bf16.mxu0 0
    %6564 = vmatmul.mubr.bf16.gmra.mxu0 %v6473
    %v6565 = vpop.f32.mrf.mxu0
    %v6566 = vadd.f32 0.0, %v6565
    %v6567 = vpop.f32.mrf.mxu0
    %v6568 = vpop.f32.mrf.mxu0
    %v6569 = vadd.f32 0.0, %v6568
    %v6570 = vpop.f32.mrf.mxu0
    %6571 = vdwg.mxu0
    %v6572 = vadd.f32 %v6405, %v6510
    %v6573 = vadd.f32 %v6406, %v6513
    %v6574 = vadd.f32 %v6407, %v6518
    %v6575 = vadd.f32 %v6408, %v6521
    %v6576 = vadd.f32 %v6409, %v6526
    %v6577 = vadd.f32 %v6410, %v6529
    %v6578 = vadd.f32 %v6411, %v6534
    %v6579 = vadd.f32 %v6412, %v6537
    %v6580 = vadd.f32 %v6413, %v6542
    %v6581 = vadd.f32 %v6414, %v6545
    %v6582 = vadd.f32 %v6415, %v6550
    %v6583 = vadd.f32 %v6416, %v6553
    %v6584 = vadd.f32 %v6417, %v6558
    %v6585 = vadd.f32 %v6418, %v6561
    %v6586 = vadd.f32 %v6419, %v6566
    %v6587 = vadd.f32 %v6420, %v6569
    %v6588 = vmax.f32 %v6572, 0.0
    %v6589 = vmax.f32 %v6573, 0.0
    %v6590 = vmax.f32 %v6574, 0.0
    %v6591 = vmax.f32 %v6575, 0.0
    %v6592 = vmax.f32 %v6576, 0.0
    %v6593 = vmax.f32 %v6577, 0.0
    %v6594 = vmax.f32 %v6578, 0.0
    %v6595 = vmax.f32 %v6579, 0.0
    %v6596 = vmax.f32 %v6580, 0.0
    %v6597 = vmax.f32 %v6581, 0.0
    %v6598 = vmax.f32 %v6582, 0.0
    %v6599 = vmax.f32 %v6583, 0.0
    %v6600 = vmax.f32 %v6584, 0.0
    %v6601 = vmax.f32 %v6585, 0.0
    %v6602 = vmax.f32 %v6586, 0.0
    %v6603 = vmax.f32 %v6587, 0.0
    %6604 = vst.msk [vmem:[#allocation4] sm:$0xff] %vm4760, %v6588
    %6605 = vst.msk [vmem:[#allocation4 + $0x8] sm:$0xff] %vm4760, %v6589
    %6606 = vst.msk [vmem:[#allocation4 + $0x10] sm:$0xff] %vm4760, %v6590
    %6607 = vst.msk [vmem:[#allocation4 + $0x18] sm:$0xff] %vm4760, %v6591
    %6608 = vst.msk [vmem:[#allocation4 + $0x20] sm:$0xff] %vm4760, %v6592
    %6609 = vst.msk [vmem:[#allocation4 + $0x28] sm:$0xff] %vm4760, %v6593
    %6610 = vst.msk [vmem:[#allocation4 + $0x30] sm:$0xff] %vm4760, %v6594
    %6611 = vst.msk [vmem:[#allocation4 + $0x38] sm:$0xff] %vm4760, %v6595
    %6612 = vst.msk [vmem:[#allocation4 + $0x40] sm:$0xff] %vm4760, %v6596
    %6613 = vst.msk [vmem:[#allocation4 + $0x48] sm:$0xff] %vm4760, %v6597
    %6614 = vst.msk [vmem:[#allocation4 + $0x50] sm:$0xff] %vm4760, %v6598
    %6615 = vst.msk [vmem:[#allocation4 + $0x58] sm:$0xff] %vm4760, %v6599
    %6616 = vst.msk [vmem:[#allocation4 + $0x60] sm:$0xff] %vm4760, %v6600
    %6617 = vst.msk [vmem:[#allocation4 + $0x68] sm:$0xff] %vm4760, %v6601
    %6618 = vst.msk [vmem:[#allocation4 + $0x70] sm:$0xff] %vm4760, %v6602
    %6619 = vst.msk [vmem:[#allocation4 + $0x78] sm:$0xff] %vm4760, %v6603
    %vm6620 = vcmask 128000
    %6621 = vst.msk [vmem:[#allocation5] sm:$0x3f] %vm6620, 0.0
    %6622 = vst.msk [vmem:[#allocation5 + $0x8] sm:$0x3f] %vm6620, 0.0
    %6623 = vst.msk [vmem:[#allocation5 + $0x10] sm:$0x3f] %vm6620, 0.0
    %6624 = vst.msk [vmem:[#allocation5 + $0x18] sm:$0x3f] %vm6620, 0.0
    %6625 = vst.msk [vmem:[#allocation5 + $0x20] sm:$0x3f] %vm6620, 0.0
    %6626 = vst.msk [vmem:[#allocation5 + $0x28] sm:$0x3f] %vm6620, 0.0
    %6627 = vst.msk [vmem:[#allocation5 + $0x30] sm:$0x3f] %vm6620, 0.0
    %6628 = vst.msk [vmem:[#allocation5 + $0x38] sm:$0x3f] %vm6620, 0.0
    %6629 = vst.msk [vmem:[#allocation5 + $0x40] sm:$0x3f] %vm6620, 0.0
    %6630 = vst.msk [vmem:[#allocation5 + $0x48] sm:$0x3f] %vm6620, 0.0
    %6631 = vst.msk [vmem:[#allocation5 + $0x50] sm:$0x3f] %vm6620, 0.0
    %6632 = vst.msk [vmem:[#allocation5 + $0x58] sm:$0x3f] %vm6620, 0.0
    %v6633 = vld [vmem:[#allocation4] ss:$2 sm:$0xf]
    %s6634 = scalar_lea.vmem [#allocation4], 16
    %v6635 = vld [vmem:[%s6634] ss:$2 sm:$0xf]
    %s6636 = scalar_lea.vmem [#allocation4], 32
    %v6637 = vld [vmem:[%s6636] ss:$2 sm:$0xf]
    %s6638 = scalar_lea.vmem [#allocation4], 48
    %v6639 = vld [vmem:[%s6638] ss:$2 sm:$0xf]
    %s6640 = scalar_lea.vmem [#allocation4], 64
    %v6641 = vld [vmem:[%s6640] ss:$2 sm:$0xf]
    %s6642 = scalar_lea.vmem [#allocation4], 80
    %v6643 = vld [vmem:[%s6642] ss:$2 sm:$0xf]
    %s6644 = scalar_lea.vmem [#allocation4], 96
    %v6645 = vld [vmem:[%s6644] ss:$2 sm:$0xf]
    %s6646 = scalar_lea.vmem [#allocation4], 112
    %v6647 = vld [vmem:[%s6646] ss:$2 sm:$0xf]
    %s6648 = scalar_lea.vmem [#allocation4], 1
    %v6649 = vld [vmem:[%s6648] ss:$2 sm:$0xf]
    %s6650 = scalar_lea.vmem [#allocation4], 17
    %v6651 = vld [vmem:[%s6650] ss:$2 sm:$0xf]
    %s6652 = scalar_lea.vmem [#allocation4], 33
    %v6653 = vld [vmem:[%s6652] ss:$2 sm:$0xf]
    %s6654 = scalar_lea.vmem [#allocation4], 49
    %v6655 = vld [vmem:[%s6654] ss:$2 sm:$0xf]
    %s6656 = scalar_lea.vmem [#allocation4], 65
    %v6657 = vld [vmem:[%s6656] ss:$2 sm:$0xf]
    %s6658 = scalar_lea.vmem [#allocation4], 81
    %v6659 = vld [vmem:[%s6658] ss:$2 sm:$0xf]
    %s6660 = scalar_lea.vmem [#allocation4], 97
    %v6661 = vld [vmem:[%s6660] ss:$2 sm:$0xf]
    %s6662 = scalar_lea.vmem [#allocation4], 113
    %v6663 = vld [vmem:[%s6662] ss:$2 sm:$0xf]
    %s6664 = scalar_lea.vmem [#allocation4], 8
    %v6665 = vld [vmem:[%s6664] ss:$2 sm:$0xf]
    %s6666 = scalar_lea.vmem %s6664, 16 [#allocation4]
    %v6667 = vld [vmem:[%s6666] ss:$2 sm:$0xf]
    %s6668 = scalar_lea.vmem %s6664, 32 [#allocation4]
    %v6669 = vld [vmem:[%s6668] ss:$2 sm:$0xf]
    %s6670 = scalar_lea.vmem %s6664, 48 [#allocation4]
    %v6671 = vld [vmem:[%s6670] ss:$2 sm:$0xf]
    %s6672 = scalar_lea.vmem %s6664, 64 [#allocation4]
    %v6673 = vld [vmem:[%s6672] ss:$2 sm:$0xf]
    %s6674 = scalar_lea.vmem %s6664, 80 [#allocation4]
    %v6675 = vld [vmem:[%s6674] ss:$2 sm:$0xf]
    %s6676 = scalar_lea.vmem %s6664, 96 [#allocation4]
    %v6677 = vld [vmem:[%s6676] ss:$2 sm:$0xf]
    %s6678 = scalar_lea.vmem %s6664, 112 [#allocation4]
    %v6679 = vld [vmem:[%s6678] ss:$2 sm:$0xf]
    %s6680 = scalar_lea.vmem %s6664, 1 [#allocation4]
    %v6681 = vld [vmem:[%s6680] ss:$2 sm:$0xf]
    %s6682 = scalar_lea.vmem %s6664, 17 [#allocation4]
    %v6683 = vld [vmem:[%s6682] ss:$2 sm:$0xf]
    %s6684 = scalar_lea.vmem %s6664, 33 [#allocation4]
    %v6685 = vld [vmem:[%s6684] ss:$2 sm:$0xf]
    %s6686 = scalar_lea.vmem %s6664, 49 [#allocation4]
    %v6687 = vld [vmem:[%s6686] ss:$2 sm:$0xf]
    %s6688 = scalar_lea.vmem %s6664, 65 [#allocation4]
    %v6689 = vld [vmem:[%s6688] ss:$2 sm:$0xf]
    %s6690 = scalar_lea.vmem %s6664, 81 [#allocation4]
    %v6691 = vld [vmem:[%s6690] ss:$2 sm:$0xf]
    %s6692 = scalar_lea.vmem %s6664, 97 [#allocation4]
    %v6693 = vld [vmem:[%s6692] ss:$2 sm:$0xf]
    %s6694 = scalar_lea.vmem %s6664, 113 [#allocation4]
    %v6695 = vld [vmem:[%s6694] ss:$2 sm:$0xf]
    %v6696 = vmax.f32 %v6633, %v6649
    %v6697 = vmax.f32 %v6635, %v6651
    %v6698 = vmax.f32 %v6637, %v6653
    %v6699 = vmax.f32 %v6639, %v6655
    %v6700 = vmax.f32 %v6641, %v6657
    %v6701 = vmax.f32 %v6643, %v6659
    %v6702 = vmax.f32 %v6645, %v6661
    %v6703 = vmax.f32 %v6647, %v6663
    %v6704 = vmax.f32 %v6665, %v6681
    %v6705 = vmax.f32 %v6667, %v6683
    %v6706 = vmax.f32 %v6669, %v6685
    %v6707 = vmax.f32 %v6671, %v6687
    %v6708 = vmax.f32 %v6673, %v6689
    %v6709 = vmax.f32 %v6675, %v6691
    %v6710 = vmax.f32 %v6677, %v6693
    %v6711 = vmax.f32 %v6679, %v6695
    %v6712 = vmax.f32 %v6696, %v6704
    %v6713 = vmax.f32 %v6697, %v6705
    %v6714 = vmax.f32 %v6698, %v6706
    %v6715 = vmax.f32 %v6699, %v6707
    %v6716 = vmax.f32 %v6700, %v6708
    %v6717 = vmax.f32 %v6701, %v6709
    %v6718 = vmax.f32 %v6702, %v6710
    %v6719 = vmax.f32 %v6703, %v6711
    %s6720 = scalar_lea.vmem [#allocation5], 8
    %vm6721 = vcmask 125952
    %6722 = vst.msk [vmem:[%s6720 + $0x1] sm:$0xf] %vm6721, %v6712
    %6723 = vst.msk [vmem:[%s6720 + $0x9] sm:$0xf] %vm6721, %v6713
    %6724 = vst.msk [vmem:[%s6720 + $0x11] sm:$0xf] %vm6721, %v6714
    %6725 = vst.msk [vmem:[%s6720 + $0x19] sm:$0xf] %vm6721, %v6715
    %6726 = vst.msk [vmem:[%s6720 + $0x31] sm:$0xf] %vm6721, %v6716
    %6727 = vst.msk [vmem:[%s6720 + $0x39] sm:$0xf] %vm6721, %v6717
    %6728 = vst.msk [vmem:[%s6720 + $0x41] sm:$0xf] %vm6721, %v6718
    %6729 = vst.msk [vmem:[%s6720 + $0x49] sm:$0xf] %vm6721, %v6719
    %v6730 = vld [vmem:[%s5] sm:$0xf]
    %v6731 = vld [vmem:[%s5 + $0x4] sm:$0xf]
    %v6732 = vld [vmem:[%s5 + $0x8] sm:$0xf]
    %v6733 = vld [vmem:[%s5 + $0xc] sm:$0xf]
    %v6734 = vld [vmem:[%s5 + $0x10] sm:$0xf]
    %v6735 = vld [vmem:[%s5 + $0x14] sm:$0xf]
    %v6736 = vld [vmem:[%s5 + $0x18] sm:$0xf]
    %v6737 = vld [vmem:[%s5 + $0x1c] sm:$0xf]
    %v6738 = vld [vmem:[%s5 + $0x20] sm:$0xf]
    %v6739 = vld [vmem:[%s5 + $0x24] sm:$0xf]
    %v6740 = vld [vmem:[%s5 + $0x28] sm:$0xf]
    %v6741 = vld [vmem:[%s5 + $0x2c] sm:$0xf]
    %v6742 = vld [vmem:[%s5 + $0x30] sm:$0xf]
    %v6743 = vld [vmem:[%s5 + $0x34] sm:$0xf]
    %v6744 = vld [vmem:[%s5 + $0x38] sm:$0xf]
    %v6745 = vld [vmem:[%s5 + $0x3c] sm:$0xf]
    %v6746 = vld [vmem:[%s5 + $0x40] sm:$0xf]
    %v6747 = vld [vmem:[%s5 + $0x44] sm:$0xf]
    %v6748 = vld [vmem:[%s6] sm:$0x1]
    %v6750 = vlaneseq
    %v6751 = vshrl.u32 %v6750, 7
    %v6752 = vsub.s32 0, %v6751
    %v6753 = vrot.slane %v6748, %v6752
    %v6755 = vadd.f32 %v6753, 0.0
    %v6756 = vld [vmem:[#allocation5] sm:$0xf]
    %v6757 = vld [vmem:[#allocation5 + $0x8] sm:$0xf]
    %v6758 = vld [vmem:[#allocation5 + $0x10] sm:$0xf]
    %v6759 = vld [vmem:[#allocation5 + $0x18] sm:$0xf]
    %v6760 = vld [vmem:[#allocation5 + $0x30] sm:$0xf]
    %v6761 = vld [vmem:[#allocation5 + $0x38] sm:$0xf]
    %v6762 = vld [vmem:[#allocation5 + $0x40] sm:$0xf]
    %v6763 = vld [vmem:[#allocation5 + $0x48] sm:$0xf]
    %v6772 = vcombine.low %v6756, %v6757
    %v6773 = vcombine.low %v6758, %v6759
    %v6774 = vcombine.low %v6760, %v6761
    %v6775 = vcombine.low %v6762, %v6763
    %v6780 = vpack.c.bf16 %v6773, %v6772
    %v6781 = vpack.c.bf16 %v6775, %v6774
    %v6784 = vunpack.c.l.b16 %v6730
    %v6785 = vunpack.c.l.b16 %v6731
    %v6786 = vpack.c.b16 %v6785, %v6784
    %v6789 = vsel %vm4760, %v6780, 0
    %v6792 = vsel %vm4760, %v6781, 0
    %6794 = vmatprep.subr.bf16.mxu0 0
    %6795 = vmatpush1.bf16.msra.mxu0 0
    %6796 = vmatprep.subr.bf16.mxu0 0
    %6797 = vmatpush1.bf16.msra.mxu0 0
    %6798 = vmatprep.subr.bf16.mxu0 0
    %6799 = vmatpush1.bf16.msra.mxu0 0
    %6800 = vmatprep.subr.bf16.mxu0 0
    %6801 = vmatpush1.bf16.msra.mxu0 0
    %6802 = vmatprep.subr.bf16.mxu0 0
    %6803 = vmatpush1.bf16.msra.mxu0 0
    %6804 = vmatprep.subr.bf16.mxu0 0
    %6805 = vmatpush1.bf16.msra.mxu0 0
    %6806 = vmatprep.subr.bf16.mxu0 0
    %6807 = vmatpush1.bf16.msra.mxu0 0
    %6808 = vmatprep.subr.bf16.mxu0 0
    %6809 = vmatpush1.bf16.msra.mxu0 %v6786
    %6810 = vmatprep.subr.bf16.mxu0 0
    %6811 = vmatpush2.bf16.msra.mxu0 0
    %6812 = vmatprep.subr.bf16.mxu0 0
    %6813 = vmatpush2.bf16.msra.mxu0 0
    %6814 = vmatprep.subr.bf16.mxu0 0
    %6815 = vmatpush2.bf16.msra.mxu0 0
    %6816 = vmatprep.subr.bf16.mxu0 0
    %6817 = vmatpush2.bf16.msra.mxu0 0
    %6818 = vmatprep.subr.bf16.mxu0 0
    %6819 = vmatpush2.bf16.msra.mxu0 0
    %6820 = vmatprep.subr.bf16.mxu0 0
    %6821 = vmatpush2.bf16.msra.mxu0 0
    %6822 = vmatprep.subr.bf16.mxu0 0
    %6823 = vmatpush2.bf16.msra.mxu0 0
    %6824 = vmatprep.subr.bf16.mxu0 0
    %6825 = vmatpush2.bf16.msra.mxu0 0
    %6826 = vmatprep.mubr.bf16.mxu0 0
    %6827 = vmatmul.mubr.bf16.gmra.mxu0 %v6789
    %v6828 = vpop.f32.mrf.mxu0
    %v6829 = vadd.f32 0.0, %v6828
    %v6830 = vpop.f32.mrf.mxu0
    %v6831 = vpop.f32.mrf.mxu0
    %v6832 = vadd.f32 0.0, %v6831
    %v6833 = vpop.f32.mrf.mxu0
    %6834 = vmatprep.mubr.bf16.mxu0 0
    %6835 = vmatmul.mubr.bf16.gmra.mxu0 %v6792
    %v6836 = vpop.f32.mrf.mxu0
    %v6837 = vadd.f32 0.0, %v6836
    %v6838 = vpop.f32.mrf.mxu0
    %v6839 = vpop.f32.mrf.mxu0
    %v6840 = vadd.f32 0.0, %v6839
    %v6841 = vpop.f32.mrf.mxu0
    %6842 = vdwg.mxu0
    %v6843 = vadd.f32 %v6755, %v6829
    %v6844 = vadd.f32 %v6755, %v6832
    %v6845 = vadd.f32 %v6755, %v6837
    %v6846 = vadd.f32 %v6755, %v6840
    %v6847 = vld [vmem:[#allocation5 + $0x1] sm:$0xf]
    %v6848 = vld [vmem:[#allocation5 + $0x9] sm:$0xf]
    %v6849 = vld [vmem:[#allocation5 + $0x11] sm:$0xf]
    %v6850 = vld [vmem:[#allocation5 + $0x19] sm:$0xf]
    %v6851 = vld [vmem:[#allocation5 + $0x31] sm:$0xf]
    %v6852 = vld [vmem:[#allocation5 + $0x39] sm:$0xf]
    %v6853 = vld [vmem:[#allocation5 + $0x41] sm:$0xf]
    %v6854 = vld [vmem:[#allocation5 + $0x49] sm:$0xf]
    %v6863 = vcombine.low %v6847, %v6848
    %v6864 = vcombine.low %v6849, %v6850
    %v6865 = vcombine.low %v6851, %v6852
    %v6866 = vcombine.low %v6853, %v6854
    %v6871 = vpack.c.bf16 %v6864, %v6863
    %v6872 = vpack.c.bf16 %v6866, %v6865
    %v6875 = vunpack.c.l.b16 %v6732
    %v6876 = vunpack.c.l.b16 %v6733
    %v6877 = vpack.c.b16 %v6876, %v6875
    %v6880 = vsel %vm4760, %v6871, 0
    %v6883 = vsel %vm4760, %v6872, 0
    %6885 = vmatprep.subr.bf16.mxu0 0
    %6886 = vmatpush1.bf16.msra.mxu0 0
    %6887 = vmatprep.subr.bf16.mxu0 0
    %6888 = vmatpush1.bf16.msra.mxu0 0
    %6889 = vmatprep.subr.bf16.mxu0 0
    %6890 = vmatpush1.bf16.msra.mxu0 0
    %6891 = vmatprep.subr.bf16.mxu0 0
    %6892 = vmatpush1.bf16.msra.mxu0 0
    %6893 = vmatprep.subr.bf16.mxu0 0
    %6894 = vmatpush1.bf16.msra.mxu0 0
    %6895 = vmatprep.subr.bf16.mxu0 0
    %6896 = vmatpush1.bf16.msra.mxu0 0
    %6897 = vmatprep.subr.bf16.mxu0 0
    %6898 = vmatpush1.bf16.msra.mxu0 0
    %6899 = vmatprep.subr.bf16.mxu0 0
    %6900 = vmatpush1.bf16.msra.mxu0 %v6877
    %6901 = vmatprep.subr.bf16.mxu0 0
    %6902 = vmatpush2.bf16.msra.mxu0 0
    %6903 = vmatprep.subr.bf16.mxu0 0
    %6904 = vmatpush2.bf16.msra.mxu0 0
    %6905 = vmatprep.subr.bf16.mxu0 0
    %6906 = vmatpush2.bf16.msra.mxu0 0
    %6907 = vmatprep.subr.bf16.mxu0 0
    %6908 = vmatpush2.bf16.msra.mxu0 0
    %6909 = vmatprep.subr.bf16.mxu0 0
    %6910 = vmatpush2.bf16.msra.mxu0 0
    %6911 = vmatprep.subr.bf16.mxu0 0
    %6912 = vmatpush2.bf16.msra.mxu0 0
    %6913 = vmatprep.subr.bf16.mxu0 0
    %6914 = vmatpush2.bf16.msra.mxu0 0
    %6915 = vmatprep.subr.bf16.mxu0 0
    %6916 = vmatpush2.bf16.msra.mxu0 0
    %6917 = vmatprep.mubr.bf16.mxu0 0
    %6918 = vmatmul.mubr.bf16.gmra.mxu0 %v6880
    %v6919 = vpop.f32.mrf.mxu0
    %v6920 = vadd.f32 0.0, %v6919
    %v6921 = vpop.f32.mrf.mxu0
    %v6922 = vpop.f32.mrf.mxu0
    %v6923 = vadd.f32 0.0, %v6922
    %v6924 = vpop.f32.mrf.mxu0
    %6925 = vmatprep.mubr.bf16.mxu0 0
    %6926 = vmatmul.mubr.bf16.gmra.mxu0 %v6883
    %v6927 = vpop.f32.mrf.mxu0
    %v6928 = vadd.f32 0.0, %v6927
    %v6929 = vpop.f32.mrf.mxu0
    %v6930 = vpop.f32.mrf.mxu0
    %v6931 = vadd.f32 0.0, %v6930
    %v6932 = vpop.f32.mrf.mxu0
    %6933 = vdwg.mxu0
    %v6934 = vadd.f32 %v6843, %v6920
    %v6935 = vadd.f32 %v6844, %v6923
    %v6936 = vadd.f32 %v6845, %v6928
    %v6937 = vadd.f32 %v6846, %v6931
    %v6938 = vld [vmem:[#allocation5 + $0x2] sm:$0xf]
    %v6939 = vld [vmem:[#allocation5 + $0xa] sm:$0xf]
    %v6940 = vld [vmem:[#allocation5 + $0x12] sm:$0xf]
    %v6941 = vld [vmem:[#allocation5 + $0x1a] sm:$0xf]
    %v6942 = vld [vmem:[#allocation5 + $0x32] sm:$0xf]
    %v6943 = vld [vmem:[#allocation5 + $0x3a] sm:$0xf]
    %v6944 = vld [vmem:[#allocation5 + $0x42] sm:$0xf]
    %v6945 = vld [vmem:[#allocation5 + $0x4a] sm:$0xf]
    %v6954 = vcombine.low %v6938, %v6939
    %v6955 = vcombine.low %v6940, %v6941
    %v6956 = vcombine.low %v6942, %v6943
    %v6957 = vcombine.low %v6944, %v6945
    %v6962 = vpack.c.bf16 %v6955, %v6954
    %v6963 = vpack.c.bf16 %v6957, %v6956
    %v6966 = vunpack.c.l.b16 %v6734
    %v6967 = vunpack.c.l.b16 %v6735
    %v6968 = vpack.c.b16 %v6967, %v6966
    %v6971 = vsel %vm4760, %v6962, 0
    %v6974 = vsel %vm4760, %v6963, 0
    %6976 = vmatprep.subr.bf16.mxu0 0
    %6977 = vmatpush1.bf16.msra.mxu0 0
    %6978 = vmatprep.subr.bf16.mxu0 0
    %6979 = vmatpush1.bf16.msra.mxu0 0
    %6980 = vmatprep.subr.bf16.mxu0 0
    %6981 = vmatpush1.bf16.msra.mxu0 0
    %6982 = vmatprep.subr.bf16.mxu0 0
    %6983 = vmatpush1.bf16.msra.mxu0 0
    %6984 = vmatprep.subr.bf16.mxu0 0
    %6985 = vmatpush1.bf16.msra.mxu0 0
    %6986 = vmatprep.subr.bf16.mxu0 0
    %6987 = vmatpush1.bf16.msra.mxu0 0
    %6988 = vmatprep.subr.bf16.mxu0 0
    %6989 = vmatpush1.bf16.msra.mxu0 0
    %6990 = vmatprep.subr.bf16.mxu0 0
    %6991 = vmatpush1.bf16.msra.mxu0 %v6968
    %6992 = vmatprep.subr.bf16.mxu0 0
    %6993 = vmatpush2.bf16.msra.mxu0 0
    %6994 = vmatprep.subr.bf16.mxu0 0
    %6995 = vmatpush2.bf16.msra.mxu0 0
    %6996 = vmatprep.subr.bf16.mxu0 0
    %6997 = vmatpush2.bf16.msra.mxu0 0
    %6998 = vmatprep.subr.bf16.mxu0 0
    %6999 = vmatpush2.bf16.msra.mxu0 0
    %7000 = vmatprep.subr.bf16.mxu0 0
    %7001 = vmatpush2.bf16.msra.mxu0 0
    %7002 = vmatprep.subr.bf16.mxu0 0
    %7003 = vmatpush2.bf16.msra.mxu0 0
    %7004 = vmatprep.subr.bf16.mxu0 0
    %7005 = vmatpush2.bf16.msra.mxu0 0
    %7006 = vmatprep.subr.bf16.mxu0 0
    %7007 = vmatpush2.bf16.msra.mxu0 0
    %7008 = vmatprep.mubr.bf16.mxu0 0
    %7009 = vmatmul.mubr.bf16.gmra.mxu0 %v6971
    %v7010 = vpop.f32.mrf.mxu0
    %v7011 = vadd.f32 0.0, %v7010
    %v7012 = vpop.f32.mrf.mxu0
    %v7013 = vpop.f32.mrf.mxu0
    %v7014 = vadd.f32 0.0, %v7013
    %v7015 = vpop.f32.mrf.mxu0
    %7016 = vmatprep.mubr.bf16.mxu0 0
    %7017 = vmatmul.mubr.bf16.gmra.mxu0 %v6974
    %v7018 = vpop.f32.mrf.mxu0
    %v7019 = vadd.f32 0.0, %v7018
    %v7020 = vpop.f32.mrf.mxu0
    %v7021 = vpop.f32.mrf.mxu0
    %v7022 = vadd.f32 0.0, %v7021
    %v7023 = vpop.f32.mrf.mxu0
    %7024 = vdwg.mxu0
    %v7025 = vadd.f32 %v6934, %v7011
    %v7026 = vadd.f32 %v6935, %v7014
    %v7027 = vadd.f32 %v6936, %v7019
    %v7028 = vadd.f32 %v6937, %v7022
    %v7029 = vld [vmem:[%s6720] sm:$0xf]
    %v7030 = vld [vmem:[%s6720 + $0x8] sm:$0xf]
    %v7031 = vld [vmem:[%s6720 + $0x10] sm:$0xf]
    %v7032 = vld [vmem:[%s6720 + $0x18] sm:$0xf]
    %v7033 = vld [vmem:[%s6720 + $0x30] sm:$0xf]
    %v7034 = vld [vmem:[%s6720 + $0x38] sm:$0xf]
    %v7035 = vld [vmem:[%s6720 + $0x40] sm:$0xf]
    %v7036 = vld [vmem:[%s6720 + $0x48] sm:$0xf]
    %v7045 = vcombine.low %v7029, %v7030
    %v7046 = vcombine.low %v7031, %v7032
    %v7047 = vcombine.low %v7033, %v7034
    %v7048 = vcombine.low %v7035, %v7036
    %v7053 = vpack.c.bf16 %v7046, %v7045
    %v7054 = vpack.c.bf16 %v7048, %v7047
    %v7057 = vunpack.c.l.b16 %v6736
    %v7058 = vunpack.c.l.b16 %v6737
    %v7059 = vpack.c.b16 %v7058, %v7057
    %v7062 = vsel %vm4760, %v7053, 0
    %v7065 = vsel %vm4760, %v7054, 0
    %7067 = vmatprep.subr.bf16.mxu0 0
    %7068 = vmatpush1.bf16.msra.mxu0 0
    %7069 = vmatprep.subr.bf16.mxu0 0
    %7070 = vmatpush1.bf16.msra.mxu0 0
    %7071 = vmatprep.subr.bf16.mxu0 0
    %7072 = vmatpush1.bf16.msra.mxu0 0
    %7073 = vmatprep.subr.bf16.mxu0 0
    %7074 = vmatpush1.bf16.msra.mxu0 0
    %7075 = vmatprep.subr.bf16.mxu0 0
    %7076 = vmatpush1.bf16.msra.mxu0 0
    %7077 = vmatprep.subr.bf16.mxu0 0
    %7078 = vmatpush1.bf16.msra.mxu0 0
    %7079 = vmatprep.subr.bf16.mxu0 0
    %7080 = vmatpush1.bf16.msra.mxu0 0
    %7081 = vmatprep.subr.bf16.mxu0 0
    %7082 = vmatpush1.bf16.msra.mxu0 %v7059
    %7083 = vmatprep.subr.bf16.mxu0 0
    %7084 = vmatpush2.bf16.msra.mxu0 0
    %7085 = vmatprep.subr.bf16.mxu0 0
    %7086 = vmatpush2.bf16.msra.mxu0 0
    %7087 = vmatprep.subr.bf16.mxu0 0
    %7088 = vmatpush2.bf16.msra.mxu0 0
    %7089 = vmatprep.subr.bf16.mxu0 0
    %7090 = vmatpush2.bf16.msra.mxu0 0
    %7091 = vmatprep.subr.bf16.mxu0 0
    %7092 = vmatpush2.bf16.msra.mxu0 0
    %7093 = vmatprep.subr.bf16.mxu0 0
    %7094 = vmatpush2.bf16.msra.mxu0 0
    %7095 = vmatprep.subr.bf16.mxu0 0
    %7096 = vmatpush2.bf16.msra.mxu0 0
    %7097 = vmatprep.subr.bf16.mxu0 0
    %7098 = vmatpush2.bf16.msra.mxu0 0
    %7099 = vmatprep.mubr.bf16.mxu0 0
    %7100 = vmatmul.mubr.bf16.gmra.mxu0 %v7062
    %v7101 = vpop.f32.mrf.mxu0
    %v7102 = vadd.f32 0.0, %v7101
    %v7103 = vpop.f32.mrf.mxu0
    %v7104 = vpop.f32.mrf.mxu0
    %v7105 = vadd.f32 0.0, %v7104
    %v7106 = vpop.f32.mrf.mxu0
    %7107 = vmatprep.mubr.bf16.mxu0 0
    %7108 = vmatmul.mubr.bf16.gmra.mxu0 %v7065
    %v7109 = vpop.f32.mrf.mxu0
    %v7110 = vadd.f32 0.0, %v7109
    %v7111 = vpop.f32.mrf.mxu0
    %v7112 = vpop.f32.mrf.mxu0
    %v7113 = vadd.f32 0.0, %v7112
    %v7114 = vpop.f32.mrf.mxu0
    %7115 = vdwg.mxu0
    %v7116 = vadd.f32 %v7025, %v7102
    %v7117 = vadd.f32 %v7026, %v7105
    %v7118 = vadd.f32 %v7027, %v7110
    %v7119 = vadd.f32 %v7028, %v7113
    %v7120 = vld [vmem:[%s6720 + $0x1] sm:$0xf]
    %v7121 = vld [vmem:[%s6720 + $0x9] sm:$0xf]
    %v7122 = vld [vmem:[%s6720 + $0x11] sm:$0xf]
    %v7123 = vld [vmem:[%s6720 + $0x19] sm:$0xf]
    %v7124 = vld [vmem:[%s6720 + $0x31] sm:$0xf]
    %v7125 = vld [vmem:[%s6720 + $0x39] sm:$0xf]
    %v7126 = vld [vmem:[%s6720 + $0x41] sm:$0xf]
    %v7127 = vld [vmem:[%s6720 + $0x49] sm:$0xf]
    %v7136 = vcombine.low %v7120, %v7121
    %v7137 = vcombine.low %v7122, %v7123
    %v7138 = vcombine.low %v7124, %v7125
    %v7139 = vcombine.low %v7126, %v7127
    %v7144 = vpack.c.bf16 %v7137, %v7136
    %v7145 = vpack.c.bf16 %v7139, %v7138
    %v7148 = vunpack.c.l.b16 %v6738
    %v7149 = vunpack.c.l.b16 %v6739
    %v7150 = vpack.c.b16 %v7149, %v7148
    %v7153 = vsel %vm4760, %v7144, 0
    %v7156 = vsel %vm4760, %v7145, 0
    %7158 = vmatprep.subr.bf16.mxu0 0
    %7159 = vmatpush1.bf16.msra.mxu0 0
    %7160 = vmatprep.subr.bf16.mxu0 0
    %7161 = vmatpush1.bf16.msra.mxu0 0
    %7162 = vmatprep.subr.bf16.mxu0 0
    %7163 = vmatpush1.bf16.msra.mxu0 0
    %7164 = vmatprep.subr.bf16.mxu0 0
    %7165 = vmatpush1.bf16.msra.mxu0 0
    %7166 = vmatprep.subr.bf16.mxu0 0
    %7167 = vmatpush1.bf16.msra.mxu0 0
    %7168 = vmatprep.subr.bf16.mxu0 0
    %7169 = vmatpush1.bf16.msra.mxu0 0
    %7170 = vmatprep.subr.bf16.mxu0 0
    %7171 = vmatpush1.bf16.msra.mxu0 0
    %7172 = vmatprep.subr.bf16.mxu0 0
    %7173 = vmatpush1.bf16.msra.mxu0 %v7150
    %7174 = vmatprep.subr.bf16.mxu0 0
    %7175 = vmatpush2.bf16.msra.mxu0 0
    %7176 = vmatprep.subr.bf16.mxu0 0
    %7177 = vmatpush2.bf16.msra.mxu0 0
    %7178 = vmatprep.subr.bf16.mxu0 0
    %7179 = vmatpush2.bf16.msra.mxu0 0
    %7180 = vmatprep.subr.bf16.mxu0 0
    %7181 = vmatpush2.bf16.msra.mxu0 0
    %7182 = vmatprep.subr.bf16.mxu0 0
    %7183 = vmatpush2.bf16.msra.mxu0 0
    %7184 = vmatprep.subr.bf16.mxu0 0
    %7185 = vmatpush2.bf16.msra.mxu0 0
    %7186 = vmatprep.subr.bf16.mxu0 0
    %7187 = vmatpush2.bf16.msra.mxu0 0
    %7188 = vmatprep.subr.bf16.mxu0 0
    %7189 = vmatpush2.bf16.msra.mxu0 0
    %7190 = vmatprep.mubr.bf16.mxu0 0
    %7191 = vmatmul.mubr.bf16.gmra.mxu0 %v7153
    %v7192 = vpop.f32.mrf.mxu0
    %v7193 = vadd.f32 0.0, %v7192
    %v7194 = vpop.f32.mrf.mxu0
    %v7195 = vpop.f32.mrf.mxu0
    %v7196 = vadd.f32 0.0, %v7195
    %v7197 = vpop.f32.mrf.mxu0
    %7198 = vmatprep.mubr.bf16.mxu0 0
    %7199 = vmatmul.mubr.bf16.gmra.mxu0 %v7156
    %v7200 = vpop.f32.mrf.mxu0
    %v7201 = vadd.f32 0.0, %v7200
    %v7202 = vpop.f32.mrf.mxu0
    %v7203 = vpop.f32.mrf.mxu0
    %v7204 = vadd.f32 0.0, %v7203
    %v7205 = vpop.f32.mrf.mxu0
    %7206 = vdwg.mxu0
    %v7207 = vadd.f32 %v7116, %v7193
    %v7208 = vadd.f32 %v7117, %v7196
    %v7209 = vadd.f32 %v7118, %v7201
    %v7210 = vadd.f32 %v7119, %v7204
    %v7211 = vld [vmem:[%s6720 + $0x2] sm:$0xf]
    %v7212 = vld [vmem:[%s6720 + $0xa] sm:$0xf]
    %v7213 = vld [vmem:[%s6720 + $0x12] sm:$0xf]
    %v7214 = vld [vmem:[%s6720 + $0x1a] sm:$0xf]
    %v7215 = vld [vmem:[%s6720 + $0x32] sm:$0xf]
    %v7216 = vld [vmem:[%s6720 + $0x3a] sm:$0xf]
    %v7217 = vld [vmem:[%s6720 + $0x42] sm:$0xf]
    %v7218 = vld [vmem:[%s6720 + $0x4a] sm:$0xf]
    %v7227 = vcombine.low %v7211, %v7212
    %v7228 = vcombine.low %v7213, %v7214
    %v7229 = vcombine.low %v7215, %v7216
    %v7230 = vcombine.low %v7217, %v7218
    %v7235 = vpack.c.bf16 %v7228, %v7227
    %v7236 = vpack.c.bf16 %v7230, %v7229
    %v7239 = vunpack.c.l.b16 %v6740
    %v7240 = vunpack.c.l.b16 %v6741
    %v7241 = vpack.c.b16 %v7240, %v7239
    %v7244 = vsel %vm4760, %v7235, 0
    %v7247 = vsel %vm4760, %v7236, 0
    %7249 = vmatprep.subr.bf16.mxu0 0
    %7250 = vmatpush1.bf16.msra.mxu0 0
    %7251 = vmatprep.subr.bf16.mxu0 0
    %7252 = vmatpush1.bf16.msra.mxu0 0
    %7253 = vmatprep.subr.bf16.mxu0 0
    %7254 = vmatpush1.bf16.msra.mxu0 0
    %7255 = vmatprep.subr.bf16.mxu0 0
    %7256 = vmatpush1.bf16.msra.mxu0 0
    %7257 = vmatprep.subr.bf16.mxu0 0
    %7258 = vmatpush1.bf16.msra.mxu0 0
    %7259 = vmatprep.subr.bf16.mxu0 0
    %7260 = vmatpush1.bf16.msra.mxu0 0
    %7261 = vmatprep.subr.bf16.mxu0 0
    %7262 = vmatpush1.bf16.msra.mxu0 0
    %7263 = vmatprep.subr.bf16.mxu0 0
    %7264 = vmatpush1.bf16.msra.mxu0 %v7241
    %7265 = vmatprep.subr.bf16.mxu0 0
    %7266 = vmatpush2.bf16.msra.mxu0 0
    %7267 = vmatprep.subr.bf16.mxu0 0
    %7268 = vmatpush2.bf16.msra.mxu0 0
    %7269 = vmatprep.subr.bf16.mxu0 0
    %7270 = vmatpush2.bf16.msra.mxu0 0
    %7271 = vmatprep.subr.bf16.mxu0 0
    %7272 = vmatpush2.bf16.msra.mxu0 0
    %7273 = vmatprep.subr.bf16.mxu0 0
    %7274 = vmatpush2.bf16.msra.mxu0 0
    %7275 = vmatprep.subr.bf16.mxu0 0
    %7276 = vmatpush2.bf16.msra.mxu0 0
    %7277 = vmatprep.subr.bf16.mxu0 0
    %7278 = vmatpush2.bf16.msra.mxu0 0
    %7279 = vmatprep.subr.bf16.mxu0 0
    %7280 = vmatpush2.bf16.msra.mxu0 0
    %7281 = vmatprep.mubr.bf16.mxu0 0
    %7282 = vmatmul.mubr.bf16.gmra.mxu0 %v7244
    %v7283 = vpop.f32.mrf.mxu0
    %v7284 = vadd.f32 0.0, %v7283
    %v7285 = vpop.f32.mrf.mxu0
    %v7286 = vpop.f32.mrf.mxu0
    %v7287 = vadd.f32 0.0, %v7286
    %v7288 = vpop.f32.mrf.mxu0
    %7289 = vmatprep.mubr.bf16.mxu0 0
    %7290 = vmatmul.mubr.bf16.gmra.mxu0 %v7247
    %v7291 = vpop.f32.mrf.mxu0
    %v7292 = vadd.f32 0.0, %v7291
    %v7293 = vpop.f32.mrf.mxu0
    %v7294 = vpop.f32.mrf.mxu0
    %v7295 = vadd.f32 0.0, %v7294
    %v7296 = vpop.f32.mrf.mxu0
    %7297 = vdwg.mxu0
    %v7298 = vadd.f32 %v7207, %v7284
    %v7299 = vadd.f32 %v7208, %v7287
    %v7300 = vadd.f32 %v7209, %v7292
    %v7301 = vadd.f32 %v7210, %v7295
    %s7302 = scalar_lea.vmem [#allocation5], 16
    %v7303 = vld [vmem:[%s7302] sm:$0xf]
    %v7304 = vld [vmem:[%s7302 + $0x8] sm:$0xf]
    %v7305 = vld [vmem:[%s7302 + $0x10] sm:$0xf]
    %v7306 = vld [vmem:[%s7302 + $0x18] sm:$0xf]
    %v7307 = vld [vmem:[%s7302 + $0x30] sm:$0xf]
    %v7308 = vld [vmem:[%s7302 + $0x38] sm:$0xf]
    %v7309 = vld [vmem:[%s7302 + $0x40] sm:$0xf]
    %v7310 = vld [vmem:[%s7302 + $0x48] sm:$0xf]
    %v7319 = vcombine.low %v7303, %v7304
    %v7320 = vcombine.low %v7305, %v7306
    %v7321 = vcombine.low %v7307, %v7308
    %v7322 = vcombine.low %v7309, %v7310
    %v7327 = vpack.c.bf16 %v7320, %v7319
    %v7328 = vpack.c.bf16 %v7322, %v7321
    %v7331 = vunpack.c.l.b16 %v6742
    %v7332 = vunpack.c.l.b16 %v6743
    %v7333 = vpack.c.b16 %v7332, %v7331
    %v7336 = vsel %vm4760, %v7327, 0
    %v7339 = vsel %vm4760, %v7328, 0
    %7341 = vmatprep.subr.bf16.mxu0 0
    %7342 = vmatpush1.bf16.msra.mxu0 0
    %7343 = vmatprep.subr.bf16.mxu0 0
    %7344 = vmatpush1.bf16.msra.mxu0 0
    %7345 = vmatprep.subr.bf16.mxu0 0
    %7346 = vmatpush1.bf16.msra.mxu0 0
    %7347 = vmatprep.subr.bf16.mxu0 0
    %7348 = vmatpush1.bf16.msra.mxu0 0
    %7349 = vmatprep.subr.bf16.mxu0 0
    %7350 = vmatpush1.bf16.msra.mxu0 0
    %7351 = vmatprep.subr.bf16.mxu0 0
    %7352 = vmatpush1.bf16.msra.mxu0 0
    %7353 = vmatprep.subr.bf16.mxu0 0
    %7354 = vmatpush1.bf16.msra.mxu0 0
    %7355 = vmatprep.subr.bf16.mxu0 0
    %7356 = vmatpush1.bf16.msra.mxu0 %v7333
    %7357 = vmatprep.subr.bf16.mxu0 0
    %7358 = vmatpush2.bf16.msra.mxu0 0
    %7359 = vmatprep.subr.bf16.mxu0 0
    %7360 = vmatpush2.bf16.msra.mxu0 0
    %7361 = vmatprep.subr.bf16.mxu0 0
    %7362 = vmatpush2.bf16.msra.mxu0 0
    %7363 = vmatprep.subr.bf16.mxu0 0
    %7364 = vmatpush2.bf16.msra.mxu0 0
    %7365 = vmatprep.subr.bf16.mxu0 0
    %7366 = vmatpush2.bf16.msra.mxu0 0
    %7367 = vmatprep.subr.bf16.mxu0 0
    %7368 = vmatpush2.bf16.msra.mxu0 0
    %7369 = vmatprep.subr.bf16.mxu0 0
    %7370 = vmatpush2.bf16.msra.mxu0 0
    %7371 = vmatprep.subr.bf16.mxu0 0
    %7372 = vmatpush2.bf16.msra.mxu0 0
    %7373 = vmatprep.mubr.bf16.mxu0 0
    %7374 = vmatmul.mubr.bf16.gmra.mxu0 %v7336
    %v7375 = vpop.f32.mrf.mxu0
    %v7376 = vadd.f32 0.0, %v7375
    %v7377 = vpop.f32.mrf.mxu0
    %v7378 = vpop.f32.mrf.mxu0
    %v7379 = vadd.f32 0.0, %v7378
    %v7380 = vpop.f32.mrf.mxu0
    %7381 = vmatprep.mubr.bf16.mxu0 0
    %7382 = vmatmul.mubr.bf16.gmra.mxu0 %v7339
    %v7383 = vpop.f32.mrf.mxu0
    %v7384 = vadd.f32 0.0, %v7383
    %v7385 = vpop.f32.mrf.mxu0
    %v7386 = vpop.f32.mrf.mxu0
    %v7387 = vadd.f32 0.0, %v7386
    %v7388 = vpop.f32.mrf.mxu0
    %7389 = vdwg.mxu0
    %v7390 = vadd.f32 %v7298, %v7376
    %v7391 = vadd.f32 %v7299, %v7379
    %v7392 = vadd.f32 %v7300, %v7384
    %v7393 = vadd.f32 %v7301, %v7387
    %v7394 = vld [vmem:[%s7302 + $0x1] sm:$0xf]
    %v7395 = vld [vmem:[%s7302 + $0x9] sm:$0xf]
    %v7396 = vld [vmem:[%s7302 + $0x11] sm:$0xf]
    %v7397 = vld [vmem:[%s7302 + $0x19] sm:$0xf]
    %v7398 = vld [vmem:[%s7302 + $0x31] sm:$0xf]
    %v7399 = vld [vmem:[%s7302 + $0x39] sm:$0xf]
    %v7400 = vld [vmem:[%s7302 + $0x41] sm:$0xf]
    %v7401 = vld [vmem:[%s7302 + $0x49] sm:$0xf]
    %v7410 = vcombine.low %v7394, %v7395
    %v7411 = vcombine.low %v7396, %v7397
    %v7412 = vcombine.low %v7398, %v7399
    %v7413 = vcombine.low %v7400, %v7401
    %v7418 = vpack.c.bf16 %v7411, %v7410
    %v7419 = vpack.c.bf16 %v7413, %v7412
    %v7422 = vunpack.c.l.b16 %v6744
    %v7423 = vunpack.c.l.b16 %v6745
    %v7424 = vpack.c.b16 %v7423, %v7422
    %v7427 = vsel %vm4760, %v7418, 0
    %v7430 = vsel %vm4760, %v7419, 0
    %7432 = vmatprep.subr.bf16.mxu0 0
    %7433 = vmatpush1.bf16.msra.mxu0 0
    %7434 = vmatprep.subr.bf16.mxu0 0
    %7435 = vmatpush1.bf16.msra.mxu0 0
    %7436 = vmatprep.subr.bf16.mxu0 0
    %7437 = vmatpush1.bf16.msra.mxu0 0
    %7438 = vmatprep.subr.bf16.mxu0 0
    %7439 = vmatpush1.bf16.msra.mxu0 0
    %7440 = vmatprep.subr.bf16.mxu0 0
    %7441 = vmatpush1.bf16.msra.mxu0 0
    %7442 = vmatprep.subr.bf16.mxu0 0
    %7443 = vmatpush1.bf16.msra.mxu0 0
    %7444 = vmatprep.subr.bf16.mxu0 0
    %7445 = vmatpush1.bf16.msra.mxu0 0
    %7446 = vmatprep.subr.bf16.mxu0 0
    %7447 = vmatpush1.bf16.msra.mxu0 %v7424
    %7448 = vmatprep.subr.bf16.mxu0 0
    %7449 = vmatpush2.bf16.msra.mxu0 0
    %7450 = vmatprep.subr.bf16.mxu0 0
    %7451 = vmatpush2.bf16.msra.mxu0 0
    %7452 = vmatprep.subr.bf16.mxu0 0
    %7453 = vmatpush2.bf16.msra.mxu0 0
    %7454 = vmatprep.subr.bf16.mxu0 0
    %7455 = vmatpush2.bf16.msra.mxu0 0
    %7456 = vmatprep.subr.bf16.mxu0 0
    %7457 = vmatpush2.bf16.msra.mxu0 0
    %7458 = vmatprep.subr.bf16.mxu0 0
    %7459 = vmatpush2.bf16.msra.mxu0 0
    %7460 = vmatprep.subr.bf16.mxu0 0
    %7461 = vmatpush2.bf16.msra.mxu0 0
    %7462 = vmatprep.subr.bf16.mxu0 0
    %7463 = vmatpush2.bf16.msra.mxu0 0
    %7464 = vmatprep.mubr.bf16.mxu0 0
    %7465 = vmatmul.mubr.bf16.gmra.mxu0 %v7427
    %v7466 = vpop.f32.mrf.mxu0
    %v7467 = vadd.f32 0.0, %v7466
    %v7468 = vpop.f32.mrf.mxu0
    %v7469 = vpop.f32.mrf.mxu0
    %v7470 = vadd.f32 0.0, %v7469
    %v7471 = vpop.f32.mrf.mxu0
    %7472 = vmatprep.mubr.bf16.mxu0 0
    %7473 = vmatmul.mubr.bf16.gmra.mxu0 %v7430
    %v7474 = vpop.f32.mrf.mxu0
    %v7475 = vadd.f32 0.0, %v7474
    %v7476 = vpop.f32.mrf.mxu0
    %v7477 = vpop.f32.mrf.mxu0
    %v7478 = vadd.f32 0.0, %v7477
    %v7479 = vpop.f32.mrf.mxu0
    %7480 = vdwg.mxu0
    %v7481 = vadd.f32 %v7390, %v7467
    %v7482 = vadd.f32 %v7391, %v7470
    %v7483 = vadd.f32 %v7392, %v7475
    %v7484 = vadd.f32 %v7393, %v7478
    %v7485 = vld [vmem:[%s7302 + $0x2] sm:$0xf]
    %v7486 = vld [vmem:[%s7302 + $0xa] sm:$0xf]
    %v7487 = vld [vmem:[%s7302 + $0x12] sm:$0xf]
    %v7488 = vld [vmem:[%s7302 + $0x1a] sm:$0xf]
    %v7489 = vld [vmem:[%s7302 + $0x32] sm:$0xf]
    %v7490 = vld [vmem:[%s7302 + $0x3a] sm:$0xf]
    %v7491 = vld [vmem:[%s7302 + $0x42] sm:$0xf]
    %v7492 = vld [vmem:[%s7302 + $0x4a] sm:$0xf]
    %v7501 = vcombine.low %v7485, %v7486
    %v7502 = vcombine.low %v7487, %v7488
    %v7503 = vcombine.low %v7489, %v7490
    %v7504 = vcombine.low %v7491, %v7492
    %v7509 = vpack.c.bf16 %v7502, %v7501
    %v7510 = vpack.c.bf16 %v7504, %v7503
    %v7513 = vunpack.c.l.b16 %v6746
    %v7514 = vunpack.c.l.b16 %v6747
    %v7515 = vpack.c.b16 %v7514, %v7513
    %v7518 = vsel %vm4760, %v7509, 0
    %v7521 = vsel %vm4760, %v7510, 0
    %7523 = vmatprep.subr.bf16.mxu0 0
    %7524 = vmatpush1.bf16.msra.mxu0 0
    %7525 = vmatprep.subr.bf16.mxu0 0
    %7526 = vmatpush1.bf16.msra.mxu0 0
    %7527 = vmatprep.subr.bf16.mxu0 0
    %7528 = vmatpush1.bf16.msra.mxu0 0
    %7529 = vmatprep.subr.bf16.mxu0 0
    %7530 = vmatpush1.bf16.msra.mxu0 0
    %7531 = vmatprep.subr.bf16.mxu0 0
    %7532 = vmatpush1.bf16.msra.mxu0 0
    %7533 = vmatprep.subr.bf16.mxu0 0
    %7534 = vmatpush1.bf16.msra.mxu0 0
    %7535 = vmatprep.subr.bf16.mxu0 0
    %7536 = vmatpush1.bf16.msra.mxu0 0
    %7537 = vmatprep.subr.bf16.mxu0 0
    %7538 = vmatpush1.bf16.msra.mxu0 %v7515
    %7539 = vmatprep.subr.bf16.mxu0 0
    %7540 = vmatpush2.bf16.msra.mxu0 0
    %7541 = vmatprep.subr.bf16.mxu0 0
    %7542 = vmatpush2.bf16.msra.mxu0 0
    %7543 = vmatprep.subr.bf16.mxu0 0
    %7544 = vmatpush2.bf16.msra.mxu0 0
    %7545 = vmatprep.subr.bf16.mxu0 0
    %7546 = vmatpush2.bf16.msra.mxu0 0
    %7547 = vmatprep.subr.bf16.mxu0 0
    %7548 = vmatpush2.bf16.msra.mxu0 0
    %7549 = vmatprep.subr.bf16.mxu0 0
    %7550 = vmatpush2.bf16.msra.mxu0 0
    %7551 = vmatprep.subr.bf16.mxu0 0
    %7552 = vmatpush2.bf16.msra.mxu0 0
    %7553 = vmatprep.subr.bf16.mxu0 0
    %7554 = vmatpush2.bf16.msra.mxu0 0
    %7555 = vmatprep.mubr.bf16.mxu0 0
    %7556 = vmatmul.mubr.bf16.gmra.mxu0 %v7518
    %v7557 = vpop.f32.mrf.mxu0
    %v7558 = vadd.f32 0.0, %v7557
    %v7559 = vpop.f32.mrf.mxu0
    %v7560 = vpop.f32.mrf.mxu0
    %v7561 = vadd.f32 0.0, %v7560
    %v7562 = vpop.f32.mrf.mxu0
    %7563 = vmatprep.mubr.bf16.mxu0 0
    %7564 = vmatmul.mubr.bf16.gmra.mxu0 %v7521
    %v7565 = vpop.f32.mrf.mxu0
    %v7566 = vadd.f32 0.0, %v7565
    %v7567 = vpop.f32.mrf.mxu0
    %v7568 = vpop.f32.mrf.mxu0
    %v7569 = vadd.f32 0.0, %v7568
    %v7570 = vpop.f32.mrf.mxu0
    %7571 = vdwg.mxu0
    %v7572 = vadd.f32 %v7481, %v7558
    %v7573 = vadd.f32 %v7482, %v7561
    %v7574 = vadd.f32 %v7483, %v7566
    %v7575 = vadd.f32 %v7484, %v7569
    %v7576 = vmax.f32 %v7572, 0.0
    %v7577 = vmax.f32 %v7573, 0.0
    %v7578 = vmax.f32 %v7574, 0.0
    %v7579 = vmax.f32 %v7575, 0.0
    %v7584 = vcombine.high %v7576, %v7576
    %v7585 = vcombine.high %v7577, %v7577
    %v7586 = vcombine.high %v7578, %v7578
    %v7587 = vcombine.high %v7579, %v7579
    %vm7592 = vcmask 257024
    %7593 = vst.msk [vmem:[#allocation6] sm:$0xf] %vm7592, %v7576
    %7594 = vst.msk [vmem:[#allocation6 + $0x4] sm:$0xf] %vm7592, %v7584
    %7595 = vst.msk [vmem:[#allocation6 + $0x8] sm:$0xf] %vm7592, %v7577
    %7596 = vst.msk [vmem:[#allocation6 + $0xc] sm:$0xf] %vm7592, %v7585
    %7597 = vst.msk [vmem:[#allocation6 + $0x10] sm:$0xf] %vm7592, %v7578
    %7598 = vst.msk [vmem:[#allocation6 + $0x14] sm:$0xf] %vm7592, %v7586
    %7599 = vst.msk [vmem:[#allocation6 + $0x18] sm:$0xf] %vm7592, %v7579
    %7600 = vst.msk [vmem:[#allocation6 + $0x1c] sm:$0xf] %vm7592, %v7587
    %v7601 = vld [vmem:[%s7] sm:$0xf]
    %v7602 = vld [vmem:[%s7 + $0x4] sm:$0xf]
    %v7603 = vld [vmem:[%s7 + $0x8] sm:$0xf]
    %v7604 = vld [vmem:[%s7 + $0xc] sm:$0xf]
    %v7605 = vld [vmem:[%s7 + $0x10] sm:$0xf]
    %v7606 = vld [vmem:[%s7 + $0x14] sm:$0xf]
    %v7607 = vld [vmem:[%s7 + $0x18] sm:$0xf]
    %v7608 = vld [vmem:[%s7 + $0x1c] sm:$0xf]
    %v7609 = vld [vmem:[%s7 + $0x20] sm:$0xf]
    %v7610 = vld [vmem:[%s7 + $0x24] sm:$0xf]
    %v7611 = vld [vmem:[%s7 + $0x28] sm:$0xf]
    %v7612 = vld [vmem:[%s7 + $0x2c] sm:$0xf]
    %v7613 = vld [vmem:[%s7 + $0x30] sm:$0xf]
    %v7614 = vld [vmem:[%s7 + $0x34] sm:$0xf]
    %v7615 = vld [vmem:[%s7 + $0x38] sm:$0xf]
    %v7616 = vld [vmem:[%s7 + $0x3c] sm:$0xf]
    %v7617 = vld [vmem:[%s8] sm:$0x1]
    %v7619 = vlaneseq
    %v7620 = vshrl.u32 %v7619, 7
    %v7621 = vsub.s32 0, %v7620
    %v7622 = vrot.slane %v7617, %v7621
    %v7624 = vadd.f32 %v7622, 0.0
    %v7625 = vld [vmem:[#allocation6] sm:$0x3]
    %v7626 = vld [vmem:[#allocation6 + $0x4] sm:$0x3]
    %v7627 = vld [vmem:[#allocation6 + $0x10] sm:$0x3]
    %v7628 = vld [vmem:[#allocation6 + $0x14] sm:$0x3]
    %v7631 = vrot.slane %v7625, 1
    %v7632 = vrot.slane %v7627, 1
    %v7635 = vmax.f32 %v7625, %v7631
    %v7636 = vmax.f32 %v7627, %v7632
    %v7639 = vrot.slane %v7626, 1
    %v7640 = vrot.slane %v7628, 1
    %v7643 = vmax.f32 %v7626, %v7639
    %v7644 = vmax.f32 %v7628, %v7640
    %v7645 = vmax.f32 %v7635, %v7643
    %v7646 = vmax.f32 %v7636, %v7644
    %v7647 = vpack.c.bf16 %v7645, %v7645
    %v7648 = vpack.c.bf16 %v7646, %v7646
    %v7651 = vunpack.c.l.b16 %v7647
    %v7652 = vunpack.c.l.b16 %v7648
    %v7653 = vrot.slane %v7652, 7
    %vm7654 = vcmask 1041409
    %v7655 = vsel %vm7654, %v7653, %v7651
    %v7656 = vpack.c.b16 %v7655, %v7655
    %v7661 = vunpack.c.l.b16 %v7601
    %v7662 = vunpack.c.l.b16 %v7602
    %v7663 = vunpack.c.l.b16 %v7603
    %v7664 = vunpack.c.l.b16 %v7604
    %v7665 = vpack.c.b16 %v7662, %v7661
    %v7666 = vpack.c.b16 %v7664, %v7663
    %vm7669 = vcmask 261120
    %v7671 = vsel %vm7669, %v7656, 0
    %7673 = vmatprep.subr.bf16.mxu0 0
    %7674 = vmatpush1.bf16.msra.mxu0 0
    %7675 = vmatprep.subr.bf16.mxu0 0
    %7676 = vmatpush1.bf16.msra.mxu0 0
    %7677 = vmatprep.subr.bf16.mxu0 0
    %7678 = vmatpush1.bf16.msra.mxu0 0
    %7679 = vmatprep.subr.bf16.mxu0 0
    %7680 = vmatpush1.bf16.msra.mxu0 0
    %7681 = vmatprep.subr.bf16.mxu0 0
    %7682 = vmatpush1.bf16.msra.mxu0 0
    %7683 = vmatprep.subr.bf16.mxu0 0
    %7684 = vmatpush1.bf16.msra.mxu0 0
    %7685 = vmatprep.subr.bf16.mxu0 0
    %7686 = vmatpush1.bf16.msra.mxu0 %v7666
    %7687 = vmatprep.subr.bf16.mxu0 0
    %7688 = vmatpush1.bf16.msra.mxu0 %v7665
    %7689 = vmatprep.subr.bf16.mxu0 0
    %7690 = vmatpush2.bf16.msra.mxu0 0
    %7691 = vmatprep.subr.bf16.mxu0 0
    %7692 = vmatpush2.bf16.msra.mxu0 0
    %7693 = vmatprep.subr.bf16.mxu0 0
    %7694 = vmatpush2.bf16.msra.mxu0 0
    %7695 = vmatprep.subr.bf16.mxu0 0
    %7696 = vmatpush2.bf16.msra.mxu0 0
    %7697 = vmatprep.subr.bf16.mxu0 0
    %7698 = vmatpush2.bf16.msra.mxu0 0
    %7699 = vmatprep.subr.bf16.mxu0 0
    %7700 = vmatpush2.bf16.msra.mxu0 0
    %7701 = vmatprep.subr.bf16.mxu0 0
    %7702 = vmatpush2.bf16.msra.mxu0 0
    %7703 = vmatprep.subr.bf16.mxu0 0
    %7704 = vmatpush2.bf16.msra.mxu0 0
    %7705 = vmatprep.mubr.bf16.mxu0 0
    %7706 = vmatmul.mubr.bf16.gmra.mxu0 %v7671
    %v7707 = vpop.f32.mrf.mxu0
    %v7708 = vadd.f32 0.0, %v7707
    %v7709 = vpop.f32.mrf.mxu0
    %v7710 = vpop.f32.mrf.mxu0
    %v7711 = vpop.f32.mrf.mxu0
    %7712 = vdwg.mxu0
    %v7713 = vadd.f32 %v7624, %v7708
    %v7714 = vld [vmem:[#allocation6 + $0x2] sm:$0x3]
    %v7715 = vld [vmem:[#allocation6 + $0x6] sm:$0x3]
    %v7716 = vld [vmem:[#allocation6 + $0x12] sm:$0x3]
    %v7717 = vld [vmem:[#allocation6 + $0x16] sm:$0x3]
    %v7720 = vrot.slane %v7714, 1
    %v7721 = vrot.slane %v7716, 1
    %v7724 = vmax.f32 %v7714, %v7720
    %v7725 = vmax.f32 %v7716, %v7721
    %v7728 = vrot.slane %v7715, 1
    %v7729 = vrot.slane %v7717, 1
    %v7732 = vmax.f32 %v7715, %v7728
    %v7733 = vmax.f32 %v7717, %v7729
    %v7734 = vmax.f32 %v7724, %v7732
    %v7735 = vmax.f32 %v7725, %v7733
    %v7736 = vpack.c.bf16 %v7734, %v7734
    %v7737 = vpack.c.bf16 %v7735, %v7735
    %v7740 = vunpack.c.l.b16 %v7736
    %v7741 = vunpack.c.l.b16 %v7737
    %v7742 = vrot.slane %v7741, 7
    %v7743 = vsel %vm7654, %v7742, %v7740
    %v7744 = vpack.c.b16 %v7743, %v7743
    %v7749 = vunpack.c.l.b16 %v7605
    %v7750 = vunpack.c.l.b16 %v7606
    %v7751 = vunpack.c.l.b16 %v7607
    %v7752 = vunpack.c.l.b16 %v7608
    %v7753 = vpack.c.b16 %v7750, %v7749
    %v7754 = vpack.c.b16 %v7752, %v7751
    %v7758 = vsel %vm7669, %v7744, 0
    %7760 = vmatprep.subr.bf16.mxu0 0
    %7761 = vmatpush1.bf16.msra.mxu0 0
    %7762 = vmatprep.subr.bf16.mxu0 0
    %7763 = vmatpush1.bf16.msra.mxu0 0
    %7764 = vmatprep.subr.bf16.mxu0 0
    %7765 = vmatpush1.bf16.msra.mxu0 0
    %7766 = vmatprep.subr.bf16.mxu0 0
    %7767 = vmatpush1.bf16.msra.mxu0 0
    %7768 = vmatprep.subr.bf16.mxu0 0
    %7769 = vmatpush1.bf16.msra.mxu0 0
    %7770 = vmatprep.subr.bf16.mxu0 0
    %7771 = vmatpush1.bf16.msra.mxu0 0
    %7772 = vmatprep.subr.bf16.mxu0 0
    %7773 = vmatpush1.bf16.msra.mxu0 %v7754
    %7774 = vmatprep.subr.bf16.mxu0 0
    %7775 = vmatpush1.bf16.msra.mxu0 %v7753
    %7776 = vmatprep.subr.bf16.mxu0 0
    %7777 = vmatpush2.bf16.msra.mxu0 0
    %7778 = vmatprep.subr.bf16.mxu0 0
    %7779 = vmatpush2.bf16.msra.mxu0 0
    %7780 = vmatprep.subr.bf16.mxu0 0
    %7781 = vmatpush2.bf16.msra.mxu0 0
    %7782 = vmatprep.subr.bf16.mxu0 0
    %7783 = vmatpush2.bf16.msra.mxu0 0
    %7784 = vmatprep.subr.bf16.mxu0 0
    %7785 = vmatpush2.bf16.msra.mxu0 0
    %7786 = vmatprep.subr.bf16.mxu0 0
    %7787 = vmatpush2.bf16.msra.mxu0 0
    %7788 = vmatprep.subr.bf16.mxu0 0
    %7789 = vmatpush2.bf16.msra.mxu0 0
    %7790 = vmatprep.subr.bf16.mxu0 0
    %7791 = vmatpush2.bf16.msra.mxu0 0
    %7792 = vmatprep.mubr.bf16.mxu0 0
    %7793 = vmatmul.mubr.bf16.gmra.mxu0 %v7758
    %v7794 = vpop.f32.mrf.mxu0
    %v7795 = vadd.f32 0.0, %v7794
    %v7796 = vpop.f32.mrf.mxu0
    %v7797 = vpop.f32.mrf.mxu0
    %v7798 = vpop.f32.mrf.mxu0
    %7799 = vdwg.mxu0
    %v7800 = vadd.f32 %v7713, %v7795
    %s7801 = scalar_lea.vmem [#allocation6], 8
    %v7802 = vld [vmem:[%s7801] sm:$0x3]
    %v7803 = vld [vmem:[%s7801 + $0x4] sm:$0x3]
    %v7804 = vld [vmem:[%s7801 + $0x10] sm:$0x3]
    %v7805 = vld [vmem:[%s7801 + $0x14] sm:$0x3]
    %v7808 = vrot.slane %v7802, 1
    %v7809 = vrot.slane %v7804, 1
    %v7812 = vmax.f32 %v7802, %v7808
    %v7813 = vmax.f32 %v7804, %v7809
    %v7816 = vrot.slane %v7803, 1
    %v7817 = vrot.slane %v7805, 1
    %v7820 = vmax.f32 %v7803, %v7816
    %v7821 = vmax.f32 %v7805, %v7817
    %v7822 = vmax.f32 %v7812, %v7820
    %v7823 = vmax.f32 %v7813, %v7821
    %v7824 = vpack.c.bf16 %v7822, %v7822
    %v7825 = vpack.c.bf16 %v7823, %v7823
    %v7828 = vunpack.c.l.b16 %v7824
    %v7829 = vunpack.c.l.b16 %v7825
    %v7830 = vrot.slane %v7829, 7
    %v7831 = vsel %vm7654, %v7830, %v7828
    %v7832 = vpack.c.b16 %v7831, %v7831
    %v7837 = vunpack.c.l.b16 %v7609
    %v7838 = vunpack.c.l.b16 %v7610
    %v7839 = vunpack.c.l.b16 %v7611
    %v7840 = vunpack.c.l.b16 %v7612
    %v7841 = vpack.c.b16 %v7838, %v7837
    %v7842 = vpack.c.b16 %v7840, %v7839
    %v7846 = vsel %vm7669, %v7832, 0
    %7848 = vmatprep.subr.bf16.mxu0 0
    %7849 = vmatpush1.bf16.msra.mxu0 0
    %7850 = vmatprep.subr.bf16.mxu0 0
    %7851 = vmatpush1.bf16.msra.mxu0 0
    %7852 = vmatprep.subr.bf16.mxu0 0
    %7853 = vmatpush1.bf16.msra.mxu0 0
    %7854 = vmatprep.subr.bf16.mxu0 0
    %7855 = vmatpush1.bf16.msra.mxu0 0
    %7856 = vmatprep.subr.bf16.mxu0 0
    %7857 = vmatpush1.bf16.msra.mxu0 0
    %7858 = vmatprep.subr.bf16.mxu0 0
    %7859 = vmatpush1.bf16.msra.mxu0 0
    %7860 = vmatprep.subr.bf16.mxu0 0
    %7861 = vmatpush1.bf16.msra.mxu0 %v7842
    %7862 = vmatprep.subr.bf16.mxu0 0
    %7863 = vmatpush1.bf16.msra.mxu0 %v7841
    %7864 = vmatprep.subr.bf16.mxu0 0
    %7865 = vmatpush2.bf16.msra.mxu0 0
    %7866 = vmatprep.subr.bf16.mxu0 0
    %7867 = vmatpush2.bf16.msra.mxu0 0
    %7868 = vmatprep.subr.bf16.mxu0 0
    %7869 = vmatpush2.bf16.msra.mxu0 0
    %7870 = vmatprep.subr.bf16.mxu0 0
    %7871 = vmatpush2.bf16.msra.mxu0 0
    %7872 = vmatprep.subr.bf16.mxu0 0
    %7873 = vmatpush2.bf16.msra.mxu0 0
    %7874 = vmatprep.subr.bf16.mxu0 0
    %7875 = vmatpush2.bf16.msra.mxu0 0
    %7876 = vmatprep.subr.bf16.mxu0 0
    %7877 = vmatpush2.bf16.msra.mxu0 0
    %7878 = vmatprep.subr.bf16.mxu0 0
    %7879 = vmatpush2.bf16.msra.mxu0 0
    %7880 = vmatprep.mubr.bf16.mxu0 0
    %7881 = vmatmul.mubr.bf16.gmra.mxu0 %v7846
    %v7882 = vpop.f32.mrf.mxu0
    %v7883 = vadd.f32 0.0, %v7882
    %v7884 = vpop.f32.mrf.mxu0
    %v7885 = vpop.f32.mrf.mxu0
    %v7886 = vpop.f32.mrf.mxu0
    %7887 = vdwg.mxu0
    %v7888 = vadd.f32 %v7800, %v7883
    %v7889 = vld [vmem:[%s7801 + $0x2] sm:$0x3]
    %v7890 = vld [vmem:[%s7801 + $0x6] sm:$0x3]
    %v7891 = vld [vmem:[%s7801 + $0x12] sm:$0x3]
    %v7892 = vld [vmem:[%s7801 + $0x16] sm:$0x3]
    %v7895 = vrot.slane %v7889, 1
    %v7896 = vrot.slane %v7891, 1
    %v7899 = vmax.f32 %v7889, %v7895
    %v7900 = vmax.f32 %v7891, %v7896
    %v7903 = vrot.slane %v7890, 1
    %v7904 = vrot.slane %v7892, 1
    %v7907 = vmax.f32 %v7890, %v7903
    %v7908 = vmax.f32 %v7892, %v7904
    %v7909 = vmax.f32 %v7899, %v7907
    %v7910 = vmax.f32 %v7900, %v7908
    %v7911 = vpack.c.bf16 %v7909, %v7909
    %v7912 = vpack.c.bf16 %v7910, %v7910
    %v7915 = vunpack.c.l.b16 %v7911
    %v7916 = vunpack.c.l.b16 %v7912
    %v7917 = vrot.slane %v7916, 7
    %v7918 = vsel %vm7654, %v7917, %v7915
    %v7919 = vpack.c.b16 %v7918, %v7918
    %v7924 = vunpack.c.l.b16 %v7613
    %v7925 = vunpack.c.l.b16 %v7614
    %v7926 = vunpack.c.l.b16 %v7615
    %v7927 = vunpack.c.l.b16 %v7616
    %v7928 = vpack.c.b16 %v7925, %v7924
    %v7929 = vpack.c.b16 %v7927, %v7926
    %v7933 = vsel %vm7669, %v7919, 0
    %7935 = vmatprep.subr.bf16.mxu0 0
    %7936 = vmatpush1.bf16.msra.mxu0 0
    %7937 = vmatprep.subr.bf16.mxu0 0
    %7938 = vmatpush1.bf16.msra.mxu0 0
    %7939 = vmatprep.subr.bf16.mxu0 0
    %7940 = vmatpush1.bf16.msra.mxu0 0
    %7941 = vmatprep.subr.bf16.mxu0 0
    %7942 = vmatpush1.bf16.msra.mxu0 0
    %7943 = vmatprep.subr.bf16.mxu0 0
    %7944 = vmatpush1.bf16.msra.mxu0 0
    %7945 = vmatprep.subr.bf16.mxu0 0
    %7946 = vmatpush1.bf16.msra.mxu0 0
    %7947 = vmatprep.subr.bf16.mxu0 0
    %7948 = vmatpush1.bf16.msra.mxu0 %v7929
    %7949 = vmatprep.subr.bf16.mxu0 0
    %7950 = vmatpush1.bf16.msra.mxu0 %v7928
    %7951 = vmatprep.subr.bf16.mxu0 0
    %7952 = vmatpush2.bf16.msra.mxu0 0
    %7953 = vmatprep.subr.bf16.mxu0 0
    %7954 = vmatpush2.bf16.msra.mxu0 0
    %7955 = vmatprep.subr.bf16.mxu0 0
    %7956 = vmatpush2.bf16.msra.mxu0 0
    %7957 = vmatprep.subr.bf16.mxu0 0
    %7958 = vmatpush2.bf16.msra.mxu0 0
    %7959 = vmatprep.subr.bf16.mxu0 0
    %7960 = vmatpush2.bf16.msra.mxu0 0
    %7961 = vmatprep.subr.bf16.mxu0 0
    %7962 = vmatpush2.bf16.msra.mxu0 0
    %7963 = vmatprep.subr.bf16.mxu0 0
    %7964 = vmatpush2.bf16.msra.mxu0 0
    %7965 = vmatprep.subr.bf16.mxu0 0
    %7966 = vmatpush2.bf16.msra.mxu0 0
    %7967 = vmatprep.mubr.bf16.mxu0 0
    %7968 = vmatmul.mubr.bf16.gmra.mxu0 %v7933
    %v7969 = vpop.f32.mrf.mxu0
    %v7970 = vadd.f32 0.0, %v7969
    %v7971 = vpop.f32.mrf.mxu0
    %v7972 = vpop.f32.mrf.mxu0
    %v7973 = vpop.f32.mrf.mxu0
    %7974 = vdwg.mxu0
    %v7975 = vadd.f32 %v7888, %v7970
    %v7976 = vmax.f32 %v7975, 0.0
    %v7977 = vpack.c.bf16 %v7976, %v7976
    %v7978 = vld [vmem:[%s9] sm:$0xf]
    %v7979 = vld [vmem:[%s9 + $0x4] sm:$0xf]
    %v7980 = vld [vmem:[%s9 + $0x8] sm:$0xf]
    %v7981 = vld [vmem:[%s9 + $0xc] sm:$0xf]
    %v7982 = vld [vmem:[%s10] sm:$0x1]
    %v7984 = vlaneseq
    %v7985 = vshrl.u32 %v7984, 7
    %v7986 = vsub.s32 0, %v7985
    %v7987 = vrot.slane %v7982, %v7986
    %v7993 = vunpack.c.l.b16 %v7978
    %v7994 = vunpack.c.l.b16 %v7979
    %v7995 = vunpack.c.l.b16 %v7980
    %v7996 = vunpack.c.l.b16 %v7981
    %v7997 = vpack.c.b16 %v7994, %v7993
    %v7998 = vpack.c.b16 %v7996, %v7995
    %v8002 = vsel %vm7669, %v7977, 0
    %8004 = vmatprep.subr.bf16.mxu0 0
    %8005 = vmatpush1.bf16.msra.mxu0 0
    %8006 = vmatprep.subr.bf16.mxu0 0
    %8007 = vmatpush1.bf16.msra.mxu0 0
    %8008 = vmatprep.subr.bf16.mxu0 0
    %8009 = vmatpush1.bf16.msra.mxu0 0
    %8010 = vmatprep.subr.bf16.mxu0 0
    %8011 = vmatpush1.bf16.msra.mxu0 0
    %8012 = vmatprep.subr.bf16.mxu0 0
    %8013 = vmatpush1.bf16.msra.mxu0 0
    %8014 = vmatprep.subr.bf16.mxu0 0
    %8015 = vmatpush1.bf16.msra.mxu0 0
    %8016 = vmatprep.subr.bf16.mxu0 0
    %8017 = vmatpush1.bf16.msra.mxu0 %v7998
    %8018 = vmatprep.subr.bf16.mxu0 0
    %8019 = vmatpush1.bf16.msra.mxu0 %v7997
    %8020 = vmatprep.subr.bf16.mxu0 0
    %8021 = vmatpush2.bf16.msra.mxu0 0
    %8022 = vmatprep.subr.bf16.mxu0 0
    %8023 = vmatpush2.bf16.msra.mxu0 0
    %8024 = vmatprep.subr.bf16.mxu0 0
    %8025 = vmatpush2.bf16.msra.mxu0 0
    %8026 = vmatprep.subr.bf16.mxu0 0
    %8027 = vmatpush2.bf16.msra.mxu0 0
    %8028 = vmatprep.subr.bf16.mxu0 0
    %8029 = vmatpush2.bf16.msra.mxu0 0
    %8030 = vmatprep.subr.bf16.mxu0 0
    %8031 = vmatpush2.bf16.msra.mxu0 0
    %8032 = vmatprep.subr.bf16.mxu0 0
    %8033 = vmatpush2.bf16.msra.mxu0 0
    %8034 = vmatprep.subr.bf16.mxu0 0
    %8035 = vmatpush2.bf16.msra.mxu0 0
    %8036 = vmatprep.mubr.bf16.mxu0 0
    %8037 = vmatmul.mubr.bf16.gmra.mxu0 %v8002
    %v8038 = vpop.f32.mrf.mxu0
    %v8039 = vadd.f32 %v7987, %v8038
    %v8040 = vpop.f32.mrf.mxu0
    %v8041 = vpop.f32.mrf.mxu0
    %v8042 = vpop.f32.mrf.mxu0
    %8043 = vdwg.mxu0
    %vm8044 = vcmask 74752
    %8045 = vst.msk [vmem:[#allocation7] sm:$0x3] %vm8044, %v8039
    // Predicated region
    $region46: #{small_cnn_forward.1} parent=1 // pred_check
      _
    $region47: #{small_cnn_forward.1} parent=1 // pred_check_branch
      %8047 = sbr.rel (0) target = $region49
    $region48: #{small_cnn_forward.1} parent=1 // pred_region
      %s8049 = ssub.s32 32, 32
      %8050 = vsyncadd [#allocation8], %s8049
      %s8052 = sshll.u32 [#allocation7], 4
      %s8053 = int_to_ptr.vmem [resolvable:$true] %s8052
      %8055 = dma.vmem_to_hbm [thread:$0]  %s8053, 32, %s11, [#allocation8]
    $region49: #{small_cnn_forward.1} parent=1 // pred_fallthru
      _
    // Predicated region
    $region50: #{small_cnn_forward.1} parent=1 // pred_check
      _
    $region51: #{small_cnn_forward.1} parent=1 // pred_check_branch
      %8057 = sbr.rel (0) target = $region53
    $region52: #{small_cnn_forward.1} parent=1 // pred_region
      %8058 = dma.done [#allocation8], 32
    $region53: #{small_cnn_forward.1} parent=1 // pred_fallthru
      _
    %8059 = vsyncpa [#allocation8], 1

</llo_original>
